<compile_context>
chip_gen: v7x
topology: tpu7x:2x2x1
jax: 0.10.0
libtpu: 0.0.40
codegen_flags: <defaults>
</compile_context>

<pallas_src>
import functools
import math

import jax
import jax.numpy as jnp
from jax import lax
from jax.experimental import pallas as pl
from jax.experimental.pallas import tpu as pltpu

C1 = 256   # conv1 output channels
C2 = 128   # conv2 output channels (input channels of the 1x1 conv)


def _round_up(x, m):
    return (x + m - 1) // m * m


# ----------------------------------------------------------------------------
# The fused kernel
# ----------------------------------------------------------------------------
def _depth_head_kernel(x_ref, w1_ref, b1_ref, w2_ref, b2_ref, w3b_ref,
                       uwm_ref, uhf_ref, b3_ref, o_ref, y1_ref, *, h, w, wpp):
    """Per-batch-element fused DepthHead.

    x_ref  : (1, (H+2)*Wpp, Cin_p) bf16  zero-padded input, spatial flattened
    w1_ref : (9, Cin_p, 256) bf16        conv1 taps (kh*3+kw, cin, cout)
    b1_ref : (1, 256) f32
    w2_ref : (9, 256, 128) bf16          conv2 taps
    b2_ref : (1, 128) f32
    w3b_ref: (128, OW) bf16              1x1-conv weight broadcast across OW lanes
    uwm_ref: (H*Wpp, OW) bf16            Uw[ow, wp-1] masked to valid columns
    uhf_ref: (OH, H*Wpp) bf16            Uh[oh, h] replicated across Wpp
    b3_ref : (1, 1) f32
    o_ref  : (1, OH, OW) f32             lane-dense depth map
    y1_ref : ((H+2)*Wpp, 256) bf16 VMEM  conv1 output in conv2's padded coordinates
    """
    m = h * wpp            # number of rows in the computed (non-halo) block
    mp1 = (h + 2) * wpp

    # Valid-column mask over the flattened rows: data columns are wp in [1, W].
    wp_idx = lax.broadcasted_iota(jnp.int32, (m, 1), 0) % wpp
    col_mask = jnp.logical_and(wp_idx >= 1, wp_idx <= w)

    def conv3x3_blocks(src, w_ref, b_ref, mask):
        """3x3 conv (pad=1) + bias + ReLU (+ optional column mask), bf16 out.

        `src` is the full padded buffer (mp1, Cin) bf16.  The three dx shifts are
        materialised once as row-shifted copies; every tap is then an ALIGNED
        row-window (offsets kh*Wpp, Wpp % 16 == 0) of one of those 3 buffers.
        Returns a list of (m, 128) bf16 blocks (output channels in 128-wide blocks).
        """
        zrow = jnp.zeros((1, src.shape[1]), src.dtype)
        shifted = (
            jnp.concatenate([zrow, src[:-1, :]], axis=0),   # [r] = src[r-1]
            src,                                            # [r] = src[r]
            jnp.concatenate([src[1:, :], zrow], axis=0),    # [r] = src[r+1]
        )
        c_out = w_ref.shape[2]
        blocks = []
        for co in range(0, c_out, 128):
            acc = None
            for kh in range(3):
                base = kh * wpp                              # sublane-aligned start
                for kw in range(3):
                    a = shifted[kw][base:base + m, :]
                    d = jnp.dot(a, w_ref[3 * kh + kw, :, co:co + 128],
                                preferred_element_type=jnp.float32)
                    acc = d if acc is None else acc + d      # pure dot-chain (MRB on v7x)
            y = jnp.maximum(acc + b_ref[:, co:co + 128], 0.0)
            if mask is not None:
                y = jnp.where(mask, y, 0.0)
            blocks.append(y.astype(jnp.bfloat16))
        return blocks

    # ---- conv1 (Cin -> 256): write into the zero-haloed padded scratch --------------
    y1_ref[0:wpp, :] = jnp.zeros((wpp, C1), jnp.bfloat16)          # top halo row
    y1_ref[wpp + m:, :] = jnp.zeros((wpp, C1), jnp.bfloat16)       # bottom halo row
    for i, blk in enumerate(conv3x3_blocks(x_ref[0], w1_ref, b1_ref, col_mask)):
        y1_ref[wpp:wpp + m, i * 128:(i + 1) * 128] = blk

    # ---- conv2 (256 -> 128); garbage columns are killed downstream by uwm -----------
    (y2,) = conv3x3_blocks(y1_ref[...], w2_ref, b2_ref, None)       # (m, 128) bf16

    # ---- 1x1 conv (128 -> 1) folded with the separable bilinear upsample ------------
    z = jnp.dot(y2, w3b_ref[...], preferred_element_type=jnp.float32)        # (m, OW)
    zz = (z * uwm_ref[...]).astype(jnp.bfloat16)                             # fold Uw + mask
    out = jnp.dot(uhf_ref[...], zz, preferred_element_type=jnp.float32)      # (OH, OW)
    o_ref[0] = out + b3_ref[...]


@functools.lru_cache(maxsize=None)
def _depth_head_call(n, h, w, wpp, cin_p, oh, ow):
    mp1 = (h + 2) * wpp
    m = h * wpp
    kernel = functools.partial(_depth_head_kernel, h=h, w=w, wpp=wpp)
    return pl.pallas_call(
        kernel,
        out_shape=jax.ShapeDtypeStruct((n, oh, ow), jnp.float32),
        grid_spec=pltpu.PrefetchScalarGridSpec(
            num_scalar_prefetch=0,
            grid=(n,),
            in_specs=[
                pl.BlockSpec((1, mp1, cin_p), lambda b: (b, 0, 0)),   # x (per batch)
                pl.BlockSpec((9, cin_p, C1), lambda b: (0, 0, 0)),    # w1 (resident)
                pl.BlockSpec((1, C1), lambda b: (0, 0)),              # b1
                pl.BlockSpec((9, C1, C2), lambda b: (0, 0, 0)),       # w2
                pl.BlockSpec((1, C2), lambda b: (0, 0)),              # b2
                pl.BlockSpec((C2, ow), lambda b: (0, 0)),             # w3 broadcast
                pl.BlockSpec((m, ow), lambda b: (0, 0)),              # Uw mask
                pl.BlockSpec((oh, m), lambda b: (0, 0)),              # Uh flat
                pl.BlockSpec((1, 1), lambda b: (0, 0)),               # b3
            ],
            out_specs=pl.BlockSpec((1, oh, ow), lambda b: (b, 0, 0)),
            scratch_shapes=[pltpu.VMEM((mp1, C1), jnp.bfloat16)],     # y1 (padded coords)
        ),
        compiler_params=pltpu.CompilerParams(
            dimension_semantics=("parallel",),
            vmem_limit_bytes=32 * 1024 * 1024),
    )


# ----------------------------------------------------------------------------
# Parameter packing / layout helpers
# ----------------------------------------------------------------------------
def _bilinear_matrix(in_size, out_size):
    """PyTorch nn.Upsample(mode='bilinear', align_corners=False) 1-D weights (out, in)."""
    i = jnp.arange(out_size, dtype=jnp.float32)
    scale = in_size / out_size
    src = jnp.maximum((i + 0.5) * scale - 0.5, 0.0)
    i0f = jnp.floor(src)
    w1 = src - i0f
    w0 = 1.0 - w1
    i0 = jnp.minimum(i0f.astype(jnp.int32), in_size - 1)
    i1 = jnp.minimum(i0 + 1, in_size - 1)
    return (jax.nn.one_hot(i0, in_size, dtype=jnp.float32) * w0[:, None]
            + jax.nn.one_hot(i1, in_size, dtype=jnp.float32) * w1[:, None])


def _pack_conv3x3(w, b):
    cout, cin, kh, kw = w.shape
    assert (kh, kw) == (3, 3) and cout % 128 == 0
    cin_p = _round_up(cin, 128)
    wm = jnp.transpose(w, (2, 3, 1, 0)).reshape(9, cin, cout)
    wm = jnp.pad(wm, ((0, 0), (0, cin_p - cin), (0, 0))).astype(jnp.bfloat16)
    bm = b.astype(jnp.float32).reshape(1, cout)
    return wm, bm


def init_params(key, in_channels):
    """PyTorch-shaped deterministic random weights (no checkpoint load)."""
    ks = jax.random.split(key, 6)

    def conv_w(k, cout, cin, ksize):
        fan_in = cin * ksize * ksize
        return jax.random.normal(k, (cout, cin, ksize, ksize), jnp.float32) / math.sqrt(fan_in)

    return dict(
        w1=conv_w(ks[0], C1, in_channels, 3),
        b1=0.01 * jax.random.normal(ks[1], (C1,), jnp.float32),
        w2=conv_w(ks[2], C2, C1, 3),
        b2=0.01 * jax.random.normal(ks[3], (C2,), jnp.float32),
        w3=conv_w(ks[4], 1, C2, 1),
        b3=0.01 * jax.random.normal(ks[5], (1,), jnp.float32),
    )


def pack_params(raw, feat_hw, out_res):
    """Pre-pack once: bf16 conv taps, broadcast 1x1 weight, folded interpolation mats."""
    h, w = feat_hw
    oh, ow = out_res
    wpp = _round_up(w + 2, 16)                  # aligned padded width
    m = h * wpp

    w1, b1 = _pack_conv3x3(raw['w1'], raw['b1'])
    w2, b2 = _pack_conv3x3(raw['w2'], raw['b2'])

    w3 = raw['w3'].reshape(C2)                                            # (128,)
    w3b = jnp.broadcast_to(w3[:, None], (C2, ow)).astype(jnp.bfloat16)    # (128, OW)

    uw = _bilinear_matrix(w, ow)                # (OW, W)
    uh = _bilinear_matrix(h, oh)                # (OH, H)

    wp_idx = jnp.arange(wpp)
    valid = (wp_idx >= 1) & (wp_idx <= w)
    uw_rows = jnp.where(valid[:, None],
                        uw.T[jnp.clip(wp_idx - 1, 0, w - 1)], 0.0)        # (Wpp, OW)
    uwm = jnp.tile(uw_rows, (h, 1)).astype(jnp.bfloat16)                  # (H*Wpp, OW)
    uhf = jnp.repeat(uh, wpp, axis=1).astype(jnp.bfloat16)                # (OH, H*Wpp)
    b3 = raw['b3'].reshape(1, 1).astype(jnp.float32)
    return dict(w1=w1, b1=b1, w2=w2, b2=b2, w3b=w3b, uwm=uwm, uhf=uhf, b3=b3)


# ----------------------------------------------------------------------------
# Forward pass (mirrors DepthHead.forward)
# ----------------------------------------------------------------------------
def depth_head_forward(x_nchw, params):
    """x: (N, Cin, H, W) float32 (PyTorch layout) -> (N, 1, OH, OW) float32."""
    n, cin, h, w = x_nchw.shape
    cin_p = params['w1'].shape[1]
    oh, m2 = params['uhf'].shape
    ow = params['w3b'].shape[1]
    wpp = m2 // h
    # Guard against a feature-map size that doesn't match the packed matrices.
    assert m2 == h * wpp and wpp >= w + 2 and wpp % 16 == 0, "packed params don't match input H/W"
    assert params['uwm'].shape == (m2, ow) and cin_p >= cin

    xt = jnp.transpose(x_nchw, (0, 2, 3, 1)).astype(jnp.bfloat16)         # NHWC bf16
    xp = jnp.pad(xt, ((0, 0), (1, 1), (1, wpp - (w + 1)), (0, cin_p - cin)))
    xf = xp.reshape(n, (h + 2) * wpp, cin_p)                              # flattened padded

    fn = _depth_head_call(n, h, w, wpp, cin_p, oh, ow)
    depth = fn(xf, params['w1'], params['b1'], params['w2'], params['b2'],
               params['w3b'], params['uwm'], params['uhf'], params['b3'])  # (N, OH, OW)
    return depth[:, None, :, :]


# ----------------------------------------------------------------------------
# Pure-JAX f32 reference (numerical sanity check)
# ----------------------------------------------------------------------------
def depth_head_reference(x, raw, out_res):
    dn = ('NCHW', 'OIHW', 'NCHW')
    hp = lax.Precision.HIGHEST
    y = lax.conv_general_dilated(x, raw['w1'], (1, 1), ((1, 1), (1, 1)),
                                 dimension_numbers=dn, precision=hp)
    y = jax.nn.relu(y + raw['b1'][None, :, None, None])
    y = lax.conv_general_dilated(y, raw['w2'], (1, 1), ((1, 1), (1, 1)),
                                 dimension_numbers=dn, precision=hp)
    y = jax.nn.relu(y + raw['b2'][None, :, None, None])
    y = lax.conv_general_dilated(y, raw['w3'], (1, 1), ((0, 0), (0, 0)),
                                 dimension_numbers=dn, precision=hp)
    d = y[:, 0] + raw['b3'][0]                                   # (N, H, W)
    oh, ow = out_res
    uh = _bilinear_matrix(d.shape[1], oh)                        # (OH, H)
    uw = _bilinear_matrix(d.shape[2], ow)                        # (OW, W)
    out = jnp.einsum('oh,nhw,pw->nop', uh, d, uw, precision=hp)
    return out[:, None]


# ----------------------------------------------------------------------------
if __name__ == "__main__":
    N, CIN, H, W = 2, 256, 8, 16          # small stand-in for a /32 backbone feature map
    OUT_RES = (64, 128)                   # small stand-in for the default (256, 512)

    key = jax.random.PRNGKey(0)
    k_param, k_x = jax.random.split(key)
    raw = init_params(k_param, CIN)
    params = pack_params(raw, (H, W), OUT_RES)

    x = jax.random.normal(k_x, (N, CIN, H, W), dtype=jnp.float32)

    fwd = jax.jit(depth_head_forward)
    out = fwd(x, params)
    jax.block_until_ready(out)

    assert out.shape == (N, 1) + OUT_RES, out.shape
    assert bool(jnp.all(jnp.isfinite(out)))

    ref = depth_head_reference(x, raw, OUT_RES)
    rel_err = float(jnp.max(jnp.abs(out - ref)) / (jnp.max(jnp.abs(ref)) + 1e-6))
    assert rel_err < 0.08, f"rel_err={rel_err}"   # bf16 MXU operands vs f32 reference

    print("KERNEL_OK")
</pallas_src>

<mosaic_0001>
module attributes {stable_mosaic.version = 11 : i64} {
  func.func @_depth_head_kernel(%arg0: i32, %arg1: memref<1x320x256xbf16, #tpu.memory_space<vmem>>, %arg2: memref<9x256x256xbf16, #tpu.memory_space<vmem>>, %arg3: memref<1x256xf32, #tpu.memory_space<vmem>>, %arg4: memref<9x256x128xbf16, #tpu.memory_space<vmem>>, %arg5: memref<1x128xf32, #tpu.memory_space<vmem>>, %arg6: memref<128x128xbf16, #tpu.memory_space<vmem>>, %arg7: memref<256x128xbf16, #tpu.memory_space<vmem>>, %arg8: memref<64x256xbf16, #tpu.memory_space<vmem>>, %arg9: memref<1x1xf32, #tpu.memory_space<vmem>>, %arg10: memref<1x64x128xf32, #tpu.memory_space<vmem>>, %arg11: memref<320x256xbf16, #tpu.memory_space<vmem>>) attributes {dimension_semantics = [#tpu.dimension_semantics<parallel>], iteration_bounds = array<i64: 2>, scalar_prefetch = 0 : i64, scratch_operands = 1 : i64, tpu.core_type = #tpu.core_type<tc>, window_params = [{transform_indices = @transform_0, window_bounds = array<i64: 1, 320, 256>}, {pipeline_mode = #tpu.pipeline_mode<synchronous>, transform_indices = @transform_1, window_bounds = array<i64: 9, 256, 256>}, {pipeline_mode = #tpu.pipeline_mode<synchronous>, transform_indices = @transform_2, window_bounds = array<i64: 1, 256>}, {pipeline_mode = #tpu.pipeline_mode<synchronous>, transform_indices = @transform_3, window_bounds = array<i64: 9, 256, 128>}, {pipeline_mode = #tpu.pipeline_mode<synchronous>, transform_indices = @transform_4, window_bounds = array<i64: 1, 128>}, {pipeline_mode = #tpu.pipeline_mode<synchronous>, transform_indices = @transform_5, window_bounds = array<i64: 128, 128>}, {pipeline_mode = #tpu.pipeline_mode<synchronous>, transform_indices = @transform_6, window_bounds = array<i64: 256, 128>}, {pipeline_mode = #tpu.pipeline_mode<synchronous>, transform_indices = @transform_7, window_bounds = array<i64: 64, 256>}, {pipeline_mode = #tpu.pipeline_mode<synchronous>, transform_indices = @transform_8, window_bounds = array<i64: 1, 1>}, {transform_indices = @transform_9, window_bounds = array<i64: 1, 64, 128>}]} {
    %0 = tpu.iota {dimensions = array<i32: 0>} : vector<256x1xi32>
    %c32_i32 = arith.constant 32 : i32
    %c0_i32 = arith.constant 0 : i32
    %1 = arith.cmpi eq, %c32_i32, %c0_i32 : i32
    %c1_i32 = arith.constant 1 : i32
    %2 = arith.select %1, %c1_i32, %c32_i32 : i32
    %3 = vector.broadcast %2 : i32 to vector<256x1xi32>
    %4 = arith.remsi %0, %3 : vector<256x1xi32>
    %c0_i32_0 = arith.constant 0 : i32
    %5 = vector.broadcast %c0_i32_0 : i32 to vector<256x1xi32>
    %6 = arith.cmpi ne, %4, %5 : vector<256x1xi32>
    %c0_i32_1 = arith.constant 0 : i32
    %7 = vector.broadcast %c0_i32_1 : i32 to vector<256x1xi32>
    %8 = arith.cmpi slt, %4, %7 : vector<256x1xi32>
    %c0_i32_2 = arith.constant 0 : i32
    %9 = arith.cmpi slt, %2, %c0_i32_2 : i32
    %10 = vector.broadcast %9 : i1 to vector<256x1xi1>
    %11 = vector.broadcast %10 : vector<256x1xi1> to vector<256x1xi1>
    %12 = arith.xori %8, %11 : vector<256x1xi1>
    %13 = arith.andi %12, %6 : vector<256x1xi1>
    %14 = vector.broadcast %2 : i32 to vector<256x1xi32>
    %15 = arith.addi %4, %14 : vector<256x1xi32>
    %16 = arith.select %13, %15, %4 : vector<256x1xi1>, vector<256x1xi32>
    %c1_i32_3 = arith.constant 1 : i32
    %17 = vector.broadcast %c1_i32_3 : i32 to vector<256x1xi32>
    %18 = arith.cmpi sge, %16, %17 : vector<256x1xi32>
    %c16_i32 = arith.constant 16 : i32
    %19 = vector.broadcast %c16_i32 : i32 to vector<256x1xi32>
    %20 = arith.cmpi sle, %16, %19 : vector<256x1xi32>
    %21 = arith.andi %18, %20 : vector<256x1xi1>
    %cst = arith.constant 0.000000e+00 : bf16
    %22 = vector.broadcast %cst : bf16 to vector<32x256xbf16>
    %c0 = arith.constant 0 : index
    %c0_4 = arith.constant 0 : index
    %23 = vector.load %arg11[%c0, %c0_4] : memref<320x256xbf16, #tpu.memory_space<vmem>>, vector<32x256xbf16>
    tpu.vector_store %arg11[%c0, %c0_4], %22 {strides = array<i32>} : memref<320x256xbf16, #tpu.memory_space<vmem>>, vector<32x256xbf16>,
    %cst_5 = arith.constant 0.000000e+00 : bf16
    %24 = vector.broadcast %cst_5 : bf16 to vector<32x256xbf16>
    %c288 = arith.constant 288 : index
    %c0_6 = arith.constant 0 : index
    %25 = vector.load %arg11[%c288, %c0_6] : memref<320x256xbf16, #tpu.memory_space<vmem>>, vector<32x256xbf16>
    tpu.vector_store %arg11[%c288, %c0_6], %24 {strides = array<i32>} : memref<320x256xbf16, #tpu.memory_space<vmem>>, vector<32x256xbf16>,
    %c0_7 = arith.constant 0 : index
    %c0_8 = arith.constant 0 : index
    %c0_9 = arith.constant 0 : index
    %26 = vector.load %arg1[%c0_7, %c0_8, %c0_9] : memref<1x320x256xbf16, #tpu.memory_space<vmem>>, vector<1x320x256xbf16>
    %27 = vector.shape_cast %26 : vector<1x320x256xbf16> to vector<320x256xbf16>
    %cst_10 = arith.constant 0.000000e+00 : bf16
    %28 = vector.broadcast %cst_10 : bf16 to vector<1x256xbf16>
    %29 = vector.extract_strided_slice %27 {offsets = [0, 0], sizes = [319, 256], strides = [1, 1]} : vector<320x256xbf16> to vector<319x256xbf16>
    %30 = tpu.concatenate %28, %29 in 0 : vector<1x256xbf16>, vector<319x256xbf16> -> vector<320x256xbf16>
    %31 = vector.extract_strided_slice %27 {offsets = [1, 0], sizes = [319, 256], strides = [1, 1]} : vector<320x256xbf16> to vector<319x256xbf16>
    %32 = tpu.concatenate %31, %28 in 0 : vector<319x256xbf16>, vector<1x256xbf16> -> vector<320x256xbf16>
    %33 = vector.extract_strided_slice %30 {offsets = [0, 0], sizes = [256, 256], strides = [1, 1]} : vector<320x256xbf16> to vector<256x256xbf16>
    %c0_11 = arith.constant 0 : index
    %c0_12 = arith.constant 0 : index
    %c0_13 = arith.constant 0 : index
    %34 = vector.load %arg2[%c0_11, %c0_12, %c0_13] : memref<9x256x256xbf16, #tpu.memory_space<vmem>>, vector<1x256x128xbf16>
    %35 = vector.shape_cast %34 : vector<1x256x128xbf16> to vector<256x128xbf16>
    %cst_14 = arith.constant dense<0.000000e+00> : vector<256x128xf32>
    %36 = tpu.matmul %33, %35, %cst_14 {dimension_numbers = #tpu.dot_dimension_numbers<[1], [0], [0], [1], [0, 0, 1, 1], [], []>} : vector<256x256xbf16>, vector<256x128xbf16>, vector<256x128xf32> -> vector<256x128xf32>
    %37 = vector.extract_strided_slice %27 {offsets = [0, 0], sizes = [256, 256], strides = [1, 1]} : vector<320x256xbf16> to vector<256x256xbf16>
    %c1 = arith.constant 1 : index
    %c0_15 = arith.constant 0 : index
    %c0_16 = arith.constant 0 : index
    %38 = vector.load %arg2[%c1, %c0_15, %c0_16] : memref<9x256x256xbf16, #tpu.memory_space<vmem>>, vector<1x256x128xbf16>
    %39 = vector.shape_cast %38 : vector<1x256x128xbf16> to vector<256x128xbf16>
    %cst_17 = arith.constant dense<0.000000e+00> : vector<256x128xf32>
    %40 = tpu.matmul %37, %39, %cst_17 {dimension_numbers = #tpu.dot_dimension_numbers<[1], [0], [0], [1], [0, 0, 1, 1], [], []>} : vector<256x256xbf16>, vector<256x128xbf16>, vector<256x128xf32> -> vector<256x128xf32>
    %41 = arith.addf %36, %40 : vector<256x128xf32>
    %42 = vector.extract_strided_slice %32 {offsets = [0, 0], sizes = [256, 256], strides = [1, 1]} : vector<320x256xbf16> to vector<256x256xbf16>
    %c2 = arith.constant 2 : index
    %c0_18 = arith.constant 0 : index
    %c0_19 = arith.constant 0 : index
    %43 = vector.load %arg2[%c2, %c0_18, %c0_19] : memref<9x256x256xbf16, #tpu.memory_space<vmem>>, vector<1x256x128xbf16>
    %44 = vector.shape_cast %43 : vector<1x256x128xbf16> to vector<256x128xbf16>
    %cst_20 = arith.constant dense<0.000000e+00> : vector<256x128xf32>
    %45 = tpu.matmul %42, %44, %cst_20 {dimension_numbers = #tpu.dot_dimension_numbers<[1], [0], [0], [1], [0, 0, 1, 1], [], []>} : vector<256x256xbf16>, vector<256x128xbf16>, vector<256x128xf32> -> vector<256x128xf32>
    %46 = arith.addf %41, %45 : vector<256x128xf32>
    %47 = vector.extract_strided_slice %30 {offsets = [32, 0], sizes = [256, 256], strides = [1, 1]} : vector<320x256xbf16> to vector<256x256xbf16>
    %c3 = arith.constant 3 : index
    %c0_21 = arith.constant 0 : index
    %c0_22 = arith.constant 0 : index
    %48 = vector.load %arg2[%c3, %c0_21, %c0_22] : memref<9x256x256xbf16, #tpu.memory_space<vmem>>, vector<1x256x128xbf16>
    %49 = vector.shape_cast %48 : vector<1x256x128xbf16> to vector<256x128xbf16>
    %cst_23 = arith.constant dense<0.000000e+00> : vector<256x128xf32>
    %50 = tpu.matmul %47, %49, %cst_23 {dimension_numbers = #tpu.dot_dimension_numbers<[1], [0], [0], [1], [0, 0, 1, 1], [], []>} : vector<256x256xbf16>, vector<256x128xbf16>, vector<256x128xf32> -> vector<256x128xf32>
    %51 = arith.addf %46, %50 : vector<256x128xf32>
    %52 = vector.extract_strided_slice %27 {offsets = [32, 0], sizes = [256, 256], strides = [1, 1]} : vector<320x256xbf16> to vector<256x256xbf16>
    %c4 = arith.constant 4 : index
    %c0_24 = arith.constant 0 : index
    %c0_25 = arith.constant 0 : index
    %53 = vector.load %arg2[%c4, %c0_24, %c0_25] : memref<9x256x256xbf16, #tpu.memory_space<vmem>>, vector<1x256x128xbf16>
    %54 = vector.shape_cast %53 : vector<1x256x128xbf16> to vector<256x128xbf16>
    %cst_26 = arith.constant dense<0.000000e+00> : vector<256x128xf32>
    %55 = tpu.matmul %52, %54, %cst_26 {dimension_numbers = #tpu.dot_dimension_numbers<[1], [0], [0], [1], [0, 0, 1, 1], [], []>} : vector<256x256xbf16>, vector<256x128xbf16>, vector<256x128xf32> -> vector<256x128xf32>
    %56 = arith.addf %51, %55 : vector<256x128xf32>
    %57 = vector.extract_strided_slice %32 {offsets = [32, 0], sizes = [256, 256], strides = [1, 1]} : vector<320x256xbf16> to vector<256x256xbf16>
    %c5 = arith.constant 5 : index
    %c0_27 = arith.constant 0 : index
    %c0_28 = arith.constant 0 : index
    %58 = vector.load %arg2[%c5, %c0_27, %c0_28] : memref<9x256x256xbf16, #tpu.memory_space<vmem>>, vector<1x256x128xbf16>
    %59 = vector.shape_cast %58 : vector<1x256x128xbf16> to vector<256x128xbf16>
    %cst_29 = arith.constant dense<0.000000e+00> : vector<256x128xf32>
    %60 = tpu.matmul %57, %59, %cst_29 {dimension_numbers = #tpu.dot_dimension_numbers<[1], [0], [0], [1], [0, 0, 1, 1], [], []>} : vector<256x256xbf16>, vector<256x128xbf16>, vector<256x128xf32> -> vector<256x128xf32>
    %61 = arith.addf %56, %60 : vector<256x128xf32>
    %62 = vector.extract_strided_slice %30 {offsets = [64, 0], sizes = [256, 256], strides = [1, 1]} : vector<320x256xbf16> to vector<256x256xbf16>
    %c6 = arith.constant 6 : index
    %c0_30 = arith.constant 0 : index
    %c0_31 = arith.constant 0 : index
    %63 = vector.load %arg2[%c6, %c0_30, %c0_31] : memref<9x256x256xbf16, #tpu.memory_space<vmem>>, vector<1x256x128xbf16>
    %64 = vector.shape_cast %63 : vector<1x256x128xbf16> to vector<256x128xbf16>
    %cst_32 = arith.constant dense<0.000000e+00> : vector<256x128xf32>
    %65 = tpu.matmul %62, %64, %cst_32 {dimension_numbers = #tpu.dot_dimension_numbers<[1], [0], [0], [1], [0, 0, 1, 1], [], []>} : vector<256x256xbf16>, vector<256x128xbf16>, vector<256x128xf32> -> vector<256x128xf32>
    %66 = arith.addf %61, %65 : vector<256x128xf32>
    %67 = vector.extract_strided_slice %27 {offsets = [64, 0], sizes = [256, 256], strides = [1, 1]} : vector<320x256xbf16> to vector<256x256xbf16>
    %c7 = arith.constant 7 : index
    %c0_33 = arith.constant 0 : index
    %c0_34 = arith.constant 0 : index
    %68 = vector.load %arg2[%c7, %c0_33, %c0_34] : memref<9x256x256xbf16, #tpu.memory_space<vmem>>, vector<1x256x128xbf16>
    %69 = vector.shape_cast %68 : vector<1x256x128xbf16> to vector<256x128xbf16>
    %cst_35 = arith.constant dense<0.000000e+00> : vector<256x128xf32>
    %70 = tpu.matmul %67, %69, %cst_35 {dimension_numbers = #tpu.dot_dimension_numbers<[1], [0], [0], [1], [0, 0, 1, 1], [], []>} : vector<256x256xbf16>, vector<256x128xbf16>, vector<256x128xf32> -> vector<256x128xf32>
    %71 = arith.addf %66, %70 : vector<256x128xf32>
    %72 = vector.extract_strided_slice %32 {offsets = [64, 0], sizes = [256, 256], strides = [1, 1]} : vector<320x256xbf16> to vector<256x256xbf16>
    %c8 = arith.constant 8 : index
    %c0_36 = arith.constant 0 : index
    %c0_37 = arith.constant 0 : index
    %73 = vector.load %arg2[%c8, %c0_36, %c0_37] : memref<9x256x256xbf16, #tpu.memory_space<vmem>>, vector<1x256x128xbf16>
    %74 = vector.shape_cast %73 : vector<1x256x128xbf16> to vector<256x128xbf16>
    %cst_38 = arith.constant dense<0.000000e+00> : vector<256x128xf32>
    %75 = tpu.matmul %72, %74, %cst_38 {dimension_numbers = #tpu.dot_dimension_numbers<[1], [0], [0], [1], [0, 0, 1, 1], [], []>} : vector<256x256xbf16>, vector<256x128xbf16>, vector<256x128xf32> -> vector<256x128xf32>
    %76 = arith.addf %71, %75 : vector<256x128xf32>
    %c0_39 = arith.constant 0 : index
    %c0_40 = arith.constant 0 : index
    %77 = vector.load %arg3[%c0_39, %c0_40] : memref<1x256xf32, #tpu.memory_space<vmem>>, vector<1x128xf32>
    %78 = vector.broadcast %77 : vector<1x128xf32> to vector<256x128xf32>
    %79 = arith.addf %76, %78 : vector<256x128xf32>
    %cst_41 = arith.constant 0.000000e+00 : f32
    %80 = vector.broadcast %cst_41 : f32 to vector<256x128xf32>
    %81 = arith.maximumf %79, %80 : vector<256x128xf32>
    %cst_42 = arith.constant 0.000000e+00 : f32
    %82 = vector.shape_cast %21 : vector<256x1xi1> to vector<256x1xi1>
    %83 = vector.broadcast %82 : vector<256x1xi1> to vector<256x128xi1>
    %84 = vector.broadcast %cst_42 : f32 to vector<256x128xf32>
    %85 = arith.select %83, %81, %84 : vector<256x128xi1>, vector<256x128xf32>
    %86 = arith.truncf %85 : vector<256x128xf32> to vector<256x128xbf16>
    %87 = vector.extract_strided_slice %30 {offsets = [0, 0], sizes = [256, 256], strides = [1, 1]} : vector<320x256xbf16> to vector<256x256xbf16>
    %c0_43 = arith.constant 0 : index
    %c0_44 = arith.constant 0 : index
    %c128 = arith.constant 128 : index
    %88 = vector.load %arg2[%c0_43, %c0_44, %c128] : memref<9x256x256xbf16, #tpu.memory_space<vmem>>, vector<1x256x128xbf16>
    %89 = vector.shape_cast %88 : vector<1x256x128xbf16> to vector<256x128xbf16>
    %cst_45 = arith.constant dense<0.000000e+00> : vector<256x128xf32>
    %90 = tpu.matmul %87, %89, %cst_45 {dimension_numbers = #tpu.dot_dimension_numbers<[1], [0], [0], [1], [0, 0, 1, 1], [], []>} : vector<256x256xbf16>, vector<256x128xbf16>, vector<256x128xf32> -> vector<256x128xf32>
    %91 = vector.extract_strided_slice %27 {offsets = [0, 0], sizes = [256, 256], strides = [1, 1]} : vector<320x256xbf16> to vector<256x256xbf16>
    %c1_46 = arith.constant 1 : index
    %c0_47 = arith.constant 0 : index
    %c128_48 = arith.constant 128 : index
    %92 = vector.load %arg2[%c1_46, %c0_47, %c128_48] : memref<9x256x256xbf16, #tpu.memory_space<vmem>>, vector<1x256x128xbf16>
    %93 = vector.shape_cast %92 : vector<1x256x128xbf16> to vector<256x128xbf16>
    %cst_49 = arith.constant dense<0.000000e+00> : vector<256x128xf32>
    %94 = tpu.matmul %91, %93, %cst_49 {dimension_numbers = #tpu.dot_dimension_numbers<[1], [0], [0], [1], [0, 0, 1, 1], [], []>} : vector<256x256xbf16>, vector<256x128xbf16>, vector<256x128xf32> -> vector<256x128xf32>
    %95 = arith.addf %90, %94 : vector<256x128xf32>
    %96 = vector.extract_strided_slice %32 {offsets = [0, 0], sizes = [256, 256], strides = [1, 1]} : vector<320x256xbf16> to vector<256x256xbf16>
    %c2_50 = arith.constant 2 : index
    %c0_51 = arith.constant 0 : index
    %c128_52 = arith.constant 128 : index
    %97 = vector.load %arg2[%c2_50, %c0_51, %c128_52] : memref<9x256x256xbf16, #tpu.memory_space<vmem>>, vector<1x256x128xbf16>
    %98 = vector.shape_cast %97 : vector<1x256x128xbf16> to vector<256x128xbf16>
    %cst_53 = arith.constant dense<0.000000e+00> : vector<256x128xf32>
    %99 = tpu.matmul %96, %98, %cst_53 {dimension_numbers = #tpu.dot_dimension_numbers<[1], [0], [0], [1], [0, 0, 1, 1], [], []>} : vector<256x256xbf16>, vector<256x128xbf16>, vector<256x128xf32> -> vector<256x128xf32>
    %100 = arith.addf %95, %99 : vector<256x128xf32>
    %101 = vector.extract_strided_slice %30 {offsets = [32, 0], sizes = [256, 256], strides = [1, 1]} : vector<320x256xbf16> to vector<256x256xbf16>
    %c3_54 = arith.constant 3 : index
    %c0_55 = arith.constant 0 : index
    %c128_56 = arith.constant 128 : index
    %102 = vector.load %arg2[%c3_54, %c0_55, %c128_56] : memref<9x256x256xbf16, #tpu.memory_space<vmem>>, vector<1x256x128xbf16>
    %103 = vector.shape_cast %102 : vector<1x256x128xbf16> to vector<256x128xbf16>
    %cst_57 = arith.constant dense<0.000000e+00> : vector<256x128xf32>
    %104 = tpu.matmul %101, %103, %cst_57 {dimension_numbers = #tpu.dot_dimension_numbers<[1], [0], [0], [1], [0, 0, 1, 1], [], []>} : vector<256x256xbf16>, vector<256x128xbf16>, vector<256x128xf32> -> vector<256x128xf32>
    %105 = arith.addf %100, %104 : vector<256x128xf32>
    %106 = vector.extract_strided_slice %27 {offsets = [32, 0], sizes = [256, 256], strides = [1, 1]} : vector<320x256xbf16> to vector<256x256xbf16>
    %c4_58 = arith.constant 4 : index
    %c0_59 = arith.constant 0 : index
    %c128_60 = arith.constant 128 : index
    %107 = vector.load %arg2[%c4_58, %c0_59, %c128_60] : memref<9x256x256xbf16, #tpu.memory_space<vmem>>, vector<1x256x128xbf16>
    %108 = vector.shape_cast %107 : vector<1x256x128xbf16> to vector<256x128xbf16>
    %cst_61 = arith.constant dense<0.000000e+00> : vector<256x128xf32>
    %109 = tpu.matmul %106, %108, %cst_61 {dimension_numbers = #tpu.dot_dimension_numbers<[1], [0], [0], [1], [0, 0, 1, 1], [], []>} : vector<256x256xbf16>, vector<256x128xbf16>, vector<256x128xf32> -> vector<256x128xf32>
    %110 = arith.addf %105, %109 : vector<256x128xf32>
    %111 = vector.extract_strided_slice %32 {offsets = [32, 0], sizes = [256, 256], strides = [1, 1]} : vector<320x256xbf16> to vector<256x256xbf16>
    %c5_62 = arith.constant 5 : index
    %c0_63 = arith.constant 0 : index
    %c128_64 = arith.constant 128 : index
    %112 = vector.load %arg2[%c5_62, %c0_63, %c128_64] : memref<9x256x256xbf16, #tpu.memory_space<vmem>>, vector<1x256x128xbf16>
    %113 = vector.shape_cast %112 : vector<1x256x128xbf16> to vector<256x128xbf16>
    %cst_65 = arith.constant dense<0.000000e+00> : vector<256x128xf32>
    %114 = tpu.matmul %111, %113, %cst_65 {dimension_numbers = #tpu.dot_dimension_numbers<[1], [0], [0], [1], [0, 0, 1, 1], [], []>} : vector<256x256xbf16>, vector<256x128xbf16>, vector<256x128xf32> -> vector<256x128xf32>
    %115 = arith.addf %110, %114 : vector<256x128xf32>
    %116 = vector.extract_strided_slice %30 {offsets = [64, 0], sizes = [256, 256], strides = [1, 1]} : vector<320x256xbf16> to vector<256x256xbf16>
    %c6_66 = arith.constant 6 : index
    %c0_67 = arith.constant 0 : index
    %c128_68 = arith.constant 128 : index
    %117 = vector.load %arg2[%c6_66, %c0_67, %c128_68] : memref<9x256x256xbf16, #tpu.memory_space<vmem>>, vector<1x256x128xbf16>
    %118 = vector.shape_cast %117 : vector<1x256x128xbf16> to vector<256x128xbf16>
    %cst_69 = arith.constant dense<0.000000e+00> : vector<256x128xf32>
    %119 = tpu.matmul %116, %118, %cst_69 {dimension_numbers = #tpu.dot_dimension_numbers<[1], [0], [0], [1], [0, 0, 1, 1], [], []>} : vector<256x256xbf16>, vector<256x128xbf16>, vector<256x128xf32> -> vector<256x128xf32>
    %120 = arith.addf %115, %119 : vector<256x128xf32>
    %121 = vector.extract_strided_slice %27 {offsets = [64, 0], sizes = [256, 256], strides = [1, 1]} : vector<320x256xbf16> to vector<256x256xbf16>
    %c7_70 = arith.constant 7 : index
    %c0_71 = arith.constant 0 : index
    %c128_72 = arith.constant 128 : index
    %122 = vector.load %arg2[%c7_70, %c0_71, %c128_72] : memref<9x256x256xbf16, #tpu.memory_space<vmem>>, vector<1x256x128xbf16>
    %123 = vector.shape_cast %122 : vector<1x256x128xbf16> to vector<256x128xbf16>
    %cst_73 = arith.constant dense<0.000000e+00> : vector<256x128xf32>
    %124 = tpu.matmul %121, %123, %cst_73 {dimension_numbers = #tpu.dot_dimension_numbers<[1], [0], [0], [1], [0, 0, 1, 1], [], []>} : vector<256x256xbf16>, vector<256x128xbf16>, vector<256x128xf32> -> vector<256x128xf32>
    %125 = arith.addf %120, %124 : vector<256x128xf32>
    %126 = vector.extract_strided_slice %32 {offsets = [64, 0], sizes = [256, 256], strides = [1, 1]} : vector<320x256xbf16> to vector<256x256xbf16>
    %c8_74 = arith.constant 8 : index
    %c0_75 = arith.constant 0 : index
    %c128_76 = arith.constant 128 : index
    %127 = vector.load %arg2[%c8_74, %c0_75, %c128_76] : memref<9x256x256xbf16, #tpu.memory_space<vmem>>, vector<1x256x128xbf16>
    %128 = vector.shape_cast %127 : vector<1x256x128xbf16> to vector<256x128xbf16>
    %cst_77 = arith.constant dense<0.000000e+00> : vector<256x128xf32>
    %129 = tpu.matmul %126, %128, %cst_77 {dimension_numbers = #tpu.dot_dimension_numbers<[1], [0], [0], [1], [0, 0, 1, 1], [], []>} : vector<256x256xbf16>, vector<256x128xbf16>, vector<256x128xf32> -> vector<256x128xf32>
    %130 = arith.addf %125, %129 : vector<256x128xf32>
    %c0_78 = arith.constant 0 : index
    %c128_79 = arith.constant 128 : index
    %131 = vector.load %arg3[%c0_78, %c128_79] : memref<1x256xf32, #tpu.memory_space<vmem>>, vector<1x128xf32>
    %132 = vector.broadcast %131 : vector<1x128xf32> to vector<256x128xf32>
    %133 = arith.addf %130, %132 : vector<256x128xf32>
    %cst_80 = arith.constant 0.000000e+00 : f32
    %134 = vector.broadcast %cst_80 : f32 to vector<256x128xf32>
    %135 = arith.maximumf %133, %134 : vector<256x128xf32>
    %cst_81 = arith.constant 0.000000e+00 : f32
    %136 = vector.shape_cast %21 : vector<256x1xi1> to vector<256x1xi1>
    %137 = vector.broadcast %136 : vector<256x1xi1> to vector<256x128xi1>
    %138 = vector.broadcast %cst_81 : f32 to vector<256x128xf32>
    %139 = arith.select %137, %135, %138 : vector<256x128xi1>, vector<256x128xf32>
    %140 = arith.truncf %139 : vector<256x128xf32> to vector<256x128xbf16>
    %c32 = arith.constant 32 : index
    %c0_82 = arith.constant 0 : index
    %141 = vector.load %arg11[%c32, %c0_82] : memref<320x256xbf16, #tpu.memory_space<vmem>>, vector<256x128xbf16>
    tpu.vector_store %arg11[%c32, %c0_82], %86 {strides = array<i32>} : memref<320x256xbf16, #tpu.memory_space<vmem>>, vector<256x128xbf16>,
    %c32_83 = arith.constant 32 : index
    %c128_84 = arith.constant 128 : index
    %142 = vector.load %arg11[%c32_83, %c128_84] : memref<320x256xbf16, #tpu.memory_space<vmem>>, vector<256x128xbf16>
    tpu.vector_store %arg11[%c32_83, %c128_84], %140 {strides = array<i32>} : memref<320x256xbf16, #tpu.memory_space<vmem>>, vector<256x128xbf16>,
    %c0_85 = arith.constant 0 : index
    %c0_86 = arith.constant 0 : index
    %143 = vector.load %arg11[%c0_85, %c0_86] : memref<320x256xbf16, #tpu.memory_space<vmem>>, vector<320x256xbf16>
    %cst_87 = arith.constant 0.000000e+00 : bf16
    %144 = vector.broadcast %cst_87 : bf16 to vector<1x256xbf16>
    %145 = vector.extract_strided_slice %143 {offsets = [0, 0], sizes = [319, 256], strides = [1, 1]} : vector<320x256xbf16> to vector<319x256xbf16>
    %146 = tpu.concatenate %144, %145 in 0 : vector<1x256xbf16>, vector<319x256xbf16> -> vector<320x256xbf16>
    %147 = vector.extract_strided_slice %143 {offsets = [1, 0], sizes = [319, 256], strides = [1, 1]} : vector<320x256xbf16> to vector<319x256xbf16>
    %148 = tpu.concatenate %147, %144 in 0 : vector<319x256xbf16>, vector<1x256xbf16> -> vector<320x256xbf16>
    %149 = vector.extract_strided_slice %146 {offsets = [0, 0], sizes = [256, 256], strides = [1, 1]} : vector<320x256xbf16> to vector<256x256xbf16>
    %c0_88 = arith.constant 0 : index
    %c0_89 = arith.constant 0 : index
    %c0_90 = arith.constant 0 : index
    %150 = vector.load %arg4[%c0_88, %c0_89, %c0_90] : memref<9x256x128xbf16, #tpu.memory_space<vmem>>, vector<1x256x128xbf16>
    %151 = vector.shape_cast %150 : vector<1x256x128xbf16> to vector<256x128xbf16>
    %cst_91 = arith.constant dense<0.000000e+00> : vector<256x128xf32>
    %152 = tpu.matmul %149, %151, %cst_91 {dimension_numbers = #tpu.dot_dimension_numbers<[1], [0], [0], [1], [0, 0, 1, 1], [], []>} : vector<256x256xbf16>, vector<256x128xbf16>, vector<256x128xf32> -> vector<256x128xf32>
    %153 = vector.extract_strided_slice %143 {offsets = [0, 0], sizes = [256, 256], strides = [1, 1]} : vector<320x256xbf16> to vector<256x256xbf16>
    %c1_92 = arith.constant 1 : index
    %c0_93 = arith.constant 0 : index
    %c0_94 = arith.constant 0 : index
    %154 = vector.load %arg4[%c1_92, %c0_93, %c0_94] : memref<9x256x128xbf16, #tpu.memory_space<vmem>>, vector<1x256x128xbf16>
    %155 = vector.shape_cast %154 : vector<1x256x128xbf16> to vector<256x128xbf16>
    %cst_95 = arith.constant dense<0.000000e+00> : vector<256x128xf32>
    %156 = tpu.matmul %153, %155, %cst_95 {dimension_numbers = #tpu.dot_dimension_numbers<[1], [0], [0], [1], [0, 0, 1, 1], [], []>} : vector<256x256xbf16>, vector<256x128xbf16>, vector<256x128xf32> -> vector<256x128xf32>
    %157 = arith.addf %152, %156 : vector<256x128xf32>
    %158 = vector.extract_strided_slice %148 {offsets = [0, 0], sizes = [256, 256], strides = [1, 1]} : vector<320x256xbf16> to vector<256x256xbf16>
    %c2_96 = arith.constant 2 : index
    %c0_97 = arith.constant 0 : index
    %c0_98 = arith.constant 0 : index
    %159 = vector.load %arg4[%c2_96, %c0_97, %c0_98] : memref<9x256x128xbf16, #tpu.memory_space<vmem>>, vector<1x256x128xbf16>
    %160 = vector.shape_cast %159 : vector<1x256x128xbf16> to vector<256x128xbf16>
    %cst_99 = arith.constant dense<0.000000e+00> : vector<256x128xf32>
    %161 = tpu.matmul %158, %160, %cst_99 {dimension_numbers = #tpu.dot_dimension_numbers<[1], [0], [0], [1], [0, 0, 1, 1], [], []>} : vector<256x256xbf16>, vector<256x128xbf16>, vector<256x128xf32> -> vector<256x128xf32>
    %162 = arith.addf %157, %161 : vector<256x128xf32>
    %163 = vector.extract_strided_slice %146 {offsets = [32, 0], sizes = [256, 256], strides = [1, 1]} : vector<320x256xbf16> to vector<256x256xbf16>
    %c3_100 = arith.constant 3 : index
    %c0_101 = arith.constant 0 : index
    %c0_102 = arith.constant 0 : index
    %164 = vector.load %arg4[%c3_100, %c0_101, %c0_102] : memref<9x256x128xbf16, #tpu.memory_space<vmem>>, vector<1x256x128xbf16>
    %165 = vector.shape_cast %164 : vector<1x256x128xbf16> to vector<256x128xbf16>
    %cst_103 = arith.constant dense<0.000000e+00> : vector<256x128xf32>
    %166 = tpu.matmul %163, %165, %cst_103 {dimension_numbers = #tpu.dot_dimension_numbers<[1], [0], [0], [1], [0, 0, 1, 1], [], []>} : vector<256x256xbf16>, vector<256x128xbf16>, vector<256x128xf32> -> vector<256x128xf32>
    %167 = arith.addf %162, %166 : vector<256x128xf32>
    %168 = vector.extract_strided_slice %143 {offsets = [32, 0], sizes = [256, 256], strides = [1, 1]} : vector<320x256xbf16> to vector<256x256xbf16>
    %c4_104 = arith.constant 4 : index
    %c0_105 = arith.constant 0 : index
    %c0_106 = arith.constant 0 : index
    %169 = vector.load %arg4[%c4_104, %c0_105, %c0_106] : memref<9x256x128xbf16, #tpu.memory_space<vmem>>, vector<1x256x128xbf16>
    %170 = vector.shape_cast %169 : vector<1x256x128xbf16> to vector<256x128xbf16>
    %cst_107 = arith.constant dense<0.000000e+00> : vector<256x128xf32>
    %171 = tpu.matmul %168, %170, %cst_107 {dimension_numbers = #tpu.dot_dimension_numbers<[1], [0], [0], [1], [0, 0, 1, 1], [], []>} : vector<256x256xbf16>, vector<256x128xbf16>, vector<256x128xf32> -> vector<256x128xf32>
    %172 = arith.addf %167, %171 : vector<256x128xf32>
    %173 = vector.extract_strided_slice %148 {offsets = [32, 0], sizes = [256, 256], strides = [1, 1]} : vector<320x256xbf16> to vector<256x256xbf16>
    %c5_108 = arith.constant 5 : index
    %c0_109 = arith.constant 0 : index
    %c0_110 = arith.constant 0 : index
    %174 = vector.load %arg4[%c5_108, %c0_109, %c0_110] : memref<9x256x128xbf16, #tpu.memory_space<vmem>>, vector<1x256x128xbf16>
    %175 = vector.shape_cast %174 : vector<1x256x128xbf16> to vector<256x128xbf16>
    %cst_111 = arith.constant dense<0.000000e+00> : vector<256x128xf32>
    %176 = tpu.matmul %173, %175, %cst_111 {dimension_numbers = #tpu.dot_dimension_numbers<[1], [0], [0], [1], [0, 0, 1, 1], [], []>} : vector<256x256xbf16>, vector<256x128xbf16>, vector<256x128xf32> -> vector<256x128xf32>
    %177 = arith.addf %172, %176 : vector<256x128xf32>
    %178 = vector.extract_strided_slice %146 {offsets = [64, 0], sizes = [256, 256], strides = [1, 1]} : vector<320x256xbf16> to vector<256x256xbf16>
    %c6_112 = arith.constant 6 : index
    %c0_113 = arith.constant 0 : index
    %c0_114 = arith.constant 0 : index
    %179 = vector.load %arg4[%c6_112, %c0_113, %c0_114] : memref<9x256x128xbf16, #tpu.memory_space<vmem>>, vector<1x256x128xbf16>
    %180 = vector.shape_cast %179 : vector<1x256x128xbf16> to vector<256x128xbf16>
    %cst_115 = arith.constant dense<0.000000e+00> : vector<256x128xf32>
    %181 = tpu.matmul %178, %180, %cst_115 {dimension_numbers = #tpu.dot_dimension_numbers<[1], [0], [0], [1], [0, 0, 1, 1], [], []>} : vector<256x256xbf16>, vector<256x128xbf16>, vector<256x128xf32> -> vector<256x128xf32>
    %182 = arith.addf %177, %181 : vector<256x128xf32>
    %183 = vector.extract_strided_slice %143 {offsets = [64, 0], sizes = [256, 256], strides = [1, 1]} : vector<320x256xbf16> to vector<256x256xbf16>
    %c7_116 = arith.constant 7 : index
    %c0_117 = arith.constant 0 : index
    %c0_118 = arith.constant 0 : index
    %184 = vector.load %arg4[%c7_116, %c0_117, %c0_118] : memref<9x256x128xbf16, #tpu.memory_space<vmem>>, vector<1x256x128xbf16>
    %185 = vector.shape_cast %184 : vector<1x256x128xbf16> to vector<256x128xbf16>
    %cst_119 = arith.constant dense<0.000000e+00> : vector<256x128xf32>
    %186 = tpu.matmul %183, %185, %cst_119 {dimension_numbers = #tpu.dot_dimension_numbers<[1], [0], [0], [1], [0, 0, 1, 1], [], []>} : vector<256x256xbf16>, vector<256x128xbf16>, vector<256x128xf32> -> vector<256x128xf32>
    %187 = arith.addf %182, %186 : vector<256x128xf32>
    %188 = vector.extract_strided_slice %148 {offsets = [64, 0], sizes = [256, 256], strides = [1, 1]} : vector<320x256xbf16> to vector<256x256xbf16>
    %c8_120 = arith.constant 8 : index
    %c0_121 = arith.constant 0 : index
    %c0_122 = arith.constant 0 : index
    %189 = vector.load %arg4[%c8_120, %c0_121, %c0_122] : memref<9x256x128xbf16, #tpu.memory_space<vmem>>, vector<1x256x128xbf16>
    %190 = vector.shape_cast %189 : vector<1x256x128xbf16> to vector<256x128xbf16>
    %cst_123 = arith.constant dense<0.000000e+00> : vector<256x128xf32>
    %191 = tpu.matmul %188, %190, %cst_123 {dimension_numbers = #tpu.dot_dimension_numbers<[1], [0], [0], [1], [0, 0, 1, 1], [], []>} : vector<256x256xbf16>, vector<256x128xbf16>, vector<256x128xf32> -> vector<256x128xf32>
    %192 = arith.addf %187, %191 : vector<256x128xf32>
    %c0_124 = arith.constant 0 : index
    %c0_125 = arith.constant 0 : index
    %193 = vector.load %arg5[%c0_124, %c0_125] : memref<1x128xf32, #tpu.memory_space<vmem>>, vector<1x128xf32>
    %194 = vector.broadcast %193 : vector<1x128xf32> to vector<256x128xf32>
    %195 = arith.addf %192, %194 : vector<256x128xf32>
    %cst_126 = arith.constant 0.000000e+00 : f32
    %196 = vector.broadcast %cst_126 : f32 to vector<256x128xf32>
    %197 = arith.maximumf %195, %196 : vector<256x128xf32>
    %198 = arith.truncf %197 : vector<256x128xf32> to vector<256x128xbf16>
    %c0_127 = arith.constant 0 : index
    %c0_128 = arith.constant 0 : index
    %199 = vector.load %arg6[%c0_127, %c0_128] : memref<128x128xbf16, #tpu.memory_space<vmem>>, vector<128x128xbf16>
    %cst_129 = arith.constant dense<0.000000e+00> : vector<256x128xf32>
    %200 = tpu.matmul %198, %199, %cst_129 {dimension_numbers = #tpu.dot_dimension_numbers<[1], [0], [0], [1], [0, 0, 1, 1], [], []>} : vector<256x128xbf16>, vector<128x128xbf16>, vector<256x128xf32> -> vector<256x128xf32>
    %c0_130 = arith.constant 0 : index
    %c0_131 = arith.constant 0 : index
    %201 = vector.load %arg7[%c0_130, %c0_131] : memref<256x128xbf16, #tpu.memory_space<vmem>>, vector<256x128xbf16>
    %202 = arith.extf %201 : vector<256x128xbf16> to vector<256x128xf32>
    %203 = arith.mulf %200, %202 : vector<256x128xf32>
    %204 = arith.truncf %203 : vector<256x128xf32> to vector<256x128xbf16>
    %c0_132 = arith.constant 0 : index
    %c0_133 = arith.constant 0 : index
    %205 = vector.load %arg8[%c0_132, %c0_133] : memref<64x256xbf16, #tpu.memory_space<vmem>>, vector<64x256xbf16>
    %cst_134 = arith.constant dense<0.000000e+00> : vector<64x128xf32>
    %206 = tpu.matmul %205, %204, %cst_134 {dimension_numbers = #tpu.dot_dimension_numbers<[1], [0], [0], [1], [0, 0, 1, 1], [], []>} : vector<64x256xbf16>, vector<256x128xbf16>, vector<64x128xf32> -> vector<64x128xf32>
    %c0_135 = arith.constant 0 : index
    %c0_136 = arith.constant 0 : index
    %207 = vector.load %arg9[%c0_135, %c0_136] : memref<1x1xf32, #tpu.memory_space<vmem>>, vector<1x1xf32>
    %208 = vector.broadcast %207 : vector<1x1xf32> to vector<64x128xf32>
    %209 = arith.addf %206, %208 : vector<64x128xf32>
    %c0_137 = arith.constant 0 : index
    %c0_138 = arith.constant 0 : index
    %c0_139 = arith.constant 0 : index
    %210 = vector.load %arg10[%c0_137, %c0_138, %c0_139] : memref<1x64x128xf32, #tpu.memory_space<vmem>>, vector<1x64x128xf32>
    %211 = vector.shape_cast %210 : vector<1x64x128xf32> to vector<64x128xf32>
    %212 = vector.shape_cast %209 : vector<64x128xf32> to vector<1x64x128xf32>
    tpu.vector_store %arg10[%c0_137, %c0_138, %c0_139], %212 {strides = array<i32>} : memref<1x64x128xf32, #tpu.memory_space<vmem>>, vector<1x64x128xf32>,
    return
  }
  func.func @transform_0(%arg0: i32) -> (i32, i32, i32) {
    %c0_i32 = arith.constant 0 : i32
    %c0_i32_0 = arith.constant 0 : i32
    %c0_i32_1 = arith.constant 0 : i32
    return %arg0, %c0_i32, %c0_i32_0 : i32, i32, i32
  }
  func.func @transform_1(%arg0: i32) -> (i32, i32, i32) {
    %c0_i32 = arith.constant 0 : i32
    %c0_i32_0 = arith.constant 0 : i32
    %c0_i32_1 = arith.constant 0 : i32
    %c0_i32_2 = arith.constant 0 : i32
    return %c0_i32, %c0_i32_0, %c0_i32_1 : i32, i32, i32
  }
  func.func @transform_2(%arg0: i32) -> (i32, i32) {
    %c0_i32 = arith.constant 0 : i32
    %c0_i32_0 = arith.constant 0 : i32
    %c0_i32_1 = arith.constant 0 : i32
    return %c0_i32, %c0_i32_0 : i32, i32
  }
  func.func @transform_3(%arg0: i32) -> (i32, i32, i32) {
    %c0_i32 = arith.constant 0 : i32
    %c0_i32_0 = arith.constant 0 : i32
    %c0_i32_1 = arith.constant 0 : i32
    %c0_i32_2 = arith.constant 0 : i32
    return %c0_i32, %c0_i32_0, %c0_i32_1 : i32, i32, i32
  }
  func.func @transform_4(%arg0: i32) -> (i32, i32) {
    %c0_i32 = arith.constant 0 : i32
    %c0_i32_0 = arith.constant 0 : i32
    %c0_i32_1 = arith.constant 0 : i32
    return %c0_i32, %c0_i32_0 : i32, i32
  }
  func.func @transform_5(%arg0: i32) -> (i32, i32) {
    %c0_i32 = arith.constant 0 : i32
    %c0_i32_0 = arith.constant 0 : i32
    %c0_i32_1 = arith.constant 0 : i32
    return %c0_i32, %c0_i32_0 : i32, i32
  }
  func.func @transform_6(%arg0: i32) -> (i32, i32) {
    %c0_i32 = arith.constant 0 : i32
    %c0_i32_0 = arith.constant 0 : i32
    %c0_i32_1 = arith.constant 0 : i32
    return %c0_i32, %c0_i32_0 : i32, i32
  }
  func.func @transform_7(%arg0: i32) -> (i32, i32) {
    %c0_i32 = arith.constant 0 : i32
    %c0_i32_0 = arith.constant 0 : i32
    %c0_i32_1 = arith.constant 0 : i32
    return %c0_i32, %c0_i32_0 : i32, i32
  }
  func.func @transform_8(%arg0: i32) -> (i32, i32) {
    %c0_i32 = arith.constant 0 : i32
    %c0_i32_0 = arith.constant 0 : i32
    %c0_i32_1 = arith.constant 0 : i32
    return %c0_i32, %c0_i32_0 : i32, i32
  }
  func.func @transform_9(%arg0: i32) -> (i32, i32, i32) {
    %c0_i32 = arith.constant 0 : i32
    %c0_i32_0 = arith.constant 0 : i32
    %c0_i32_1 = arith.constant 0 : i32
    return %arg0, %c0_i32, %c0_i32_0 : i32, i32, i32
  }
}

</mosaic_0001>

<llo_original>
// kernel: depth_head_forward.1
$region0: #{depth_head_forward.1}
  #allocation0 [shape = 'u32[]', space=smem, size = 0x4, offset = 0x4, fixed_abs, tag = 'smem constant byte address 0x4 - core index']
  #allocation1 [shape = 'u32[144,128]{1,0:T(1,128)}', space=vmem, size = 0x12000, scoped, tag = 'internal scratch']
  #allocation2 [shape = 'bf16[320,256]{1,0:T(16,128)(2,1)}', space=vmem, size = 0x28000, scoped, tag = 'scratch operand']
  #allocation3 [shape = 'f32[1,1]{1,0:T(1,128)S(1)}', space=vmem, size = 0x200, scoped, tag = 'scoped memory for depth_head_forward.1']
  %s0 = inlined_call_operand.vmem [shape: bf16[2,320,256], index: 0, kind: input, shape index: {}]
  %s1 = inlined_call_operand.hbm [shape: bf16[9,256,256], index: 1, kind: input, shape index: {}]
  %s2 = inlined_call_operand.hbm [shape: f32[1,256], index: 2, kind: input, shape index: {}]
  %s3 = inlined_call_operand.vmem [shape: bf16[9,256,128], index: 3, kind: input, shape index: {}]
  %s4 = inlined_call_operand.hbm [shape: f32[1,128], index: 4, kind: input, shape index: {}]
  %s5 = inlined_call_operand.hbm [shape: bf16[128,128], index: 5, kind: input, shape index: {}]
  %s6 = inlined_call_operand.hbm [shape: bf16[256,128], index: 6, kind: input, shape index: {}]
  %s7 = inlined_call_operand.hbm [shape: bf16[64,256], index: 7, kind: input, shape index: {}]
  %s8 = inlined_call_operand.<no memory space> [shape: f32[1,1], index: 8, kind: input, shape index: {}]
  %s9 = inlined_call_operand.hbm [shape: f32[2,64,128], index: 9, kind: output, shape index: {}]
  %s10 = sld [smem:[#allocation0]]
  $region93: #{depth_head_forward.1} parent=0
    _
  %s12 = ssub.s32 1, %s10
  %s13 = scalar_select 0, %s12, %s10
  %v14 = vstv %s8
  %15 = vst [vmem:[#allocation3] sm:$0x1] %v14
  $region1: #{depth_head_forward.1} parent=0
    #allocation4 [shape = 'u8[1179648]{0}', space=vmem, size = 0x120000, scoped, tag = 'input window, operand 1, single buffered']
    #allocation5 [shape = 's32[2]{0}', space=sflag, size = 0x8, scoped, tag = 'scoped memory for depth_head_forward.1']
    #allocation6 [shape = 's32[2]{0}', space=sflag, size = 0x8, scoped, tag = 'scoped memory for depth_head_forward.1']
    #allocation7 [shape = 'u8[1024]{0}', space=vmem, size = 0x400, scoped, tag = 'input window, operand 2, single buffered']
    #allocation8 [shape = 's32[1]{0}', space=sflag, size = 0x4, scoped, tag = 'scoped memory for depth_head_forward.1']
    #allocation9 [shape = 'u8[512]{0}', space=vmem, size = 0x400, scoped, tag = 'input window, operand 4, single buffered']
    #allocation10 [shape = 'u8[32768]{0}', space=vmem, size = 0x8000, scoped, tag = 'input window, operand 5, single buffered']
    #allocation11 [shape = 's32[1]{0}', space=sflag, size = 0x4, scoped, tag = 'scoped memory for depth_head_forward.1']
    #allocation12 [shape = 'u8[65536]{0}', space=vmem, size = 0x10000, scoped, tag = 'input window, operand 6, single buffered']
    #allocation13 [shape = 'u8[32768]{0}', space=vmem, size = 0x8000, scoped, tag = 'input window, operand 7, single buffered']
    #allocation14 [shape = 's32[1]{0}', space=sflag, size = 0x4, scoped, tag = 'scoped memory for depth_head_forward.1']
    #allocation15 [shape = 'u8[65536]{0}', space=vmem, size = 0x10000, scoped, tag = 'output window, operand 0']
    %16 = vsyncpa [#allocation5], 0
    %17 = vsyncpa [#allocation8], 0
    %18 = vsyncpa [#allocation11], 0
    %19 = vsyncpa [#allocation14], 0
    %20 = vsyncpa [#allocation6], 0
    %s21 = scalar_lea.sflag [#allocation6], 1
    %22 = vsyncpa %s21, 0
    loop: start=0, step=1, limit=4
    $region2: #{depth_head_forward.1} parent=1 // loop_pre_header
      _
    $region3: #{depth_head_forward.1} parent=1 // loop_header
      %s24 = sphi 0, %s28
      %p25 = scmp.ge.s32.totalorder %s24, 4
      %s34 = sphi 0, %s36
      %s37 = sphi 0, %s34
      %s38 = sphi 0, %s37
      %s54 = sphi 0, %s38
      %s58 = sphi 0, %s58
      %s60 = sphi 0, %s58
      %s61 = sphi 0, %s60
      %s75 = sphi 0, %s61
      %s79 = sphi 0, %s79
      %s81 = sphi 0, %s79
      %s82 = sphi 0, %s81
      %s96 = sphi 0, %s82
      %s100 = sphi 0, %s100
      %s102 = sphi 0, %s100
      %s103 = sphi 0, %s102
      %s117 = sphi 0, %s103
      %s121 = sphi 0, %s121
      %s123 = sphi 0, %s121
      %s124 = sphi 0, %s123
      %s138 = sphi 0, %s124
      %s142 = sphi 0, %s142
      %s144 = sphi 0, %s142
      %s145 = sphi 0, %s144
      %s159 = sphi 0, %s145
      %s163 = sphi 0, %s163
      %s165 = sphi 0, %s163
      %s166 = sphi 0, %s165
      %s180 = sphi 0, %s166
      %s184 = sphi 0, %s184
      %s186 = sphi 0, %s184
      %s187 = sphi 0, %s186
      %s201 = sphi 0, %s187
      %s205 = sphi 0, %s205
      %s207 = sphi 0, %s205
      %s208 = sphi 0, %s207
      %s222 = sphi 0, %s208
      %s228 = sphi 0, %s230
      %s231 = sphi 0, %s228
      %s232 = sphi 0, %s231
      %s248 = sphi 0, %s232
    $region4: #{depth_head_forward.1} parent=1 // loop_header_branch
      %27 = sbr.rel (%p25) target = $region8
    $region5: #{depth_head_forward.1} parent=1 // loop_body
      %s29 = ssub.s32 %s24, 1
      %s30 = ssub.s32 %s24, 2
      %s31 = sadd.s32 %s24, 1
      %s32 = ssub.s32 %s24, %s31
      %p33 = scmp.eq.s32.totalorder %s32, 0
      %s35 = sadd.s32 %s34, 1
      %s36 = scalar_select %p33, %s34, %s35
      %p39 = pneg %p33
      %p40 = scmp.eq.s32.totalorder %s24, 1
      %p41 = por %p39, %p40
      %p42 = scmp.ne.s32.totalorder %s34, %s37
      %p43 = scmp.eq.s32.totalorder %s24, 0
      %p44 = por %p42, %p43
      %p45 = scmp.ne.s32.totalorder %s34, %s37
      %p46 = scmp.eq.s32.totalorder %s29, 1
      %p47 = por %p45, %p46
      %p48 = scmp.ne.s32.totalorder %s37, %s38
      %p49 = scmp.eq.s32.totalorder %s29, 0
      %p50 = por %p48, %p49
      %p51 = scmp.ne.s32.totalorder %s37, %s38
      %p52 = scmp.eq.s32.totalorder %s30, 1
      %p53 = por %p51, %p52
      %p55 = scmp.ne.s32.totalorder %s38, %s54
      %p56 = scmp.eq.s32.totalorder %s30, 0
      %p57 = por %p55, %p56
      %s59 = sadd.s32 %s58, 1
      %p62 = scmp.eq.s32.totalorder %s24, 1
      %p63 = scmp.ne.s32.totalorder %s58, %s60
      %p64 = scmp.eq.s32.totalorder %s24, 0
      %p65 = por %p63, %p64
      %p66 = scmp.ne.s32.totalorder %s58, %s60
      %p67 = scmp.eq.s32.totalorder %s29, 1
      %p68 = por %p66, %p67
      %p69 = scmp.ne.s32.totalorder %s60, %s61
      %p70 = scmp.eq.s32.totalorder %s29, 0
      %p71 = por %p69, %p70
      %p72 = scmp.ne.s32.totalorder %s60, %s61
      %p73 = scmp.eq.s32.totalorder %s30, 1
      %p74 = por %p72, %p73
      %p76 = scmp.ne.s32.totalorder %s61, %s75
      %p77 = scmp.eq.s32.totalorder %s30, 0
      %p78 = por %p76, %p77
      %s80 = sadd.s32 %s79, 1
      %p83 = scmp.eq.s32.totalorder %s24, 1
      %p84 = scmp.ne.s32.totalorder %s79, %s81
      %p85 = scmp.eq.s32.totalorder %s24, 0
      %p86 = por %p84, %p85
      %p87 = scmp.ne.s32.totalorder %s79, %s81
      %p88 = scmp.eq.s32.totalorder %s29, 1
      %p89 = por %p87, %p88
      %p90 = scmp.ne.s32.totalorder %s81, %s82
      %p91 = scmp.eq.s32.totalorder %s29, 0
      %p92 = por %p90, %p91
      %p93 = scmp.ne.s32.totalorder %s81, %s82
      %p94 = scmp.eq.s32.totalorder %s30, 1
      %p95 = por %p93, %p94
      %p97 = scmp.ne.s32.totalorder %s82, %s96
      %p98 = scmp.eq.s32.totalorder %s30, 0
      %p99 = por %p97, %p98
      %s101 = sadd.s32 %s100, 1
      %p104 = scmp.eq.s32.totalorder %s24, 1
      %p105 = scmp.ne.s32.totalorder %s100, %s102
      %p106 = scmp.eq.s32.totalorder %s24, 0
      %p107 = por %p105, %p106
      %p108 = scmp.ne.s32.totalorder %s100, %s102
      %p109 = scmp.eq.s32.totalorder %s29, 1
      %p110 = por %p108, %p109
      %p111 = scmp.ne.s32.totalorder %s102, %s103
      %p112 = scmp.eq.s32.totalorder %s29, 0
      %p113 = por %p111, %p112
      %p114 = scmp.ne.s32.totalorder %s102, %s103
      %p115 = scmp.eq.s32.totalorder %s30, 1
      %p116 = por %p114, %p115
      %p118 = scmp.ne.s32.totalorder %s103, %s117
      %p119 = scmp.eq.s32.totalorder %s30, 0
      %p120 = por %p118, %p119
      %s122 = sadd.s32 %s121, 1
      %p125 = scmp.eq.s32.totalorder %s24, 1
      %p126 = scmp.ne.s32.totalorder %s121, %s123
      %p127 = scmp.eq.s32.totalorder %s24, 0
      %p128 = por %p126, %p127
      %p129 = scmp.ne.s32.totalorder %s121, %s123
      %p130 = scmp.eq.s32.totalorder %s29, 1
      %p131 = por %p129, %p130
      %p132 = scmp.ne.s32.totalorder %s123, %s124
      %p133 = scmp.eq.s32.totalorder %s29, 0
      %p134 = por %p132, %p133
      %p135 = scmp.ne.s32.totalorder %s123, %s124
      %p136 = scmp.eq.s32.totalorder %s30, 1
      %p137 = por %p135, %p136
      %p139 = scmp.ne.s32.totalorder %s124, %s138
      %p140 = scmp.eq.s32.totalorder %s30, 0
      %p141 = por %p139, %p140
      %s143 = sadd.s32 %s142, 1
      %p146 = scmp.eq.s32.totalorder %s24, 1
      %p147 = scmp.ne.s32.totalorder %s142, %s144
      %p148 = scmp.eq.s32.totalorder %s24, 0
      %p149 = por %p147, %p148
      %p150 = scmp.ne.s32.totalorder %s142, %s144
      %p151 = scmp.eq.s32.totalorder %s29, 1
      %p152 = por %p150, %p151
      %p153 = scmp.ne.s32.totalorder %s144, %s145
      %p154 = scmp.eq.s32.totalorder %s29, 0
      %p155 = por %p153, %p154
      %p156 = scmp.ne.s32.totalorder %s144, %s145
      %p157 = scmp.eq.s32.totalorder %s30, 1
      %p158 = por %p156, %p157
      %p160 = scmp.ne.s32.totalorder %s145, %s159
      %p161 = scmp.eq.s32.totalorder %s30, 0
      %p162 = por %p160, %p161
      %s164 = sadd.s32 %s163, 1
      %p167 = scmp.eq.s32.totalorder %s24, 1
      %p168 = scmp.ne.s32.totalorder %s163, %s165
      %p169 = scmp.eq.s32.totalorder %s24, 0
      %p170 = por %p168, %p169
      %p171 = scmp.ne.s32.totalorder %s163, %s165
      %p172 = scmp.eq.s32.totalorder %s29, 1
      %p173 = por %p171, %p172
      %p174 = scmp.ne.s32.totalorder %s165, %s166
      %p175 = scmp.eq.s32.totalorder %s29, 0
      %p176 = por %p174, %p175
      %p177 = scmp.ne.s32.totalorder %s165, %s166
      %p178 = scmp.eq.s32.totalorder %s30, 1
      %p179 = por %p177, %p178
      %p181 = scmp.ne.s32.totalorder %s166, %s180
      %p182 = scmp.eq.s32.totalorder %s30, 0
      %p183 = por %p181, %p182
      %s185 = sadd.s32 %s184, 1
      %p188 = scmp.eq.s32.totalorder %s24, 1
      %p189 = scmp.ne.s32.totalorder %s184, %s186
      %p190 = scmp.eq.s32.totalorder %s24, 0
      %p191 = por %p189, %p190
      %p192 = scmp.ne.s32.totalorder %s184, %s186
      %p193 = scmp.eq.s32.totalorder %s29, 1
      %p194 = por %p192, %p193
      %p195 = scmp.ne.s32.totalorder %s186, %s187
      %p196 = scmp.eq.s32.totalorder %s29, 0
      %p197 = por %p195, %p196
      %p198 = scmp.ne.s32.totalorder %s186, %s187
      %p199 = scmp.eq.s32.totalorder %s30, 1
      %p200 = por %p198, %p199
      %p202 = scmp.ne.s32.totalorder %s187, %s201
      %p203 = scmp.eq.s32.totalorder %s30, 0
      %p204 = por %p202, %p203
      %s206 = sadd.s32 %s205, 1
      %p209 = scmp.eq.s32.totalorder %s24, 1
      %p210 = scmp.ne.s32.totalorder %s205, %s207
      %p211 = scmp.eq.s32.totalorder %s24, 0
      %p212 = por %p210, %p211
      %p213 = scmp.ne.s32.totalorder %s205, %s207
      %p214 = scmp.eq.s32.totalorder %s29, 1
      %p215 = por %p213, %p214
      %p216 = scmp.ne.s32.totalorder %s207, %s208
      %p217 = scmp.eq.s32.totalorder %s29, 0
      %p218 = por %p216, %p217
      %p219 = scmp.ne.s32.totalorder %s207, %s208
      %p220 = scmp.eq.s32.totalorder %s30, 1
      %p221 = por %p219, %p220
      %p223 = scmp.ne.s32.totalorder %s208, %s222
      %p224 = scmp.eq.s32.totalorder %s30, 0
      %p225 = por %p223, %p224
      %s226 = ssub.s32 %s24, %s31
      %p227 = scmp.eq.s32.totalorder %s226, 0
      %s229 = sadd.s32 %s228, 1
      %s230 = scalar_select %p227, %s228, %s229
      %p233 = pneg %p227
      %p234 = scmp.eq.s32.totalorder %s24, 1
      %p235 = por %p233, %p234
      %p236 = scmp.ne.s32.totalorder %s228, %s231
      %p237 = scmp.eq.s32.totalorder %s24, 0
      %p238 = por %p236, %p237
      %p239 = scmp.ne.s32.totalorder %s228, %s231
      %p240 = scmp.eq.s32.totalorder %s29, 1
      %p241 = por %p239, %p240
      %p242 = scmp.ne.s32.totalorder %s231, %s232
      %p243 = scmp.eq.s32.totalorder %s29, 0
      %p244 = por %p242, %p243
      %p245 = scmp.ne.s32.totalorder %s231, %s232
      %p246 = scmp.eq.s32.totalorder %s30, 1
      %p247 = por %p245, %p246
      %p249 = scmp.ne.s32.totalorder %s232, %s248
      %p250 = scmp.eq.s32.totalorder %s30, 0
      %p251 = por %p249, %p250
      %p252 = scmp.le.s32.totalorder 1, %s24
      %p253 = scmp.lt.s32.totalorder %s24, 3
      %p254 = pnand %p252, %p253
      %p255 = pneg %p254
      // Predicated region
      $region9: #{depth_head_forward.1} parent=5 // pred_check
        _
      $region10: #{depth_head_forward.1} parent=5 // pred_check_branch
        %257 = sbr.rel (%p254) target = $region12
      $region11: #{depth_head_forward.1} parent=5 // pred_region
        %s258 = ssub.s32 %s24, 1
        // Predicated region
        $region13: #{depth_head_forward.1} parent=11 // pred_check
          %p259 = pneg %p71
        $region14: #{depth_head_forward.1} parent=11 // pred_check_branch
          %261 = sbr.rel (%p259) target = $region16
        $region15: #{depth_head_forward.1} parent=11 // pred_region
          %s263 = ssub.s32 36864, 36864
          %264 = vsyncadd [#allocation5], %s263
          %s265 = sshll.u32 [#allocation4], 4
          %s266 = int_to_ptr.vmem [resolvable:$true] %s265
          %271 = dma.hbm_to_vmem [thread:$0]  %s1, 36864, %s266, [#allocation5], 128, 128, 8
        $region16: #{depth_head_forward.1} parent=11 // pred_fallthru
          _
        // Predicated region
        $region17: #{depth_head_forward.1} parent=11 // pred_check
          %p272 = pneg %p92
        $region18: #{depth_head_forward.1} parent=11 // pred_check_branch
          %274 = sbr.rel (%p272) target = $region20
        $region19: #{depth_head_forward.1} parent=11 // pred_region
          %s276 = ssub.s32 32, 32
          %277 = vsyncadd [#allocation8], %s276
          %s279 = sshll.u32 [#allocation7], 4
          %s280 = int_to_ptr.vmem [resolvable:$true] %s279
          %282 = dma.hbm_to_vmem [thread:$0]  %s2, 32, %s280, [#allocation8]
        $region20: #{depth_head_forward.1} parent=11 // pred_fallthru
          _
        // Predicated region
        $region21: #{depth_head_forward.1} parent=11 // pred_check
          %p283 = pneg %p113
        $region22: #{depth_head_forward.1} parent=11 // pred_check_branch
          %285 = sbr.rel (%p283) target = $region24
        $region23: #{depth_head_forward.1} parent=11 // pred_region
          _
        $region24: #{depth_head_forward.1} parent=11 // pred_fallthru
          _
        // Predicated region
        $region25: #{depth_head_forward.1} parent=11 // pred_check
          %p286 = pneg %p134
        $region26: #{depth_head_forward.1} parent=11 // pred_check_branch
          %288 = sbr.rel (%p286) target = $region28
        $region27: #{depth_head_forward.1} parent=11 // pred_region
          %s290 = ssub.s32 16, 16
          %291 = vsyncadd [#allocation8], %s290
          %s293 = sshll.u32 [#allocation9], 4
          %s294 = int_to_ptr.vmem [resolvable:$true] %s293
          %296 = dma.hbm_to_vmem [thread:$0]  %s4, 16, %s294, [#allocation8]
        $region28: #{depth_head_forward.1} parent=11 // pred_fallthru
          _
        // Predicated region
        $region29: #{depth_head_forward.1} parent=11 // pred_check
          %p297 = pneg %p155
        $region30: #{depth_head_forward.1} parent=11 // pred_check_branch
          %299 = sbr.rel (%p297) target = $region32
        $region31: #{depth_head_forward.1} parent=11 // pred_region
          %s301 = ssub.s32 1024, 1024
          %302 = vsyncadd [#allocation11], %s301
          %s303 = sshll.u32 [#allocation10], 4
          %s304 = int_to_ptr.vmem [resolvable:$true] %s303
          %309 = dma.hbm_to_vmem [thread:$0]  %s5, 1024, %s304, [#allocation11], 64, 64, 4
        $region32: #{depth_head_forward.1} parent=11 // pred_fallthru
          _
        // Predicated region
        $region33: #{depth_head_forward.1} parent=11 // pred_check
          %p310 = pneg %p176
        $region34: #{depth_head_forward.1} parent=11 // pred_check_branch
          %312 = sbr.rel (%p310) target = $region36
        $region35: #{depth_head_forward.1} parent=11 // pred_region
          %s314 = ssub.s32 2048, 2048
          %315 = vsyncadd [#allocation11], %s314
          %s316 = sshll.u32 [#allocation12], 4
          %s317 = int_to_ptr.vmem [resolvable:$true] %s316
          %322 = dma.hbm_to_vmem [thread:$0]  %s6, 2048, %s317, [#allocation11], 64, 64, 4
        $region36: #{depth_head_forward.1} parent=11 // pred_fallthru
          _
        // Predicated region
        $region37: #{depth_head_forward.1} parent=11 // pred_check
          %p323 = pneg %p197
        $region38: #{depth_head_forward.1} parent=11 // pred_check_branch
          %325 = sbr.rel (%p323) target = $region40
        $region39: #{depth_head_forward.1} parent=11 // pred_region
          %s327 = ssub.s32 1024, 1024
          %328 = vsyncadd [#allocation14], %s327
          %s329 = sshll.u32 [#allocation13], 4
          %s330 = int_to_ptr.vmem [resolvable:$true] %s329
          %335 = dma.hbm_to_vmem [thread:$0]  %s7, 1024, %s330, [#allocation14], 128, 128, 8
        $region40: #{depth_head_forward.1} parent=11 // pred_fallthru
          _
        // Predicated region
        $region41: #{depth_head_forward.1} parent=11 // pred_check
          %p336 = pneg %p218
        $region42: #{depth_head_forward.1} parent=11 // pred_check_branch
          %338 = sbr.rel (%p336) target = $region44
        $region43: #{depth_head_forward.1} parent=11 // pred_region
          _
        $region44: #{depth_head_forward.1} parent=11 // pred_fallthru
          _
      $region12: #{depth_head_forward.1} parent=5 // pred_fallthru
        _
      %p339 = scmp.lt.s32.totalorder %s24, 2
      // Predicated region
      $region45: #{depth_head_forward.1} parent=5 // pred_check
        %p340 = pneg %p339
      $region46: #{depth_head_forward.1} parent=5 // pred_check_branch
        %342 = sbr.rel (%p340) target = $region48
      $region47: #{depth_head_forward.1} parent=5 // pred_region
        // Predicated region
        $region49: #{depth_head_forward.1} parent=47 // pred_check
          %p343 = pneg %p44
        $region50: #{depth_head_forward.1} parent=47 // pred_check_branch
          %345 = sbr.rel (%p343) target = $region52
        $region51: #{depth_head_forward.1} parent=47 // pred_region
          %p346 = scmp.lt.s32.totalorder %s24, 1
          %s347 = scalar_select %p346, %s24, 1
          %s348 = smul.addr %s347, 80
          %s349 = smul.addr %s348, 4
          %s350 = scalar_lea.vmem %s0, %s349
        $region52: #{depth_head_forward.1} parent=47 // pred_fallthru
          _
      $region48: #{depth_head_forward.1} parent=5 // pred_fallthru
        _
      %p351 = scmp.le.s32.totalorder 1, %s24
      %p352 = scmp.lt.s32.totalorder %s24, 3
      %p353 = pnand %p351, %p352
      %p354 = pneg %p353
      // Predicated region
      $region53: #{depth_head_forward.1} parent=5 // pred_check
        _
      $region54: #{depth_head_forward.1} parent=5 // pred_check_branch
        %356 = sbr.rel (%p353) target = $region56
      $region55: #{depth_head_forward.1} parent=5 // pred_region
        %s357 = ssub.s32 %s24, 1
        // Predicated region
        $region57: #{depth_head_forward.1} parent=55 // pred_check
          %p358 = pneg %p71
        $region58: #{depth_head_forward.1} parent=55 // pred_check_branch
          %360 = sbr.rel (%p358) target = $region60
        $region59: #{depth_head_forward.1} parent=55 // pred_region
          %361 = dma.done [#allocation5], 36864
        $region60: #{depth_head_forward.1} parent=55 // pred_fallthru
          _
        // Predicated region
        $region61: #{depth_head_forward.1} parent=55 // pred_check
          %p362 = pneg %p92
        $region62: #{depth_head_forward.1} parent=55 // pred_check_branch
          %364 = sbr.rel (%p362) target = $region64
        $region63: #{depth_head_forward.1} parent=55 // pred_region
          %365 = dma.done [#allocation8], 32
        $region64: #{depth_head_forward.1} parent=55 // pred_fallthru
          _
        // Predicated region
        $region65: #{depth_head_forward.1} parent=55 // pred_check
          %p366 = pneg %p134
        $region66: #{depth_head_forward.1} parent=55 // pred_check_branch
          %368 = sbr.rel (%p366) target = $region68
        $region67: #{depth_head_forward.1} parent=55 // pred_region
          %369 = dma.done [#allocation8], 16
        $region68: #{depth_head_forward.1} parent=55 // pred_fallthru
          _
        // Predicated region
        $region69: #{depth_head_forward.1} parent=55 // pred_check
          %p370 = pneg %p155
        $region70: #{depth_head_forward.1} parent=55 // pred_check_branch
          %372 = sbr.rel (%p370) target = $region72
        $region71: #{depth_head_forward.1} parent=55 // pred_region
          %373 = dma.done [#allocation11], 1024
        $region72: #{depth_head_forward.1} parent=55 // pred_fallthru
          _
        // Predicated region
        $region73: #{depth_head_forward.1} parent=55 // pred_check
          %p374 = pneg %p176
        $region74: #{depth_head_forward.1} parent=55 // pred_check_branch
          %376 = sbr.rel (%p374) target = $region76
        $region75: #{depth_head_forward.1} parent=55 // pred_region
          %377 = dma.done [#allocation11], 2048
        $region76: #{depth_head_forward.1} parent=55 // pred_fallthru
          _
        // Predicated region
        $region77: #{depth_head_forward.1} parent=55 // pred_check
          %p378 = pneg %p197
        $region78: #{depth_head_forward.1} parent=55 // pred_check_branch
          %380 = sbr.rel (%p378) target = $region80
        $region79: #{depth_head_forward.1} parent=55 // pred_region
          %381 = dma.done [#allocation14], 1024
        $region80: #{depth_head_forward.1} parent=55 // pred_fallthru
          _
        %p382 = scmp.lt.s32.totalorder %s29, 1
        %s383 = scalar_select %p382, %s29, 1
        %s384 = smul.addr %s383, 80
        %s385 = smul.addr %s384, 4
        %s386 = scalar_lea.vmem %s0, %s385
        %p387 = pneg %p50
        %p388 = pneg %p47
        %p389 = pneg %p71
        %p390 = pneg %p68
        %p391 = pneg %p92
        %p392 = pneg %p89
        %p393 = pneg %p113
        %p394 = pneg %p110
        %p395 = pneg %p134
        %p396 = pneg %p131
        %p397 = pneg %p155
        %p398 = pneg %p152
        %p399 = pneg %p176
        %p400 = pneg %p173
        %p401 = pneg %p197
        %p402 = pneg %p194
        %p403 = pneg %p218
        %p404 = pneg %p215
        %p405 = pneg %p244
        %p406 = pneg %p241
        %s407 = sand.u32 %s231, 1
        %s408 = scalar_lea.sflag [#allocation6], %s407
        %s409 = sand.u32 %s231, 1
        %s410 = smul.addr %s409, 64
        %s411 = scalar_lea.vmem [#allocation15], %s410
        %p412 = scmp.lt.s32.totalorder %s29, 1
        %s413 = scalar_select %p412, %s29, 1
        %s414 = smul.addr %s413, 80
        %s415 = smul.addr %s414, 4
        %s416 = scalar_lea.vmem %s0, %s415
        %v418 = vlaneseq
        %v419 = vshrl.u32 %v418, 7
        %v420 = vadd.s32 %v419, 8
        %v421 = vadd.s32 %v419, 16
        %v422 = vadd.s32 %v419, 24
        %v423 = vadd.s32 %v419, 32
        %v424 = vadd.s32 %v419, 40
        %v425 = vadd.s32 %v419, 48
        %v426 = vadd.s32 %v419, 56
        %v427 = vadd.s32 %v419, 64
        %v428 = vadd.s32 %v419, 72
        %v429 = vadd.s32 %v419, 80
        %v430 = vadd.s32 %v419, 88
        %v431 = vadd.s32 %v419, 96
        %v432 = vadd.s32 %v419, 104
        %v433 = vadd.s32 %v419, 112
        %v434 = vadd.s32 %v419, 120
        %v435 = vadd.s32 %v419, 128
        %v436 = vadd.s32 %v419, 136
        %v437 = vadd.s32 %v419, 144
        %v438 = vadd.s32 %v419, 152
        %v439 = vadd.s32 %v419, 160
        %v440 = vadd.s32 %v419, 168
        %v441 = vadd.s32 %v419, 176
        %v442 = vadd.s32 %v419, 184
        %v443 = vadd.s32 %v419, 192
        %v444 = vadd.s32 %v419, 200
        %v445 = vadd.s32 %v419, 208
        %v446 = vadd.s32 %v419, 216
        %v447 = vadd.s32 %v419, 224
        %v448 = vadd.s32 %v419, 232
        %v449 = vadd.s32 %v419, 240
        %v450 = vadd.s32 %v419, 248
        %vm451 = vcmp.lt.s32.totalorder %v419, 0
        %v452 = vsub.s32 0, %v419
        %v453 = vsel %vm451, %v452, %v419
        %v454 = vshrl.u32 %v453, 5
        %v455 = vand.u32 %v453, 31
        %v456 = vsub.s32 0, %v455
        %v457 = vsel %vm451, %v456, %v455
        %vm458 = vcmp.lt.s32.totalorder %v420, 0
        %v459 = vsub.s32 0, %v420
        %v460 = vsel %vm458, %v459, %v420
        %v461 = vshrl.u32 %v460, 5
        %v462 = vand.u32 %v460, 31
        %v463 = vsub.s32 0, %v462
        %v464 = vsel %vm458, %v463, %v462
        %vm465 = vcmp.lt.s32.totalorder %v421, 0
        %v466 = vsub.s32 0, %v421
        %v467 = vsel %vm465, %v466, %v421
        %v468 = vshrl.u32 %v467, 5
        %v469 = vand.u32 %v467, 31
        %v470 = vsub.s32 0, %v469
        %v471 = vsel %vm465, %v470, %v469
        %vm472 = vcmp.lt.s32.totalorder %v422, 0
        %v473 = vsub.s32 0, %v422
        %v474 = vsel %vm472, %v473, %v422
        %v475 = vshrl.u32 %v474, 5
        %v476 = vand.u32 %v474, 31
        %v477 = vsub.s32 0, %v476
        %v478 = vsel %vm472, %v477, %v476
        %vm479 = vcmp.lt.s32.totalorder %v423, 0
        %v480 = vsub.s32 0, %v423
        %v481 = vsel %vm479, %v480, %v423
        %v482 = vshrl.u32 %v481, 5
        %v483 = vand.u32 %v481, 31
        %v484 = vsub.s32 0, %v483
        %v485 = vsel %vm479, %v484, %v483
        %vm486 = vcmp.lt.s32.totalorder %v424, 0
        %v487 = vsub.s32 0, %v424
        %v488 = vsel %vm486, %v487, %v424
        %v489 = vshrl.u32 %v488, 5
        %v490 = vand.u32 %v488, 31
        %v491 = vsub.s32 0, %v490
        %v492 = vsel %vm486, %v491, %v490
        %vm493 = vcmp.lt.s32.totalorder %v425, 0
        %v494 = vsub.s32 0, %v425
        %v495 = vsel %vm493, %v494, %v425
        %v496 = vshrl.u32 %v495, 5
        %v497 = vand.u32 %v495, 31
        %v498 = vsub.s32 0, %v497
        %v499 = vsel %vm493, %v498, %v497
        %vm500 = vcmp.lt.s32.totalorder %v426, 0
        %v501 = vsub.s32 0, %v426
        %v502 = vsel %vm500, %v501, %v426
        %v503 = vshrl.u32 %v502, 5
        %v504 = vand.u32 %v502, 31
        %v505 = vsub.s32 0, %v504
        %v506 = vsel %vm500, %v505, %v504
        %vm507 = vcmp.lt.s32.totalorder %v427, 0
        %v508 = vsub.s32 0, %v427
        %v509 = vsel %vm507, %v508, %v427
        %v510 = vshrl.u32 %v509, 5
        %v511 = vand.u32 %v509, 31
        %v512 = vsub.s32 0, %v511
        %v513 = vsel %vm507, %v512, %v511
        %vm514 = vcmp.lt.s32.totalorder %v428, 0
        %v515 = vsub.s32 0, %v428
        %v516 = vsel %vm514, %v515, %v428
        %v517 = vshrl.u32 %v516, 5
        %v518 = vand.u32 %v516, 31
        %v519 = vsub.s32 0, %v518
        %v520 = vsel %vm514, %v519, %v518
        %vm521 = vcmp.lt.s32.totalorder %v429, 0
        %v522 = vsub.s32 0, %v429
        %v523 = vsel %vm521, %v522, %v429
        %v524 = vshrl.u32 %v523, 5
        %v525 = vand.u32 %v523, 31
        %v526 = vsub.s32 0, %v525
        %v527 = vsel %vm521, %v526, %v525
        %vm528 = vcmp.lt.s32.totalorder %v430, 0
        %v529 = vsub.s32 0, %v430
        %v530 = vsel %vm528, %v529, %v430
        %v531 = vshrl.u32 %v530, 5
        %v532 = vand.u32 %v530, 31
        %v533 = vsub.s32 0, %v532
        %v534 = vsel %vm528, %v533, %v532
        %vm535 = vcmp.lt.s32.totalorder %v431, 0
        %v536 = vsub.s32 0, %v431
        %v537 = vsel %vm535, %v536, %v431
        %v538 = vshrl.u32 %v537, 5
        %v539 = vand.u32 %v537, 31
        %v540 = vsub.s32 0, %v539
        %v541 = vsel %vm535, %v540, %v539
        %vm542 = vcmp.lt.s32.totalorder %v432, 0
        %v543 = vsub.s32 0, %v432
        %v544 = vsel %vm542, %v543, %v432
        %v545 = vshrl.u32 %v544, 5
        %v546 = vand.u32 %v544, 31
        %v547 = vsub.s32 0, %v546
        %v548 = vsel %vm542, %v547, %v546
        %vm549 = vcmp.lt.s32.totalorder %v433, 0
        %v550 = vsub.s32 0, %v433
        %v551 = vsel %vm549, %v550, %v433
        %v552 = vshrl.u32 %v551, 5
        %v553 = vand.u32 %v551, 31
        %v554 = vsub.s32 0, %v553
        %v555 = vsel %vm549, %v554, %v553
        %vm556 = vcmp.lt.s32.totalorder %v434, 0
        %v557 = vsub.s32 0, %v434
        %v558 = vsel %vm556, %v557, %v434
        %v559 = vshrl.u32 %v558, 5
        %v560 = vand.u32 %v558, 31
        %v561 = vsub.s32 0, %v560
        %v562 = vsel %vm556, %v561, %v560
        %vm563 = vcmp.lt.s32.totalorder %v435, 0
        %v564 = vsub.s32 0, %v435
        %v565 = vsel %vm563, %v564, %v435
        %v566 = vshrl.u32 %v565, 5
        %v567 = vand.u32 %v565, 31
        %v568 = vsub.s32 0, %v567
        %v569 = vsel %vm563, %v568, %v567
        %vm570 = vcmp.lt.s32.totalorder %v436, 0
        %v571 = vsub.s32 0, %v436
        %v572 = vsel %vm570, %v571, %v436
        %v573 = vshrl.u32 %v572, 5
        %v574 = vand.u32 %v572, 31
        %v575 = vsub.s32 0, %v574
        %v576 = vsel %vm570, %v575, %v574
        %vm577 = vcmp.lt.s32.totalorder %v437, 0
        %v578 = vsub.s32 0, %v437
        %v579 = vsel %vm577, %v578, %v437
        %v580 = vshrl.u32 %v579, 5
        %v581 = vand.u32 %v579, 31
        %v582 = vsub.s32 0, %v581
        %v583 = vsel %vm577, %v582, %v581
        %vm584 = vcmp.lt.s32.totalorder %v438, 0
        %v585 = vsub.s32 0, %v438
        %v586 = vsel %vm584, %v585, %v438
        %v587 = vshrl.u32 %v586, 5
        %v588 = vand.u32 %v586, 31
        %v589 = vsub.s32 0, %v588
        %v590 = vsel %vm584, %v589, %v588
        %vm591 = vcmp.lt.s32.totalorder %v439, 0
        %v592 = vsub.s32 0, %v439
        %v593 = vsel %vm591, %v592, %v439
        %v594 = vshrl.u32 %v593, 5
        %v595 = vand.u32 %v593, 31
        %v596 = vsub.s32 0, %v595
        %v597 = vsel %vm591, %v596, %v595
        %vm598 = vcmp.lt.s32.totalorder %v440, 0
        %v599 = vsub.s32 0, %v440
        %v600 = vsel %vm598, %v599, %v440
        %v601 = vshrl.u32 %v600, 5
        %v602 = vand.u32 %v600, 31
        %v603 = vsub.s32 0, %v602
        %v604 = vsel %vm598, %v603, %v602
        %vm605 = vcmp.lt.s32.totalorder %v441, 0
        %v606 = vsub.s32 0, %v441
        %v607 = vsel %vm605, %v606, %v441
        %v608 = vshrl.u32 %v607, 5
        %v609 = vand.u32 %v607, 31
        %v610 = vsub.s32 0, %v609
        %v611 = vsel %vm605, %v610, %v609
        %vm612 = vcmp.lt.s32.totalorder %v442, 0
        %v613 = vsub.s32 0, %v442
        %v614 = vsel %vm612, %v613, %v442
        %v615 = vshrl.u32 %v614, 5
        %v616 = vand.u32 %v614, 31
        %v617 = vsub.s32 0, %v616
        %v618 = vsel %vm612, %v617, %v616
        %vm619 = vcmp.lt.s32.totalorder %v443, 0
        %v620 = vsub.s32 0, %v443
        %v621 = vsel %vm619, %v620, %v443
        %v622 = vshrl.u32 %v621, 5
        %v623 = vand.u32 %v621, 31
        %v624 = vsub.s32 0, %v623
        %v625 = vsel %vm619, %v624, %v623
        %vm626 = vcmp.lt.s32.totalorder %v444, 0
        %v627 = vsub.s32 0, %v444
        %v628 = vsel %vm626, %v627, %v444
        %v629 = vshrl.u32 %v628, 5
        %v630 = vand.u32 %v628, 31
        %v631 = vsub.s32 0, %v630
        %v632 = vsel %vm626, %v631, %v630
        %vm633 = vcmp.lt.s32.totalorder %v445, 0
        %v634 = vsub.s32 0, %v445
        %v635 = vsel %vm633, %v634, %v445
        %v636 = vshrl.u32 %v635, 5
        %v637 = vand.u32 %v635, 31
        %v638 = vsub.s32 0, %v637
        %v639 = vsel %vm633, %v638, %v637
        %vm640 = vcmp.lt.s32.totalorder %v446, 0
        %v641 = vsub.s32 0, %v446
        %v642 = vsel %vm640, %v641, %v446
        %v643 = vshrl.u32 %v642, 5
        %v644 = vand.u32 %v642, 31
        %v645 = vsub.s32 0, %v644
        %v646 = vsel %vm640, %v645, %v644
        %vm647 = vcmp.lt.s32.totalorder %v447, 0
        %v648 = vsub.s32 0, %v447
        %v649 = vsel %vm647, %v648, %v447
        %v650 = vshrl.u32 %v649, 5
        %v651 = vand.u32 %v649, 31
        %v652 = vsub.s32 0, %v651
        %v653 = vsel %vm647, %v652, %v651
        %vm654 = vcmp.lt.s32.totalorder %v448, 0
        %v655 = vsub.s32 0, %v448
        %v656 = vsel %vm654, %v655, %v448
        %v657 = vshrl.u32 %v656, 5
        %v658 = vand.u32 %v656, 31
        %v659 = vsub.s32 0, %v658
        %v660 = vsel %vm654, %v659, %v658
        %vm661 = vcmp.lt.s32.totalorder %v449, 0
        %v662 = vsub.s32 0, %v449
        %v663 = vsel %vm661, %v662, %v449
        %v664 = vshrl.u32 %v663, 5
        %v665 = vand.u32 %v663, 31
        %v666 = vsub.s32 0, %v665
        %v667 = vsel %vm661, %v666, %v665
        %vm668 = vcmp.lt.s32.totalorder %v450, 0
        %v669 = vsub.s32 0, %v450
        %v670 = vsel %vm668, %v669, %v450
        %v671 = vshrl.u32 %v670, 5
        %v672 = vand.u32 %v670, 31
        %v673 = vsub.s32 0, %v672
        %v674 = vsel %vm668, %v673, %v672
        %vm675 = vcmp.ne.s32.totalorder %v457, 0
        %vm676 = vcmp.ne.s32.totalorder %v464, 0
        %vm677 = vcmp.ne.s32.totalorder %v471, 0
        %vm678 = vcmp.ne.s32.totalorder %v478, 0
        %vm679 = vcmp.ne.s32.totalorder %v485, 0
        %vm680 = vcmp.ne.s32.totalorder %v492, 0
        %vm681 = vcmp.ne.s32.totalorder %v499, 0
        %vm682 = vcmp.ne.s32.totalorder %v506, 0
        %vm683 = vcmp.ne.s32.totalorder %v513, 0
        %vm684 = vcmp.ne.s32.totalorder %v520, 0
        %vm685 = vcmp.ne.s32.totalorder %v527, 0
        %vm686 = vcmp.ne.s32.totalorder %v534, 0
        %vm687 = vcmp.ne.s32.totalorder %v541, 0
        %vm688 = vcmp.ne.s32.totalorder %v548, 0
        %vm689 = vcmp.ne.s32.totalorder %v555, 0
        %vm690 = vcmp.ne.s32.totalorder %v562, 0
        %vm691 = vcmp.ne.s32.totalorder %v569, 0
        %vm692 = vcmp.ne.s32.totalorder %v576, 0
        %vm693 = vcmp.ne.s32.totalorder %v583, 0
        %vm694 = vcmp.ne.s32.totalorder %v590, 0
        %vm695 = vcmp.ne.s32.totalorder %v597, 0
        %vm696 = vcmp.ne.s32.totalorder %v604, 0
        %vm697 = vcmp.ne.s32.totalorder %v611, 0
        %vm698 = vcmp.ne.s32.totalorder %v618, 0
        %vm699 = vcmp.ne.s32.totalorder %v625, 0
        %vm700 = vcmp.ne.s32.totalorder %v632, 0
        %vm701 = vcmp.ne.s32.totalorder %v639, 0
        %vm702 = vcmp.ne.s32.totalorder %v646, 0
        %vm703 = vcmp.ne.s32.totalorder %v653, 0
        %vm704 = vcmp.ne.s32.totalorder %v660, 0
        %vm705 = vcmp.ne.s32.totalorder %v667, 0
        %vm706 = vcmp.ne.s32.totalorder %v674, 0
        %vm707 = vcmp.lt.s32.totalorder %v457, 0
        %vm708 = vcmp.lt.s32.totalorder %v464, 0
        %vm709 = vcmp.lt.s32.totalorder %v471, 0
        %vm710 = vcmp.lt.s32.totalorder %v478, 0
        %vm711 = vcmp.lt.s32.totalorder %v485, 0
        %vm712 = vcmp.lt.s32.totalorder %v492, 0
        %vm713 = vcmp.lt.s32.totalorder %v499, 0
        %vm714 = vcmp.lt.s32.totalorder %v506, 0
        %vm715 = vcmp.lt.s32.totalorder %v513, 0
        %vm716 = vcmp.lt.s32.totalorder %v520, 0
        %vm717 = vcmp.lt.s32.totalorder %v527, 0
        %vm718 = vcmp.lt.s32.totalorder %v534, 0
        %vm719 = vcmp.lt.s32.totalorder %v541, 0
        %vm720 = vcmp.lt.s32.totalorder %v548, 0
        %vm721 = vcmp.lt.s32.totalorder %v555, 0
        %vm722 = vcmp.lt.s32.totalorder %v562, 0
        %vm723 = vcmp.lt.s32.totalorder %v569, 0
        %vm724 = vcmp.lt.s32.totalorder %v576, 0
        %vm725 = vcmp.lt.s32.totalorder %v583, 0
        %vm726 = vcmp.lt.s32.totalorder %v590, 0
        %vm727 = vcmp.lt.s32.totalorder %v597, 0
        %vm728 = vcmp.lt.s32.totalorder %v604, 0
        %vm729 = vcmp.lt.s32.totalorder %v611, 0
        %vm730 = vcmp.lt.s32.totalorder %v618, 0
        %vm731 = vcmp.lt.s32.totalorder %v625, 0
        %vm732 = vcmp.lt.s32.totalorder %v632, 0
        %vm733 = vcmp.lt.s32.totalorder %v639, 0
        %vm734 = vcmp.lt.s32.totalorder %v646, 0
        %vm735 = vcmp.lt.s32.totalorder %v653, 0
        %vm736 = vcmp.lt.s32.totalorder %v660, 0
        %vm737 = vcmp.lt.s32.totalorder %v667, 0
        %vm738 = vcmp.lt.s32.totalorder %v674, 0
        %vm739 = vmand %vm707, %vm675
        %vm740 = vmand %vm708, %vm676
        %vm741 = vmand %vm709, %vm677
        %vm742 = vmand %vm710, %vm678
        %vm743 = vmand %vm711, %vm679
        %vm744 = vmand %vm712, %vm680
        %vm745 = vmand %vm713, %vm681
        %vm746 = vmand %vm714, %vm682
        %vm747 = vmand %vm715, %vm683
        %vm748 = vmand %vm716, %vm684
        %vm749 = vmand %vm717, %vm685
        %vm750 = vmand %vm718, %vm686
        %vm751 = vmand %vm719, %vm687
        %vm752 = vmand %vm720, %vm688
        %vm753 = vmand %vm721, %vm689
        %vm754 = vmand %vm722, %vm690
        %vm755 = vmand %vm723, %vm691
        %vm756 = vmand %vm724, %vm692
        %vm757 = vmand %vm725, %vm693
        %vm758 = vmand %vm726, %vm694
        %vm759 = vmand %vm727, %vm695
        %vm760 = vmand %vm728, %vm696
        %vm761 = vmand %vm729, %vm697
        %vm762 = vmand %vm730, %vm698
        %vm763 = vmand %vm731, %vm699
        %vm764 = vmand %vm732, %vm700
        %vm765 = vmand %vm733, %vm701
        %vm766 = vmand %vm734, %vm702
        %vm767 = vmand %vm735, %vm703
        %vm768 = vmand %vm736, %vm704
        %vm769 = vmand %vm737, %vm705
        %vm770 = vmand %vm738, %vm706
        %v771 = vadd.s32 %v457, 32
        %v772 = vadd.s32 %v464, 32
        %v773 = vadd.s32 %v471, 32
        %v774 = vadd.s32 %v478, 32
        %v775 = vadd.s32 %v485, 32
        %v776 = vadd.s32 %v492, 32
        %v777 = vadd.s32 %v499, 32
        %v778 = vadd.s32 %v506, 32
        %v779 = vadd.s32 %v513, 32
        %v780 = vadd.s32 %v520, 32
        %v781 = vadd.s32 %v527, 32
        %v782 = vadd.s32 %v534, 32
        %v783 = vadd.s32 %v541, 32
        %v784 = vadd.s32 %v548, 32
        %v785 = vadd.s32 %v555, 32
        %v786 = vadd.s32 %v562, 32
        %v787 = vadd.s32 %v569, 32
        %v788 = vadd.s32 %v576, 32
        %v789 = vadd.s32 %v583, 32
        %v790 = vadd.s32 %v590, 32
        %v791 = vadd.s32 %v597, 32
        %v792 = vadd.s32 %v604, 32
        %v793 = vadd.s32 %v611, 32
        %v794 = vadd.s32 %v618, 32
        %v795 = vadd.s32 %v625, 32
        %v796 = vadd.s32 %v632, 32
        %v797 = vadd.s32 %v639, 32
        %v798 = vadd.s32 %v646, 32
        %v799 = vadd.s32 %v653, 32
        %v800 = vadd.s32 %v660, 32
        %v801 = vadd.s32 %v667, 32
        %v802 = vadd.s32 %v674, 32
        %v803 = vsel %vm739, %v771, %v457
        %v804 = vsel %vm740, %v772, %v464
        %v805 = vsel %vm741, %v773, %v471
        %v806 = vsel %vm742, %v774, %v478
        %v807 = vsel %vm743, %v775, %v485
        %v808 = vsel %vm744, %v776, %v492
        %v809 = vsel %vm745, %v777, %v499
        %v810 = vsel %vm746, %v778, %v506
        %v811 = vsel %vm747, %v779, %v513
        %v812 = vsel %vm748, %v780, %v520
        %v813 = vsel %vm749, %v781, %v527
        %v814 = vsel %vm750, %v782, %v534
        %v815 = vsel %vm751, %v783, %v541
        %v816 = vsel %vm752, %v784, %v548
        %v817 = vsel %vm753, %v785, %v555
        %v818 = vsel %vm754, %v786, %v562
        %v819 = vsel %vm755, %v787, %v569
        %v820 = vsel %vm756, %v788, %v576
        %v821 = vsel %vm757, %v789, %v583
        %v822 = vsel %vm758, %v790, %v590
        %v823 = vsel %vm759, %v791, %v597
        %v824 = vsel %vm760, %v792, %v604
        %v825 = vsel %vm761, %v793, %v611
        %v826 = vsel %vm762, %v794, %v618
        %v827 = vsel %vm763, %v795, %v625
        %v828 = vsel %vm764, %v796, %v632
        %v829 = vsel %vm765, %v797, %v639
        %v830 = vsel %vm766, %v798, %v646
        %v831 = vsel %vm767, %v799, %v653
        %v832 = vsel %vm768, %v800, %v660
        %v833 = vsel %vm769, %v801, %v667
        %v834 = vsel %vm770, %v802, %v674
        %vm835 = vcmp.ge.s32.totalorder %v803, 1
        %vm836 = vcmp.ge.s32.totalorder %v804, 1
        %vm837 = vcmp.ge.s32.totalorder %v805, 1
        %vm838 = vcmp.ge.s32.totalorder %v806, 1
        %vm839 = vcmp.ge.s32.totalorder %v807, 1
        %vm840 = vcmp.ge.s32.totalorder %v808, 1
        %vm841 = vcmp.ge.s32.totalorder %v809, 1
        %vm842 = vcmp.ge.s32.totalorder %v810, 1
        %vm843 = vcmp.ge.s32.totalorder %v811, 1
        %vm844 = vcmp.ge.s32.totalorder %v812, 1
        %vm845 = vcmp.ge.s32.totalorder %v813, 1
        %vm846 = vcmp.ge.s32.totalorder %v814, 1
        %vm847 = vcmp.ge.s32.totalorder %v815, 1
        %vm848 = vcmp.ge.s32.totalorder %v816, 1
        %vm849 = vcmp.ge.s32.totalorder %v817, 1
        %vm850 = vcmp.ge.s32.totalorder %v818, 1
        %vm851 = vcmp.ge.s32.totalorder %v819, 1
        %vm852 = vcmp.ge.s32.totalorder %v820, 1
        %vm853 = vcmp.ge.s32.totalorder %v821, 1
        %vm854 = vcmp.ge.s32.totalorder %v822, 1
        %vm855 = vcmp.ge.s32.totalorder %v823, 1
        %vm856 = vcmp.ge.s32.totalorder %v824, 1
        %vm857 = vcmp.ge.s32.totalorder %v825, 1
        %vm858 = vcmp.ge.s32.totalorder %v826, 1
        %vm859 = vcmp.ge.s32.totalorder %v827, 1
        %vm860 = vcmp.ge.s32.totalorder %v828, 1
        %vm861 = vcmp.ge.s32.totalorder %v829, 1
        %vm862 = vcmp.ge.s32.totalorder %v830, 1
        %vm863 = vcmp.ge.s32.totalorder %v831, 1
        %vm864 = vcmp.ge.s32.totalorder %v832, 1
        %vm865 = vcmp.ge.s32.totalorder %v833, 1
        %vm866 = vcmp.ge.s32.totalorder %v834, 1
        %vm867 = vcmp.le.s32.totalorder %v803, 16
        %vm868 = vcmp.le.s32.totalorder %v804, 16
        %vm869 = vcmp.le.s32.totalorder %v805, 16
        %vm870 = vcmp.le.s32.totalorder %v806, 16
        %vm871 = vcmp.le.s32.totalorder %v807, 16
        %vm872 = vcmp.le.s32.totalorder %v808, 16
        %vm873 = vcmp.le.s32.totalorder %v809, 16
        %vm874 = vcmp.le.s32.totalorder %v810, 16
        %vm875 = vcmp.le.s32.totalorder %v811, 16
        %vm876 = vcmp.le.s32.totalorder %v812, 16
        %vm877 = vcmp.le.s32.totalorder %v813, 16
        %vm878 = vcmp.le.s32.totalorder %v814, 16
        %vm879 = vcmp.le.s32.totalorder %v815, 16
        %vm880 = vcmp.le.s32.totalorder %v816, 16
        %vm881 = vcmp.le.s32.totalorder %v817, 16
        %vm882 = vcmp.le.s32.totalorder %v818, 16
        %vm883 = vcmp.le.s32.totalorder %v819, 16
        %vm884 = vcmp.le.s32.totalorder %v820, 16
        %vm885 = vcmp.le.s32.totalorder %v821, 16
        %vm886 = vcmp.le.s32.totalorder %v822, 16
        %vm887 = vcmp.le.s32.totalorder %v823, 16
        %vm888 = vcmp.le.s32.totalorder %v824, 16
        %vm889 = vcmp.le.s32.totalorder %v825, 16
        %vm890 = vcmp.le.s32.totalorder %v826, 16
        %vm891 = vcmp.le.s32.totalorder %v827, 16
        %vm892 = vcmp.le.s32.totalorder %v828, 16
        %vm893 = vcmp.le.s32.totalorder %v829, 16
        %vm894 = vcmp.le.s32.totalorder %v830, 16
        %vm895 = vcmp.le.s32.totalorder %v831, 16
        %vm896 = vcmp.le.s32.totalorder %v832, 16
        %vm897 = vcmp.le.s32.totalorder %v833, 16
        %vm898 = vcmp.le.s32.totalorder %v834, 16
        %vm899 = vmand %vm835, %vm867
        %vm900 = vmand %vm836, %vm868
        %vm901 = vmand %vm837, %vm869
        %vm902 = vmand %vm838, %vm870
        %vm903 = vmand %vm839, %vm871
        %vm904 = vmand %vm840, %vm872
        %vm905 = vmand %vm841, %vm873
        %vm906 = vmand %vm842, %vm874
        %vm907 = vmand %vm843, %vm875
        %vm908 = vmand %vm844, %vm876
        %vm909 = vmand %vm845, %vm877
        %vm910 = vmand %vm846, %vm878
        %vm911 = vmand %vm847, %vm879
        %vm912 = vmand %vm848, %vm880
        %vm913 = vmand %vm849, %vm881
        %vm914 = vmand %vm850, %vm882
        %vm915 = vmand %vm851, %vm883
        %vm916 = vmand %vm852, %vm884
        %vm917 = vmand %vm853, %vm885
        %vm918 = vmand %vm854, %vm886
        %vm919 = vmand %vm855, %vm887
        %vm920 = vmand %vm856, %vm888
        %vm921 = vmand %vm857, %vm889
        %vm922 = vmand %vm858, %vm890
        %vm923 = vmand %vm859, %vm891
        %vm924 = vmand %vm860, %vm892
        %vm925 = vmand %vm861, %vm893
        %vm926 = vmand %vm862, %vm894
        %vm927 = vmand %vm863, %vm895
        %vm928 = vmand %vm864, %vm896
        %vm929 = vmand %vm865, %vm897
        %vm930 = vmand %vm866, %vm898
        %931 = vst [vmem:[#allocation2] sm:$0xff] 0
        %932 = vst [vmem:[#allocation2 + $0x8] sm:$0xff] 0
        %933 = vst [vmem:[#allocation2 + $0x10] sm:$0xff] 0
        %934 = vst [vmem:[#allocation2 + $0x18] sm:$0xff] 0
        %935 = vst [vmem:[#allocation2 + $0x120] sm:$0xff] 0
        %936 = vst [vmem:[#allocation2 + $0x128] sm:$0xff] 0
        %937 = vst [vmem:[#allocation2 + $0x130] sm:$0xff] 0
        %938 = vst [vmem:[#allocation2 + $0x138] sm:$0xff] 0
        %v939 = vld [vmem:[%s416] sm:$0xff]
        %v940 = vld [vmem:[%s416 + $0x8] sm:$0xff]
        %v941 = vld [vmem:[%s416 + $0x10] sm:$0xff]
        %v942 = vld [vmem:[%s416 + $0x18] sm:$0xff]
        %v943 = vld [vmem:[%s416 + $0x20] sm:$0xff]
        %v944 = vld [vmem:[%s416 + $0x28] sm:$0xff]
        %v945 = vld [vmem:[%s416 + $0x30] sm:$0xff]
        %v946 = vld [vmem:[%s416 + $0x38] sm:$0xff]
        %v947 = vld [vmem:[%s416 + $0x40] sm:$0xff]
        %v948 = vld [vmem:[%s416 + $0x48] sm:$0xff]
        %v949 = vld [vmem:[%s416 + $0x50] sm:$0xff]
        %v950 = vld [vmem:[%s416 + $0x58] sm:$0xff]
        %v951 = vld [vmem:[%s416 + $0x60] sm:$0xff]
        %v952 = vld [vmem:[%s416 + $0x68] sm:$0xff]
        %v953 = vld [vmem:[%s416 + $0x70] sm:$0xff]
        %v954 = vld [vmem:[%s416 + $0x78] sm:$0xff]
        %v955 = vld [vmem:[%s416 + $0x80] sm:$0xff]
        %v956 = vld [vmem:[%s416 + $0x88] sm:$0xff]
        %v957 = vld [vmem:[%s416 + $0x90] sm:$0xff]
        %v958 = vld [vmem:[%s416 + $0x98] sm:$0xff]
        %v959 = vld [vmem:[%s416 + $0xa0] sm:$0xff]
        %v960 = vld [vmem:[%s416 + $0xa8] sm:$0xff]
        %v961 = vld [vmem:[%s416 + $0xb0] sm:$0xff]
        %v962 = vld [vmem:[%s416 + $0xb8] sm:$0xff]
        %v963 = vld [vmem:[%s416 + $0xc0] sm:$0xff]
        %v964 = vld [vmem:[%s416 + $0xc8] sm:$0xff]
        %v965 = vld [vmem:[%s416 + $0xd0] sm:$0xff]
        %v966 = vld [vmem:[%s416 + $0xd8] sm:$0xff]
        %v967 = vld [vmem:[%s416 + $0xe0] sm:$0xff]
        %v968 = vld [vmem:[%s416 + $0xe8] sm:$0xff]
        %v969 = vld [vmem:[%s416 + $0xf0] sm:$0xff]
        %v970 = vld [vmem:[%s416 + $0xf8] sm:$0xff]
        %v971 = vld [vmem:[%s416 + $0x100] sm:$0xff]
        %v972 = vld [vmem:[%s416 + $0x108] sm:$0xff]
        %v973 = vld [vmem:[%s416 + $0x110] sm:$0xff]
        %v974 = vld [vmem:[%s416 + $0x118] sm:$0xff]
        %v975 = vld [vmem:[%s416 + $0x120] sm:$0xff]
        %v976 = vld [vmem:[%s416 + $0x128] sm:$0xff]
        %v977 = vld [vmem:[%s416 + $0x130] sm:$0xff]
        %v978 = vld [vmem:[%s416 + $0x138] sm:$0xff]
        %v1019 = vunpack.c.l.b16 %v939
        %v1020 = vunpack.c.h.b16 %v939
        %v1021 = vunpack.c.l.b16 %v940
        %v1022 = vunpack.c.h.b16 %v940
        %v1023 = vunpack.c.l.b16 %v941
        %v1024 = vunpack.c.h.b16 %v941
        %v1025 = vunpack.c.l.b16 %v942
        %v1026 = vunpack.c.h.b16 %v942
        %v1027 = vunpack.c.l.b16 %v943
        %v1028 = vunpack.c.h.b16 %v943
        %v1029 = vunpack.c.l.b16 %v944
        %v1030 = vunpack.c.h.b16 %v944
        %v1031 = vunpack.c.l.b16 %v945
        %v1032 = vunpack.c.h.b16 %v945
        %v1033 = vunpack.c.l.b16 %v946
        %v1034 = vunpack.c.h.b16 %v946
        %v1035 = vunpack.c.l.b16 %v947
        %v1036 = vunpack.c.h.b16 %v947
        %v1037 = vunpack.c.l.b16 %v948
        %v1038 = vunpack.c.h.b16 %v948
        %v1039 = vunpack.c.l.b16 %v949
        %v1040 = vunpack.c.h.b16 %v949
        %v1041 = vunpack.c.l.b16 %v950
        %v1042 = vunpack.c.h.b16 %v950
        %v1043 = vunpack.c.l.b16 %v951
        %v1044 = vunpack.c.h.b16 %v951
        %v1045 = vunpack.c.l.b16 %v952
        %v1046 = vunpack.c.h.b16 %v952
        %v1047 = vunpack.c.l.b16 %v953
        %v1048 = vunpack.c.h.b16 %v953
        %v1049 = vunpack.c.l.b16 %v954
        %v1050 = vunpack.c.h.b16 %v954
        %v1051 = vunpack.c.l.b16 %v955
        %v1052 = vunpack.c.h.b16 %v955
        %v1053 = vunpack.c.l.b16 %v956
        %v1054 = vunpack.c.h.b16 %v956
        %v1055 = vunpack.c.l.b16 %v957
        %v1056 = vunpack.c.h.b16 %v957
        %v1057 = vunpack.c.l.b16 %v958
        %v1058 = vunpack.c.h.b16 %v958
        %v1059 = vunpack.c.l.b16 %v959
        %v1060 = vunpack.c.h.b16 %v959
        %v1061 = vunpack.c.l.b16 %v960
        %v1062 = vunpack.c.h.b16 %v960
        %v1063 = vunpack.c.l.b16 %v961
        %v1064 = vunpack.c.h.b16 %v961
        %v1065 = vunpack.c.l.b16 %v962
        %v1066 = vunpack.c.h.b16 %v962
        %v1067 = vunpack.c.l.b16 %v963
        %v1068 = vunpack.c.h.b16 %v963
        %v1069 = vunpack.c.l.b16 %v964
        %v1070 = vunpack.c.h.b16 %v964
        %v1071 = vunpack.c.l.b16 %v965
        %v1072 = vunpack.c.h.b16 %v965
        %v1073 = vunpack.c.l.b16 %v966
        %v1074 = vunpack.c.h.b16 %v966
        %v1075 = vunpack.c.l.b16 %v967
        %v1076 = vunpack.c.h.b16 %v967
        %v1077 = vunpack.c.l.b16 %v968
        %v1078 = vunpack.c.h.b16 %v968
        %v1079 = vunpack.c.l.b16 %v969
        %v1080 = vunpack.c.h.b16 %v969
        %v1081 = vunpack.c.l.b16 %v970
        %v1082 = vunpack.c.h.b16 %v970
        %v1083 = vunpack.c.l.b16 %v971
        %v1084 = vunpack.c.h.b16 %v971
        %v1085 = vunpack.c.l.b16 %v972
        %v1086 = vunpack.c.h.b16 %v972
        %v1087 = vunpack.c.l.b16 %v973
        %v1088 = vunpack.c.h.b16 %v973
        %v1089 = vunpack.c.l.b16 %v974
        %v1090 = vunpack.c.h.b16 %v974
        %v1091 = vunpack.c.l.b16 %v975
        %v1092 = vunpack.c.h.b16 %v975
        %v1093 = vunpack.c.l.b16 %v976
        %v1094 = vunpack.c.h.b16 %v976
        %v1095 = vunpack.c.l.b16 %v977
        %v1096 = vunpack.c.h.b16 %v977
        %v1097 = vunpack.c.l.b16 %v978
        %v1098 = vunpack.c.h.b16 %v978
        %v1099 = vpack.c.b16 %v1021, %v1019
        %v1100 = vpack.c.b16 %v1022, %v1020
        %v1101 = vpack.c.b16 %v1025, %v1023
        %v1102 = vpack.c.b16 %v1026, %v1024
        %v1103 = vpack.c.b16 %v1029, %v1027
        %v1104 = vpack.c.b16 %v1030, %v1028
        %v1105 = vpack.c.b16 %v1033, %v1031
        %v1106 = vpack.c.b16 %v1034, %v1032
        %v1107 = vpack.c.b16 %v1037, %v1035
        %v1108 = vpack.c.b16 %v1038, %v1036
        %v1109 = vpack.c.b16 %v1041, %v1039
        %v1110 = vpack.c.b16 %v1042, %v1040
        %v1111 = vpack.c.b16 %v1045, %v1043
        %v1112 = vpack.c.b16 %v1046, %v1044
        %v1113 = vpack.c.b16 %v1049, %v1047
        %v1114 = vpack.c.b16 %v1050, %v1048
        %v1115 = vpack.c.b16 %v1053, %v1051
        %v1116 = vpack.c.b16 %v1054, %v1052
        %v1117 = vpack.c.b16 %v1057, %v1055
        %v1118 = vpack.c.b16 %v1058, %v1056
        %v1119 = vpack.c.b16 %v1061, %v1059
        %v1120 = vpack.c.b16 %v1062, %v1060
        %v1121 = vpack.c.b16 %v1065, %v1063
        %v1122 = vpack.c.b16 %v1066, %v1064
        %v1123 = vpack.c.b16 %v1069, %v1067
        %v1124 = vpack.c.b16 %v1070, %v1068
        %v1125 = vpack.c.b16 %v1073, %v1071
        %v1126 = vpack.c.b16 %v1074, %v1072
        %v1127 = vpack.c.b16 %v1077, %v1075
        %v1128 = vpack.c.b16 %v1078, %v1076
        %v1129 = vpack.c.b16 %v1081, %v1079
        %v1130 = vpack.c.b16 %v1082, %v1080
        %v1131 = vpack.c.b16 %v1085, %v1083
        %v1132 = vpack.c.b16 %v1086, %v1084
        %v1133 = vpack.c.b16 %v1089, %v1087
        %v1134 = vpack.c.b16 %v1090, %v1088
        %v1135 = vpack.c.b16 %v1093, %v1091
        %v1136 = vpack.c.b16 %v1094, %v1092
        %v1137 = vpack.c.b16 %v1097, %v1095
        %v1138 = vpack.c.b16 %v1098, %v1096
        %vm1139 = vsmask.f32 256
        %v1141 = vshrl.u32 %v1099, 16
        %v1143 = vrot.slane %v1141, 7
        %v1144 = vshll.u32 %v1099, 16
        %v1146 = vor.u32 %v1143, %v1144
        %v1148 = vshrl.u32 %v1100, 16
        %v1150 = vrot.slane %v1148, 7
        %v1151 = vshll.u32 %v1100, 16
        %v1153 = vor.u32 %v1150, %v1151
        %v1155 = vshrl.u32 %v1101, 16
        %v1157 = vrot.slane %v1155, 7
        %v1158 = vshll.u32 %v1101, 16
        %v1160 = vor.u32 %v1157, %v1158
        %v1161 = vsel %vm1139, %v1143, %v1160
        %v1163 = vshrl.u32 %v1102, 16
        %v1165 = vrot.slane %v1163, 7
        %v1166 = vshll.u32 %v1102, 16
        %v1168 = vor.u32 %v1165, %v1166
        %v1169 = vsel %vm1139, %v1150, %v1168
        %v1171 = vshrl.u32 %v1103, 16
        %v1173 = vrot.slane %v1171, 7
        %v1174 = vshll.u32 %v1103, 16
        %v1176 = vor.u32 %v1173, %v1174
        %v1177 = vsel %vm1139, %v1157, %v1176
        %v1179 = vshrl.u32 %v1104, 16
        %v1181 = vrot.slane %v1179, 7
        %v1182 = vshll.u32 %v1104, 16
        %v1184 = vor.u32 %v1181, %v1182
        %v1185 = vsel %vm1139, %v1165, %v1184
        %v1187 = vshrl.u32 %v1105, 16
        %v1189 = vrot.slane %v1187, 7
        %v1190 = vshll.u32 %v1105, 16
        %v1192 = vor.u32 %v1189, %v1190
        %v1193 = vsel %vm1139, %v1173, %v1192
        %v1195 = vshrl.u32 %v1106, 16
        %v1197 = vrot.slane %v1195, 7
        %v1198 = vshll.u32 %v1106, 16
        %v1200 = vor.u32 %v1197, %v1198
        %v1201 = vsel %vm1139, %v1181, %v1200
        %v1203 = vshrl.u32 %v1107, 16
        %v1205 = vrot.slane %v1203, 7
        %v1206 = vshll.u32 %v1107, 16
        %v1208 = vor.u32 %v1205, %v1206
        %v1209 = vsel %vm1139, %v1189, %v1208
        %v1211 = vshrl.u32 %v1108, 16
        %v1213 = vrot.slane %v1211, 7
        %v1214 = vshll.u32 %v1108, 16
        %v1216 = vor.u32 %v1213, %v1214
        %v1217 = vsel %vm1139, %v1197, %v1216
        %v1219 = vshrl.u32 %v1109, 16
        %v1221 = vrot.slane %v1219, 7
        %v1222 = vshll.u32 %v1109, 16
        %v1224 = vor.u32 %v1221, %v1222
        %v1225 = vsel %vm1139, %v1205, %v1224
        %v1227 = vshrl.u32 %v1110, 16
        %v1229 = vrot.slane %v1227, 7
        %v1230 = vshll.u32 %v1110, 16
        %v1232 = vor.u32 %v1229, %v1230
        %v1233 = vsel %vm1139, %v1213, %v1232
        %v1235 = vshrl.u32 %v1111, 16
        %v1237 = vrot.slane %v1235, 7
        %v1238 = vshll.u32 %v1111, 16
        %v1240 = vor.u32 %v1237, %v1238
        %v1241 = vsel %vm1139, %v1221, %v1240
        %v1243 = vshrl.u32 %v1112, 16
        %v1245 = vrot.slane %v1243, 7
        %v1246 = vshll.u32 %v1112, 16
        %v1248 = vor.u32 %v1245, %v1246
        %v1249 = vsel %vm1139, %v1229, %v1248
        %v1251 = vshrl.u32 %v1113, 16
        %v1253 = vrot.slane %v1251, 7
        %v1254 = vshll.u32 %v1113, 16
        %v1256 = vor.u32 %v1253, %v1254
        %v1257 = vsel %vm1139, %v1237, %v1256
        %v1259 = vshrl.u32 %v1114, 16
        %v1261 = vrot.slane %v1259, 7
        %v1262 = vshll.u32 %v1114, 16
        %v1264 = vor.u32 %v1261, %v1262
        %v1265 = vsel %vm1139, %v1245, %v1264
        %v1267 = vshrl.u32 %v1115, 16
        %v1269 = vrot.slane %v1267, 7
        %v1270 = vshll.u32 %v1115, 16
        %v1272 = vor.u32 %v1269, %v1270
        %v1273 = vsel %vm1139, %v1253, %v1272
        %v1275 = vshrl.u32 %v1116, 16
        %v1277 = vrot.slane %v1275, 7
        %v1278 = vshll.u32 %v1116, 16
        %v1280 = vor.u32 %v1277, %v1278
        %v1281 = vsel %vm1139, %v1261, %v1280
        %v1283 = vshrl.u32 %v1117, 16
        %v1285 = vrot.slane %v1283, 7
        %v1286 = vshll.u32 %v1117, 16
        %v1288 = vor.u32 %v1285, %v1286
        %v1289 = vsel %vm1139, %v1269, %v1288
        %v1291 = vshrl.u32 %v1118, 16
        %v1293 = vrot.slane %v1291, 7
        %v1294 = vshll.u32 %v1118, 16
        %v1296 = vor.u32 %v1293, %v1294
        %v1297 = vsel %vm1139, %v1277, %v1296
        %v1299 = vshrl.u32 %v1119, 16
        %v1301 = vrot.slane %v1299, 7
        %v1302 = vshll.u32 %v1119, 16
        %v1304 = vor.u32 %v1301, %v1302
        %v1305 = vsel %vm1139, %v1285, %v1304
        %v1307 = vshrl.u32 %v1120, 16
        %v1309 = vrot.slane %v1307, 7
        %v1310 = vshll.u32 %v1120, 16
        %v1312 = vor.u32 %v1309, %v1310
        %v1313 = vsel %vm1139, %v1293, %v1312
        %v1315 = vshrl.u32 %v1121, 16
        %v1317 = vrot.slane %v1315, 7
        %v1318 = vshll.u32 %v1121, 16
        %v1320 = vor.u32 %v1317, %v1318
        %v1321 = vsel %vm1139, %v1301, %v1320
        %v1323 = vshrl.u32 %v1122, 16
        %v1325 = vrot.slane %v1323, 7
        %v1326 = vshll.u32 %v1122, 16
        %v1328 = vor.u32 %v1325, %v1326
        %v1329 = vsel %vm1139, %v1309, %v1328
        %v1331 = vshrl.u32 %v1123, 16
        %v1333 = vrot.slane %v1331, 7
        %v1334 = vshll.u32 %v1123, 16
        %v1336 = vor.u32 %v1333, %v1334
        %v1337 = vsel %vm1139, %v1317, %v1336
        %v1339 = vshrl.u32 %v1124, 16
        %v1341 = vrot.slane %v1339, 7
        %v1342 = vshll.u32 %v1124, 16
        %v1344 = vor.u32 %v1341, %v1342
        %v1345 = vsel %vm1139, %v1325, %v1344
        %v1347 = vshrl.u32 %v1125, 16
        %v1349 = vrot.slane %v1347, 7
        %v1350 = vshll.u32 %v1125, 16
        %v1352 = vor.u32 %v1349, %v1350
        %v1353 = vsel %vm1139, %v1333, %v1352
        %v1355 = vshrl.u32 %v1126, 16
        %v1357 = vrot.slane %v1355, 7
        %v1358 = vshll.u32 %v1126, 16
        %v1360 = vor.u32 %v1357, %v1358
        %v1361 = vsel %vm1139, %v1341, %v1360
        %v1363 = vshrl.u32 %v1127, 16
        %v1365 = vrot.slane %v1363, 7
        %v1366 = vshll.u32 %v1127, 16
        %v1368 = vor.u32 %v1365, %v1366
        %v1369 = vsel %vm1139, %v1349, %v1368
        %v1371 = vshrl.u32 %v1128, 16
        %v1373 = vrot.slane %v1371, 7
        %v1374 = vshll.u32 %v1128, 16
        %v1376 = vor.u32 %v1373, %v1374
        %v1377 = vsel %vm1139, %v1357, %v1376
        %v1379 = vshrl.u32 %v1129, 16
        %v1381 = vrot.slane %v1379, 7
        %v1382 = vshll.u32 %v1129, 16
        %v1384 = vor.u32 %v1381, %v1382
        %v1385 = vsel %vm1139, %v1365, %v1384
        %v1387 = vshrl.u32 %v1130, 16
        %v1389 = vrot.slane %v1387, 7
        %v1390 = vshll.u32 %v1130, 16
        %v1392 = vor.u32 %v1389, %v1390
        %v1393 = vsel %vm1139, %v1373, %v1392
        %v1395 = vshrl.u32 %v1131, 16
        %v1397 = vrot.slane %v1395, 7
        %v1398 = vshll.u32 %v1131, 16
        %v1400 = vor.u32 %v1397, %v1398
        %v1401 = vsel %vm1139, %v1381, %v1400
        %v1403 = vshrl.u32 %v1132, 16
        %v1405 = vrot.slane %v1403, 7
        %v1406 = vshll.u32 %v1132, 16
        %v1408 = vor.u32 %v1405, %v1406
        %v1409 = vsel %vm1139, %v1389, %v1408
        %v1411 = vshrl.u32 %v1133, 16
        %v1413 = vrot.slane %v1411, 7
        %v1414 = vshll.u32 %v1133, 16
        %v1416 = vor.u32 %v1413, %v1414
        %v1417 = vsel %vm1139, %v1397, %v1416
        %v1419 = vshrl.u32 %v1134, 16
        %v1421 = vrot.slane %v1419, 7
        %v1422 = vshll.u32 %v1134, 16
        %v1424 = vor.u32 %v1421, %v1422
        %v1425 = vsel %vm1139, %v1405, %v1424
        %v1427 = vshrl.u32 %v1135, 16
        %v1429 = vrot.slane %v1427, 7
        %v1430 = vshll.u32 %v1135, 16
        %v1432 = vor.u32 %v1429, %v1430
        %v1433 = vsel %vm1139, %v1413, %v1432
        %v1435 = vshrl.u32 %v1136, 16
        %v1437 = vrot.slane %v1435, 7
        %v1438 = vshll.u32 %v1136, 16
        %v1440 = vor.u32 %v1437, %v1438
        %v1441 = vsel %vm1139, %v1421, %v1440
        %v1443 = vshrl.u32 %v1137, 16
        %v1445 = vrot.slane %v1443, 7
        %v1446 = vshll.u32 %v1137, 16
        %v1448 = vor.u32 %v1445, %v1446
        %v1449 = vsel %vm1139, %v1429, %v1448
        %v1451 = vshrl.u32 %v1138, 16
        %v1453 = vrot.slane %v1451, 7
        %v1454 = vshll.u32 %v1138, 16
        %v1456 = vor.u32 %v1453, %v1454
        %v1457 = vsel %vm1139, %v1437, %v1456
        %vm1498 = vcmask 1040384
        %vm1499 = vmand %vm1498, %vm1139
        %v1500 = vsel %vm1499, 0, %v1146
        %v1501 = vsel %vm1499, 0, %v1153
        %vm1502 = vsmask.f32 7424
        %v1503 = vrot.slane %v1144, 1
        %v1504 = vor.u32 %v1141, %v1503
        %v1505 = vrot.slane %v1158, 1
        %v1506 = vsel %vm1502, %v1504, %v1505
        %v1507 = vrot.slane %v1151, 1
        %v1508 = vor.u32 %v1148, %v1507
        %v1509 = vrot.slane %v1166, 1
        %v1510 = vsel %vm1502, %v1508, %v1509
        %v1511 = vor.u32 %v1155, %v1505
        %v1512 = vrot.slane %v1174, 1
        %v1513 = vsel %vm1502, %v1511, %v1512
        %v1514 = vor.u32 %v1163, %v1509
        %v1515 = vrot.slane %v1182, 1
        %v1516 = vsel %vm1502, %v1514, %v1515
        %v1517 = vor.u32 %v1171, %v1512
        %v1518 = vrot.slane %v1190, 1
        %v1519 = vsel %vm1502, %v1517, %v1518
        %v1520 = vor.u32 %v1179, %v1515
        %v1521 = vrot.slane %v1198, 1
        %v1522 = vsel %vm1502, %v1520, %v1521
        %v1523 = vor.u32 %v1187, %v1518
        %v1524 = vrot.slane %v1206, 1
        %v1525 = vsel %vm1502, %v1523, %v1524
        %v1526 = vor.u32 %v1195, %v1521
        %v1527 = vrot.slane %v1214, 1
        %v1528 = vsel %vm1502, %v1526, %v1527
        %v1529 = vor.u32 %v1203, %v1524
        %v1530 = vrot.slane %v1222, 1
        %v1531 = vsel %vm1502, %v1529, %v1530
        %v1532 = vor.u32 %v1211, %v1527
        %v1533 = vrot.slane %v1230, 1
        %v1534 = vsel %vm1502, %v1532, %v1533
        %v1535 = vor.u32 %v1219, %v1530
        %v1536 = vrot.slane %v1238, 1
        %v1537 = vsel %vm1502, %v1535, %v1536
        %v1538 = vor.u32 %v1227, %v1533
        %v1539 = vrot.slane %v1246, 1
        %v1540 = vsel %vm1502, %v1538, %v1539
        %v1541 = vor.u32 %v1235, %v1536
        %v1542 = vrot.slane %v1254, 1
        %v1543 = vsel %vm1502, %v1541, %v1542
        %v1544 = vor.u32 %v1243, %v1539
        %v1545 = vrot.slane %v1262, 1
        %v1546 = vsel %vm1502, %v1544, %v1545
        %v1547 = vor.u32 %v1251, %v1542
        %v1548 = vrot.slane %v1270, 1
        %v1549 = vsel %vm1502, %v1547, %v1548
        %v1550 = vor.u32 %v1259, %v1545
        %v1551 = vrot.slane %v1278, 1
        %v1552 = vsel %vm1502, %v1550, %v1551
        %v1553 = vor.u32 %v1267, %v1548
        %v1554 = vrot.slane %v1286, 1
        %v1555 = vsel %vm1502, %v1553, %v1554
        %v1556 = vor.u32 %v1275, %v1551
        %v1557 = vrot.slane %v1294, 1
        %v1558 = vsel %vm1502, %v1556, %v1557
        %v1559 = vor.u32 %v1283, %v1554
        %v1560 = vrot.slane %v1302, 1
        %v1561 = vsel %vm1502, %v1559, %v1560
        %v1562 = vor.u32 %v1291, %v1557
        %v1563 = vrot.slane %v1310, 1
        %v1564 = vsel %vm1502, %v1562, %v1563
        %v1565 = vor.u32 %v1299, %v1560
        %v1566 = vrot.slane %v1318, 1
        %v1567 = vsel %vm1502, %v1565, %v1566
        %v1568 = vor.u32 %v1307, %v1563
        %v1569 = vrot.slane %v1326, 1
        %v1570 = vsel %vm1502, %v1568, %v1569
        %v1571 = vor.u32 %v1315, %v1566
        %v1572 = vrot.slane %v1334, 1
        %v1573 = vsel %vm1502, %v1571, %v1572
        %v1574 = vor.u32 %v1323, %v1569
        %v1575 = vrot.slane %v1342, 1
        %v1576 = vsel %vm1502, %v1574, %v1575
        %v1577 = vor.u32 %v1331, %v1572
        %v1578 = vrot.slane %v1350, 1
        %v1579 = vsel %vm1502, %v1577, %v1578
        %v1580 = vor.u32 %v1339, %v1575
        %v1581 = vrot.slane %v1358, 1
        %v1582 = vsel %vm1502, %v1580, %v1581
        %v1583 = vor.u32 %v1347, %v1578
        %v1584 = vrot.slane %v1366, 1
        %v1585 = vsel %vm1502, %v1583, %v1584
        %v1586 = vor.u32 %v1355, %v1581
        %v1587 = vrot.slane %v1374, 1
        %v1588 = vsel %vm1502, %v1586, %v1587
        %v1589 = vor.u32 %v1363, %v1584
        %v1590 = vrot.slane %v1382, 1
        %v1591 = vsel %vm1502, %v1589, %v1590
        %v1592 = vor.u32 %v1371, %v1587
        %v1593 = vrot.slane %v1390, 1
        %v1594 = vsel %vm1502, %v1592, %v1593
        %v1595 = vor.u32 %v1379, %v1590
        %v1596 = vrot.slane %v1398, 1
        %v1597 = vsel %vm1502, %v1595, %v1596
        %v1598 = vor.u32 %v1387, %v1593
        %v1599 = vrot.slane %v1406, 1
        %v1600 = vsel %vm1502, %v1598, %v1599
        %v1601 = vor.u32 %v1395, %v1596
        %v1602 = vrot.slane %v1414, 1
        %v1603 = vsel %vm1502, %v1601, %v1602
        %v1604 = vor.u32 %v1403, %v1599
        %v1605 = vrot.slane %v1422, 1
        %v1606 = vsel %vm1502, %v1604, %v1605
        %v1607 = vor.u32 %v1411, %v1602
        %v1608 = vrot.slane %v1430, 1
        %v1609 = vsel %vm1502, %v1607, %v1608
        %v1610 = vor.u32 %v1419, %v1605
        %v1611 = vrot.slane %v1438, 1
        %v1612 = vsel %vm1502, %v1610, %v1611
        %v1613 = vor.u32 %v1427, %v1608
        %v1614 = vrot.slane %v1446, 1
        %v1615 = vsel %vm1502, %v1613, %v1614
        %v1616 = vor.u32 %v1435, %v1611
        %v1617 = vrot.slane %v1454, 1
        %v1618 = vsel %vm1502, %v1616, %v1617
        %v1619 = vor.u32 %v1443, %v1614
        %v1620 = vor.u32 %v1451, %v1617
        %vm1661 = vcmask 1047552
        %vm1662 = vmand %vm1661, %vm1502
        %v1663 = vsel %vm1662, %v1619, 0
        %v1664 = vsel %vm1662, %v1620, 0
        %v1665 = vld [vmem:[#allocation4] sm:$0xf]
        %v1666 = vld [vmem:[#allocation4 + $0x8] sm:$0xf]
        %v1667 = vld [vmem:[#allocation4 + $0x10] sm:$0xf]
        %v1668 = vld [vmem:[#allocation4 + $0x18] sm:$0xf]
        %v1669 = vld [vmem:[#allocation4 + $0x20] sm:$0xf]
        %v1670 = vld [vmem:[#allocation4 + $0x28] sm:$0xf]
        %v1671 = vld [vmem:[#allocation4 + $0x30] sm:$0xf]
        %v1672 = vld [vmem:[#allocation4 + $0x38] sm:$0xf]
        %v1673 = vld [vmem:[#allocation4 + $0x40] sm:$0xf]
        %v1674 = vld [vmem:[#allocation4 + $0x48] sm:$0xf]
        %v1675 = vld [vmem:[#allocation4 + $0x50] sm:$0xf]
        %v1676 = vld [vmem:[#allocation4 + $0x58] sm:$0xf]
        %v1677 = vld [vmem:[#allocation4 + $0x60] sm:$0xf]
        %v1678 = vld [vmem:[#allocation4 + $0x68] sm:$0xf]
        %v1679 = vld [vmem:[#allocation4 + $0x70] sm:$0xf]
        %v1680 = vld [vmem:[#allocation4 + $0x78] sm:$0xf]
        %v1681 = vld [vmem:[#allocation4 + $0x80] sm:$0xf]
        %v1682 = vld [vmem:[#allocation4 + $0x88] sm:$0xf]
        %v1683 = vld [vmem:[#allocation4 + $0x90] sm:$0xf]
        %v1684 = vld [vmem:[#allocation4 + $0x98] sm:$0xf]
        %v1685 = vld [vmem:[#allocation4 + $0xa0] sm:$0xf]
        %v1686 = vld [vmem:[#allocation4 + $0xa8] sm:$0xf]
        %v1687 = vld [vmem:[#allocation4 + $0xb0] sm:$0xf]
        %v1688 = vld [vmem:[#allocation4 + $0xb8] sm:$0xf]
        %v1689 = vld [vmem:[#allocation4 + $0xc0] sm:$0xf]
        %v1690 = vld [vmem:[#allocation4 + $0xc8] sm:$0xf]
        %v1691 = vld [vmem:[#allocation4 + $0xd0] sm:$0xf]
        %v1692 = vld [vmem:[#allocation4 + $0xd8] sm:$0xf]
        %v1693 = vld [vmem:[#allocation4 + $0xe0] sm:$0xf]
        %v1694 = vld [vmem:[#allocation4 + $0xe8] sm:$0xf]
        %v1695 = vld [vmem:[#allocation4 + $0xf0] sm:$0xf]
        %v1696 = vld [vmem:[#allocation4 + $0xf8] sm:$0xf]
        %s1697 = scalar_lea.vmem [#allocation4], 256
        %v1698 = vld [vmem:[%s1697] sm:$0xf]
        %v1699 = vld [vmem:[%s1697 + $0x8] sm:$0xf]
        %v1700 = vld [vmem:[%s1697 + $0x10] sm:$0xf]
        %v1701 = vld [vmem:[%s1697 + $0x18] sm:$0xf]
        %v1702 = vld [vmem:[%s1697 + $0x20] sm:$0xf]
        %v1703 = vld [vmem:[%s1697 + $0x28] sm:$0xf]
        %v1704 = vld [vmem:[%s1697 + $0x30] sm:$0xf]
        %v1705 = vld [vmem:[%s1697 + $0x38] sm:$0xf]
        %v1706 = vld [vmem:[%s1697 + $0x40] sm:$0xf]
        %v1707 = vld [vmem:[%s1697 + $0x48] sm:$0xf]
        %v1708 = vld [vmem:[%s1697 + $0x50] sm:$0xf]
        %v1709 = vld [vmem:[%s1697 + $0x58] sm:$0xf]
        %v1710 = vld [vmem:[%s1697 + $0x60] sm:$0xf]
        %v1711 = vld [vmem:[%s1697 + $0x68] sm:$0xf]
        %v1712 = vld [vmem:[%s1697 + $0x70] sm:$0xf]
        %v1713 = vld [vmem:[%s1697 + $0x78] sm:$0xf]
        %v1714 = vld [vmem:[%s1697 + $0x80] sm:$0xf]
        %v1715 = vld [vmem:[%s1697 + $0x88] sm:$0xf]
        %v1716 = vld [vmem:[%s1697 + $0x90] sm:$0xf]
        %v1717 = vld [vmem:[%s1697 + $0x98] sm:$0xf]
        %v1718 = vld [vmem:[%s1697 + $0xa0] sm:$0xf]
        %v1719 = vld [vmem:[%s1697 + $0xa8] sm:$0xf]
        %v1720 = vld [vmem:[%s1697 + $0xb0] sm:$0xf]
        %v1721 = vld [vmem:[%s1697 + $0xb8] sm:$0xf]
        %v1722 = vld [vmem:[%s1697 + $0xc0] sm:$0xf]
        %v1723 = vld [vmem:[%s1697 + $0xc8] sm:$0xf]
        %v1724 = vld [vmem:[%s1697 + $0xd0] sm:$0xf]
        %v1725 = vld [vmem:[%s1697 + $0xd8] sm:$0xf]
        %v1726 = vld [vmem:[%s1697 + $0xe0] sm:$0xf]
        %v1727 = vld [vmem:[%s1697 + $0xe8] sm:$0xf]
        %v1728 = vld [vmem:[%s1697 + $0xf0] sm:$0xf]
        %v1729 = vld [vmem:[%s1697 + $0xf8] sm:$0xf]
        %v1794 = vunpack.c.l.b16 %v1698
        %v1795 = vunpack.c.l.b16 %v1699
        %v1796 = vunpack.c.l.b16 %v1700
        %v1797 = vunpack.c.l.b16 %v1701
        %v1798 = vunpack.c.l.b16 %v1702
        %v1799 = vunpack.c.l.b16 %v1703
        %v1800 = vunpack.c.l.b16 %v1704
        %v1801 = vunpack.c.l.b16 %v1705
        %v1802 = vunpack.c.l.b16 %v1706
        %v1803 = vunpack.c.l.b16 %v1707
        %v1804 = vunpack.c.l.b16 %v1708
        %v1805 = vunpack.c.l.b16 %v1709
        %v1806 = vunpack.c.l.b16 %v1710
        %v1807 = vunpack.c.l.b16 %v1711
        %v1808 = vunpack.c.l.b16 %v1712
        %v1809 = vunpack.c.l.b16 %v1713
        %v1810 = vunpack.c.l.b16 %v1714
        %v1811 = vunpack.c.l.b16 %v1715
        %v1812 = vunpack.c.l.b16 %v1716
        %v1813 = vunpack.c.l.b16 %v1717
        %v1814 = vunpack.c.l.b16 %v1718
        %v1815 = vunpack.c.l.b16 %v1719
        %v1816 = vunpack.c.l.b16 %v1720
        %v1817 = vunpack.c.l.b16 %v1721
        %v1818 = vunpack.c.l.b16 %v1722
        %v1819 = vunpack.c.l.b16 %v1723
        %v1820 = vunpack.c.l.b16 %v1724
        %v1821 = vunpack.c.l.b16 %v1725
        %v1822 = vunpack.c.l.b16 %v1726
        %v1823 = vunpack.c.l.b16 %v1727
        %v1824 = vunpack.c.l.b16 %v1728
        %v1825 = vunpack.c.l.b16 %v1729
        %v1826 = vpack.c.b16 %v1795, %v1794
        %v1827 = vpack.c.b16 %v1797, %v1796
        %v1828 = vpack.c.b16 %v1799, %v1798
        %v1829 = vpack.c.b16 %v1801, %v1800
        %v1830 = vpack.c.b16 %v1803, %v1802
        %v1831 = vpack.c.b16 %v1805, %v1804
        %v1832 = vpack.c.b16 %v1807, %v1806
        %v1833 = vpack.c.b16 %v1809, %v1808
        %v1834 = vpack.c.b16 %v1811, %v1810
        %v1835 = vpack.c.b16 %v1813, %v1812
        %v1836 = vpack.c.b16 %v1815, %v1814
        %v1837 = vpack.c.b16 %v1817, %v1816
        %v1838 = vpack.c.b16 %v1819, %v1818
        %v1839 = vpack.c.b16 %v1821, %v1820
        %v1840 = vpack.c.b16 %v1823, %v1822
        %v1841 = vpack.c.b16 %v1825, %v1824
        %1858 = vmatprep.subr.bf16.mxu0 0
        %1859 = vmatpush1.bf16.msra.mxu0 %v1826
        %1860 = vmatprep.subr.bf16.mxu0 0
        %1861 = vmatpush1.bf16.msra.mxu0 %v1827
        %1862 = vmatprep.subr.bf16.mxu0 0
        %1863 = vmatpush1.bf16.msra.mxu0 %v1828
        %1864 = vmatprep.subr.bf16.mxu0 0
        %1865 = vmatpush1.bf16.msra.mxu0 %v1829
        %1866 = vmatprep.subr.bf16.mxu0 0
        %1867 = vmatpush1.bf16.msra.mxu0 %v1830
        %1868 = vmatprep.subr.bf16.mxu0 0
        %1869 = vmatpush1.bf16.msra.mxu0 %v1831
        %1870 = vmatprep.subr.bf16.mxu0 0
        %1871 = vmatpush1.bf16.msra.mxu0 %v1832
        %1872 = vmatprep.subr.bf16.mxu0 0
        %1873 = vmatpush1.bf16.msra.mxu0 %v1833
        %1874 = vmatprep.subr.bf16.mxu0 0
        %1875 = vmatpush1.bf16.msra.mxu0 %v1834
        %1876 = vmatprep.subr.bf16.mxu0 0
        %1877 = vmatpush1.bf16.msra.mxu0 %v1835
        %1878 = vmatprep.subr.bf16.mxu0 0
        %1879 = vmatpush1.bf16.msra.mxu0 %v1836
        %1880 = vmatprep.subr.bf16.mxu0 0
        %1881 = vmatpush1.bf16.msra.mxu0 %v1837
        %1882 = vmatprep.subr.bf16.mxu0 0
        %1883 = vmatpush1.bf16.msra.mxu0 %v1838
        %1884 = vmatprep.subr.bf16.mxu0 0
        %1885 = vmatpush1.bf16.msra.mxu0 %v1839
        %1886 = vmatprep.subr.bf16.mxu0 0
        %1887 = vmatpush1.bf16.msra.mxu0 %v1840
        %1888 = vmatprep.subr.bf16.mxu0 0
        %1889 = vmatpush1.bf16.msra.mxu0 %v1841
        %1890 = vmatprep.mubr.bf16.mxu0 %v1100
        %1891 = vmatmul.mubr.bf16.gmra.mrb[0].mxu0 %v1099
        %v1892 = vpop.f32.mrb[0].mxu0
        %v1893 = vadd.f32 0.0, %v1892
        %v1894 = vpop.f32.mrb[0].mxu0
        %v1895 = vpop.f32.mrb[0].mxu0
        %v1896 = vadd.f32 0.0, %v1895
        %v1897 = vpop.f32.mrb[0].mxu0
        %1898 = vmatprep.mubr.bf16.mxu0 %v1102
        %1899 = vmatmul.mubr.bf16.gmra.mrb[0].mxu0 %v1101
        %v1900 = vpop.f32.mrb[0].mxu0
        %v1901 = vadd.f32 0.0, %v1900
        %v1902 = vpop.f32.mrb[0].mxu0
        %v1903 = vpop.f32.mrb[0].mxu0
        %v1904 = vadd.f32 0.0, %v1903
        %v1905 = vpop.f32.mrb[0].mxu0
        %1906 = vmatprep.mubr.bf16.mxu0 %v1104
        %1907 = vmatmul.mubr.bf16.gmra.mrb[0].mxu0 %v1103
        %v1908 = vpop.f32.mrb[0].mxu0
        %v1909 = vadd.f32 0.0, %v1908
        %v1910 = vpop.f32.mrb[0].mxu0
        %v1911 = vpop.f32.mrb[0].mxu0
        %v1912 = vadd.f32 0.0, %v1911
        %v1913 = vpop.f32.mrb[0].mxu0
        %1914 = vmatprep.mubr.bf16.mxu0 %v1106
        %1915 = vmatmul.mubr.bf16.gmra.mrb[0].mxu0 %v1105
        %v1916 = vpop.f32.mrb[0].mxu0
        %v1917 = vadd.f32 0.0, %v1916
        %v1918 = vpop.f32.mrb[0].mxu0
        %v1919 = vpop.f32.mrb[0].mxu0
        %v1920 = vadd.f32 0.0, %v1919
        %v1921 = vpop.f32.mrb[0].mxu0
        %1922 = vmatprep.mubr.bf16.mxu0 %v1108
        %1923 = vmatmul.mubr.bf16.gmra.mrb[0].mxu0 %v1107
        %v1924 = vpop.f32.mrb[0].mxu0
        %v1925 = vadd.f32 0.0, %v1924
        %v1926 = vpop.f32.mrb[0].mxu0
        %v1927 = vpop.f32.mrb[0].mxu0
        %v1928 = vadd.f32 0.0, %v1927
        %v1929 = vpop.f32.mrb[0].mxu0
        %1930 = vmatprep.mubr.bf16.mxu0 %v1110
        %1931 = vmatmul.mubr.bf16.gmra.mrb[0].mxu0 %v1109
        %v1932 = vpop.f32.mrb[0].mxu0
        %v1933 = vadd.f32 0.0, %v1932
        %v1934 = vpop.f32.mrb[0].mxu0
        %v1935 = vpop.f32.mrb[0].mxu0
        %v1936 = vadd.f32 0.0, %v1935
        %v1937 = vpop.f32.mrb[0].mxu0
        %1938 = vmatprep.mubr.bf16.mxu0 %v1112
        %1939 = vmatmul.mubr.bf16.gmra.mrb[0].mxu0 %v1111
        %v1940 = vpop.f32.mrb[0].mxu0
        %v1941 = vadd.f32 0.0, %v1940
        %v1942 = vpop.f32.mrb[0].mxu0
        %v1943 = vpop.f32.mrb[0].mxu0
        %v1944 = vadd.f32 0.0, %v1943
        %v1945 = vpop.f32.mrb[0].mxu0
        %1946 = vmatprep.mubr.bf16.mxu0 %v1114
        %1947 = vmatmul.mubr.bf16.gmra.mrb[0].mxu0 %v1113
        %v1948 = vpop.f32.mrb[0].mxu0
        %v1949 = vadd.f32 0.0, %v1948
        %v1950 = vpop.f32.mrb[0].mxu0
        %v1951 = vpop.f32.mrb[0].mxu0
        %v1952 = vadd.f32 0.0, %v1951
        %v1953 = vpop.f32.mrb[0].mxu0
        %1954 = vmatprep.mubr.bf16.mxu0 %v1116
        %1955 = vmatmul.mubr.bf16.gmra.mrb[0].mxu0 %v1115
        %v1956 = vpop.f32.mrb[0].mxu0
        %v1957 = vadd.f32 0.0, %v1956
        %v1958 = vpop.f32.mrb[0].mxu0
        %v1959 = vpop.f32.mrb[0].mxu0
        %v1960 = vadd.f32 0.0, %v1959
        %v1961 = vpop.f32.mrb[0].mxu0
        %1962 = vmatprep.mubr.bf16.mxu0 %v1118
        %1963 = vmatmul.mubr.bf16.gmra.mrb[0].mxu0 %v1117
        %v1964 = vpop.f32.mrb[0].mxu0
        %v1965 = vadd.f32 0.0, %v1964
        %v1966 = vpop.f32.mrb[0].mxu0
        %v1967 = vpop.f32.mrb[0].mxu0
        %v1968 = vadd.f32 0.0, %v1967
        %v1969 = vpop.f32.mrb[0].mxu0
        %1970 = vmatprep.mubr.bf16.mxu0 %v1120
        %1971 = vmatmul.mubr.bf16.gmra.mrb[0].mxu0 %v1119
        %v1972 = vpop.f32.mrb[0].mxu0
        %v1973 = vadd.f32 0.0, %v1972
        %v1974 = vpop.f32.mrb[0].mxu0
        %v1975 = vpop.f32.mrb[0].mxu0
        %v1976 = vadd.f32 0.0, %v1975
        %v1977 = vpop.f32.mrb[0].mxu0
        %1978 = vmatprep.mubr.bf16.mxu0 %v1122
        %1979 = vmatmul.mubr.bf16.gmra.mrb[0].mxu0 %v1121
        %v1980 = vpop.f32.mrb[0].mxu0
        %v1981 = vadd.f32 0.0, %v1980
        %v1982 = vpop.f32.mrb[0].mxu0
        %v1983 = vpop.f32.mrb[0].mxu0
        %v1984 = vadd.f32 0.0, %v1983
        %v1985 = vpop.f32.mrb[0].mxu0
        %1986 = vmatprep.mubr.bf16.mxu0 %v1124
        %1987 = vmatmul.mubr.bf16.gmra.mrb[0].mxu0 %v1123
        %v1988 = vpop.f32.mrb[0].mxu0
        %v1989 = vadd.f32 0.0, %v1988
        %v1990 = vpop.f32.mrb[0].mxu0
        %v1991 = vpop.f32.mrb[0].mxu0
        %v1992 = vadd.f32 0.0, %v1991
        %v1993 = vpop.f32.mrb[0].mxu0
        %1994 = vmatprep.mubr.bf16.mxu0 %v1126
        %1995 = vmatmul.mubr.bf16.gmra.mrb[0].mxu0 %v1125
        %v1996 = vpop.f32.mrb[0].mxu0
        %v1997 = vadd.f32 0.0, %v1996
        %v1998 = vpop.f32.mrb[0].mxu0
        %v1999 = vpop.f32.mrb[0].mxu0
        %v2000 = vadd.f32 0.0, %v1999
        %v2001 = vpop.f32.mrb[0].mxu0
        %2002 = vmatprep.mubr.bf16.mxu0 %v1128
        %2003 = vmatmul.mubr.bf16.gmra.mrb[0].mxu0 %v1127
        %v2004 = vpop.f32.mrb[0].mxu0
        %v2005 = vadd.f32 0.0, %v2004
        %v2006 = vpop.f32.mrb[0].mxu0
        %v2007 = vpop.f32.mrb[0].mxu0
        %v2008 = vadd.f32 0.0, %v2007
        %v2009 = vpop.f32.mrb[0].mxu0
        %2010 = vmatprep.mubr.bf16.mxu0 %v1130
        %2011 = vmatmul.mubr.bf16.gmra.mrb[0].mxu0 %v1129
        %v2012 = vpop.f32.mrb[0].mxu0
        %v2013 = vadd.f32 0.0, %v2012
        %v2014 = vpop.f32.mrb[0].mxu0
        %v2015 = vpop.f32.mrb[0].mxu0
        %v2016 = vadd.f32 0.0, %v2015
        %v2017 = vpop.f32.mrb[0].mxu0
        %2018 = vdwg.mxu0
        %v2051 = vunpack.c.l.b16 %v1665
        %v2052 = vunpack.c.l.b16 %v1666
        %v2053 = vunpack.c.l.b16 %v1667
        %v2054 = vunpack.c.l.b16 %v1668
        %v2055 = vunpack.c.l.b16 %v1669
        %v2056 = vunpack.c.l.b16 %v1670
        %v2057 = vunpack.c.l.b16 %v1671
        %v2058 = vunpack.c.l.b16 %v1672
        %v2059 = vunpack.c.l.b16 %v1673
        %v2060 = vunpack.c.l.b16 %v1674
        %v2061 = vunpack.c.l.b16 %v1675
        %v2062 = vunpack.c.l.b16 %v1676
        %v2063 = vunpack.c.l.b16 %v1677
        %v2064 = vunpack.c.l.b16 %v1678
        %v2065 = vunpack.c.l.b16 %v1679
        %v2066 = vunpack.c.l.b16 %v1680
        %v2067 = vunpack.c.l.b16 %v1681
        %v2068 = vunpack.c.l.b16 %v1682
        %v2069 = vunpack.c.l.b16 %v1683
        %v2070 = vunpack.c.l.b16 %v1684
        %v2071 = vunpack.c.l.b16 %v1685
        %v2072 = vunpack.c.l.b16 %v1686
        %v2073 = vunpack.c.l.b16 %v1687
        %v2074 = vunpack.c.l.b16 %v1688
        %v2075 = vunpack.c.l.b16 %v1689
        %v2076 = vunpack.c.l.b16 %v1690
        %v2077 = vunpack.c.l.b16 %v1691
        %v2078 = vunpack.c.l.b16 %v1692
        %v2079 = vunpack.c.l.b16 %v1693
        %v2080 = vunpack.c.l.b16 %v1694
        %v2081 = vunpack.c.l.b16 %v1695
        %v2082 = vunpack.c.l.b16 %v1696
        %v2083 = vpack.c.b16 %v2052, %v2051
        %v2084 = vpack.c.b16 %v2054, %v2053
        %v2085 = vpack.c.b16 %v2056, %v2055
        %v2086 = vpack.c.b16 %v2058, %v2057
        %v2087 = vpack.c.b16 %v2060, %v2059
        %v2088 = vpack.c.b16 %v2062, %v2061
        %v2089 = vpack.c.b16 %v2064, %v2063
        %v2090 = vpack.c.b16 %v2066, %v2065
        %v2091 = vpack.c.b16 %v2068, %v2067
        %v2092 = vpack.c.b16 %v2070, %v2069
        %v2093 = vpack.c.b16 %v2072, %v2071
        %v2094 = vpack.c.b16 %v2074, %v2073
        %v2095 = vpack.c.b16 %v2076, %v2075
        %v2096 = vpack.c.b16 %v2078, %v2077
        %v2097 = vpack.c.b16 %v2080, %v2079
        %v2098 = vpack.c.b16 %v2082, %v2081
        %2115 = vmatprep.subr.bf16.mxu0 0
        %2116 = vmatpush1.bf16.msra.mxu0 %v2083
        %2117 = vmatprep.subr.bf16.mxu0 0
        %2118 = vmatpush1.bf16.msra.mxu0 %v2084
        %2119 = vmatprep.subr.bf16.mxu0 0
        %2120 = vmatpush1.bf16.msra.mxu0 %v2085
        %2121 = vmatprep.subr.bf16.mxu0 0
        %2122 = vmatpush1.bf16.msra.mxu0 %v2086
        %2123 = vmatprep.subr.bf16.mxu0 0
        %2124 = vmatpush1.bf16.msra.mxu0 %v2087
        %2125 = vmatprep.subr.bf16.mxu0 0
        %2126 = vmatpush1.bf16.msra.mxu0 %v2088
        %2127 = vmatprep.subr.bf16.mxu0 0
        %2128 = vmatpush1.bf16.msra.mxu0 %v2089
        %2129 = vmatprep.subr.bf16.mxu0 0
        %2130 = vmatpush1.bf16.msra.mxu0 %v2090
        %2131 = vmatprep.subr.bf16.mxu0 0
        %2132 = vmatpush1.bf16.msra.mxu0 %v2091
        %2133 = vmatprep.subr.bf16.mxu0 0
        %2134 = vmatpush1.bf16.msra.mxu0 %v2092
        %2135 = vmatprep.subr.bf16.mxu0 0
        %2136 = vmatpush1.bf16.msra.mxu0 %v2093
        %2137 = vmatprep.subr.bf16.mxu0 0
        %2138 = vmatpush1.bf16.msra.mxu0 %v2094
        %2139 = vmatprep.subr.bf16.mxu0 0
        %2140 = vmatpush1.bf16.msra.mxu0 %v2095
        %2141 = vmatprep.subr.bf16.mxu0 0
        %2142 = vmatpush1.bf16.msra.mxu0 %v2096
        %2143 = vmatprep.subr.bf16.mxu0 0
        %2144 = vmatpush1.bf16.msra.mxu0 %v2097
        %2145 = vmatprep.subr.bf16.mxu0 0
        %2146 = vmatpush1.bf16.msra.mxu0 %v2098
        %2147 = vmatprep.mubr.bf16.mxu0 %v1501
        %2148 = vmatmul.mubr.bf16.gmra.mrb[0].mxu0 %v1500
        %v2149 = vpop.f32.mrb[0].mxu0
        %v2150 = vadd.f32 %v1893, %v2149
        %v2151 = vpop.f32.mrb[0].mxu0
        %v2152 = vpop.f32.mrb[0].mxu0
        %v2153 = vadd.f32 %v1896, %v2152
        %v2154 = vpop.f32.mrb[0].mxu0
        %2155 = vmatprep.mubr.bf16.mxu0 %v1169
        %2156 = vmatmul.mubr.bf16.gmra.mrb[0].mxu0 %v1161
        %v2157 = vpop.f32.mrb[0].mxu0
        %v2158 = vadd.f32 %v1901, %v2157
        %v2159 = vpop.f32.mrb[0].mxu0
        %v2160 = vpop.f32.mrb[0].mxu0
        %v2161 = vadd.f32 %v1904, %v2160
        %v2162 = vpop.f32.mrb[0].mxu0
        %2163 = vmatprep.mubr.bf16.mxu0 %v1185
        %2164 = vmatmul.mubr.bf16.gmra.mrb[0].mxu0 %v1177
        %v2165 = vpop.f32.mrb[0].mxu0
        %v2166 = vadd.f32 %v1909, %v2165
        %v2167 = vpop.f32.mrb[0].mxu0
        %v2168 = vpop.f32.mrb[0].mxu0
        %v2169 = vadd.f32 %v1912, %v2168
        %v2170 = vpop.f32.mrb[0].mxu0
        %2171 = vmatprep.mubr.bf16.mxu0 %v1201
        %2172 = vmatmul.mubr.bf16.gmra.mrb[0].mxu0 %v1193
        %v2173 = vpop.f32.mrb[0].mxu0
        %v2174 = vadd.f32 %v1917, %v2173
        %v2175 = vpop.f32.mrb[0].mxu0
        %v2176 = vpop.f32.mrb[0].mxu0
        %v2177 = vadd.f32 %v1920, %v2176
        %v2178 = vpop.f32.mrb[0].mxu0
        %2179 = vmatprep.mubr.bf16.mxu0 %v1217
        %2180 = vmatmul.mubr.bf16.gmra.mrb[0].mxu0 %v1209
        %v2181 = vpop.f32.mrb[0].mxu0
        %v2182 = vadd.f32 %v1925, %v2181
        %v2183 = vpop.f32.mrb[0].mxu0
        %v2184 = vpop.f32.mrb[0].mxu0
        %v2185 = vadd.f32 %v1928, %v2184
        %v2186 = vpop.f32.mrb[0].mxu0
        %2187 = vmatprep.mubr.bf16.mxu0 %v1233
        %2188 = vmatmul.mubr.bf16.gmra.mrb[0].mxu0 %v1225
        %v2189 = vpop.f32.mrb[0].mxu0
        %v2190 = vadd.f32 %v1933, %v2189
        %v2191 = vpop.f32.mrb[0].mxu0
        %v2192 = vpop.f32.mrb[0].mxu0
        %v2193 = vadd.f32 %v1936, %v2192
        %v2194 = vpop.f32.mrb[0].mxu0
        %2195 = vmatprep.mubr.bf16.mxu0 %v1249
        %2196 = vmatmul.mubr.bf16.gmra.mrb[0].mxu0 %v1241
        %v2197 = vpop.f32.mrb[0].mxu0
        %v2198 = vadd.f32 %v1941, %v2197
        %v2199 = vpop.f32.mrb[0].mxu0
        %v2200 = vpop.f32.mrb[0].mxu0
        %v2201 = vadd.f32 %v1944, %v2200
        %v2202 = vpop.f32.mrb[0].mxu0
        %2203 = vmatprep.mubr.bf16.mxu0 %v1265
        %2204 = vmatmul.mubr.bf16.gmra.mrb[0].mxu0 %v1257
        %v2205 = vpop.f32.mrb[0].mxu0
        %v2206 = vadd.f32 %v1949, %v2205
        %v2207 = vpop.f32.mrb[0].mxu0
        %v2208 = vpop.f32.mrb[0].mxu0
        %v2209 = vadd.f32 %v1952, %v2208
        %v2210 = vpop.f32.mrb[0].mxu0
        %2211 = vmatprep.mubr.bf16.mxu0 %v1281
        %2212 = vmatmul.mubr.bf16.gmra.mrb[0].mxu0 %v1273
        %v2213 = vpop.f32.mrb[0].mxu0
        %v2214 = vadd.f32 %v1957, %v2213
        %v2215 = vpop.f32.mrb[0].mxu0
        %v2216 = vpop.f32.mrb[0].mxu0
        %v2217 = vadd.f32 %v1960, %v2216
        %v2218 = vpop.f32.mrb[0].mxu0
        %2219 = vmatprep.mubr.bf16.mxu0 %v1297
        %2220 = vmatmul.mubr.bf16.gmra.mrb[0].mxu0 %v1289
        %v2221 = vpop.f32.mrb[0].mxu0
        %v2222 = vadd.f32 %v1965, %v2221
        %v2223 = vpop.f32.mrb[0].mxu0
        %v2224 = vpop.f32.mrb[0].mxu0
        %v2225 = vadd.f32 %v1968, %v2224
        %v2226 = vpop.f32.mrb[0].mxu0
        %2227 = vmatprep.mubr.bf16.mxu0 %v1313
        %2228 = vmatmul.mubr.bf16.gmra.mrb[0].mxu0 %v1305
        %v2229 = vpop.f32.mrb[0].mxu0
        %v2230 = vadd.f32 %v1973, %v2229
        %v2231 = vpop.f32.mrb[0].mxu0
        %v2232 = vpop.f32.mrb[0].mxu0
        %v2233 = vadd.f32 %v1976, %v2232
        %v2234 = vpop.f32.mrb[0].mxu0
        %2235 = vmatprep.mubr.bf16.mxu0 %v1329
        %2236 = vmatmul.mubr.bf16.gmra.mrb[0].mxu0 %v1321
        %v2237 = vpop.f32.mrb[0].mxu0
        %v2238 = vadd.f32 %v1981, %v2237
        %v2239 = vpop.f32.mrb[0].mxu0
        %v2240 = vpop.f32.mrb[0].mxu0
        %v2241 = vadd.f32 %v1984, %v2240
        %v2242 = vpop.f32.mrb[0].mxu0
        %2243 = vmatprep.mubr.bf16.mxu0 %v1345
        %2244 = vmatmul.mubr.bf16.gmra.mrb[0].mxu0 %v1337
        %v2245 = vpop.f32.mrb[0].mxu0
        %v2246 = vadd.f32 %v1989, %v2245
        %v2247 = vpop.f32.mrb[0].mxu0
        %v2248 = vpop.f32.mrb[0].mxu0
        %v2249 = vadd.f32 %v1992, %v2248
        %v2250 = vpop.f32.mrb[0].mxu0
        %2251 = vmatprep.mubr.bf16.mxu0 %v1361
        %2252 = vmatmul.mubr.bf16.gmra.mrb[0].mxu0 %v1353
        %v2253 = vpop.f32.mrb[0].mxu0
        %v2254 = vadd.f32 %v1997, %v2253
        %v2255 = vpop.f32.mrb[0].mxu0
        %v2256 = vpop.f32.mrb[0].mxu0
        %v2257 = vadd.f32 %v2000, %v2256
        %v2258 = vpop.f32.mrb[0].mxu0
        %2259 = vmatprep.mubr.bf16.mxu0 %v1377
        %2260 = vmatmul.mubr.bf16.gmra.mrb[0].mxu0 %v1369
        %v2261 = vpop.f32.mrb[0].mxu0
        %v2262 = vadd.f32 %v2005, %v2261
        %v2263 = vpop.f32.mrb[0].mxu0
        %v2264 = vpop.f32.mrb[0].mxu0
        %v2265 = vadd.f32 %v2008, %v2264
        %v2266 = vpop.f32.mrb[0].mxu0
        %2267 = vmatprep.mubr.bf16.mxu0 %v1393
        %2268 = vmatmul.mubr.bf16.gmra.mrb[0].mxu0 %v1385
        %v2269 = vpop.f32.mrb[0].mxu0
        %v2270 = vadd.f32 %v2013, %v2269
        %v2271 = vpop.f32.mrb[0].mxu0
        %v2272 = vpop.f32.mrb[0].mxu0
        %v2273 = vadd.f32 %v2016, %v2272
        %v2274 = vpop.f32.mrb[0].mxu0
        %2275 = vdwg.mxu0
        %s2276 = scalar_lea.vmem [#allocation4], 512
        %v2277 = vld [vmem:[%s2276] sm:$0xf]
        %v2278 = vld [vmem:[%s2276 + $0x8] sm:$0xf]
        %v2279 = vld [vmem:[%s2276 + $0x10] sm:$0xf]
        %v2280 = vld [vmem:[%s2276 + $0x18] sm:$0xf]
        %v2281 = vld [vmem:[%s2276 + $0x20] sm:$0xf]
        %v2282 = vld [vmem:[%s2276 + $0x28] sm:$0xf]
        %v2283 = vld [vmem:[%s2276 + $0x30] sm:$0xf]
        %v2284 = vld [vmem:[%s2276 + $0x38] sm:$0xf]
        %v2285 = vld [vmem:[%s2276 + $0x40] sm:$0xf]
        %v2286 = vld [vmem:[%s2276 + $0x48] sm:$0xf]
        %v2287 = vld [vmem:[%s2276 + $0x50] sm:$0xf]
        %v2288 = vld [vmem:[%s2276 + $0x58] sm:$0xf]
        %v2289 = vld [vmem:[%s2276 + $0x60] sm:$0xf]
        %v2290 = vld [vmem:[%s2276 + $0x68] sm:$0xf]
        %v2291 = vld [vmem:[%s2276 + $0x70] sm:$0xf]
        %v2292 = vld [vmem:[%s2276 + $0x78] sm:$0xf]
        %v2293 = vld [vmem:[%s2276 + $0x80] sm:$0xf]
        %v2294 = vld [vmem:[%s2276 + $0x88] sm:$0xf]
        %v2295 = vld [vmem:[%s2276 + $0x90] sm:$0xf]
        %v2296 = vld [vmem:[%s2276 + $0x98] sm:$0xf]
        %v2297 = vld [vmem:[%s2276 + $0xa0] sm:$0xf]
        %v2298 = vld [vmem:[%s2276 + $0xa8] sm:$0xf]
        %v2299 = vld [vmem:[%s2276 + $0xb0] sm:$0xf]
        %v2300 = vld [vmem:[%s2276 + $0xb8] sm:$0xf]
        %v2301 = vld [vmem:[%s2276 + $0xc0] sm:$0xf]
        %v2302 = vld [vmem:[%s2276 + $0xc8] sm:$0xf]
        %v2303 = vld [vmem:[%s2276 + $0xd0] sm:$0xf]
        %v2304 = vld [vmem:[%s2276 + $0xd8] sm:$0xf]
        %v2305 = vld [vmem:[%s2276 + $0xe0] sm:$0xf]
        %v2306 = vld [vmem:[%s2276 + $0xe8] sm:$0xf]
        %v2307 = vld [vmem:[%s2276 + $0xf0] sm:$0xf]
        %v2308 = vld [vmem:[%s2276 + $0xf8] sm:$0xf]
        %v2341 = vunpack.c.l.b16 %v2277
        %v2342 = vunpack.c.l.b16 %v2278
        %v2343 = vunpack.c.l.b16 %v2279
        %v2344 = vunpack.c.l.b16 %v2280
        %v2345 = vunpack.c.l.b16 %v2281
        %v2346 = vunpack.c.l.b16 %v2282
        %v2347 = vunpack.c.l.b16 %v2283
        %v2348 = vunpack.c.l.b16 %v2284
        %v2349 = vunpack.c.l.b16 %v2285
        %v2350 = vunpack.c.l.b16 %v2286
        %v2351 = vunpack.c.l.b16 %v2287
        %v2352 = vunpack.c.l.b16 %v2288
        %v2353 = vunpack.c.l.b16 %v2289
        %v2354 = vunpack.c.l.b16 %v2290
        %v2355 = vunpack.c.l.b16 %v2291
        %v2356 = vunpack.c.l.b16 %v2292
        %v2357 = vunpack.c.l.b16 %v2293
        %v2358 = vunpack.c.l.b16 %v2294
        %v2359 = vunpack.c.l.b16 %v2295
        %v2360 = vunpack.c.l.b16 %v2296
        %v2361 = vunpack.c.l.b16 %v2297
        %v2362 = vunpack.c.l.b16 %v2298
        %v2363 = vunpack.c.l.b16 %v2299
        %v2364 = vunpack.c.l.b16 %v2300
        %v2365 = vunpack.c.l.b16 %v2301
        %v2366 = vunpack.c.l.b16 %v2302
        %v2367 = vunpack.c.l.b16 %v2303
        %v2368 = vunpack.c.l.b16 %v2304
        %v2369 = vunpack.c.l.b16 %v2305
        %v2370 = vunpack.c.l.b16 %v2306
        %v2371 = vunpack.c.l.b16 %v2307
        %v2372 = vunpack.c.l.b16 %v2308
        %v2373 = vpack.c.b16 %v2342, %v2341
        %v2374 = vpack.c.b16 %v2344, %v2343
        %v2375 = vpack.c.b16 %v2346, %v2345
        %v2376 = vpack.c.b16 %v2348, %v2347
        %v2377 = vpack.c.b16 %v2350, %v2349
        %v2378 = vpack.c.b16 %v2352, %v2351
        %v2379 = vpack.c.b16 %v2354, %v2353
        %v2380 = vpack.c.b16 %v2356, %v2355
        %v2381 = vpack.c.b16 %v2358, %v2357
        %v2382 = vpack.c.b16 %v2360, %v2359
        %v2383 = vpack.c.b16 %v2362, %v2361
        %v2384 = vpack.c.b16 %v2364, %v2363
        %v2385 = vpack.c.b16 %v2366, %v2365
        %v2386 = vpack.c.b16 %v2368, %v2367
        %v2387 = vpack.c.b16 %v2370, %v2369
        %v2388 = vpack.c.b16 %v2372, %v2371
        %2405 = vmatprep.subr.bf16.mxu0 0
        %2406 = vmatpush1.bf16.msra.mxu0 %v2373
        %2407 = vmatprep.subr.bf16.mxu0 0
        %2408 = vmatpush1.bf16.msra.mxu0 %v2374
        %2409 = vmatprep.subr.bf16.mxu0 0
        %2410 = vmatpush1.bf16.msra.mxu0 %v2375
        %2411 = vmatprep.subr.bf16.mxu0 0
        %2412 = vmatpush1.bf16.msra.mxu0 %v2376
        %2413 = vmatprep.subr.bf16.mxu0 0
        %2414 = vmatpush1.bf16.msra.mxu0 %v2377
        %2415 = vmatprep.subr.bf16.mxu0 0
        %2416 = vmatpush1.bf16.msra.mxu0 %v2378
        %2417 = vmatprep.subr.bf16.mxu0 0
        %2418 = vmatpush1.bf16.msra.mxu0 %v2379
        %2419 = vmatprep.subr.bf16.mxu0 0
        %2420 = vmatpush1.bf16.msra.mxu0 %v2380
        %2421 = vmatprep.subr.bf16.mxu0 0
        %2422 = vmatpush1.bf16.msra.mxu0 %v2381
        %2423 = vmatprep.subr.bf16.mxu0 0
        %2424 = vmatpush1.bf16.msra.mxu0 %v2382
        %2425 = vmatprep.subr.bf16.mxu0 0
        %2426 = vmatpush1.bf16.msra.mxu0 %v2383
        %2427 = vmatprep.subr.bf16.mxu0 0
        %2428 = vmatpush1.bf16.msra.mxu0 %v2384
        %2429 = vmatprep.subr.bf16.mxu0 0
        %2430 = vmatpush1.bf16.msra.mxu0 %v2385
        %2431 = vmatprep.subr.bf16.mxu0 0
        %2432 = vmatpush1.bf16.msra.mxu0 %v2386
        %2433 = vmatprep.subr.bf16.mxu0 0
        %2434 = vmatpush1.bf16.msra.mxu0 %v2387
        %2435 = vmatprep.subr.bf16.mxu0 0
        %2436 = vmatpush1.bf16.msra.mxu0 %v2388
        %2437 = vmatprep.mubr.bf16.mxu0 %v1510
        %2438 = vmatmul.mubr.bf16.gmra.mrb[0].mxu0 %v1506
        %v2439 = vpop.f32.mrb[0].mxu0
        %v2440 = vadd.f32 0.0, %v2439
        %v2441 = vpop.f32.mrb[0].mxu0
        %v2442 = vpop.f32.mrb[0].mxu0
        %v2443 = vadd.f32 0.0, %v2442
        %v2444 = vpop.f32.mrb[0].mxu0
        %2445 = vmatprep.mubr.bf16.mxu0 %v1516
        %2446 = vmatmul.mubr.bf16.gmra.mrb[0].mxu0 %v1513
        %v2447 = vpop.f32.mrb[0].mxu0
        %v2448 = vadd.f32 0.0, %v2447
        %v2449 = vpop.f32.mrb[0].mxu0
        %v2450 = vpop.f32.mrb[0].mxu0
        %v2451 = vadd.f32 0.0, %v2450
        %v2452 = vpop.f32.mrb[0].mxu0
        %2453 = vmatprep.mubr.bf16.mxu0 %v1522
        %2454 = vmatmul.mubr.bf16.gmra.mrb[0].mxu0 %v1519
        %v2455 = vpop.f32.mrb[0].mxu0
        %v2456 = vadd.f32 0.0, %v2455
        %v2457 = vpop.f32.mrb[0].mxu0
        %v2458 = vpop.f32.mrb[0].mxu0
        %v2459 = vadd.f32 0.0, %v2458
        %v2460 = vpop.f32.mrb[0].mxu0
        %2461 = vmatprep.mubr.bf16.mxu0 %v1528
        %2462 = vmatmul.mubr.bf16.gmra.mrb[0].mxu0 %v1525
        %v2463 = vpop.f32.mrb[0].mxu0
        %v2464 = vadd.f32 0.0, %v2463
        %v2465 = vpop.f32.mrb[0].mxu0
        %v2466 = vpop.f32.mrb[0].mxu0
        %v2467 = vadd.f32 0.0, %v2466
        %v2468 = vpop.f32.mrb[0].mxu0
        %2469 = vmatprep.mubr.bf16.mxu0 %v1534
        %2470 = vmatmul.mubr.bf16.gmra.mrb[0].mxu0 %v1531
        %v2471 = vpop.f32.mrb[0].mxu0
        %v2472 = vadd.f32 0.0, %v2471
        %v2473 = vpop.f32.mrb[0].mxu0
        %v2474 = vpop.f32.mrb[0].mxu0
        %v2475 = vadd.f32 0.0, %v2474
        %v2476 = vpop.f32.mrb[0].mxu0
        %2477 = vmatprep.mubr.bf16.mxu0 %v1540
        %2478 = vmatmul.mubr.bf16.gmra.mrb[0].mxu0 %v1537
        %v2479 = vpop.f32.mrb[0].mxu0
        %v2480 = vadd.f32 0.0, %v2479
        %v2481 = vpop.f32.mrb[0].mxu0
        %v2482 = vpop.f32.mrb[0].mxu0
        %v2483 = vadd.f32 0.0, %v2482
        %v2484 = vpop.f32.mrb[0].mxu0
        %2485 = vmatprep.mubr.bf16.mxu0 %v1546
        %2486 = vmatmul.mubr.bf16.gmra.mrb[0].mxu0 %v1543
        %v2487 = vpop.f32.mrb[0].mxu0
        %v2488 = vadd.f32 0.0, %v2487
        %v2489 = vpop.f32.mrb[0].mxu0
        %v2490 = vpop.f32.mrb[0].mxu0
        %v2491 = vadd.f32 0.0, %v2490
        %v2492 = vpop.f32.mrb[0].mxu0
        %2493 = vmatprep.mubr.bf16.mxu0 %v1552
        %2494 = vmatmul.mubr.bf16.gmra.mrb[0].mxu0 %v1549
        %v2495 = vpop.f32.mrb[0].mxu0
        %v2496 = vadd.f32 0.0, %v2495
        %v2497 = vpop.f32.mrb[0].mxu0
        %v2498 = vpop.f32.mrb[0].mxu0
        %v2499 = vadd.f32 0.0, %v2498
        %v2500 = vpop.f32.mrb[0].mxu0
        %2501 = vmatprep.mubr.bf16.mxu0 %v1558
        %2502 = vmatmul.mubr.bf16.gmra.mrb[0].mxu0 %v1555
        %v2503 = vpop.f32.mrb[0].mxu0
        %v2504 = vadd.f32 0.0, %v2503
        %v2505 = vpop.f32.mrb[0].mxu0
        %v2506 = vpop.f32.mrb[0].mxu0
        %v2507 = vadd.f32 0.0, %v2506
        %v2508 = vpop.f32.mrb[0].mxu0
        %2509 = vmatprep.mubr.bf16.mxu0 %v1564
        %2510 = vmatmul.mubr.bf16.gmra.mrb[0].mxu0 %v1561
        %v2511 = vpop.f32.mrb[0].mxu0
        %v2512 = vadd.f32 0.0, %v2511
        %v2513 = vpop.f32.mrb[0].mxu0
        %v2514 = vpop.f32.mrb[0].mxu0
        %v2515 = vadd.f32 0.0, %v2514
        %v2516 = vpop.f32.mrb[0].mxu0
        %2517 = vmatprep.mubr.bf16.mxu0 %v1570
        %2518 = vmatmul.mubr.bf16.gmra.mrb[0].mxu0 %v1567
        %v2519 = vpop.f32.mrb[0].mxu0
        %v2520 = vadd.f32 0.0, %v2519
        %v2521 = vpop.f32.mrb[0].mxu0
        %v2522 = vpop.f32.mrb[0].mxu0
        %v2523 = vadd.f32 0.0, %v2522
        %v2524 = vpop.f32.mrb[0].mxu0
        %2525 = vmatprep.mubr.bf16.mxu0 %v1576
        %2526 = vmatmul.mubr.bf16.gmra.mrb[0].mxu0 %v1573
        %v2527 = vpop.f32.mrb[0].mxu0
        %v2528 = vadd.f32 0.0, %v2527
        %v2529 = vpop.f32.mrb[0].mxu0
        %v2530 = vpop.f32.mrb[0].mxu0
        %v2531 = vadd.f32 0.0, %v2530
        %v2532 = vpop.f32.mrb[0].mxu0
        %2533 = vmatprep.mubr.bf16.mxu0 %v1582
        %2534 = vmatmul.mubr.bf16.gmra.mrb[0].mxu0 %v1579
        %v2535 = vpop.f32.mrb[0].mxu0
        %v2536 = vadd.f32 0.0, %v2535
        %v2537 = vpop.f32.mrb[0].mxu0
        %v2538 = vpop.f32.mrb[0].mxu0
        %v2539 = vadd.f32 0.0, %v2538
        %v2540 = vpop.f32.mrb[0].mxu0
        %2541 = vmatprep.mubr.bf16.mxu0 %v1588
        %2542 = vmatmul.mubr.bf16.gmra.mrb[0].mxu0 %v1585
        %v2543 = vpop.f32.mrb[0].mxu0
        %v2544 = vadd.f32 0.0, %v2543
        %v2545 = vpop.f32.mrb[0].mxu0
        %v2546 = vpop.f32.mrb[0].mxu0
        %v2547 = vadd.f32 0.0, %v2546
        %v2548 = vpop.f32.mrb[0].mxu0
        %2549 = vmatprep.mubr.bf16.mxu0 %v1594
        %2550 = vmatmul.mubr.bf16.gmra.mrb[0].mxu0 %v1591
        %v2551 = vpop.f32.mrb[0].mxu0
        %v2552 = vadd.f32 0.0, %v2551
        %v2553 = vpop.f32.mrb[0].mxu0
        %v2554 = vpop.f32.mrb[0].mxu0
        %v2555 = vadd.f32 0.0, %v2554
        %v2556 = vpop.f32.mrb[0].mxu0
        %2557 = vmatprep.mubr.bf16.mxu0 %v1600
        %2558 = vmatmul.mubr.bf16.gmra.mrb[0].mxu0 %v1597
        %v2559 = vpop.f32.mrb[0].mxu0
        %v2560 = vadd.f32 0.0, %v2559
        %v2561 = vpop.f32.mrb[0].mxu0
        %v2562 = vpop.f32.mrb[0].mxu0
        %v2563 = vadd.f32 0.0, %v2562
        %v2564 = vpop.f32.mrb[0].mxu0
        %2565 = vdwg.mxu0
        %v2566 = vadd.f32 %v2150, %v2440
        %v2567 = vadd.f32 %v2153, %v2443
        %v2568 = vadd.f32 %v2158, %v2448
        %v2569 = vadd.f32 %v2161, %v2451
        %v2570 = vadd.f32 %v2166, %v2456
        %v2571 = vadd.f32 %v2169, %v2459
        %v2572 = vadd.f32 %v2174, %v2464
        %v2573 = vadd.f32 %v2177, %v2467
        %v2574 = vadd.f32 %v2182, %v2472
        %v2575 = vadd.f32 %v2185, %v2475
        %v2576 = vadd.f32 %v2190, %v2480
        %v2577 = vadd.f32 %v2193, %v2483
        %v2578 = vadd.f32 %v2198, %v2488
        %v2579 = vadd.f32 %v2201, %v2491
        %v2580 = vadd.f32 %v2206, %v2496
        %v2581 = vadd.f32 %v2209, %v2499
        %v2582 = vadd.f32 %v2214, %v2504
        %v2583 = vadd.f32 %v2217, %v2507
        %v2584 = vadd.f32 %v2222, %v2512
        %v2585 = vadd.f32 %v2225, %v2515
        %v2586 = vadd.f32 %v2230, %v2520
        %v2587 = vadd.f32 %v2233, %v2523
        %v2588 = vadd.f32 %v2238, %v2528
        %v2589 = vadd.f32 %v2241, %v2531
        %v2590 = vadd.f32 %v2246, %v2536
        %v2591 = vadd.f32 %v2249, %v2539
        %v2592 = vadd.f32 %v2254, %v2544
        %v2593 = vadd.f32 %v2257, %v2547
        %v2594 = vadd.f32 %v2262, %v2552
        %v2595 = vadd.f32 %v2265, %v2555
        %v2596 = vadd.f32 %v2270, %v2560
        %v2597 = vadd.f32 %v2273, %v2563
        %s2598 = scalar_lea.vmem [#allocation4], 768
        %v2599 = vld [vmem:[%s2598] sm:$0xf]
        %v2600 = vld [vmem:[%s2598 + $0x8] sm:$0xf]
        %v2601 = vld [vmem:[%s2598 + $0x10] sm:$0xf]
        %v2602 = vld [vmem:[%s2598 + $0x18] sm:$0xf]
        %v2603 = vld [vmem:[%s2598 + $0x20] sm:$0xf]
        %v2604 = vld [vmem:[%s2598 + $0x28] sm:$0xf]
        %v2605 = vld [vmem:[%s2598 + $0x30] sm:$0xf]
        %v2606 = vld [vmem:[%s2598 + $0x38] sm:$0xf]
        %v2607 = vld [vmem:[%s2598 + $0x40] sm:$0xf]
        %v2608 = vld [vmem:[%s2598 + $0x48] sm:$0xf]
        %v2609 = vld [vmem:[%s2598 + $0x50] sm:$0xf]
        %v2610 = vld [vmem:[%s2598 + $0x58] sm:$0xf]
        %v2611 = vld [vmem:[%s2598 + $0x60] sm:$0xf]
        %v2612 = vld [vmem:[%s2598 + $0x68] sm:$0xf]
        %v2613 = vld [vmem:[%s2598 + $0x70] sm:$0xf]
        %v2614 = vld [vmem:[%s2598 + $0x78] sm:$0xf]
        %v2615 = vld [vmem:[%s2598 + $0x80] sm:$0xf]
        %v2616 = vld [vmem:[%s2598 + $0x88] sm:$0xf]
        %v2617 = vld [vmem:[%s2598 + $0x90] sm:$0xf]
        %v2618 = vld [vmem:[%s2598 + $0x98] sm:$0xf]
        %v2619 = vld [vmem:[%s2598 + $0xa0] sm:$0xf]
        %v2620 = vld [vmem:[%s2598 + $0xa8] sm:$0xf]
        %v2621 = vld [vmem:[%s2598 + $0xb0] sm:$0xf]
        %v2622 = vld [vmem:[%s2598 + $0xb8] sm:$0xf]
        %v2623 = vld [vmem:[%s2598 + $0xc0] sm:$0xf]
        %v2624 = vld [vmem:[%s2598 + $0xc8] sm:$0xf]
        %v2625 = vld [vmem:[%s2598 + $0xd0] sm:$0xf]
        %v2626 = vld [vmem:[%s2598 + $0xd8] sm:$0xf]
        %v2627 = vld [vmem:[%s2598 + $0xe0] sm:$0xf]
        %v2628 = vld [vmem:[%s2598 + $0xe8] sm:$0xf]
        %v2629 = vld [vmem:[%s2598 + $0xf0] sm:$0xf]
        %v2630 = vld [vmem:[%s2598 + $0xf8] sm:$0xf]
        %v2663 = vunpack.c.l.b16 %v2599
        %v2664 = vunpack.c.l.b16 %v2600
        %v2665 = vunpack.c.l.b16 %v2601
        %v2666 = vunpack.c.l.b16 %v2602
        %v2667 = vunpack.c.l.b16 %v2603
        %v2668 = vunpack.c.l.b16 %v2604
        %v2669 = vunpack.c.l.b16 %v2605
        %v2670 = vunpack.c.l.b16 %v2606
        %v2671 = vunpack.c.l.b16 %v2607
        %v2672 = vunpack.c.l.b16 %v2608
        %v2673 = vunpack.c.l.b16 %v2609
        %v2674 = vunpack.c.l.b16 %v2610
        %v2675 = vunpack.c.l.b16 %v2611
        %v2676 = vunpack.c.l.b16 %v2612
        %v2677 = vunpack.c.l.b16 %v2613
        %v2678 = vunpack.c.l.b16 %v2614
        %v2679 = vunpack.c.l.b16 %v2615
        %v2680 = vunpack.c.l.b16 %v2616
        %v2681 = vunpack.c.l.b16 %v2617
        %v2682 = vunpack.c.l.b16 %v2618
        %v2683 = vunpack.c.l.b16 %v2619
        %v2684 = vunpack.c.l.b16 %v2620
        %v2685 = vunpack.c.l.b16 %v2621
        %v2686 = vunpack.c.l.b16 %v2622
        %v2687 = vunpack.c.l.b16 %v2623
        %v2688 = vunpack.c.l.b16 %v2624
        %v2689 = vunpack.c.l.b16 %v2625
        %v2690 = vunpack.c.l.b16 %v2626
        %v2691 = vunpack.c.l.b16 %v2627
        %v2692 = vunpack.c.l.b16 %v2628
        %v2693 = vunpack.c.l.b16 %v2629
        %v2694 = vunpack.c.l.b16 %v2630
        %v2695 = vpack.c.b16 %v2664, %v2663
        %v2696 = vpack.c.b16 %v2666, %v2665
        %v2697 = vpack.c.b16 %v2668, %v2667
        %v2698 = vpack.c.b16 %v2670, %v2669
        %v2699 = vpack.c.b16 %v2672, %v2671
        %v2700 = vpack.c.b16 %v2674, %v2673
        %v2701 = vpack.c.b16 %v2676, %v2675
        %v2702 = vpack.c.b16 %v2678, %v2677
        %v2703 = vpack.c.b16 %v2680, %v2679
        %v2704 = vpack.c.b16 %v2682, %v2681
        %v2705 = vpack.c.b16 %v2684, %v2683
        %v2706 = vpack.c.b16 %v2686, %v2685
        %v2707 = vpack.c.b16 %v2688, %v2687
        %v2708 = vpack.c.b16 %v2690, %v2689
        %v2709 = vpack.c.b16 %v2692, %v2691
        %v2710 = vpack.c.b16 %v2694, %v2693
        %2727 = vmatprep.subr.bf16.mxu0 0
        %2728 = vmatpush1.bf16.msra.mxu0 %v2695
        %2729 = vmatprep.subr.bf16.mxu0 0
        %2730 = vmatpush1.bf16.msra.mxu0 %v2696
        %2731 = vmatprep.subr.bf16.mxu0 0
        %2732 = vmatpush1.bf16.msra.mxu0 %v2697
        %2733 = vmatprep.subr.bf16.mxu0 0
        %2734 = vmatpush1.bf16.msra.mxu0 %v2698
        %2735 = vmatprep.subr.bf16.mxu0 0
        %2736 = vmatpush1.bf16.msra.mxu0 %v2699
        %2737 = vmatprep.subr.bf16.mxu0 0
        %2738 = vmatpush1.bf16.msra.mxu0 %v2700
        %2739 = vmatprep.subr.bf16.mxu0 0
        %2740 = vmatpush1.bf16.msra.mxu0 %v2701
        %2741 = vmatprep.subr.bf16.mxu0 0
        %2742 = vmatpush1.bf16.msra.mxu0 %v2702
        %2743 = vmatprep.subr.bf16.mxu0 0
        %2744 = vmatpush1.bf16.msra.mxu0 %v2703
        %2745 = vmatprep.subr.bf16.mxu0 0
        %2746 = vmatpush1.bf16.msra.mxu0 %v2704
        %2747 = vmatprep.subr.bf16.mxu0 0
        %2748 = vmatpush1.bf16.msra.mxu0 %v2705
        %2749 = vmatprep.subr.bf16.mxu0 0
        %2750 = vmatpush1.bf16.msra.mxu0 %v2706
        %2751 = vmatprep.subr.bf16.mxu0 0
        %2752 = vmatpush1.bf16.msra.mxu0 %v2707
        %2753 = vmatprep.subr.bf16.mxu0 0
        %2754 = vmatpush1.bf16.msra.mxu0 %v2708
        %2755 = vmatprep.subr.bf16.mxu0 0
        %2756 = vmatpush1.bf16.msra.mxu0 %v2709
        %2757 = vmatprep.subr.bf16.mxu0 0
        %2758 = vmatpush1.bf16.msra.mxu0 %v2710
        %2759 = vmatprep.mubr.bf16.mxu0 %v1185
        %2760 = vmatmul.mubr.bf16.gmra.mrb[0].mxu0 %v1177
        %v2761 = vpop.f32.mrb[0].mxu0
        %v2762 = vadd.f32 0.0, %v2761
        %v2763 = vpop.f32.mrb[0].mxu0
        %v2764 = vpop.f32.mrb[0].mxu0
        %v2765 = vadd.f32 0.0, %v2764
        %v2766 = vpop.f32.mrb[0].mxu0
        %2767 = vmatprep.mubr.bf16.mxu0 %v1201
        %2768 = vmatmul.mubr.bf16.gmra.mrb[0].mxu0 %v1193
        %v2769 = vpop.f32.mrb[0].mxu0
        %v2770 = vadd.f32 0.0, %v2769
        %v2771 = vpop.f32.mrb[0].mxu0
        %v2772 = vpop.f32.mrb[0].mxu0
        %v2773 = vadd.f32 0.0, %v2772
        %v2774 = vpop.f32.mrb[0].mxu0
        %2775 = vmatprep.mubr.bf16.mxu0 %v1217
        %2776 = vmatmul.mubr.bf16.gmra.mrb[0].mxu0 %v1209
        %v2777 = vpop.f32.mrb[0].mxu0
        %v2778 = vadd.f32 0.0, %v2777
        %v2779 = vpop.f32.mrb[0].mxu0
        %v2780 = vpop.f32.mrb[0].mxu0
        %v2781 = vadd.f32 0.0, %v2780
        %v2782 = vpop.f32.mrb[0].mxu0
        %2783 = vmatprep.mubr.bf16.mxu0 %v1233
        %2784 = vmatmul.mubr.bf16.gmra.mrb[0].mxu0 %v1225
        %v2785 = vpop.f32.mrb[0].mxu0
        %v2786 = vadd.f32 0.0, %v2785
        %v2787 = vpop.f32.mrb[0].mxu0
        %v2788 = vpop.f32.mrb[0].mxu0
        %v2789 = vadd.f32 0.0, %v2788
        %v2790 = vpop.f32.mrb[0].mxu0
        %2791 = vmatprep.mubr.bf16.mxu0 %v1249
        %2792 = vmatmul.mubr.bf16.gmra.mrb[0].mxu0 %v1241
        %v2793 = vpop.f32.mrb[0].mxu0
        %v2794 = vadd.f32 0.0, %v2793
        %v2795 = vpop.f32.mrb[0].mxu0
        %v2796 = vpop.f32.mrb[0].mxu0
        %v2797 = vadd.f32 0.0, %v2796
        %v2798 = vpop.f32.mrb[0].mxu0
        %2799 = vmatprep.mubr.bf16.mxu0 %v1265
        %2800 = vmatmul.mubr.bf16.gmra.mrb[0].mxu0 %v1257
        %v2801 = vpop.f32.mrb[0].mxu0
        %v2802 = vadd.f32 0.0, %v2801
        %v2803 = vpop.f32.mrb[0].mxu0
        %v2804 = vpop.f32.mrb[0].mxu0
        %v2805 = vadd.f32 0.0, %v2804
        %v2806 = vpop.f32.mrb[0].mxu0
        %2807 = vmatprep.mubr.bf16.mxu0 %v1281
        %2808 = vmatmul.mubr.bf16.gmra.mrb[0].mxu0 %v1273
        %v2809 = vpop.f32.mrb[0].mxu0
        %v2810 = vadd.f32 0.0, %v2809
        %v2811 = vpop.f32.mrb[0].mxu0
        %v2812 = vpop.f32.mrb[0].mxu0
        %v2813 = vadd.f32 0.0, %v2812
        %v2814 = vpop.f32.mrb[0].mxu0
        %2815 = vmatprep.mubr.bf16.mxu0 %v1297
        %2816 = vmatmul.mubr.bf16.gmra.mrb[0].mxu0 %v1289
        %v2817 = vpop.f32.mrb[0].mxu0
        %v2818 = vadd.f32 0.0, %v2817
        %v2819 = vpop.f32.mrb[0].mxu0
        %v2820 = vpop.f32.mrb[0].mxu0
        %v2821 = vadd.f32 0.0, %v2820
        %v2822 = vpop.f32.mrb[0].mxu0
        %2823 = vmatprep.mubr.bf16.mxu0 %v1313
        %2824 = vmatmul.mubr.bf16.gmra.mrb[0].mxu0 %v1305
        %v2825 = vpop.f32.mrb[0].mxu0
        %v2826 = vadd.f32 0.0, %v2825
        %v2827 = vpop.f32.mrb[0].mxu0
        %v2828 = vpop.f32.mrb[0].mxu0
        %v2829 = vadd.f32 0.0, %v2828
        %v2830 = vpop.f32.mrb[0].mxu0
        %2831 = vmatprep.mubr.bf16.mxu0 %v1329
        %2832 = vmatmul.mubr.bf16.gmra.mrb[0].mxu0 %v1321
        %v2833 = vpop.f32.mrb[0].mxu0
        %v2834 = vadd.f32 0.0, %v2833
        %v2835 = vpop.f32.mrb[0].mxu0
        %v2836 = vpop.f32.mrb[0].mxu0
        %v2837 = vadd.f32 0.0, %v2836
        %v2838 = vpop.f32.mrb[0].mxu0
        %2839 = vmatprep.mubr.bf16.mxu0 %v1345
        %2840 = vmatmul.mubr.bf16.gmra.mrb[0].mxu0 %v1337
        %v2841 = vpop.f32.mrb[0].mxu0
        %v2842 = vadd.f32 0.0, %v2841
        %v2843 = vpop.f32.mrb[0].mxu0
        %v2844 = vpop.f32.mrb[0].mxu0
        %v2845 = vadd.f32 0.0, %v2844
        %v2846 = vpop.f32.mrb[0].mxu0
        %2847 = vmatprep.mubr.bf16.mxu0 %v1361
        %2848 = vmatmul.mubr.bf16.gmra.mrb[0].mxu0 %v1353
        %v2849 = vpop.f32.mrb[0].mxu0
        %v2850 = vadd.f32 0.0, %v2849
        %v2851 = vpop.f32.mrb[0].mxu0
        %v2852 = vpop.f32.mrb[0].mxu0
        %v2853 = vadd.f32 0.0, %v2852
        %v2854 = vpop.f32.mrb[0].mxu0
        %2855 = vmatprep.mubr.bf16.mxu0 %v1377
        %2856 = vmatmul.mubr.bf16.gmra.mrb[0].mxu0 %v1369
        %v2857 = vpop.f32.mrb[0].mxu0
        %v2858 = vadd.f32 0.0, %v2857
        %v2859 = vpop.f32.mrb[0].mxu0
        %v2860 = vpop.f32.mrb[0].mxu0
        %v2861 = vadd.f32 0.0, %v2860
        %v2862 = vpop.f32.mrb[0].mxu0
        %2863 = vmatprep.mubr.bf16.mxu0 %v1393
        %2864 = vmatmul.mubr.bf16.gmra.mrb[0].mxu0 %v1385
        %v2865 = vpop.f32.mrb[0].mxu0
        %v2866 = vadd.f32 0.0, %v2865
        %v2867 = vpop.f32.mrb[0].mxu0
        %v2868 = vpop.f32.mrb[0].mxu0
        %v2869 = vadd.f32 0.0, %v2868
        %v2870 = vpop.f32.mrb[0].mxu0
        %2871 = vmatprep.mubr.bf16.mxu0 %v1409
        %2872 = vmatmul.mubr.bf16.gmra.mrb[0].mxu0 %v1401
        %v2873 = vpop.f32.mrb[0].mxu0
        %v2874 = vadd.f32 0.0, %v2873
        %v2875 = vpop.f32.mrb[0].mxu0
        %v2876 = vpop.f32.mrb[0].mxu0
        %v2877 = vadd.f32 0.0, %v2876
        %v2878 = vpop.f32.mrb[0].mxu0
        %2879 = vmatprep.mubr.bf16.mxu0 %v1425
        %2880 = vmatmul.mubr.bf16.gmra.mrb[0].mxu0 %v1417
        %v2881 = vpop.f32.mrb[0].mxu0
        %v2882 = vadd.f32 0.0, %v2881
        %v2883 = vpop.f32.mrb[0].mxu0
        %v2884 = vpop.f32.mrb[0].mxu0
        %v2885 = vadd.f32 0.0, %v2884
        %v2886 = vpop.f32.mrb[0].mxu0
        %2887 = vdwg.mxu0
        %v2888 = vadd.f32 %v2566, %v2762
        %v2889 = vadd.f32 %v2567, %v2765
        %v2890 = vadd.f32 %v2568, %v2770
        %v2891 = vadd.f32 %v2569, %v2773
        %v2892 = vadd.f32 %v2570, %v2778
        %v2893 = vadd.f32 %v2571, %v2781
        %v2894 = vadd.f32 %v2572, %v2786
        %v2895 = vadd.f32 %v2573, %v2789
        %v2896 = vadd.f32 %v2574, %v2794
        %v2897 = vadd.f32 %v2575, %v2797
        %v2898 = vadd.f32 %v2576, %v2802
        %v2899 = vadd.f32 %v2577, %v2805
        %v2900 = vadd.f32 %v2578, %v2810
        %v2901 = vadd.f32 %v2579, %v2813
        %v2902 = vadd.f32 %v2580, %v2818
        %v2903 = vadd.f32 %v2581, %v2821
        %v2904 = vadd.f32 %v2582, %v2826
        %v2905 = vadd.f32 %v2583, %v2829
        %v2906 = vadd.f32 %v2584, %v2834
        %v2907 = vadd.f32 %v2585, %v2837
        %v2908 = vadd.f32 %v2586, %v2842
        %v2909 = vadd.f32 %v2587, %v2845
        %v2910 = vadd.f32 %v2588, %v2850
        %v2911 = vadd.f32 %v2589, %v2853
        %v2912 = vadd.f32 %v2590, %v2858
        %v2913 = vadd.f32 %v2591, %v2861
        %v2914 = vadd.f32 %v2592, %v2866
        %v2915 = vadd.f32 %v2593, %v2869
        %v2916 = vadd.f32 %v2594, %v2874
        %v2917 = vadd.f32 %v2595, %v2877
        %v2918 = vadd.f32 %v2596, %v2882
        %v2919 = vadd.f32 %v2597, %v2885
        %s2920 = scalar_lea.vmem [#allocation4], 1024
        %v2921 = vld [vmem:[%s2920] sm:$0xf]
        %v2922 = vld [vmem:[%s2920 + $0x8] sm:$0xf]
        %v2923 = vld [vmem:[%s2920 + $0x10] sm:$0xf]
        %v2924 = vld [vmem:[%s2920 + $0x18] sm:$0xf]
        %v2925 = vld [vmem:[%s2920 + $0x20] sm:$0xf]
        %v2926 = vld [vmem:[%s2920 + $0x28] sm:$0xf]
        %v2927 = vld [vmem:[%s2920 + $0x30] sm:$0xf]
        %v2928 = vld [vmem:[%s2920 + $0x38] sm:$0xf]
        %v2929 = vld [vmem:[%s2920 + $0x40] sm:$0xf]
        %v2930 = vld [vmem:[%s2920 + $0x48] sm:$0xf]
        %v2931 = vld [vmem:[%s2920 + $0x50] sm:$0xf]
        %v2932 = vld [vmem:[%s2920 + $0x58] sm:$0xf]
        %v2933 = vld [vmem:[%s2920 + $0x60] sm:$0xf]
        %v2934 = vld [vmem:[%s2920 + $0x68] sm:$0xf]
        %v2935 = vld [vmem:[%s2920 + $0x70] sm:$0xf]
        %v2936 = vld [vmem:[%s2920 + $0x78] sm:$0xf]
        %v2937 = vld [vmem:[%s2920 + $0x80] sm:$0xf]
        %v2938 = vld [vmem:[%s2920 + $0x88] sm:$0xf]
        %v2939 = vld [vmem:[%s2920 + $0x90] sm:$0xf]
        %v2940 = vld [vmem:[%s2920 + $0x98] sm:$0xf]
        %v2941 = vld [vmem:[%s2920 + $0xa0] sm:$0xf]
        %v2942 = vld [vmem:[%s2920 + $0xa8] sm:$0xf]
        %v2943 = vld [vmem:[%s2920 + $0xb0] sm:$0xf]
        %v2944 = vld [vmem:[%s2920 + $0xb8] sm:$0xf]
        %v2945 = vld [vmem:[%s2920 + $0xc0] sm:$0xf]
        %v2946 = vld [vmem:[%s2920 + $0xc8] sm:$0xf]
        %v2947 = vld [vmem:[%s2920 + $0xd0] sm:$0xf]
        %v2948 = vld [vmem:[%s2920 + $0xd8] sm:$0xf]
        %v2949 = vld [vmem:[%s2920 + $0xe0] sm:$0xf]
        %v2950 = vld [vmem:[%s2920 + $0xe8] sm:$0xf]
        %v2951 = vld [vmem:[%s2920 + $0xf0] sm:$0xf]
        %v2952 = vld [vmem:[%s2920 + $0xf8] sm:$0xf]
        %v2989 = vunpack.c.l.b16 %v2921
        %v2990 = vunpack.c.l.b16 %v2922
        %v2991 = vunpack.c.l.b16 %v2923
        %v2992 = vunpack.c.l.b16 %v2924
        %v2993 = vunpack.c.l.b16 %v2925
        %v2994 = vunpack.c.l.b16 %v2926
        %v2995 = vunpack.c.l.b16 %v2927
        %v2996 = vunpack.c.l.b16 %v2928
        %v2997 = vunpack.c.l.b16 %v2929
        %v2998 = vunpack.c.l.b16 %v2930
        %v2999 = vunpack.c.l.b16 %v2931
        %v3000 = vunpack.c.l.b16 %v2932
        %v3001 = vunpack.c.l.b16 %v2933
        %v3002 = vunpack.c.l.b16 %v2934
        %v3003 = vunpack.c.l.b16 %v2935
        %v3004 = vunpack.c.l.b16 %v2936
        %v3005 = vunpack.c.l.b16 %v2937
        %v3006 = vunpack.c.l.b16 %v2938
        %v3007 = vunpack.c.l.b16 %v2939
        %v3008 = vunpack.c.l.b16 %v2940
        %v3009 = vunpack.c.l.b16 %v2941
        %v3010 = vunpack.c.l.b16 %v2942
        %v3011 = vunpack.c.l.b16 %v2943
        %v3012 = vunpack.c.l.b16 %v2944
        %v3013 = vunpack.c.l.b16 %v2945
        %v3014 = vunpack.c.l.b16 %v2946
        %v3015 = vunpack.c.l.b16 %v2947
        %v3016 = vunpack.c.l.b16 %v2948
        %v3017 = vunpack.c.l.b16 %v2949
        %v3018 = vunpack.c.l.b16 %v2950
        %v3019 = vunpack.c.l.b16 %v2951
        %v3020 = vunpack.c.l.b16 %v2952
        %v3021 = vpack.c.b16 %v2990, %v2989
        %v3022 = vpack.c.b16 %v2992, %v2991
        %v3023 = vpack.c.b16 %v2994, %v2993
        %v3024 = vpack.c.b16 %v2996, %v2995
        %v3025 = vpack.c.b16 %v2998, %v2997
        %v3026 = vpack.c.b16 %v3000, %v2999
        %v3027 = vpack.c.b16 %v3002, %v3001
        %v3028 = vpack.c.b16 %v3004, %v3003
        %v3029 = vpack.c.b16 %v3006, %v3005
        %v3030 = vpack.c.b16 %v3008, %v3007
        %v3031 = vpack.c.b16 %v3010, %v3009
        %v3032 = vpack.c.b16 %v3012, %v3011
        %v3033 = vpack.c.b16 %v3014, %v3013
        %v3034 = vpack.c.b16 %v3016, %v3015
        %v3035 = vpack.c.b16 %v3018, %v3017
        %v3036 = vpack.c.b16 %v3020, %v3019
        %3053 = vmatprep.subr.bf16.mxu0 0
        %3054 = vmatpush1.bf16.msra.mxu0 %v3021
        %3055 = vmatprep.subr.bf16.mxu0 0
        %3056 = vmatpush1.bf16.msra.mxu0 %v3022
        %3057 = vmatprep.subr.bf16.mxu0 0
        %3058 = vmatpush1.bf16.msra.mxu0 %v3023
        %3059 = vmatprep.subr.bf16.mxu0 0
        %3060 = vmatpush1.bf16.msra.mxu0 %v3024
        %3061 = vmatprep.subr.bf16.mxu0 0
        %3062 = vmatpush1.bf16.msra.mxu0 %v3025
        %3063 = vmatprep.subr.bf16.mxu0 0
        %3064 = vmatpush1.bf16.msra.mxu0 %v3026
        %3065 = vmatprep.subr.bf16.mxu0 0
        %3066 = vmatpush1.bf16.msra.mxu0 %v3027
        %3067 = vmatprep.subr.bf16.mxu0 0
        %3068 = vmatpush1.bf16.msra.mxu0 %v3028
        %3069 = vmatprep.subr.bf16.mxu0 0
        %3070 = vmatpush1.bf16.msra.mxu0 %v3029
        %3071 = vmatprep.subr.bf16.mxu0 0
        %3072 = vmatpush1.bf16.msra.mxu0 %v3030
        %3073 = vmatprep.subr.bf16.mxu0 0
        %3074 = vmatpush1.bf16.msra.mxu0 %v3031
        %3075 = vmatprep.subr.bf16.mxu0 0
        %3076 = vmatpush1.bf16.msra.mxu0 %v3032
        %3077 = vmatprep.subr.bf16.mxu0 0
        %3078 = vmatpush1.bf16.msra.mxu0 %v3033
        %3079 = vmatprep.subr.bf16.mxu0 0
        %3080 = vmatpush1.bf16.msra.mxu0 %v3034
        %3081 = vmatprep.subr.bf16.mxu0 0
        %3082 = vmatpush1.bf16.msra.mxu0 %v3035
        %3083 = vmatprep.subr.bf16.mxu0 0
        %3084 = vmatpush1.bf16.msra.mxu0 %v3036
        %3085 = vmatprep.mubr.bf16.mxu0 %v1104
        %3086 = vmatmul.mubr.bf16.gmra.mrb[0].mxu0 %v1103
        %v3087 = vpop.f32.mrb[0].mxu0
        %v3088 = vadd.f32 0.0, %v3087
        %v3089 = vpop.f32.mrb[0].mxu0
        %v3090 = vpop.f32.mrb[0].mxu0
        %v3091 = vadd.f32 0.0, %v3090
        %v3092 = vpop.f32.mrb[0].mxu0
        %3093 = vmatprep.mubr.bf16.mxu0 %v1106
        %3094 = vmatmul.mubr.bf16.gmra.mrb[0].mxu0 %v1105
        %v3095 = vpop.f32.mrb[0].mxu0
        %v3096 = vadd.f32 0.0, %v3095
        %v3097 = vpop.f32.mrb[0].mxu0
        %v3098 = vpop.f32.mrb[0].mxu0
        %v3099 = vadd.f32 0.0, %v3098
        %v3100 = vpop.f32.mrb[0].mxu0
        %3101 = vmatprep.mubr.bf16.mxu0 %v1108
        %3102 = vmatmul.mubr.bf16.gmra.mrb[0].mxu0 %v1107
        %v3103 = vpop.f32.mrb[0].mxu0
        %v3104 = vadd.f32 0.0, %v3103
        %v3105 = vpop.f32.mrb[0].mxu0
        %v3106 = vpop.f32.mrb[0].mxu0
        %v3107 = vadd.f32 0.0, %v3106
        %v3108 = vpop.f32.mrb[0].mxu0
        %3109 = vmatprep.mubr.bf16.mxu0 %v1110
        %3110 = vmatmul.mubr.bf16.gmra.mrb[0].mxu0 %v1109
        %v3111 = vpop.f32.mrb[0].mxu0
        %v3112 = vadd.f32 0.0, %v3111
        %v3113 = vpop.f32.mrb[0].mxu0
        %v3114 = vpop.f32.mrb[0].mxu0
        %v3115 = vadd.f32 0.0, %v3114
        %v3116 = vpop.f32.mrb[0].mxu0
        %3117 = vmatprep.mubr.bf16.mxu0 %v1112
        %3118 = vmatmul.mubr.bf16.gmra.mrb[0].mxu0 %v1111
        %v3119 = vpop.f32.mrb[0].mxu0
        %v3120 = vadd.f32 0.0, %v3119
        %v3121 = vpop.f32.mrb[0].mxu0
        %v3122 = vpop.f32.mrb[0].mxu0
        %v3123 = vadd.f32 0.0, %v3122
        %v3124 = vpop.f32.mrb[0].mxu0
        %3125 = vmatprep.mubr.bf16.mxu0 %v1114
        %3126 = vmatmul.mubr.bf16.gmra.mrb[0].mxu0 %v1113
        %v3127 = vpop.f32.mrb[0].mxu0
        %v3128 = vadd.f32 0.0, %v3127
        %v3129 = vpop.f32.mrb[0].mxu0
        %v3130 = vpop.f32.mrb[0].mxu0
        %v3131 = vadd.f32 0.0, %v3130
        %v3132 = vpop.f32.mrb[0].mxu0
        %3133 = vmatprep.mubr.bf16.mxu0 %v1116
        %3134 = vmatmul.mubr.bf16.gmra.mrb[0].mxu0 %v1115
        %v3135 = vpop.f32.mrb[0].mxu0
        %v3136 = vadd.f32 0.0, %v3135
        %v3137 = vpop.f32.mrb[0].mxu0
        %v3138 = vpop.f32.mrb[0].mxu0
        %v3139 = vadd.f32 0.0, %v3138
        %v3140 = vpop.f32.mrb[0].mxu0
        %3141 = vmatprep.mubr.bf16.mxu0 %v1118
        %3142 = vmatmul.mubr.bf16.gmra.mrb[0].mxu0 %v1117
        %v3143 = vpop.f32.mrb[0].mxu0
        %v3144 = vadd.f32 0.0, %v3143
        %v3145 = vpop.f32.mrb[0].mxu0
        %v3146 = vpop.f32.mrb[0].mxu0
        %v3147 = vadd.f32 0.0, %v3146
        %v3148 = vpop.f32.mrb[0].mxu0
        %3149 = vmatprep.mubr.bf16.mxu0 %v1120
        %3150 = vmatmul.mubr.bf16.gmra.mrb[0].mxu0 %v1119
        %v3151 = vpop.f32.mrb[0].mxu0
        %v3152 = vadd.f32 0.0, %v3151
        %v3153 = vpop.f32.mrb[0].mxu0
        %v3154 = vpop.f32.mrb[0].mxu0
        %v3155 = vadd.f32 0.0, %v3154
        %v3156 = vpop.f32.mrb[0].mxu0
        %3157 = vmatprep.mubr.bf16.mxu0 %v1122
        %3158 = vmatmul.mubr.bf16.gmra.mrb[0].mxu0 %v1121
        %v3159 = vpop.f32.mrb[0].mxu0
        %v3160 = vadd.f32 0.0, %v3159
        %v3161 = vpop.f32.mrb[0].mxu0
        %v3162 = vpop.f32.mrb[0].mxu0
        %v3163 = vadd.f32 0.0, %v3162
        %v3164 = vpop.f32.mrb[0].mxu0
        %3165 = vmatprep.mubr.bf16.mxu0 %v1124
        %3166 = vmatmul.mubr.bf16.gmra.mrb[0].mxu0 %v1123
        %v3167 = vpop.f32.mrb[0].mxu0
        %v3168 = vadd.f32 0.0, %v3167
        %v3169 = vpop.f32.mrb[0].mxu0
        %v3170 = vpop.f32.mrb[0].mxu0
        %v3171 = vadd.f32 0.0, %v3170
        %v3172 = vpop.f32.mrb[0].mxu0
        %3173 = vmatprep.mubr.bf16.mxu0 %v1126
        %3174 = vmatmul.mubr.bf16.gmra.mrb[0].mxu0 %v1125
        %v3175 = vpop.f32.mrb[0].mxu0
        %v3176 = vadd.f32 0.0, %v3175
        %v3177 = vpop.f32.mrb[0].mxu0
        %v3178 = vpop.f32.mrb[0].mxu0
        %v3179 = vadd.f32 0.0, %v3178
        %v3180 = vpop.f32.mrb[0].mxu0
        %3181 = vmatprep.mubr.bf16.mxu0 %v1128
        %3182 = vmatmul.mubr.bf16.gmra.mrb[0].mxu0 %v1127
        %v3183 = vpop.f32.mrb[0].mxu0
        %v3184 = vadd.f32 0.0, %v3183
        %v3185 = vpop.f32.mrb[0].mxu0
        %v3186 = vpop.f32.mrb[0].mxu0
        %v3187 = vadd.f32 0.0, %v3186
        %v3188 = vpop.f32.mrb[0].mxu0
        %3189 = vmatprep.mubr.bf16.mxu0 %v1130
        %3190 = vmatmul.mubr.bf16.gmra.mrb[0].mxu0 %v1129
        %v3191 = vpop.f32.mrb[0].mxu0
        %v3192 = vadd.f32 0.0, %v3191
        %v3193 = vpop.f32.mrb[0].mxu0
        %v3194 = vpop.f32.mrb[0].mxu0
        %v3195 = vadd.f32 0.0, %v3194
        %v3196 = vpop.f32.mrb[0].mxu0
        %3197 = vmatprep.mubr.bf16.mxu0 %v1132
        %3198 = vmatmul.mubr.bf16.gmra.mrb[0].mxu0 %v1131
        %v3199 = vpop.f32.mrb[0].mxu0
        %v3200 = vadd.f32 0.0, %v3199
        %v3201 = vpop.f32.mrb[0].mxu0
        %v3202 = vpop.f32.mrb[0].mxu0
        %v3203 = vadd.f32 0.0, %v3202
        %v3204 = vpop.f32.mrb[0].mxu0
        %3205 = vmatprep.mubr.bf16.mxu0 %v1134
        %3206 = vmatmul.mubr.bf16.gmra.mrb[0].mxu0 %v1133
        %v3207 = vpop.f32.mrb[0].mxu0
        %v3208 = vadd.f32 0.0, %v3207
        %v3209 = vpop.f32.mrb[0].mxu0
        %v3210 = vpop.f32.mrb[0].mxu0
        %v3211 = vadd.f32 0.0, %v3210
        %v3212 = vpop.f32.mrb[0].mxu0
        %3213 = vdwg.mxu0
        %v3214 = vadd.f32 %v2888, %v3088
        %v3215 = vadd.f32 %v2889, %v3091
        %v3216 = vadd.f32 %v2890, %v3096
        %v3217 = vadd.f32 %v2891, %v3099
        %v3218 = vadd.f32 %v2892, %v3104
        %v3219 = vadd.f32 %v2893, %v3107
        %v3220 = vadd.f32 %v2894, %v3112
        %v3221 = vadd.f32 %v2895, %v3115
        %v3222 = vadd.f32 %v2896, %v3120
        %v3223 = vadd.f32 %v2897, %v3123
        %v3224 = vadd.f32 %v2898, %v3128
        %v3225 = vadd.f32 %v2899, %v3131
        %v3226 = vadd.f32 %v2900, %v3136
        %v3227 = vadd.f32 %v2901, %v3139
        %v3228 = vadd.f32 %v2902, %v3144
        %v3229 = vadd.f32 %v2903, %v3147
        %v3230 = vadd.f32 %v2904, %v3152
        %v3231 = vadd.f32 %v2905, %v3155
        %v3232 = vadd.f32 %v2906, %v3160
        %v3233 = vadd.f32 %v2907, %v3163
        %v3234 = vadd.f32 %v2908, %v3168
        %v3235 = vadd.f32 %v2909, %v3171
        %v3236 = vadd.f32 %v2910, %v3176
        %v3237 = vadd.f32 %v2911, %v3179
        %v3238 = vadd.f32 %v2912, %v3184
        %v3239 = vadd.f32 %v2913, %v3187
        %v3240 = vadd.f32 %v2914, %v3192
        %v3241 = vadd.f32 %v2915, %v3195
        %v3242 = vadd.f32 %v2916, %v3200
        %v3243 = vadd.f32 %v2917, %v3203
        %v3244 = vadd.f32 %v2918, %v3208
        %v3245 = vadd.f32 %v2919, %v3211
        %s3246 = scalar_lea.vmem [#allocation4], 1280
        %v3247 = vld [vmem:[%s3246] sm:$0xf]
        %v3248 = vld [vmem:[%s3246 + $0x8] sm:$0xf]
        %v3249 = vld [vmem:[%s3246 + $0x10] sm:$0xf]
        %v3250 = vld [vmem:[%s3246 + $0x18] sm:$0xf]
        %v3251 = vld [vmem:[%s3246 + $0x20] sm:$0xf]
        %v3252 = vld [vmem:[%s3246 + $0x28] sm:$0xf]
        %v3253 = vld [vmem:[%s3246 + $0x30] sm:$0xf]
        %v3254 = vld [vmem:[%s3246 + $0x38] sm:$0xf]
        %v3255 = vld [vmem:[%s3246 + $0x40] sm:$0xf]
        %v3256 = vld [vmem:[%s3246 + $0x48] sm:$0xf]
        %v3257 = vld [vmem:[%s3246 + $0x50] sm:$0xf]
        %v3258 = vld [vmem:[%s3246 + $0x58] sm:$0xf]
        %v3259 = vld [vmem:[%s3246 + $0x60] sm:$0xf]
        %v3260 = vld [vmem:[%s3246 + $0x68] sm:$0xf]
        %v3261 = vld [vmem:[%s3246 + $0x70] sm:$0xf]
        %v3262 = vld [vmem:[%s3246 + $0x78] sm:$0xf]
        %v3263 = vld [vmem:[%s3246 + $0x80] sm:$0xf]
        %v3264 = vld [vmem:[%s3246 + $0x88] sm:$0xf]
        %v3265 = vld [vmem:[%s3246 + $0x90] sm:$0xf]
        %v3266 = vld [vmem:[%s3246 + $0x98] sm:$0xf]
        %v3267 = vld [vmem:[%s3246 + $0xa0] sm:$0xf]
        %v3268 = vld [vmem:[%s3246 + $0xa8] sm:$0xf]
        %v3269 = vld [vmem:[%s3246 + $0xb0] sm:$0xf]
        %v3270 = vld [vmem:[%s3246 + $0xb8] sm:$0xf]
        %v3271 = vld [vmem:[%s3246 + $0xc0] sm:$0xf]
        %v3272 = vld [vmem:[%s3246 + $0xc8] sm:$0xf]
        %v3273 = vld [vmem:[%s3246 + $0xd0] sm:$0xf]
        %v3274 = vld [vmem:[%s3246 + $0xd8] sm:$0xf]
        %v3275 = vld [vmem:[%s3246 + $0xe0] sm:$0xf]
        %v3276 = vld [vmem:[%s3246 + $0xe8] sm:$0xf]
        %v3277 = vld [vmem:[%s3246 + $0xf0] sm:$0xf]
        %v3278 = vld [vmem:[%s3246 + $0xf8] sm:$0xf]
        %v3311 = vunpack.c.l.b16 %v3247
        %v3312 = vunpack.c.l.b16 %v3248
        %v3313 = vunpack.c.l.b16 %v3249
        %v3314 = vunpack.c.l.b16 %v3250
        %v3315 = vunpack.c.l.b16 %v3251
        %v3316 = vunpack.c.l.b16 %v3252
        %v3317 = vunpack.c.l.b16 %v3253
        %v3318 = vunpack.c.l.b16 %v3254
        %v3319 = vunpack.c.l.b16 %v3255
        %v3320 = vunpack.c.l.b16 %v3256
        %v3321 = vunpack.c.l.b16 %v3257
        %v3322 = vunpack.c.l.b16 %v3258
        %v3323 = vunpack.c.l.b16 %v3259
        %v3324 = vunpack.c.l.b16 %v3260
        %v3325 = vunpack.c.l.b16 %v3261
        %v3326 = vunpack.c.l.b16 %v3262
        %v3327 = vunpack.c.l.b16 %v3263
        %v3328 = vunpack.c.l.b16 %v3264
        %v3329 = vunpack.c.l.b16 %v3265
        %v3330 = vunpack.c.l.b16 %v3266
        %v3331 = vunpack.c.l.b16 %v3267
        %v3332 = vunpack.c.l.b16 %v3268
        %v3333 = vunpack.c.l.b16 %v3269
        %v3334 = vunpack.c.l.b16 %v3270
        %v3335 = vunpack.c.l.b16 %v3271
        %v3336 = vunpack.c.l.b16 %v3272
        %v3337 = vunpack.c.l.b16 %v3273
        %v3338 = vunpack.c.l.b16 %v3274
        %v3339 = vunpack.c.l.b16 %v3275
        %v3340 = vunpack.c.l.b16 %v3276
        %v3341 = vunpack.c.l.b16 %v3277
        %v3342 = vunpack.c.l.b16 %v3278
        %v3343 = vpack.c.b16 %v3312, %v3311
        %v3344 = vpack.c.b16 %v3314, %v3313
        %v3345 = vpack.c.b16 %v3316, %v3315
        %v3346 = vpack.c.b16 %v3318, %v3317
        %v3347 = vpack.c.b16 %v3320, %v3319
        %v3348 = vpack.c.b16 %v3322, %v3321
        %v3349 = vpack.c.b16 %v3324, %v3323
        %v3350 = vpack.c.b16 %v3326, %v3325
        %v3351 = vpack.c.b16 %v3328, %v3327
        %v3352 = vpack.c.b16 %v3330, %v3329
        %v3353 = vpack.c.b16 %v3332, %v3331
        %v3354 = vpack.c.b16 %v3334, %v3333
        %v3355 = vpack.c.b16 %v3336, %v3335
        %v3356 = vpack.c.b16 %v3338, %v3337
        %v3357 = vpack.c.b16 %v3340, %v3339
        %v3358 = vpack.c.b16 %v3342, %v3341
        %3375 = vmatprep.subr.bf16.mxu0 0
        %3376 = vmatpush1.bf16.msra.mxu0 %v3343
        %3377 = vmatprep.subr.bf16.mxu0 0
        %3378 = vmatpush1.bf16.msra.mxu0 %v3344
        %3379 = vmatprep.subr.bf16.mxu0 0
        %3380 = vmatpush1.bf16.msra.mxu0 %v3345
        %3381 = vmatprep.subr.bf16.mxu0 0
        %3382 = vmatpush1.bf16.msra.mxu0 %v3346
        %3383 = vmatprep.subr.bf16.mxu0 0
        %3384 = vmatpush1.bf16.msra.mxu0 %v3347
        %3385 = vmatprep.subr.bf16.mxu0 0
        %3386 = vmatpush1.bf16.msra.mxu0 %v3348
        %3387 = vmatprep.subr.bf16.mxu0 0
        %3388 = vmatpush1.bf16.msra.mxu0 %v3349
        %3389 = vmatprep.subr.bf16.mxu0 0
        %3390 = vmatpush1.bf16.msra.mxu0 %v3350
        %3391 = vmatprep.subr.bf16.mxu0 0
        %3392 = vmatpush1.bf16.msra.mxu0 %v3351
        %3393 = vmatprep.subr.bf16.mxu0 0
        %3394 = vmatpush1.bf16.msra.mxu0 %v3352
        %3395 = vmatprep.subr.bf16.mxu0 0
        %3396 = vmatpush1.bf16.msra.mxu0 %v3353
        %3397 = vmatprep.subr.bf16.mxu0 0
        %3398 = vmatpush1.bf16.msra.mxu0 %v3354
        %3399 = vmatprep.subr.bf16.mxu0 0
        %3400 = vmatpush1.bf16.msra.mxu0 %v3355
        %3401 = vmatprep.subr.bf16.mxu0 0
        %3402 = vmatpush1.bf16.msra.mxu0 %v3356
        %3403 = vmatprep.subr.bf16.mxu0 0
        %3404 = vmatpush1.bf16.msra.mxu0 %v3357
        %3405 = vmatprep.subr.bf16.mxu0 0
        %3406 = vmatpush1.bf16.msra.mxu0 %v3358
        %3407 = vmatprep.mubr.bf16.mxu0 %v1522
        %3408 = vmatmul.mubr.bf16.gmra.mrb[0].mxu0 %v1519
        %v3409 = vpop.f32.mrb[0].mxu0
        %v3410 = vadd.f32 0.0, %v3409
        %v3411 = vpop.f32.mrb[0].mxu0
        %v3412 = vpop.f32.mrb[0].mxu0
        %v3413 = vadd.f32 0.0, %v3412
        %v3414 = vpop.f32.mrb[0].mxu0
        %3415 = vmatprep.mubr.bf16.mxu0 %v1528
        %3416 = vmatmul.mubr.bf16.gmra.mrb[0].mxu0 %v1525
        %v3417 = vpop.f32.mrb[0].mxu0
        %v3418 = vadd.f32 0.0, %v3417
        %v3419 = vpop.f32.mrb[0].mxu0
        %v3420 = vpop.f32.mrb[0].mxu0
        %v3421 = vadd.f32 0.0, %v3420
        %v3422 = vpop.f32.mrb[0].mxu0
        %3423 = vmatprep.mubr.bf16.mxu0 %v1534
        %3424 = vmatmul.mubr.bf16.gmra.mrb[0].mxu0 %v1531
        %v3425 = vpop.f32.mrb[0].mxu0
        %v3426 = vadd.f32 0.0, %v3425
        %v3427 = vpop.f32.mrb[0].mxu0
        %v3428 = vpop.f32.mrb[0].mxu0
        %v3429 = vadd.f32 0.0, %v3428
        %v3430 = vpop.f32.mrb[0].mxu0
        %3431 = vmatprep.mubr.bf16.mxu0 %v1540
        %3432 = vmatmul.mubr.bf16.gmra.mrb[0].mxu0 %v1537
        %v3433 = vpop.f32.mrb[0].mxu0
        %v3434 = vadd.f32 0.0, %v3433
        %v3435 = vpop.f32.mrb[0].mxu0
        %v3436 = vpop.f32.mrb[0].mxu0
        %v3437 = vadd.f32 0.0, %v3436
        %v3438 = vpop.f32.mrb[0].mxu0
        %3439 = vmatprep.mubr.bf16.mxu0 %v1546
        %3440 = vmatmul.mubr.bf16.gmra.mrb[0].mxu0 %v1543
        %v3441 = vpop.f32.mrb[0].mxu0
        %v3442 = vadd.f32 0.0, %v3441
        %v3443 = vpop.f32.mrb[0].mxu0
        %v3444 = vpop.f32.mrb[0].mxu0
        %v3445 = vadd.f32 0.0, %v3444
        %v3446 = vpop.f32.mrb[0].mxu0
        %3447 = vmatprep.mubr.bf16.mxu0 %v1552
        %3448 = vmatmul.mubr.bf16.gmra.mrb[0].mxu0 %v1549
        %v3449 = vpop.f32.mrb[0].mxu0
        %v3450 = vadd.f32 0.0, %v3449
        %v3451 = vpop.f32.mrb[0].mxu0
        %v3452 = vpop.f32.mrb[0].mxu0
        %v3453 = vadd.f32 0.0, %v3452
        %v3454 = vpop.f32.mrb[0].mxu0
        %3455 = vmatprep.mubr.bf16.mxu0 %v1558
        %3456 = vmatmul.mubr.bf16.gmra.mrb[0].mxu0 %v1555
        %v3457 = vpop.f32.mrb[0].mxu0
        %v3458 = vadd.f32 0.0, %v3457
        %v3459 = vpop.f32.mrb[0].mxu0
        %v3460 = vpop.f32.mrb[0].mxu0
        %v3461 = vadd.f32 0.0, %v3460
        %v3462 = vpop.f32.mrb[0].mxu0
        %3463 = vmatprep.mubr.bf16.mxu0 %v1564
        %3464 = vmatmul.mubr.bf16.gmra.mrb[0].mxu0 %v1561
        %v3465 = vpop.f32.mrb[0].mxu0
        %v3466 = vadd.f32 0.0, %v3465
        %v3467 = vpop.f32.mrb[0].mxu0
        %v3468 = vpop.f32.mrb[0].mxu0
        %v3469 = vadd.f32 0.0, %v3468
        %v3470 = vpop.f32.mrb[0].mxu0
        %3471 = vmatprep.mubr.bf16.mxu0 %v1570
        %3472 = vmatmul.mubr.bf16.gmra.mrb[0].mxu0 %v1567
        %v3473 = vpop.f32.mrb[0].mxu0
        %v3474 = vadd.f32 0.0, %v3473
        %v3475 = vpop.f32.mrb[0].mxu0
        %v3476 = vpop.f32.mrb[0].mxu0
        %v3477 = vadd.f32 0.0, %v3476
        %v3478 = vpop.f32.mrb[0].mxu0
        %3479 = vmatprep.mubr.bf16.mxu0 %v1576
        %3480 = vmatmul.mubr.bf16.gmra.mrb[0].mxu0 %v1573
        %v3481 = vpop.f32.mrb[0].mxu0
        %v3482 = vadd.f32 0.0, %v3481
        %v3483 = vpop.f32.mrb[0].mxu0
        %v3484 = vpop.f32.mrb[0].mxu0
        %v3485 = vadd.f32 0.0, %v3484
        %v3486 = vpop.f32.mrb[0].mxu0
        %3487 = vmatprep.mubr.bf16.mxu0 %v1582
        %3488 = vmatmul.mubr.bf16.gmra.mrb[0].mxu0 %v1579
        %v3489 = vpop.f32.mrb[0].mxu0
        %v3490 = vadd.f32 0.0, %v3489
        %v3491 = vpop.f32.mrb[0].mxu0
        %v3492 = vpop.f32.mrb[0].mxu0
        %v3493 = vadd.f32 0.0, %v3492
        %v3494 = vpop.f32.mrb[0].mxu0
        %3495 = vmatprep.mubr.bf16.mxu0 %v1588
        %3496 = vmatmul.mubr.bf16.gmra.mrb[0].mxu0 %v1585
        %v3497 = vpop.f32.mrb[0].mxu0
        %v3498 = vadd.f32 0.0, %v3497
        %v3499 = vpop.f32.mrb[0].mxu0
        %v3500 = vpop.f32.mrb[0].mxu0
        %v3501 = vadd.f32 0.0, %v3500
        %v3502 = vpop.f32.mrb[0].mxu0
        %3503 = vmatprep.mubr.bf16.mxu0 %v1594
        %3504 = vmatmul.mubr.bf16.gmra.mrb[0].mxu0 %v1591
        %v3505 = vpop.f32.mrb[0].mxu0
        %v3506 = vadd.f32 0.0, %v3505
        %v3507 = vpop.f32.mrb[0].mxu0
        %v3508 = vpop.f32.mrb[0].mxu0
        %v3509 = vadd.f32 0.0, %v3508
        %v3510 = vpop.f32.mrb[0].mxu0
        %3511 = vmatprep.mubr.bf16.mxu0 %v1600
        %3512 = vmatmul.mubr.bf16.gmra.mrb[0].mxu0 %v1597
        %v3513 = vpop.f32.mrb[0].mxu0
        %v3514 = vadd.f32 0.0, %v3513
        %v3515 = vpop.f32.mrb[0].mxu0
        %v3516 = vpop.f32.mrb[0].mxu0
        %v3517 = vadd.f32 0.0, %v3516
        %v3518 = vpop.f32.mrb[0].mxu0
        %3519 = vmatprep.mubr.bf16.mxu0 %v1606
        %3520 = vmatmul.mubr.bf16.gmra.mrb[0].mxu0 %v1603
        %v3521 = vpop.f32.mrb[0].mxu0
        %v3522 = vadd.f32 0.0, %v3521
        %v3523 = vpop.f32.mrb[0].mxu0
        %v3524 = vpop.f32.mrb[0].mxu0
        %v3525 = vadd.f32 0.0, %v3524
        %v3526 = vpop.f32.mrb[0].mxu0
        %3527 = vmatprep.mubr.bf16.mxu0 %v1612
        %3528 = vmatmul.mubr.bf16.gmra.mrb[0].mxu0 %v1609
        %v3529 = vpop.f32.mrb[0].mxu0
        %v3530 = vadd.f32 0.0, %v3529
        %v3531 = vpop.f32.mrb[0].mxu0
        %v3532 = vpop.f32.mrb[0].mxu0
        %v3533 = vadd.f32 0.0, %v3532
        %v3534 = vpop.f32.mrb[0].mxu0
        %3535 = vdwg.mxu0
        %v3536 = vadd.f32 %v3214, %v3410
        %v3537 = vadd.f32 %v3215, %v3413
        %v3538 = vadd.f32 %v3216, %v3418
        %v3539 = vadd.f32 %v3217, %v3421
        %v3540 = vadd.f32 %v3218, %v3426
        %v3541 = vadd.f32 %v3219, %v3429
        %v3542 = vadd.f32 %v3220, %v3434
        %v3543 = vadd.f32 %v3221, %v3437
        %v3544 = vadd.f32 %v3222, %v3442
        %v3545 = vadd.f32 %v3223, %v3445
        %v3546 = vadd.f32 %v3224, %v3450
        %v3547 = vadd.f32 %v3225, %v3453
        %v3548 = vadd.f32 %v3226, %v3458
        %v3549 = vadd.f32 %v3227, %v3461
        %v3550 = vadd.f32 %v3228, %v3466
        %v3551 = vadd.f32 %v3229, %v3469
        %v3552 = vadd.f32 %v3230, %v3474
        %v3553 = vadd.f32 %v3231, %v3477
        %v3554 = vadd.f32 %v3232, %v3482
        %v3555 = vadd.f32 %v3233, %v3485
        %v3556 = vadd.f32 %v3234, %v3490
        %v3557 = vadd.f32 %v3235, %v3493
        %v3558 = vadd.f32 %v3236, %v3498
        %v3559 = vadd.f32 %v3237, %v3501
        %v3560 = vadd.f32 %v3238, %v3506
        %v3561 = vadd.f32 %v3239, %v3509
        %v3562 = vadd.f32 %v3240, %v3514
        %v3563 = vadd.f32 %v3241, %v3517
        %v3564 = vadd.f32 %v3242, %v3522
        %v3565 = vadd.f32 %v3243, %v3525
        %v3566 = vadd.f32 %v3244, %v3530
        %v3567 = vadd.f32 %v3245, %v3533
        %s3568 = scalar_lea.vmem [#allocation4], 1536
        %v3569 = vld [vmem:[%s3568] sm:$0xf]
        %v3570 = vld [vmem:[%s3568 + $0x8] sm:$0xf]
        %v3571 = vld [vmem:[%s3568 + $0x10] sm:$0xf]
        %v3572 = vld [vmem:[%s3568 + $0x18] sm:$0xf]
        %v3573 = vld [vmem:[%s3568 + $0x20] sm:$0xf]
        %v3574 = vld [vmem:[%s3568 + $0x28] sm:$0xf]
        %v3575 = vld [vmem:[%s3568 + $0x30] sm:$0xf]
        %v3576 = vld [vmem:[%s3568 + $0x38] sm:$0xf]
        %v3577 = vld [vmem:[%s3568 + $0x40] sm:$0xf]
        %v3578 = vld [vmem:[%s3568 + $0x48] sm:$0xf]
        %v3579 = vld [vmem:[%s3568 + $0x50] sm:$0xf]
        %v3580 = vld [vmem:[%s3568 + $0x58] sm:$0xf]
        %v3581 = vld [vmem:[%s3568 + $0x60] sm:$0xf]
        %v3582 = vld [vmem:[%s3568 + $0x68] sm:$0xf]
        %v3583 = vld [vmem:[%s3568 + $0x70] sm:$0xf]
        %v3584 = vld [vmem:[%s3568 + $0x78] sm:$0xf]
        %v3585 = vld [vmem:[%s3568 + $0x80] sm:$0xf]
        %v3586 = vld [vmem:[%s3568 + $0x88] sm:$0xf]
        %v3587 = vld [vmem:[%s3568 + $0x90] sm:$0xf]
        %v3588 = vld [vmem:[%s3568 + $0x98] sm:$0xf]
        %v3589 = vld [vmem:[%s3568 + $0xa0] sm:$0xf]
        %v3590 = vld [vmem:[%s3568 + $0xa8] sm:$0xf]
        %v3591 = vld [vmem:[%s3568 + $0xb0] sm:$0xf]
        %v3592 = vld [vmem:[%s3568 + $0xb8] sm:$0xf]
        %v3593 = vld [vmem:[%s3568 + $0xc0] sm:$0xf]
        %v3594 = vld [vmem:[%s3568 + $0xc8] sm:$0xf]
        %v3595 = vld [vmem:[%s3568 + $0xd0] sm:$0xf]
        %v3596 = vld [vmem:[%s3568 + $0xd8] sm:$0xf]
        %v3597 = vld [vmem:[%s3568 + $0xe0] sm:$0xf]
        %v3598 = vld [vmem:[%s3568 + $0xe8] sm:$0xf]
        %v3599 = vld [vmem:[%s3568 + $0xf0] sm:$0xf]
        %v3600 = vld [vmem:[%s3568 + $0xf8] sm:$0xf]
        %v3633 = vunpack.c.l.b16 %v3569
        %v3634 = vunpack.c.l.b16 %v3570
        %v3635 = vunpack.c.l.b16 %v3571
        %v3636 = vunpack.c.l.b16 %v3572
        %v3637 = vunpack.c.l.b16 %v3573
        %v3638 = vunpack.c.l.b16 %v3574
        %v3639 = vunpack.c.l.b16 %v3575
        %v3640 = vunpack.c.l.b16 %v3576
        %v3641 = vunpack.c.l.b16 %v3577
        %v3642 = vunpack.c.l.b16 %v3578
        %v3643 = vunpack.c.l.b16 %v3579
        %v3644 = vunpack.c.l.b16 %v3580
        %v3645 = vunpack.c.l.b16 %v3581
        %v3646 = vunpack.c.l.b16 %v3582
        %v3647 = vunpack.c.l.b16 %v3583
        %v3648 = vunpack.c.l.b16 %v3584
        %v3649 = vunpack.c.l.b16 %v3585
        %v3650 = vunpack.c.l.b16 %v3586
        %v3651 = vunpack.c.l.b16 %v3587
        %v3652 = vunpack.c.l.b16 %v3588
        %v3653 = vunpack.c.l.b16 %v3589
        %v3654 = vunpack.c.l.b16 %v3590
        %v3655 = vunpack.c.l.b16 %v3591
        %v3656 = vunpack.c.l.b16 %v3592
        %v3657 = vunpack.c.l.b16 %v3593
        %v3658 = vunpack.c.l.b16 %v3594
        %v3659 = vunpack.c.l.b16 %v3595
        %v3660 = vunpack.c.l.b16 %v3596
        %v3661 = vunpack.c.l.b16 %v3597
        %v3662 = vunpack.c.l.b16 %v3598
        %v3663 = vunpack.c.l.b16 %v3599
        %v3664 = vunpack.c.l.b16 %v3600
        %v3665 = vpack.c.b16 %v3634, %v3633
        %v3666 = vpack.c.b16 %v3636, %v3635
        %v3667 = vpack.c.b16 %v3638, %v3637
        %v3668 = vpack.c.b16 %v3640, %v3639
        %v3669 = vpack.c.b16 %v3642, %v3641
        %v3670 = vpack.c.b16 %v3644, %v3643
        %v3671 = vpack.c.b16 %v3646, %v3645
        %v3672 = vpack.c.b16 %v3648, %v3647
        %v3673 = vpack.c.b16 %v3650, %v3649
        %v3674 = vpack.c.b16 %v3652, %v3651
        %v3675 = vpack.c.b16 %v3654, %v3653
        %v3676 = vpack.c.b16 %v3656, %v3655
        %v3677 = vpack.c.b16 %v3658, %v3657
        %v3678 = vpack.c.b16 %v3660, %v3659
        %v3679 = vpack.c.b16 %v3662, %v3661
        %v3680 = vpack.c.b16 %v3664, %v3663
        %3697 = vmatprep.subr.bf16.mxu0 0
        %3698 = vmatpush1.bf16.msra.mxu0 %v3665
        %3699 = vmatprep.subr.bf16.mxu0 0
        %3700 = vmatpush1.bf16.msra.mxu0 %v3666
        %3701 = vmatprep.subr.bf16.mxu0 0
        %3702 = vmatpush1.bf16.msra.mxu0 %v3667
        %3703 = vmatprep.subr.bf16.mxu0 0
        %3704 = vmatpush1.bf16.msra.mxu0 %v3668
        %3705 = vmatprep.subr.bf16.mxu0 0
        %3706 = vmatpush1.bf16.msra.mxu0 %v3669
        %3707 = vmatprep.subr.bf16.mxu0 0
        %3708 = vmatpush1.bf16.msra.mxu0 %v3670
        %3709 = vmatprep.subr.bf16.mxu0 0
        %3710 = vmatpush1.bf16.msra.mxu0 %v3671
        %3711 = vmatprep.subr.bf16.mxu0 0
        %3712 = vmatpush1.bf16.msra.mxu0 %v3672
        %3713 = vmatprep.subr.bf16.mxu0 0
        %3714 = vmatpush1.bf16.msra.mxu0 %v3673
        %3715 = vmatprep.subr.bf16.mxu0 0
        %3716 = vmatpush1.bf16.msra.mxu0 %v3674
        %3717 = vmatprep.subr.bf16.mxu0 0
        %3718 = vmatpush1.bf16.msra.mxu0 %v3675
        %3719 = vmatprep.subr.bf16.mxu0 0
        %3720 = vmatpush1.bf16.msra.mxu0 %v3676
        %3721 = vmatprep.subr.bf16.mxu0 0
        %3722 = vmatpush1.bf16.msra.mxu0 %v3677
        %3723 = vmatprep.subr.bf16.mxu0 0
        %3724 = vmatpush1.bf16.msra.mxu0 %v3678
        %3725 = vmatprep.subr.bf16.mxu0 0
        %3726 = vmatpush1.bf16.msra.mxu0 %v3679
        %3727 = vmatprep.subr.bf16.mxu0 0
        %3728 = vmatpush1.bf16.msra.mxu0 %v3680
        %3729 = vmatprep.mubr.bf16.mxu0 %v1217
        %3730 = vmatmul.mubr.bf16.gmra.mrb[0].mxu0 %v1209
        %v3731 = vpop.f32.mrb[0].mxu0
        %v3732 = vadd.f32 0.0, %v3731
        %v3733 = vpop.f32.mrb[0].mxu0
        %v3734 = vpop.f32.mrb[0].mxu0
        %v3735 = vadd.f32 0.0, %v3734
        %v3736 = vpop.f32.mrb[0].mxu0
        %3737 = vmatprep.mubr.bf16.mxu0 %v1233
        %3738 = vmatmul.mubr.bf16.gmra.mrb[0].mxu0 %v1225
        %v3739 = vpop.f32.mrb[0].mxu0
        %v3740 = vadd.f32 0.0, %v3739
        %v3741 = vpop.f32.mrb[0].mxu0
        %v3742 = vpop.f32.mrb[0].mxu0
        %v3743 = vadd.f32 0.0, %v3742
        %v3744 = vpop.f32.mrb[0].mxu0
        %3745 = vmatprep.mubr.bf16.mxu0 %v1249
        %3746 = vmatmul.mubr.bf16.gmra.mrb[0].mxu0 %v1241
        %v3747 = vpop.f32.mrb[0].mxu0
        %v3748 = vadd.f32 0.0, %v3747
        %v3749 = vpop.f32.mrb[0].mxu0
        %v3750 = vpop.f32.mrb[0].mxu0
        %v3751 = vadd.f32 0.0, %v3750
        %v3752 = vpop.f32.mrb[0].mxu0
        %3753 = vmatprep.mubr.bf16.mxu0 %v1265
        %3754 = vmatmul.mubr.bf16.gmra.mrb[0].mxu0 %v1257
        %v3755 = vpop.f32.mrb[0].mxu0
        %v3756 = vadd.f32 0.0, %v3755
        %v3757 = vpop.f32.mrb[0].mxu0
        %v3758 = vpop.f32.mrb[0].mxu0
        %v3759 = vadd.f32 0.0, %v3758
        %v3760 = vpop.f32.mrb[0].mxu0
        %3761 = vmatprep.mubr.bf16.mxu0 %v1281
        %3762 = vmatmul.mubr.bf16.gmra.mrb[0].mxu0 %v1273
        %v3763 = vpop.f32.mrb[0].mxu0
        %v3764 = vadd.f32 0.0, %v3763
        %v3765 = vpop.f32.mrb[0].mxu0
        %v3766 = vpop.f32.mrb[0].mxu0
        %v3767 = vadd.f32 0.0, %v3766
        %v3768 = vpop.f32.mrb[0].mxu0
        %3769 = vmatprep.mubr.bf16.mxu0 %v1297
        %3770 = vmatmul.mubr.bf16.gmra.mrb[0].mxu0 %v1289
        %v3771 = vpop.f32.mrb[0].mxu0
        %v3772 = vadd.f32 0.0, %v3771
        %v3773 = vpop.f32.mrb[0].mxu0
        %v3774 = vpop.f32.mrb[0].mxu0
        %v3775 = vadd.f32 0.0, %v3774
        %v3776 = vpop.f32.mrb[0].mxu0
        %3777 = vmatprep.mubr.bf16.mxu0 %v1313
        %3778 = vmatmul.mubr.bf16.gmra.mrb[0].mxu0 %v1305
        %v3779 = vpop.f32.mrb[0].mxu0
        %v3780 = vadd.f32 0.0, %v3779
        %v3781 = vpop.f32.mrb[0].mxu0
        %v3782 = vpop.f32.mrb[0].mxu0
        %v3783 = vadd.f32 0.0, %v3782
        %v3784 = vpop.f32.mrb[0].mxu0
        %3785 = vmatprep.mubr.bf16.mxu0 %v1329
        %3786 = vmatmul.mubr.bf16.gmra.mrb[0].mxu0 %v1321
        %v3787 = vpop.f32.mrb[0].mxu0
        %v3788 = vadd.f32 0.0, %v3787
        %v3789 = vpop.f32.mrb[0].mxu0
        %v3790 = vpop.f32.mrb[0].mxu0
        %v3791 = vadd.f32 0.0, %v3790
        %v3792 = vpop.f32.mrb[0].mxu0
        %3793 = vmatprep.mubr.bf16.mxu0 %v1345
        %3794 = vmatmul.mubr.bf16.gmra.mrb[0].mxu0 %v1337
        %v3795 = vpop.f32.mrb[0].mxu0
        %v3796 = vadd.f32 0.0, %v3795
        %v3797 = vpop.f32.mrb[0].mxu0
        %v3798 = vpop.f32.mrb[0].mxu0
        %v3799 = vadd.f32 0.0, %v3798
        %v3800 = vpop.f32.mrb[0].mxu0
        %3801 = vmatprep.mubr.bf16.mxu0 %v1361
        %3802 = vmatmul.mubr.bf16.gmra.mrb[0].mxu0 %v1353
        %v3803 = vpop.f32.mrb[0].mxu0
        %v3804 = vadd.f32 0.0, %v3803
        %v3805 = vpop.f32.mrb[0].mxu0
        %v3806 = vpop.f32.mrb[0].mxu0
        %v3807 = vadd.f32 0.0, %v3806
        %v3808 = vpop.f32.mrb[0].mxu0
        %3809 = vmatprep.mubr.bf16.mxu0 %v1377
        %3810 = vmatmul.mubr.bf16.gmra.mrb[0].mxu0 %v1369
        %v3811 = vpop.f32.mrb[0].mxu0
        %v3812 = vadd.f32 0.0, %v3811
        %v3813 = vpop.f32.mrb[0].mxu0
        %v3814 = vpop.f32.mrb[0].mxu0
        %v3815 = vadd.f32 0.0, %v3814
        %v3816 = vpop.f32.mrb[0].mxu0
        %3817 = vmatprep.mubr.bf16.mxu0 %v1393
        %3818 = vmatmul.mubr.bf16.gmra.mrb[0].mxu0 %v1385
        %v3819 = vpop.f32.mrb[0].mxu0
        %v3820 = vadd.f32 0.0, %v3819
        %v3821 = vpop.f32.mrb[0].mxu0
        %v3822 = vpop.f32.mrb[0].mxu0
        %v3823 = vadd.f32 0.0, %v3822
        %v3824 = vpop.f32.mrb[0].mxu0
        %3825 = vmatprep.mubr.bf16.mxu0 %v1409
        %3826 = vmatmul.mubr.bf16.gmra.mrb[0].mxu0 %v1401
        %v3827 = vpop.f32.mrb[0].mxu0
        %v3828 = vadd.f32 0.0, %v3827
        %v3829 = vpop.f32.mrb[0].mxu0
        %v3830 = vpop.f32.mrb[0].mxu0
        %v3831 = vadd.f32 0.0, %v3830
        %v3832 = vpop.f32.mrb[0].mxu0
        %3833 = vmatprep.mubr.bf16.mxu0 %v1425
        %3834 = vmatmul.mubr.bf16.gmra.mrb[0].mxu0 %v1417
        %v3835 = vpop.f32.mrb[0].mxu0
        %v3836 = vadd.f32 0.0, %v3835
        %v3837 = vpop.f32.mrb[0].mxu0
        %v3838 = vpop.f32.mrb[0].mxu0
        %v3839 = vadd.f32 0.0, %v3838
        %v3840 = vpop.f32.mrb[0].mxu0
        %3841 = vmatprep.mubr.bf16.mxu0 %v1441
        %3842 = vmatmul.mubr.bf16.gmra.mrb[0].mxu0 %v1433
        %v3843 = vpop.f32.mrb[0].mxu0
        %v3844 = vadd.f32 0.0, %v3843
        %v3845 = vpop.f32.mrb[0].mxu0
        %v3846 = vpop.f32.mrb[0].mxu0
        %v3847 = vadd.f32 0.0, %v3846
        %v3848 = vpop.f32.mrb[0].mxu0
        %3849 = vmatprep.mubr.bf16.mxu0 %v1457
        %3850 = vmatmul.mubr.bf16.gmra.mrb[0].mxu0 %v1449
        %v3851 = vpop.f32.mrb[0].mxu0
        %v3852 = vadd.f32 0.0, %v3851
        %v3853 = vpop.f32.mrb[0].mxu0
        %v3854 = vpop.f32.mrb[0].mxu0
        %v3855 = vadd.f32 0.0, %v3854
        %v3856 = vpop.f32.mrb[0].mxu0
        %3857 = vdwg.mxu0
        %v3858 = vadd.f32 %v3536, %v3732
        %v3859 = vadd.f32 %v3537, %v3735
        %v3860 = vadd.f32 %v3538, %v3740
        %v3861 = vadd.f32 %v3539, %v3743
        %v3862 = vadd.f32 %v3540, %v3748
        %v3863 = vadd.f32 %v3541, %v3751
        %v3864 = vadd.f32 %v3542, %v3756
        %v3865 = vadd.f32 %v3543, %v3759
        %v3866 = vadd.f32 %v3544, %v3764
        %v3867 = vadd.f32 %v3545, %v3767
        %v3868 = vadd.f32 %v3546, %v3772
        %v3869 = vadd.f32 %v3547, %v3775
        %v3870 = vadd.f32 %v3548, %v3780
        %v3871 = vadd.f32 %v3549, %v3783
        %v3872 = vadd.f32 %v3550, %v3788
        %v3873 = vadd.f32 %v3551, %v3791
        %v3874 = vadd.f32 %v3552, %v3796
        %v3875 = vadd.f32 %v3553, %v3799
        %v3876 = vadd.f32 %v3554, %v3804
        %v3877 = vadd.f32 %v3555, %v3807
        %v3878 = vadd.f32 %v3556, %v3812
        %v3879 = vadd.f32 %v3557, %v3815
        %v3880 = vadd.f32 %v3558, %v3820
        %v3881 = vadd.f32 %v3559, %v3823
        %v3882 = vadd.f32 %v3560, %v3828
        %v3883 = vadd.f32 %v3561, %v3831
        %v3884 = vadd.f32 %v3562, %v3836
        %v3885 = vadd.f32 %v3563, %v3839
        %v3886 = vadd.f32 %v3564, %v3844
        %v3887 = vadd.f32 %v3565, %v3847
        %v3888 = vadd.f32 %v3566, %v3852
        %v3889 = vadd.f32 %v3567, %v3855
        %s3890 = scalar_lea.vmem [#allocation4], 1792
        %v3891 = vld [vmem:[%s3890] sm:$0xf]
        %v3892 = vld [vmem:[%s3890 + $0x8] sm:$0xf]
        %v3893 = vld [vmem:[%s3890 + $0x10] sm:$0xf]
        %v3894 = vld [vmem:[%s3890 + $0x18] sm:$0xf]
        %v3895 = vld [vmem:[%s3890 + $0x20] sm:$0xf]
        %v3896 = vld [vmem:[%s3890 + $0x28] sm:$0xf]
        %v3897 = vld [vmem:[%s3890 + $0x30] sm:$0xf]
        %v3898 = vld [vmem:[%s3890 + $0x38] sm:$0xf]
        %v3899 = vld [vmem:[%s3890 + $0x40] sm:$0xf]
        %v3900 = vld [vmem:[%s3890 + $0x48] sm:$0xf]
        %v3901 = vld [vmem:[%s3890 + $0x50] sm:$0xf]
        %v3902 = vld [vmem:[%s3890 + $0x58] sm:$0xf]
        %v3903 = vld [vmem:[%s3890 + $0x60] sm:$0xf]
        %v3904 = vld [vmem:[%s3890 + $0x68] sm:$0xf]
        %v3905 = vld [vmem:[%s3890 + $0x70] sm:$0xf]
        %v3906 = vld [vmem:[%s3890 + $0x78] sm:$0xf]
        %v3907 = vld [vmem:[%s3890 + $0x80] sm:$0xf]
        %v3908 = vld [vmem:[%s3890 + $0x88] sm:$0xf]
        %v3909 = vld [vmem:[%s3890 + $0x90] sm:$0xf]
        %v3910 = vld [vmem:[%s3890 + $0x98] sm:$0xf]
        %v3911 = vld [vmem:[%s3890 + $0xa0] sm:$0xf]
        %v3912 = vld [vmem:[%s3890 + $0xa8] sm:$0xf]
        %v3913 = vld [vmem:[%s3890 + $0xb0] sm:$0xf]
        %v3914 = vld [vmem:[%s3890 + $0xb8] sm:$0xf]
        %v3915 = vld [vmem:[%s3890 + $0xc0] sm:$0xf]
        %v3916 = vld [vmem:[%s3890 + $0xc8] sm:$0xf]
        %v3917 = vld [vmem:[%s3890 + $0xd0] sm:$0xf]
        %v3918 = vld [vmem:[%s3890 + $0xd8] sm:$0xf]
        %v3919 = vld [vmem:[%s3890 + $0xe0] sm:$0xf]
        %v3920 = vld [vmem:[%s3890 + $0xe8] sm:$0xf]
        %v3921 = vld [vmem:[%s3890 + $0xf0] sm:$0xf]
        %v3922 = vld [vmem:[%s3890 + $0xf8] sm:$0xf]
        %v3959 = vunpack.c.l.b16 %v3891
        %v3960 = vunpack.c.l.b16 %v3892
        %v3961 = vunpack.c.l.b16 %v3893
        %v3962 = vunpack.c.l.b16 %v3894
        %v3963 = vunpack.c.l.b16 %v3895
        %v3964 = vunpack.c.l.b16 %v3896
        %v3965 = vunpack.c.l.b16 %v3897
        %v3966 = vunpack.c.l.b16 %v3898
        %v3967 = vunpack.c.l.b16 %v3899
        %v3968 = vunpack.c.l.b16 %v3900
        %v3969 = vunpack.c.l.b16 %v3901
        %v3970 = vunpack.c.l.b16 %v3902
        %v3971 = vunpack.c.l.b16 %v3903
        %v3972 = vunpack.c.l.b16 %v3904
        %v3973 = vunpack.c.l.b16 %v3905
        %v3974 = vunpack.c.l.b16 %v3906
        %v3975 = vunpack.c.l.b16 %v3907
        %v3976 = vunpack.c.l.b16 %v3908
        %v3977 = vunpack.c.l.b16 %v3909
        %v3978 = vunpack.c.l.b16 %v3910
        %v3979 = vunpack.c.l.b16 %v3911
        %v3980 = vunpack.c.l.b16 %v3912
        %v3981 = vunpack.c.l.b16 %v3913
        %v3982 = vunpack.c.l.b16 %v3914
        %v3983 = vunpack.c.l.b16 %v3915
        %v3984 = vunpack.c.l.b16 %v3916
        %v3985 = vunpack.c.l.b16 %v3917
        %v3986 = vunpack.c.l.b16 %v3918
        %v3987 = vunpack.c.l.b16 %v3919
        %v3988 = vunpack.c.l.b16 %v3920
        %v3989 = vunpack.c.l.b16 %v3921
        %v3990 = vunpack.c.l.b16 %v3922
        %v3991 = vpack.c.b16 %v3960, %v3959
        %v3992 = vpack.c.b16 %v3962, %v3961
        %v3993 = vpack.c.b16 %v3964, %v3963
        %v3994 = vpack.c.b16 %v3966, %v3965
        %v3995 = vpack.c.b16 %v3968, %v3967
        %v3996 = vpack.c.b16 %v3970, %v3969
        %v3997 = vpack.c.b16 %v3972, %v3971
        %v3998 = vpack.c.b16 %v3974, %v3973
        %v3999 = vpack.c.b16 %v3976, %v3975
        %v4000 = vpack.c.b16 %v3978, %v3977
        %v4001 = vpack.c.b16 %v3980, %v3979
        %v4002 = vpack.c.b16 %v3982, %v3981
        %v4003 = vpack.c.b16 %v3984, %v3983
        %v4004 = vpack.c.b16 %v3986, %v3985
        %v4005 = vpack.c.b16 %v3988, %v3987
        %v4006 = vpack.c.b16 %v3990, %v3989
        %4023 = vmatprep.subr.bf16.mxu0 0
        %4024 = vmatpush1.bf16.msra.mxu0 %v3991
        %4025 = vmatprep.subr.bf16.mxu0 0
        %4026 = vmatpush1.bf16.msra.mxu0 %v3992
        %4027 = vmatprep.subr.bf16.mxu0 0
        %4028 = vmatpush1.bf16.msra.mxu0 %v3993
        %4029 = vmatprep.subr.bf16.mxu0 0
        %4030 = vmatpush1.bf16.msra.mxu0 %v3994
        %4031 = vmatprep.subr.bf16.mxu0 0
        %4032 = vmatpush1.bf16.msra.mxu0 %v3995
        %4033 = vmatprep.subr.bf16.mxu0 0
        %4034 = vmatpush1.bf16.msra.mxu0 %v3996
        %4035 = vmatprep.subr.bf16.mxu0 0
        %4036 = vmatpush1.bf16.msra.mxu0 %v3997
        %4037 = vmatprep.subr.bf16.mxu0 0
        %4038 = vmatpush1.bf16.msra.mxu0 %v3998
        %4039 = vmatprep.subr.bf16.mxu0 0
        %4040 = vmatpush1.bf16.msra.mxu0 %v3999
        %4041 = vmatprep.subr.bf16.mxu0 0
        %4042 = vmatpush1.bf16.msra.mxu0 %v4000
        %4043 = vmatprep.subr.bf16.mxu0 0
        %4044 = vmatpush1.bf16.msra.mxu0 %v4001
        %4045 = vmatprep.subr.bf16.mxu0 0
        %4046 = vmatpush1.bf16.msra.mxu0 %v4002
        %4047 = vmatprep.subr.bf16.mxu0 0
        %4048 = vmatpush1.bf16.msra.mxu0 %v4003
        %4049 = vmatprep.subr.bf16.mxu0 0
        %4050 = vmatpush1.bf16.msra.mxu0 %v4004
        %4051 = vmatprep.subr.bf16.mxu0 0
        %4052 = vmatpush1.bf16.msra.mxu0 %v4005
        %4053 = vmatprep.subr.bf16.mxu0 0
        %4054 = vmatpush1.bf16.msra.mxu0 %v4006
        %4055 = vmatprep.mubr.bf16.mxu0 %v1108
        %4056 = vmatmul.mubr.bf16.gmra.mrb[0].mxu0 %v1107
        %v4057 = vpop.f32.mrb[0].mxu0
        %v4058 = vadd.f32 0.0, %v4057
        %v4059 = vpop.f32.mrb[0].mxu0
        %v4060 = vpop.f32.mrb[0].mxu0
        %v4061 = vadd.f32 0.0, %v4060
        %v4062 = vpop.f32.mrb[0].mxu0
        %4063 = vmatprep.mubr.bf16.mxu0 %v1110
        %4064 = vmatmul.mubr.bf16.gmra.mrb[0].mxu0 %v1109
        %v4065 = vpop.f32.mrb[0].mxu0
        %v4066 = vadd.f32 0.0, %v4065
        %v4067 = vpop.f32.mrb[0].mxu0
        %v4068 = vpop.f32.mrb[0].mxu0
        %v4069 = vadd.f32 0.0, %v4068
        %v4070 = vpop.f32.mrb[0].mxu0
        %4071 = vmatprep.mubr.bf16.mxu0 %v1112
        %4072 = vmatmul.mubr.bf16.gmra.mrb[0].mxu0 %v1111
        %v4073 = vpop.f32.mrb[0].mxu0
        %v4074 = vadd.f32 0.0, %v4073
        %v4075 = vpop.f32.mrb[0].mxu0
        %v4076 = vpop.f32.mrb[0].mxu0
        %v4077 = vadd.f32 0.0, %v4076
        %v4078 = vpop.f32.mrb[0].mxu0
        %4079 = vmatprep.mubr.bf16.mxu0 %v1114
        %4080 = vmatmul.mubr.bf16.gmra.mrb[0].mxu0 %v1113
        %v4081 = vpop.f32.mrb[0].mxu0
        %v4082 = vadd.f32 0.0, %v4081
        %v4083 = vpop.f32.mrb[0].mxu0
        %v4084 = vpop.f32.mrb[0].mxu0
        %v4085 = vadd.f32 0.0, %v4084
        %v4086 = vpop.f32.mrb[0].mxu0
        %4087 = vmatprep.mubr.bf16.mxu0 %v1116
        %4088 = vmatmul.mubr.bf16.gmra.mrb[0].mxu0 %v1115
        %v4089 = vpop.f32.mrb[0].mxu0
        %v4090 = vadd.f32 0.0, %v4089
        %v4091 = vpop.f32.mrb[0].mxu0
        %v4092 = vpop.f32.mrb[0].mxu0
        %v4093 = vadd.f32 0.0, %v4092
        %v4094 = vpop.f32.mrb[0].mxu0
        %4095 = vmatprep.mubr.bf16.mxu0 %v1118
        %4096 = vmatmul.mubr.bf16.gmra.mrb[0].mxu0 %v1117
        %v4097 = vpop.f32.mrb[0].mxu0
        %v4098 = vadd.f32 0.0, %v4097
        %v4099 = vpop.f32.mrb[0].mxu0
        %v4100 = vpop.f32.mrb[0].mxu0
        %v4101 = vadd.f32 0.0, %v4100
        %v4102 = vpop.f32.mrb[0].mxu0
        %4103 = vmatprep.mubr.bf16.mxu0 %v1120
        %4104 = vmatmul.mubr.bf16.gmra.mrb[0].mxu0 %v1119
        %v4105 = vpop.f32.mrb[0].mxu0
        %v4106 = vadd.f32 0.0, %v4105
        %v4107 = vpop.f32.mrb[0].mxu0
        %v4108 = vpop.f32.mrb[0].mxu0
        %v4109 = vadd.f32 0.0, %v4108
        %v4110 = vpop.f32.mrb[0].mxu0
        %4111 = vmatprep.mubr.bf16.mxu0 %v1122
        %4112 = vmatmul.mubr.bf16.gmra.mrb[0].mxu0 %v1121
        %v4113 = vpop.f32.mrb[0].mxu0
        %v4114 = vadd.f32 0.0, %v4113
        %v4115 = vpop.f32.mrb[0].mxu0
        %v4116 = vpop.f32.mrb[0].mxu0
        %v4117 = vadd.f32 0.0, %v4116
        %v4118 = vpop.f32.mrb[0].mxu0
        %4119 = vmatprep.mubr.bf16.mxu0 %v1124
        %4120 = vmatmul.mubr.bf16.gmra.mrb[0].mxu0 %v1123
        %v4121 = vpop.f32.mrb[0].mxu0
        %v4122 = vadd.f32 0.0, %v4121
        %v4123 = vpop.f32.mrb[0].mxu0
        %v4124 = vpop.f32.mrb[0].mxu0
        %v4125 = vadd.f32 0.0, %v4124
        %v4126 = vpop.f32.mrb[0].mxu0
        %4127 = vmatprep.mubr.bf16.mxu0 %v1126
        %4128 = vmatmul.mubr.bf16.gmra.mrb[0].mxu0 %v1125
        %v4129 = vpop.f32.mrb[0].mxu0
        %v4130 = vadd.f32 0.0, %v4129
        %v4131 = vpop.f32.mrb[0].mxu0
        %v4132 = vpop.f32.mrb[0].mxu0
        %v4133 = vadd.f32 0.0, %v4132
        %v4134 = vpop.f32.mrb[0].mxu0
        %4135 = vmatprep.mubr.bf16.mxu0 %v1128
        %4136 = vmatmul.mubr.bf16.gmra.mrb[0].mxu0 %v1127
        %v4137 = vpop.f32.mrb[0].mxu0
        %v4138 = vadd.f32 0.0, %v4137
        %v4139 = vpop.f32.mrb[0].mxu0
        %v4140 = vpop.f32.mrb[0].mxu0
        %v4141 = vadd.f32 0.0, %v4140
        %v4142 = vpop.f32.mrb[0].mxu0
        %4143 = vmatprep.mubr.bf16.mxu0 %v1130
        %4144 = vmatmul.mubr.bf16.gmra.mrb[0].mxu0 %v1129
        %v4145 = vpop.f32.mrb[0].mxu0
        %v4146 = vadd.f32 0.0, %v4145
        %v4147 = vpop.f32.mrb[0].mxu0
        %v4148 = vpop.f32.mrb[0].mxu0
        %v4149 = vadd.f32 0.0, %v4148
        %v4150 = vpop.f32.mrb[0].mxu0
        %4151 = vmatprep.mubr.bf16.mxu0 %v1132
        %4152 = vmatmul.mubr.bf16.gmra.mrb[0].mxu0 %v1131
        %v4153 = vpop.f32.mrb[0].mxu0
        %v4154 = vadd.f32 0.0, %v4153
        %v4155 = vpop.f32.mrb[0].mxu0
        %v4156 = vpop.f32.mrb[0].mxu0
        %v4157 = vadd.f32 0.0, %v4156
        %v4158 = vpop.f32.mrb[0].mxu0
        %4159 = vmatprep.mubr.bf16.mxu0 %v1134
        %4160 = vmatmul.mubr.bf16.gmra.mrb[0].mxu0 %v1133
        %v4161 = vpop.f32.mrb[0].mxu0
        %v4162 = vadd.f32 0.0, %v4161
        %v4163 = vpop.f32.mrb[0].mxu0
        %v4164 = vpop.f32.mrb[0].mxu0
        %v4165 = vadd.f32 0.0, %v4164
        %v4166 = vpop.f32.mrb[0].mxu0
        %4167 = vmatprep.mubr.bf16.mxu0 %v1136
        %4168 = vmatmul.mubr.bf16.gmra.mrb[0].mxu0 %v1135
        %v4169 = vpop.f32.mrb[0].mxu0
        %v4170 = vadd.f32 0.0, %v4169
        %v4171 = vpop.f32.mrb[0].mxu0
        %v4172 = vpop.f32.mrb[0].mxu0
        %v4173 = vadd.f32 0.0, %v4172
        %v4174 = vpop.f32.mrb[0].mxu0
        %4175 = vmatprep.mubr.bf16.mxu0 %v1138
        %4176 = vmatmul.mubr.bf16.gmra.mrb[0].mxu0 %v1137
        %v4177 = vpop.f32.mrb[0].mxu0
        %v4178 = vadd.f32 0.0, %v4177
        %v4179 = vpop.f32.mrb[0].mxu0
        %v4180 = vpop.f32.mrb[0].mxu0
        %v4181 = vadd.f32 0.0, %v4180
        %v4182 = vpop.f32.mrb[0].mxu0
        %4183 = vdwg.mxu0
        %v4184 = vadd.f32 %v3858, %v4058
        %v4185 = vadd.f32 %v3859, %v4061
        %v4186 = vadd.f32 %v3860, %v4066
        %v4187 = vadd.f32 %v3861, %v4069
        %v4188 = vadd.f32 %v3862, %v4074
        %v4189 = vadd.f32 %v3863, %v4077
        %v4190 = vadd.f32 %v3864, %v4082
        %v4191 = vadd.f32 %v3865, %v4085
        %v4192 = vadd.f32 %v3866, %v4090
        %v4193 = vadd.f32 %v3867, %v4093
        %v4194 = vadd.f32 %v3868, %v4098
        %v4195 = vadd.f32 %v3869, %v4101
        %v4196 = vadd.f32 %v3870, %v4106
        %v4197 = vadd.f32 %v3871, %v4109
        %v4198 = vadd.f32 %v3872, %v4114
        %v4199 = vadd.f32 %v3873, %v4117
        %v4200 = vadd.f32 %v3874, %v4122
        %v4201 = vadd.f32 %v3875, %v4125
        %v4202 = vadd.f32 %v3876, %v4130
        %v4203 = vadd.f32 %v3877, %v4133
        %v4204 = vadd.f32 %v3878, %v4138
        %v4205 = vadd.f32 %v3879, %v4141
        %v4206 = vadd.f32 %v3880, %v4146
        %v4207 = vadd.f32 %v3881, %v4149
        %v4208 = vadd.f32 %v3882, %v4154
        %v4209 = vadd.f32 %v3883, %v4157
        %v4210 = vadd.f32 %v3884, %v4162
        %v4211 = vadd.f32 %v3885, %v4165
        %v4212 = vadd.f32 %v3886, %v4170
        %v4213 = vadd.f32 %v3887, %v4173
        %v4214 = vadd.f32 %v3888, %v4178
        %v4215 = vadd.f32 %v3889, %v4181
        %s4216 = scalar_lea.vmem [#allocation4], 2048
        %v4217 = vld [vmem:[%s4216] sm:$0xf]
        %v4218 = vld [vmem:[%s4216 + $0x8] sm:$0xf]
        %v4219 = vld [vmem:[%s4216 + $0x10] sm:$0xf]
        %v4220 = vld [vmem:[%s4216 + $0x18] sm:$0xf]
        %v4221 = vld [vmem:[%s4216 + $0x20] sm:$0xf]
        %v4222 = vld [vmem:[%s4216 + $0x28] sm:$0xf]
        %v4223 = vld [vmem:[%s4216 + $0x30] sm:$0xf]
        %v4224 = vld [vmem:[%s4216 + $0x38] sm:$0xf]
        %v4225 = vld [vmem:[%s4216 + $0x40] sm:$0xf]
        %v4226 = vld [vmem:[%s4216 + $0x48] sm:$0xf]
        %v4227 = vld [vmem:[%s4216 + $0x50] sm:$0xf]
        %v4228 = vld [vmem:[%s4216 + $0x58] sm:$0xf]
        %v4229 = vld [vmem:[%s4216 + $0x60] sm:$0xf]
        %v4230 = vld [vmem:[%s4216 + $0x68] sm:$0xf]
        %v4231 = vld [vmem:[%s4216 + $0x70] sm:$0xf]
        %v4232 = vld [vmem:[%s4216 + $0x78] sm:$0xf]
        %v4233 = vld [vmem:[%s4216 + $0x80] sm:$0xf]
        %v4234 = vld [vmem:[%s4216 + $0x88] sm:$0xf]
        %v4235 = vld [vmem:[%s4216 + $0x90] sm:$0xf]
        %v4236 = vld [vmem:[%s4216 + $0x98] sm:$0xf]
        %v4237 = vld [vmem:[%s4216 + $0xa0] sm:$0xf]
        %v4238 = vld [vmem:[%s4216 + $0xa8] sm:$0xf]
        %v4239 = vld [vmem:[%s4216 + $0xb0] sm:$0xf]
        %v4240 = vld [vmem:[%s4216 + $0xb8] sm:$0xf]
        %v4241 = vld [vmem:[%s4216 + $0xc0] sm:$0xf]
        %v4242 = vld [vmem:[%s4216 + $0xc8] sm:$0xf]
        %v4243 = vld [vmem:[%s4216 + $0xd0] sm:$0xf]
        %v4244 = vld [vmem:[%s4216 + $0xd8] sm:$0xf]
        %v4245 = vld [vmem:[%s4216 + $0xe0] sm:$0xf]
        %v4246 = vld [vmem:[%s4216 + $0xe8] sm:$0xf]
        %v4247 = vld [vmem:[%s4216 + $0xf0] sm:$0xf]
        %v4248 = vld [vmem:[%s4216 + $0xf8] sm:$0xf]
        %v4281 = vunpack.c.l.b16 %v4217
        %v4282 = vunpack.c.l.b16 %v4218
        %v4283 = vunpack.c.l.b16 %v4219
        %v4284 = vunpack.c.l.b16 %v4220
        %v4285 = vunpack.c.l.b16 %v4221
        %v4286 = vunpack.c.l.b16 %v4222
        %v4287 = vunpack.c.l.b16 %v4223
        %v4288 = vunpack.c.l.b16 %v4224
        %v4289 = vunpack.c.l.b16 %v4225
        %v4290 = vunpack.c.l.b16 %v4226
        %v4291 = vunpack.c.l.b16 %v4227
        %v4292 = vunpack.c.l.b16 %v4228
        %v4293 = vunpack.c.l.b16 %v4229
        %v4294 = vunpack.c.l.b16 %v4230
        %v4295 = vunpack.c.l.b16 %v4231
        %v4296 = vunpack.c.l.b16 %v4232
        %v4297 = vunpack.c.l.b16 %v4233
        %v4298 = vunpack.c.l.b16 %v4234
        %v4299 = vunpack.c.l.b16 %v4235
        %v4300 = vunpack.c.l.b16 %v4236
        %v4301 = vunpack.c.l.b16 %v4237
        %v4302 = vunpack.c.l.b16 %v4238
        %v4303 = vunpack.c.l.b16 %v4239
        %v4304 = vunpack.c.l.b16 %v4240
        %v4305 = vunpack.c.l.b16 %v4241
        %v4306 = vunpack.c.l.b16 %v4242
        %v4307 = vunpack.c.l.b16 %v4243
        %v4308 = vunpack.c.l.b16 %v4244
        %v4309 = vunpack.c.l.b16 %v4245
        %v4310 = vunpack.c.l.b16 %v4246
        %v4311 = vunpack.c.l.b16 %v4247
        %v4312 = vunpack.c.l.b16 %v4248
        %v4313 = vpack.c.b16 %v4282, %v4281
        %v4314 = vpack.c.b16 %v4284, %v4283
        %v4315 = vpack.c.b16 %v4286, %v4285
        %v4316 = vpack.c.b16 %v4288, %v4287
        %v4317 = vpack.c.b16 %v4290, %v4289
        %v4318 = vpack.c.b16 %v4292, %v4291
        %v4319 = vpack.c.b16 %v4294, %v4293
        %v4320 = vpack.c.b16 %v4296, %v4295
        %v4321 = vpack.c.b16 %v4298, %v4297
        %v4322 = vpack.c.b16 %v4300, %v4299
        %v4323 = vpack.c.b16 %v4302, %v4301
        %v4324 = vpack.c.b16 %v4304, %v4303
        %v4325 = vpack.c.b16 %v4306, %v4305
        %v4326 = vpack.c.b16 %v4308, %v4307
        %v4327 = vpack.c.b16 %v4310, %v4309
        %v4328 = vpack.c.b16 %v4312, %v4311
        %4345 = vmatprep.subr.bf16.mxu0 0
        %4346 = vmatpush1.bf16.msra.mxu0 %v4313
        %4347 = vmatprep.subr.bf16.mxu0 0
        %4348 = vmatpush1.bf16.msra.mxu0 %v4314
        %4349 = vmatprep.subr.bf16.mxu0 0
        %4350 = vmatpush1.bf16.msra.mxu0 %v4315
        %4351 = vmatprep.subr.bf16.mxu0 0
        %4352 = vmatpush1.bf16.msra.mxu0 %v4316
        %4353 = vmatprep.subr.bf16.mxu0 0
        %4354 = vmatpush1.bf16.msra.mxu0 %v4317
        %4355 = vmatprep.subr.bf16.mxu0 0
        %4356 = vmatpush1.bf16.msra.mxu0 %v4318
        %4357 = vmatprep.subr.bf16.mxu0 0
        %4358 = vmatpush1.bf16.msra.mxu0 %v4319
        %4359 = vmatprep.subr.bf16.mxu0 0
        %4360 = vmatpush1.bf16.msra.mxu0 %v4320
        %4361 = vmatprep.subr.bf16.mxu0 0
        %4362 = vmatpush1.bf16.msra.mxu0 %v4321
        %4363 = vmatprep.subr.bf16.mxu0 0
        %4364 = vmatpush1.bf16.msra.mxu0 %v4322
        %4365 = vmatprep.subr.bf16.mxu0 0
        %4366 = vmatpush1.bf16.msra.mxu0 %v4323
        %4367 = vmatprep.subr.bf16.mxu0 0
        %4368 = vmatpush1.bf16.msra.mxu0 %v4324
        %4369 = vmatprep.subr.bf16.mxu0 0
        %4370 = vmatpush1.bf16.msra.mxu0 %v4325
        %4371 = vmatprep.subr.bf16.mxu0 0
        %4372 = vmatpush1.bf16.msra.mxu0 %v4326
        %4373 = vmatprep.subr.bf16.mxu0 0
        %4374 = vmatpush1.bf16.msra.mxu0 %v4327
        %4375 = vmatprep.subr.bf16.mxu0 0
        %4376 = vmatpush1.bf16.msra.mxu0 %v4328
        %4377 = vmatprep.mubr.bf16.mxu0 %v1534
        %4378 = vmatmul.mubr.bf16.gmra.mrb[0].mxu0 %v1531
        %v4379 = vpop.f32.mrb[0].mxu0
        %v4380 = vadd.f32 0.0, %v4379
        %v4381 = vpop.f32.mrb[0].mxu0
        %v4382 = vpop.f32.mrb[0].mxu0
        %v4383 = vadd.f32 0.0, %v4382
        %v4384 = vpop.f32.mrb[0].mxu0
        %4385 = vmatprep.mubr.bf16.mxu0 %v1540
        %4386 = vmatmul.mubr.bf16.gmra.mrb[0].mxu0 %v1537
        %v4387 = vpop.f32.mrb[0].mxu0
        %v4388 = vadd.f32 0.0, %v4387
        %v4389 = vpop.f32.mrb[0].mxu0
        %v4390 = vpop.f32.mrb[0].mxu0
        %v4391 = vadd.f32 0.0, %v4390
        %v4392 = vpop.f32.mrb[0].mxu0
        %4393 = vmatprep.mubr.bf16.mxu0 %v1546
        %4394 = vmatmul.mubr.bf16.gmra.mrb[0].mxu0 %v1543
        %v4395 = vpop.f32.mrb[0].mxu0
        %v4396 = vadd.f32 0.0, %v4395
        %v4397 = vpop.f32.mrb[0].mxu0
        %v4398 = vpop.f32.mrb[0].mxu0
        %v4399 = vadd.f32 0.0, %v4398
        %v4400 = vpop.f32.mrb[0].mxu0
        %4401 = vmatprep.mubr.bf16.mxu0 %v1552
        %4402 = vmatmul.mubr.bf16.gmra.mrb[0].mxu0 %v1549
        %v4403 = vpop.f32.mrb[0].mxu0
        %v4404 = vadd.f32 0.0, %v4403
        %v4405 = vpop.f32.mrb[0].mxu0
        %v4406 = vpop.f32.mrb[0].mxu0
        %v4407 = vadd.f32 0.0, %v4406
        %v4408 = vpop.f32.mrb[0].mxu0
        %4409 = vmatprep.mubr.bf16.mxu0 %v1558
        %4410 = vmatmul.mubr.bf16.gmra.mrb[0].mxu0 %v1555
        %v4411 = vpop.f32.mrb[0].mxu0
        %v4412 = vadd.f32 0.0, %v4411
        %v4413 = vpop.f32.mrb[0].mxu0
        %v4414 = vpop.f32.mrb[0].mxu0
        %v4415 = vadd.f32 0.0, %v4414
        %v4416 = vpop.f32.mrb[0].mxu0
        %4417 = vmatprep.mubr.bf16.mxu0 %v1564
        %4418 = vmatmul.mubr.bf16.gmra.mrb[0].mxu0 %v1561
        %v4419 = vpop.f32.mrb[0].mxu0
        %v4420 = vadd.f32 0.0, %v4419
        %v4421 = vpop.f32.mrb[0].mxu0
        %v4422 = vpop.f32.mrb[0].mxu0
        %v4423 = vadd.f32 0.0, %v4422
        %v4424 = vpop.f32.mrb[0].mxu0
        %4425 = vmatprep.mubr.bf16.mxu0 %v1570
        %4426 = vmatmul.mubr.bf16.gmra.mrb[0].mxu0 %v1567
        %v4427 = vpop.f32.mrb[0].mxu0
        %v4428 = vadd.f32 0.0, %v4427
        %v4429 = vpop.f32.mrb[0].mxu0
        %v4430 = vpop.f32.mrb[0].mxu0
        %v4431 = vadd.f32 0.0, %v4430
        %v4432 = vpop.f32.mrb[0].mxu0
        %4433 = vmatprep.mubr.bf16.mxu0 %v1576
        %4434 = vmatmul.mubr.bf16.gmra.mrb[0].mxu0 %v1573
        %v4435 = vpop.f32.mrb[0].mxu0
        %v4436 = vadd.f32 0.0, %v4435
        %v4437 = vpop.f32.mrb[0].mxu0
        %v4438 = vpop.f32.mrb[0].mxu0
        %v4439 = vadd.f32 0.0, %v4438
        %v4440 = vpop.f32.mrb[0].mxu0
        %4441 = vmatprep.mubr.bf16.mxu0 %v1582
        %4442 = vmatmul.mubr.bf16.gmra.mrb[0].mxu0 %v1579
        %v4443 = vpop.f32.mrb[0].mxu0
        %v4444 = vadd.f32 0.0, %v4443
        %v4445 = vpop.f32.mrb[0].mxu0
        %v4446 = vpop.f32.mrb[0].mxu0
        %v4447 = vadd.f32 0.0, %v4446
        %v4448 = vpop.f32.mrb[0].mxu0
        %4449 = vmatprep.mubr.bf16.mxu0 %v1588
        %4450 = vmatmul.mubr.bf16.gmra.mrb[0].mxu0 %v1585
        %v4451 = vpop.f32.mrb[0].mxu0
        %v4452 = vadd.f32 0.0, %v4451
        %v4453 = vpop.f32.mrb[0].mxu0
        %v4454 = vpop.f32.mrb[0].mxu0
        %v4455 = vadd.f32 0.0, %v4454
        %v4456 = vpop.f32.mrb[0].mxu0
        %4457 = vmatprep.mubr.bf16.mxu0 %v1594
        %4458 = vmatmul.mubr.bf16.gmra.mrb[0].mxu0 %v1591
        %v4459 = vpop.f32.mrb[0].mxu0
        %v4460 = vadd.f32 0.0, %v4459
        %v4461 = vpop.f32.mrb[0].mxu0
        %v4462 = vpop.f32.mrb[0].mxu0
        %v4463 = vadd.f32 0.0, %v4462
        %v4464 = vpop.f32.mrb[0].mxu0
        %4465 = vmatprep.mubr.bf16.mxu0 %v1600
        %4466 = vmatmul.mubr.bf16.gmra.mrb[0].mxu0 %v1597
        %v4467 = vpop.f32.mrb[0].mxu0
        %v4468 = vadd.f32 0.0, %v4467
        %v4469 = vpop.f32.mrb[0].mxu0
        %v4470 = vpop.f32.mrb[0].mxu0
        %v4471 = vadd.f32 0.0, %v4470
        %v4472 = vpop.f32.mrb[0].mxu0
        %4473 = vmatprep.mubr.bf16.mxu0 %v1606
        %4474 = vmatmul.mubr.bf16.gmra.mrb[0].mxu0 %v1603
        %v4475 = vpop.f32.mrb[0].mxu0
        %v4476 = vadd.f32 0.0, %v4475
        %v4477 = vpop.f32.mrb[0].mxu0
        %v4478 = vpop.f32.mrb[0].mxu0
        %v4479 = vadd.f32 0.0, %v4478
        %v4480 = vpop.f32.mrb[0].mxu0
        %4481 = vmatprep.mubr.bf16.mxu0 %v1612
        %4482 = vmatmul.mubr.bf16.gmra.mrb[0].mxu0 %v1609
        %v4483 = vpop.f32.mrb[0].mxu0
        %v4484 = vadd.f32 0.0, %v4483
        %v4485 = vpop.f32.mrb[0].mxu0
        %v4486 = vpop.f32.mrb[0].mxu0
        %v4487 = vadd.f32 0.0, %v4486
        %v4488 = vpop.f32.mrb[0].mxu0
        %4489 = vmatprep.mubr.bf16.mxu0 %v1618
        %4490 = vmatmul.mubr.bf16.gmra.mrb[0].mxu0 %v1615
        %v4491 = vpop.f32.mrb[0].mxu0
        %v4492 = vadd.f32 0.0, %v4491
        %v4493 = vpop.f32.mrb[0].mxu0
        %v4494 = vpop.f32.mrb[0].mxu0
        %v4495 = vadd.f32 0.0, %v4494
        %v4496 = vpop.f32.mrb[0].mxu0
        %4497 = vmatprep.mubr.bf16.mxu0 %v1664
        %4498 = vmatmul.mubr.bf16.gmra.mrb[0].mxu0 %v1663
        %v4499 = vpop.f32.mrb[0].mxu0
        %v4500 = vadd.f32 0.0, %v4499
        %v4501 = vpop.f32.mrb[0].mxu0
        %v4502 = vpop.f32.mrb[0].mxu0
        %v4503 = vadd.f32 0.0, %v4502
        %v4504 = vpop.f32.mrb[0].mxu0
        %4505 = vdwg.mxu0
        %v4506 = vadd.f32 %v4184, %v4380
        %v4507 = vadd.f32 %v4185, %v4383
        %v4508 = vadd.f32 %v4186, %v4388
        %v4509 = vadd.f32 %v4187, %v4391
        %v4510 = vadd.f32 %v4188, %v4396
        %v4511 = vadd.f32 %v4189, %v4399
        %v4512 = vadd.f32 %v4190, %v4404
        %v4513 = vadd.f32 %v4191, %v4407
        %v4514 = vadd.f32 %v4192, %v4412
        %v4515 = vadd.f32 %v4193, %v4415
        %v4516 = vadd.f32 %v4194, %v4420
        %v4517 = vadd.f32 %v4195, %v4423
        %v4518 = vadd.f32 %v4196, %v4428
        %v4519 = vadd.f32 %v4197, %v4431
        %v4520 = vadd.f32 %v4198, %v4436
        %v4521 = vadd.f32 %v4199, %v4439
        %v4522 = vadd.f32 %v4200, %v4444
        %v4523 = vadd.f32 %v4201, %v4447
        %v4524 = vadd.f32 %v4202, %v4452
        %v4525 = vadd.f32 %v4203, %v4455
        %v4526 = vadd.f32 %v4204, %v4460
        %v4527 = vadd.f32 %v4205, %v4463
        %v4528 = vadd.f32 %v4206, %v4468
        %v4529 = vadd.f32 %v4207, %v4471
        %v4530 = vadd.f32 %v4208, %v4476
        %v4531 = vadd.f32 %v4209, %v4479
        %v4532 = vadd.f32 %v4210, %v4484
        %v4533 = vadd.f32 %v4211, %v4487
        %v4534 = vadd.f32 %v4212, %v4492
        %v4535 = vadd.f32 %v4213, %v4495
        %v4536 = vadd.f32 %v4214, %v4500
        %v4537 = vadd.f32 %v4215, %v4503
        %v4538 = vld [vmem:[#allocation7] sm:$0x1]
        %v4540 = vlaneseq
        %v4541 = vshrl.u32 %v4540, 7
        %v4542 = vsub.s32 0, %v4541
        %v4543 = vrot.slane %v4538, %v4542
        %v4545 = vadd.f32 %v4506, %v4543
        %v4546 = vadd.f32 %v4507, %v4543
        %v4547 = vadd.f32 %v4508, %v4543
        %v4548 = vadd.f32 %v4509, %v4543
        %v4549 = vadd.f32 %v4510, %v4543
        %v4550 = vadd.f32 %v4511, %v4543
        %v4551 = vadd.f32 %v4512, %v4543
        %v4552 = vadd.f32 %v4513, %v4543
        %v4553 = vadd.f32 %v4514, %v4543
        %v4554 = vadd.f32 %v4515, %v4543
        %v4555 = vadd.f32 %v4516, %v4543
        %v4556 = vadd.f32 %v4517, %v4543
        %v4557 = vadd.f32 %v4518, %v4543
        %v4558 = vadd.f32 %v4519, %v4543
        %v4559 = vadd.f32 %v4520, %v4543
        %v4560 = vadd.f32 %v4521, %v4543
        %v4561 = vadd.f32 %v4522, %v4543
        %v4562 = vadd.f32 %v4523, %v4543
        %v4563 = vadd.f32 %v4524, %v4543
        %v4564 = vadd.f32 %v4525, %v4543
        %v4565 = vadd.f32 %v4526, %v4543
        %v4566 = vadd.f32 %v4527, %v4543
        %v4567 = vadd.f32 %v4528, %v4543
        %v4568 = vadd.f32 %v4529, %v4543
        %v4569 = vadd.f32 %v4530, %v4543
        %v4570 = vadd.f32 %v4531, %v4543
        %v4571 = vadd.f32 %v4532, %v4543
        %v4572 = vadd.f32 %v4533, %v4543
        %v4573 = vadd.f32 %v4534, %v4543
        %v4574 = vadd.f32 %v4535, %v4543
        %v4575 = vadd.f32 %v4536, %v4543
        %v4576 = vadd.f32 %v4537, %v4543
        %v4577 = vmax.f32 %v4545, 0.0
        %v4578 = vmax.f32 %v4546, 0.0
        %v4579 = vmax.f32 %v4547, 0.0
        %v4580 = vmax.f32 %v4548, 0.0
        %v4581 = vmax.f32 %v4549, 0.0
        %v4582 = vmax.f32 %v4550, 0.0
        %v4583 = vmax.f32 %v4551, 0.0
        %v4584 = vmax.f32 %v4552, 0.0
        %v4585 = vmax.f32 %v4553, 0.0
        %v4586 = vmax.f32 %v4554, 0.0
        %v4587 = vmax.f32 %v4555, 0.0
        %v4588 = vmax.f32 %v4556, 0.0
        %v4589 = vmax.f32 %v4557, 0.0
        %v4590 = vmax.f32 %v4558, 0.0
        %v4591 = vmax.f32 %v4559, 0.0
        %v4592 = vmax.f32 %v4560, 0.0
        %v4593 = vmax.f32 %v4561, 0.0
        %v4594 = vmax.f32 %v4562, 0.0
        %v4595 = vmax.f32 %v4563, 0.0
        %v4596 = vmax.f32 %v4564, 0.0
        %v4597 = vmax.f32 %v4565, 0.0
        %v4598 = vmax.f32 %v4566, 0.0
        %v4599 = vmax.f32 %v4567, 0.0
        %v4600 = vmax.f32 %v4568, 0.0
        %v4601 = vmax.f32 %v4569, 0.0
        %v4602 = vmax.f32 %v4570, 0.0
        %v4603 = vmax.f32 %v4571, 0.0
        %v4604 = vmax.f32 %v4572, 0.0
        %v4605 = vmax.f32 %v4573, 0.0
        %v4606 = vmax.f32 %v4574, 0.0
        %v4607 = vmax.f32 %v4575, 0.0
        %v4608 = vmax.f32 %v4576, 0.0
        %v4609 = vsel %vm899, 1, 0
        %v4610 = vsel %vm900, 1, 0
        %v4611 = vsel %vm901, 1, 0
        %v4612 = vsel %vm902, 1, 0
        %v4613 = vsel %vm903, 1, 0
        %v4614 = vsel %vm904, 1, 0
        %v4615 = vsel %vm905, 1, 0
        %v4616 = vsel %vm906, 1, 0
        %v4617 = vsel %vm907, 1, 0
        %v4618 = vsel %vm908, 1, 0
        %v4619 = vsel %vm909, 1, 0
        %v4620 = vsel %vm910, 1, 0
        %v4621 = vsel %vm911, 1, 0
        %v4622 = vsel %vm912, 1, 0
        %v4623 = vsel %vm913, 1, 0
        %v4624 = vsel %vm914, 1, 0
        %v4625 = vsel %vm915, 1, 0
        %v4626 = vsel %vm916, 1, 0
        %v4627 = vsel %vm917, 1, 0
        %v4628 = vsel %vm918, 1, 0
        %v4629 = vsel %vm919, 1, 0
        %v4630 = vsel %vm920, 1, 0
        %v4631 = vsel %vm921, 1, 0
        %v4632 = vsel %vm922, 1, 0
        %v4633 = vsel %vm923, 1, 0
        %v4634 = vsel %vm924, 1, 0
        %v4635 = vsel %vm925, 1, 0
        %v4636 = vsel %vm926, 1, 0
        %v4637 = vsel %vm927, 1, 0
        %v4638 = vsel %vm928, 1, 0
        %v4639 = vsel %vm929, 1, 0
        %v4640 = vsel %vm930, 1, 0
        %vm4641 = vcmp.eq.s32.totalorder %v4609, 1
        %vm4642 = vcmp.eq.s32.totalorder %v4610, 1
        %vm4643 = vcmp.eq.s32.totalorder %v4611, 1
        %vm4644 = vcmp.eq.s32.totalorder %v4612, 1
        %vm4645 = vcmp.eq.s32.totalorder %v4613, 1
        %vm4646 = vcmp.eq.s32.totalorder %v4614, 1
        %vm4647 = vcmp.eq.s32.totalorder %v4615, 1
        %vm4648 = vcmp.eq.s32.totalorder %v4616, 1
        %vm4649 = vcmp.eq.s32.totalorder %v4617, 1
        %vm4650 = vcmp.eq.s32.totalorder %v4618, 1
        %vm4651 = vcmp.eq.s32.totalorder %v4619, 1
        %vm4652 = vcmp.eq.s32.totalorder %v4620, 1
        %vm4653 = vcmp.eq.s32.totalorder %v4621, 1
        %vm4654 = vcmp.eq.s32.totalorder %v4622, 1
        %vm4655 = vcmp.eq.s32.totalorder %v4623, 1
        %vm4656 = vcmp.eq.s32.totalorder %v4624, 1
        %vm4657 = vcmp.eq.s32.totalorder %v4625, 1
        %vm4658 = vcmp.eq.s32.totalorder %v4626, 1
        %vm4659 = vcmp.eq.s32.totalorder %v4627, 1
        %vm4660 = vcmp.eq.s32.totalorder %v4628, 1
        %vm4661 = vcmp.eq.s32.totalorder %v4629, 1
        %vm4662 = vcmp.eq.s32.totalorder %v4630, 1
        %vm4663 = vcmp.eq.s32.totalorder %v4631, 1
        %vm4664 = vcmp.eq.s32.totalorder %v4632, 1
        %vm4665 = vcmp.eq.s32.totalorder %v4633, 1
        %vm4666 = vcmp.eq.s32.totalorder %v4634, 1
        %vm4667 = vcmp.eq.s32.totalorder %v4635, 1
        %vm4668 = vcmp.eq.s32.totalorder %v4636, 1
        %vm4669 = vcmp.eq.s32.totalorder %v4637, 1
        %vm4670 = vcmp.eq.s32.totalorder %v4638, 1
        %vm4671 = vcmp.eq.s32.totalorder %v4639, 1
        %vm4672 = vcmp.eq.s32.totalorder %v4640, 1
        %v4673 = vsel %vm4641, %v4577, 0.0
        %v4674 = vsel %vm4642, %v4578, 0.0
        %v4675 = vsel %vm4643, %v4579, 0.0
        %v4676 = vsel %vm4644, %v4580, 0.0
        %v4677 = vsel %vm4645, %v4581, 0.0
        %v4678 = vsel %vm4646, %v4582, 0.0
        %v4679 = vsel %vm4647, %v4583, 0.0
        %v4680 = vsel %vm4648, %v4584, 0.0
        %v4681 = vsel %vm4649, %v4585, 0.0
        %v4682 = vsel %vm4650, %v4586, 0.0
        %v4683 = vsel %vm4651, %v4587, 0.0
        %v4684 = vsel %vm4652, %v4588, 0.0
        %v4685 = vsel %vm4653, %v4589, 0.0
        %v4686 = vsel %vm4654, %v4590, 0.0
        %v4687 = vsel %vm4655, %v4591, 0.0
        %v4688 = vsel %vm4656, %v4592, 0.0
        %v4689 = vsel %vm4657, %v4593, 0.0
        %v4690 = vsel %vm4658, %v4594, 0.0
        %v4691 = vsel %vm4659, %v4595, 0.0
        %v4692 = vsel %vm4660, %v4596, 0.0
        %v4693 = vsel %vm4661, %v4597, 0.0
        %v4694 = vsel %vm4662, %v4598, 0.0
        %v4695 = vsel %vm4663, %v4599, 0.0
        %v4696 = vsel %vm4664, %v4600, 0.0
        %v4697 = vsel %vm4665, %v4601, 0.0
        %v4698 = vsel %vm4666, %v4602, 0.0
        %v4699 = vsel %vm4667, %v4603, 0.0
        %v4700 = vsel %vm4668, %v4604, 0.0
        %v4701 = vsel %vm4669, %v4605, 0.0
        %v4702 = vsel %vm4670, %v4606, 0.0
        %v4703 = vsel %vm4671, %v4607, 0.0
        %v4704 = vsel %vm4672, %v4608, 0.0
        %v4705 = vpack.c.bf16 %v4674, %v4673
        %v4706 = vpack.c.bf16 %v4676, %v4675
        %v4707 = vpack.c.bf16 %v4678, %v4677
        %v4708 = vpack.c.bf16 %v4680, %v4679
        %v4709 = vpack.c.bf16 %v4682, %v4681
        %v4710 = vpack.c.bf16 %v4684, %v4683
        %v4711 = vpack.c.bf16 %v4686, %v4685
        %v4712 = vpack.c.bf16 %v4688, %v4687
        %v4713 = vpack.c.bf16 %v4690, %v4689
        %v4714 = vpack.c.bf16 %v4692, %v4691
        %v4715 = vpack.c.bf16 %v4694, %v4693
        %v4716 = vpack.c.bf16 %v4696, %v4695
        %v4717 = vpack.c.bf16 %v4698, %v4697
        %v4718 = vpack.c.bf16 %v4700, %v4699
        %v4719 = vpack.c.bf16 %v4702, %v4701
        %v4720 = vpack.c.bf16 %v4704, %v4703
        %v4721 = vld [vmem:[#allocation4 + $0x4] sm:$0xf]
        %v4722 = vld [vmem:[#allocation4 + $0xc] sm:$0xf]
        %v4723 = vld [vmem:[#allocation4 + $0x14] sm:$0xf]
        %v4724 = vld [vmem:[#allocation4 + $0x1c] sm:$0xf]
        %v4725 = vld [vmem:[#allocation4 + $0x24] sm:$0xf]
        %v4726 = vld [vmem:[#allocation4 + $0x2c] sm:$0xf]
        %v4727 = vld [vmem:[#allocation4 + $0x34] sm:$0xf]
        %v4728 = vld [vmem:[#allocation4 + $0x3c] sm:$0xf]
        %v4729 = vld [vmem:[#allocation4 + $0x44] sm:$0xf]
        %v4730 = vld [vmem:[#allocation4 + $0x4c] sm:$0xf]
        %v4731 = vld [vmem:[#allocation4 + $0x54] sm:$0xf]
        %v4732 = vld [vmem:[#allocation4 + $0x5c] sm:$0xf]
        %v4733 = vld [vmem:[#allocation4 + $0x64] sm:$0xf]
        %v4734 = vld [vmem:[#allocation4 + $0x6c] sm:$0xf]
        %v4735 = vld [vmem:[#allocation4 + $0x74] sm:$0xf]
        %v4736 = vld [vmem:[#allocation4 + $0x7c] sm:$0xf]
        %v4737 = vld [vmem:[#allocation4 + $0x84] sm:$0xf]
        %v4738 = vld [vmem:[#allocation4 + $0x8c] sm:$0xf]
        %v4739 = vld [vmem:[#allocation4 + $0x94] sm:$0xf]
        %v4740 = vld [vmem:[#allocation4 + $0x9c] sm:$0xf]
        %v4741 = vld [vmem:[#allocation4 + $0xa4] sm:$0xf]
        %v4742 = vld [vmem:[#allocation4 + $0xac] sm:$0xf]
        %v4743 = vld [vmem:[#allocation4 + $0xb4] sm:$0xf]
        %v4744 = vld [vmem:[#allocation4 + $0xbc] sm:$0xf]
        %v4745 = vld [vmem:[#allocation4 + $0xc4] sm:$0xf]
        %v4746 = vld [vmem:[#allocation4 + $0xcc] sm:$0xf]
        %v4747 = vld [vmem:[#allocation4 + $0xd4] sm:$0xf]
        %v4748 = vld [vmem:[#allocation4 + $0xdc] sm:$0xf]
        %v4749 = vld [vmem:[#allocation4 + $0xe4] sm:$0xf]
        %v4750 = vld [vmem:[#allocation4 + $0xec] sm:$0xf]
        %v4751 = vld [vmem:[#allocation4 + $0xf4] sm:$0xf]
        %v4752 = vld [vmem:[#allocation4 + $0xfc] sm:$0xf]
        %v4753 = vld [vmem:[%s1697 + $0x4] sm:$0xf]
        %v4754 = vld [vmem:[%s1697 + $0xc] sm:$0xf]
        %v4755 = vld [vmem:[%s1697 + $0x14] sm:$0xf]
        %v4756 = vld [vmem:[%s1697 + $0x1c] sm:$0xf]
        %v4757 = vld [vmem:[%s1697 + $0x24] sm:$0xf]
        %v4758 = vld [vmem:[%s1697 + $0x2c] sm:$0xf]
        %v4759 = vld [vmem:[%s1697 + $0x34] sm:$0xf]
        %v4760 = vld [vmem:[%s1697 + $0x3c] sm:$0xf]
        %v4761 = vld [vmem:[%s1697 + $0x44] sm:$0xf]
        %v4762 = vld [vmem:[%s1697 + $0x4c] sm:$0xf]
        %v4763 = vld [vmem:[%s1697 + $0x54] sm:$0xf]
        %v4764 = vld [vmem:[%s1697 + $0x5c] sm:$0xf]
        %v4765 = vld [vmem:[%s1697 + $0x64] sm:$0xf]
        %v4766 = vld [vmem:[%s1697 + $0x6c] sm:$0xf]
        %v4767 = vld [vmem:[%s1697 + $0x74] sm:$0xf]
        %v4768 = vld [vmem:[%s1697 + $0x7c] sm:$0xf]
        %v4769 = vld [vmem:[%s1697 + $0x84] sm:$0xf]
        %v4770 = vld [vmem:[%s1697 + $0x8c] sm:$0xf]
        %v4771 = vld [vmem:[%s1697 + $0x94] sm:$0xf]
        %v4772 = vld [vmem:[%s1697 + $0x9c] sm:$0xf]
        %v4773 = vld [vmem:[%s1697 + $0xa4] sm:$0xf]
        %v4774 = vld [vmem:[%s1697 + $0xac] sm:$0xf]
        %v4775 = vld [vmem:[%s1697 + $0xb4] sm:$0xf]
        %v4776 = vld [vmem:[%s1697 + $0xbc] sm:$0xf]
        %v4777 = vld [vmem:[%s1697 + $0xc4] sm:$0xf]
        %v4778 = vld [vmem:[%s1697 + $0xcc] sm:$0xf]
        %v4779 = vld [vmem:[%s1697 + $0xd4] sm:$0xf]
        %v4780 = vld [vmem:[%s1697 + $0xdc] sm:$0xf]
        %v4781 = vld [vmem:[%s1697 + $0xe4] sm:$0xf]
        %v4782 = vld [vmem:[%s1697 + $0xec] sm:$0xf]
        %v4783 = vld [vmem:[%s1697 + $0xf4] sm:$0xf]
        %v4784 = vld [vmem:[%s1697 + $0xfc] sm:$0xf]
        %v4817 = vunpack.c.l.b16 %v4753
        %v4818 = vunpack.c.l.b16 %v4754
        %v4819 = vunpack.c.l.b16 %v4755
        %v4820 = vunpack.c.l.b16 %v4756
        %v4821 = vunpack.c.l.b16 %v4757
        %v4822 = vunpack.c.l.b16 %v4758
        %v4823 = vunpack.c.l.b16 %v4759
        %v4824 = vunpack.c.l.b16 %v4760
        %v4825 = vunpack.c.l.b16 %v4761
        %v4826 = vunpack.c.l.b16 %v4762
        %v4827 = vunpack.c.l.b16 %v4763
        %v4828 = vunpack.c.l.b16 %v4764
        %v4829 = vunpack.c.l.b16 %v4765
        %v4830 = vunpack.c.l.b16 %v4766
        %v4831 = vunpack.c.l.b16 %v4767
        %v4832 = vunpack.c.l.b16 %v4768
        %v4833 = vunpack.c.l.b16 %v4769
        %v4834 = vunpack.c.l.b16 %v4770
        %v4835 = vunpack.c.l.b16 %v4771
        %v4836 = vunpack.c.l.b16 %v4772
        %v4837 = vunpack.c.l.b16 %v4773
        %v4838 = vunpack.c.l.b16 %v4774
        %v4839 = vunpack.c.l.b16 %v4775
        %v4840 = vunpack.c.l.b16 %v4776
        %v4841 = vunpack.c.l.b16 %v4777
        %v4842 = vunpack.c.l.b16 %v4778
        %v4843 = vunpack.c.l.b16 %v4779
        %v4844 = vunpack.c.l.b16 %v4780
        %v4845 = vunpack.c.l.b16 %v4781
        %v4846 = vunpack.c.l.b16 %v4782
        %v4847 = vunpack.c.l.b16 %v4783
        %v4848 = vunpack.c.l.b16 %v4784
        %v4849 = vpack.c.b16 %v4818, %v4817
        %v4850 = vpack.c.b16 %v4820, %v4819
        %v4851 = vpack.c.b16 %v4822, %v4821
        %v4852 = vpack.c.b16 %v4824, %v4823
        %v4853 = vpack.c.b16 %v4826, %v4825
        %v4854 = vpack.c.b16 %v4828, %v4827
        %v4855 = vpack.c.b16 %v4830, %v4829
        %v4856 = vpack.c.b16 %v4832, %v4831
        %v4857 = vpack.c.b16 %v4834, %v4833
        %v4858 = vpack.c.b16 %v4836, %v4835
        %v4859 = vpack.c.b16 %v4838, %v4837
        %v4860 = vpack.c.b16 %v4840, %v4839
        %v4861 = vpack.c.b16 %v4842, %v4841
        %v4862 = vpack.c.b16 %v4844, %v4843
        %v4863 = vpack.c.b16 %v4846, %v4845
        %v4864 = vpack.c.b16 %v4848, %v4847
        %4881 = vmatprep.subr.bf16.mxu0 0
        %4882 = vmatpush1.bf16.msra.mxu0 %v4849
        %4883 = vmatprep.subr.bf16.mxu0 0
        %4884 = vmatpush1.bf16.msra.mxu0 %v4850
        %4885 = vmatprep.subr.bf16.mxu0 0
        %4886 = vmatpush1.bf16.msra.mxu0 %v4851
        %4887 = vmatprep.subr.bf16.mxu0 0
        %4888 = vmatpush1.bf16.msra.mxu0 %v4852
        %4889 = vmatprep.subr.bf16.mxu0 0
        %4890 = vmatpush1.bf16.msra.mxu0 %v4853
        %4891 = vmatprep.subr.bf16.mxu0 0
        %4892 = vmatpush1.bf16.msra.mxu0 %v4854
        %4893 = vmatprep.subr.bf16.mxu0 0
        %4894 = vmatpush1.bf16.msra.mxu0 %v4855
        %4895 = vmatprep.subr.bf16.mxu0 0
        %4896 = vmatpush1.bf16.msra.mxu0 %v4856
        %4897 = vmatprep.subr.bf16.mxu0 0
        %4898 = vmatpush1.bf16.msra.mxu0 %v4857
        %4899 = vmatprep.subr.bf16.mxu0 0
        %4900 = vmatpush1.bf16.msra.mxu0 %v4858
        %4901 = vmatprep.subr.bf16.mxu0 0
        %4902 = vmatpush1.bf16.msra.mxu0 %v4859
        %4903 = vmatprep.subr.bf16.mxu0 0
        %4904 = vmatpush1.bf16.msra.mxu0 %v4860
        %4905 = vmatprep.subr.bf16.mxu0 0
        %4906 = vmatpush1.bf16.msra.mxu0 %v4861
        %4907 = vmatprep.subr.bf16.mxu0 0
        %4908 = vmatpush1.bf16.msra.mxu0 %v4862
        %4909 = vmatprep.subr.bf16.mxu0 0
        %4910 = vmatpush1.bf16.msra.mxu0 %v4863
        %4911 = vmatprep.subr.bf16.mxu0 0
        %4912 = vmatpush1.bf16.msra.mxu0 %v4864
        %4913 = vmatprep.mubr.bf16.mxu0 %v1100
        %4914 = vmatmul.mubr.bf16.gmra.mrb[0].mxu0 %v1099
        %v4915 = vpop.f32.mrb[0].mxu0
        %v4916 = vadd.f32 0.0, %v4915
        %v4917 = vpop.f32.mrb[0].mxu0
        %v4918 = vpop.f32.mrb[0].mxu0
        %v4919 = vadd.f32 0.0, %v4918
        %v4920 = vpop.f32.mrb[0].mxu0
        %4921 = vmatprep.mubr.bf16.mxu0 %v1102
        %4922 = vmatmul.mubr.bf16.gmra.mrb[0].mxu0 %v1101
        %v4923 = vpop.f32.mrb[0].mxu0
        %v4924 = vadd.f32 0.0, %v4923
        %v4925 = vpop.f32.mrb[0].mxu0
        %v4926 = vpop.f32.mrb[0].mxu0
        %v4927 = vadd.f32 0.0, %v4926
        %v4928 = vpop.f32.mrb[0].mxu0
        %4929 = vmatprep.mubr.bf16.mxu0 %v1104
        %4930 = vmatmul.mubr.bf16.gmra.mrb[0].mxu0 %v1103
        %v4931 = vpop.f32.mrb[0].mxu0
        %v4932 = vadd.f32 0.0, %v4931
        %v4933 = vpop.f32.mrb[0].mxu0
        %v4934 = vpop.f32.mrb[0].mxu0
        %v4935 = vadd.f32 0.0, %v4934
        %v4936 = vpop.f32.mrb[0].mxu0
        %4937 = vmatprep.mubr.bf16.mxu0 %v1106
        %4938 = vmatmul.mubr.bf16.gmra.mrb[0].mxu0 %v1105
        %v4939 = vpop.f32.mrb[0].mxu0
        %v4940 = vadd.f32 0.0, %v4939
        %v4941 = vpop.f32.mrb[0].mxu0
        %v4942 = vpop.f32.mrb[0].mxu0
        %v4943 = vadd.f32 0.0, %v4942
        %v4944 = vpop.f32.mrb[0].mxu0
        %4945 = vmatprep.mubr.bf16.mxu0 %v1108
        %4946 = vmatmul.mubr.bf16.gmra.mrb[0].mxu0 %v1107
        %v4947 = vpop.f32.mrb[0].mxu0
        %v4948 = vadd.f32 0.0, %v4947
        %v4949 = vpop.f32.mrb[0].mxu0
        %v4950 = vpop.f32.mrb[0].mxu0
        %v4951 = vadd.f32 0.0, %v4950
        %v4952 = vpop.f32.mrb[0].mxu0
        %4953 = vmatprep.mubr.bf16.mxu0 %v1110
        %4954 = vmatmul.mubr.bf16.gmra.mrb[0].mxu0 %v1109
        %v4955 = vpop.f32.mrb[0].mxu0
        %v4956 = vadd.f32 0.0, %v4955
        %v4957 = vpop.f32.mrb[0].mxu0
        %v4958 = vpop.f32.mrb[0].mxu0
        %v4959 = vadd.f32 0.0, %v4958
        %v4960 = vpop.f32.mrb[0].mxu0
        %4961 = vmatprep.mubr.bf16.mxu0 %v1112
        %4962 = vmatmul.mubr.bf16.gmra.mrb[0].mxu0 %v1111
        %v4963 = vpop.f32.mrb[0].mxu0
        %v4964 = vadd.f32 0.0, %v4963
        %v4965 = vpop.f32.mrb[0].mxu0
        %v4966 = vpop.f32.mrb[0].mxu0
        %v4967 = vadd.f32 0.0, %v4966
        %v4968 = vpop.f32.mrb[0].mxu0
        %4969 = vmatprep.mubr.bf16.mxu0 %v1114
        %4970 = vmatmul.mubr.bf16.gmra.mrb[0].mxu0 %v1113
        %v4971 = vpop.f32.mrb[0].mxu0
        %v4972 = vadd.f32 0.0, %v4971
        %v4973 = vpop.f32.mrb[0].mxu0
        %v4974 = vpop.f32.mrb[0].mxu0
        %v4975 = vadd.f32 0.0, %v4974
        %v4976 = vpop.f32.mrb[0].mxu0
        %4977 = vmatprep.mubr.bf16.mxu0 %v1116
        %4978 = vmatmul.mubr.bf16.gmra.mrb[0].mxu0 %v1115
        %v4979 = vpop.f32.mrb[0].mxu0
        %v4980 = vadd.f32 0.0, %v4979
        %v4981 = vpop.f32.mrb[0].mxu0
        %v4982 = vpop.f32.mrb[0].mxu0
        %v4983 = vadd.f32 0.0, %v4982
        %v4984 = vpop.f32.mrb[0].mxu0
        %4985 = vmatprep.mubr.bf16.mxu0 %v1118
        %4986 = vmatmul.mubr.bf16.gmra.mrb[0].mxu0 %v1117
        %v4987 = vpop.f32.mrb[0].mxu0
        %v4988 = vadd.f32 0.0, %v4987
        %v4989 = vpop.f32.mrb[0].mxu0
        %v4990 = vpop.f32.mrb[0].mxu0
        %v4991 = vadd.f32 0.0, %v4990
        %v4992 = vpop.f32.mrb[0].mxu0
        %4993 = vmatprep.mubr.bf16.mxu0 %v1120
        %4994 = vmatmul.mubr.bf16.gmra.mrb[0].mxu0 %v1119
        %v4995 = vpop.f32.mrb[0].mxu0
        %v4996 = vadd.f32 0.0, %v4995
        %v4997 = vpop.f32.mrb[0].mxu0
        %v4998 = vpop.f32.mrb[0].mxu0
        %v4999 = vadd.f32 0.0, %v4998
        %v5000 = vpop.f32.mrb[0].mxu0
        %5001 = vmatprep.mubr.bf16.mxu0 %v1122
        %5002 = vmatmul.mubr.bf16.gmra.mrb[0].mxu0 %v1121
        %v5003 = vpop.f32.mrb[0].mxu0
        %v5004 = vadd.f32 0.0, %v5003
        %v5005 = vpop.f32.mrb[0].mxu0
        %v5006 = vpop.f32.mrb[0].mxu0
        %v5007 = vadd.f32 0.0, %v5006
        %v5008 = vpop.f32.mrb[0].mxu0
        %5009 = vmatprep.mubr.bf16.mxu0 %v1124
        %5010 = vmatmul.mubr.bf16.gmra.mrb[0].mxu0 %v1123
        %v5011 = vpop.f32.mrb[0].mxu0
        %v5012 = vadd.f32 0.0, %v5011
        %v5013 = vpop.f32.mrb[0].mxu0
        %v5014 = vpop.f32.mrb[0].mxu0
        %v5015 = vadd.f32 0.0, %v5014
        %v5016 = vpop.f32.mrb[0].mxu0
        %5017 = vmatprep.mubr.bf16.mxu0 %v1126
        %5018 = vmatmul.mubr.bf16.gmra.mrb[0].mxu0 %v1125
        %v5019 = vpop.f32.mrb[0].mxu0
        %v5020 = vadd.f32 0.0, %v5019
        %v5021 = vpop.f32.mrb[0].mxu0
        %v5022 = vpop.f32.mrb[0].mxu0
        %v5023 = vadd.f32 0.0, %v5022
        %v5024 = vpop.f32.mrb[0].mxu0
        %5025 = vmatprep.mubr.bf16.mxu0 %v1128
        %5026 = vmatmul.mubr.bf16.gmra.mrb[0].mxu0 %v1127
        %v5027 = vpop.f32.mrb[0].mxu0
        %v5028 = vadd.f32 0.0, %v5027
        %v5029 = vpop.f32.mrb[0].mxu0
        %v5030 = vpop.f32.mrb[0].mxu0
        %v5031 = vadd.f32 0.0, %v5030
        %v5032 = vpop.f32.mrb[0].mxu0
        %5033 = vmatprep.mubr.bf16.mxu0 %v1130
        %5034 = vmatmul.mubr.bf16.gmra.mrb[0].mxu0 %v1129
        %v5035 = vpop.f32.mrb[0].mxu0
        %v5036 = vadd.f32 0.0, %v5035
        %v5037 = vpop.f32.mrb[0].mxu0
        %v5038 = vpop.f32.mrb[0].mxu0
        %v5039 = vadd.f32 0.0, %v5038
        %v5040 = vpop.f32.mrb[0].mxu0
        %5041 = vdwg.mxu0
        %v5074 = vunpack.c.l.b16 %v4721
        %v5075 = vunpack.c.l.b16 %v4722
        %v5076 = vunpack.c.l.b16 %v4723
        %v5077 = vunpack.c.l.b16 %v4724
        %v5078 = vunpack.c.l.b16 %v4725
        %v5079 = vunpack.c.l.b16 %v4726
        %v5080 = vunpack.c.l.b16 %v4727
        %v5081 = vunpack.c.l.b16 %v4728
        %v5082 = vunpack.c.l.b16 %v4729
        %v5083 = vunpack.c.l.b16 %v4730
        %v5084 = vunpack.c.l.b16 %v4731
        %v5085 = vunpack.c.l.b16 %v4732
        %v5086 = vunpack.c.l.b16 %v4733
        %v5087 = vunpack.c.l.b16 %v4734
        %v5088 = vunpack.c.l.b16 %v4735
        %v5089 = vunpack.c.l.b16 %v4736
        %v5090 = vunpack.c.l.b16 %v4737
        %v5091 = vunpack.c.l.b16 %v4738
        %v5092 = vunpack.c.l.b16 %v4739
        %v5093 = vunpack.c.l.b16 %v4740
        %v5094 = vunpack.c.l.b16 %v4741
        %v5095 = vunpack.c.l.b16 %v4742
        %v5096 = vunpack.c.l.b16 %v4743
        %v5097 = vunpack.c.l.b16 %v4744
        %v5098 = vunpack.c.l.b16 %v4745
        %v5099 = vunpack.c.l.b16 %v4746
        %v5100 = vunpack.c.l.b16 %v4747
        %v5101 = vunpack.c.l.b16 %v4748
        %v5102 = vunpack.c.l.b16 %v4749
        %v5103 = vunpack.c.l.b16 %v4750
        %v5104 = vunpack.c.l.b16 %v4751
        %v5105 = vunpack.c.l.b16 %v4752
        %v5106 = vpack.c.b16 %v5075, %v5074
        %v5107 = vpack.c.b16 %v5077, %v5076
        %v5108 = vpack.c.b16 %v5079, %v5078
        %v5109 = vpack.c.b16 %v5081, %v5080
        %v5110 = vpack.c.b16 %v5083, %v5082
        %v5111 = vpack.c.b16 %v5085, %v5084
        %v5112 = vpack.c.b16 %v5087, %v5086
        %v5113 = vpack.c.b16 %v5089, %v5088
        %v5114 = vpack.c.b16 %v5091, %v5090
        %v5115 = vpack.c.b16 %v5093, %v5092
        %v5116 = vpack.c.b16 %v5095, %v5094
        %v5117 = vpack.c.b16 %v5097, %v5096
        %v5118 = vpack.c.b16 %v5099, %v5098
        %v5119 = vpack.c.b16 %v5101, %v5100
        %v5120 = vpack.c.b16 %v5103, %v5102
        %v5121 = vpack.c.b16 %v5105, %v5104
        %5138 = vmatprep.subr.bf16.mxu0 0
        %5139 = vmatpush1.bf16.msra.mxu0 %v5106
        %5140 = vmatprep.subr.bf16.mxu0 0
        %5141 = vmatpush1.bf16.msra.mxu0 %v5107
        %5142 = vmatprep.subr.bf16.mxu0 0
        %5143 = vmatpush1.bf16.msra.mxu0 %v5108
        %5144 = vmatprep.subr.bf16.mxu0 0
        %5145 = vmatpush1.bf16.msra.mxu0 %v5109
        %5146 = vmatprep.subr.bf16.mxu0 0
        %5147 = vmatpush1.bf16.msra.mxu0 %v5110
        %5148 = vmatprep.subr.bf16.mxu0 0
        %5149 = vmatpush1.bf16.msra.mxu0 %v5111
        %5150 = vmatprep.subr.bf16.mxu0 0
        %5151 = vmatpush1.bf16.msra.mxu0 %v5112
        %5152 = vmatprep.subr.bf16.mxu0 0
        %5153 = vmatpush1.bf16.msra.mxu0 %v5113
        %5154 = vmatprep.subr.bf16.mxu0 0
        %5155 = vmatpush1.bf16.msra.mxu0 %v5114
        %5156 = vmatprep.subr.bf16.mxu0 0
        %5157 = vmatpush1.bf16.msra.mxu0 %v5115
        %5158 = vmatprep.subr.bf16.mxu0 0
        %5159 = vmatpush1.bf16.msra.mxu0 %v5116
        %5160 = vmatprep.subr.bf16.mxu0 0
        %5161 = vmatpush1.bf16.msra.mxu0 %v5117
        %5162 = vmatprep.subr.bf16.mxu0 0
        %5163 = vmatpush1.bf16.msra.mxu0 %v5118
        %5164 = vmatprep.subr.bf16.mxu0 0
        %5165 = vmatpush1.bf16.msra.mxu0 %v5119
        %5166 = vmatprep.subr.bf16.mxu0 0
        %5167 = vmatpush1.bf16.msra.mxu0 %v5120
        %5168 = vmatprep.subr.bf16.mxu0 0
        %5169 = vmatpush1.bf16.msra.mxu0 %v5121
        %5170 = vmatprep.mubr.bf16.mxu0 %v1501
        %5171 = vmatmul.mubr.bf16.gmra.mrb[0].mxu0 %v1500
        %v5172 = vpop.f32.mrb[0].mxu0
        %v5173 = vadd.f32 %v4916, %v5172
        %v5174 = vpop.f32.mrb[0].mxu0
        %v5175 = vpop.f32.mrb[0].mxu0
        %v5176 = vadd.f32 %v4919, %v5175
        %v5177 = vpop.f32.mrb[0].mxu0
        %5178 = vmatprep.mubr.bf16.mxu0 %v1169
        %5179 = vmatmul.mubr.bf16.gmra.mrb[0].mxu0 %v1161
        %v5180 = vpop.f32.mrb[0].mxu0
        %v5181 = vadd.f32 %v4924, %v5180
        %v5182 = vpop.f32.mrb[0].mxu0
        %v5183 = vpop.f32.mrb[0].mxu0
        %v5184 = vadd.f32 %v4927, %v5183
        %v5185 = vpop.f32.mrb[0].mxu0
        %5186 = vmatprep.mubr.bf16.mxu0 %v1185
        %5187 = vmatmul.mubr.bf16.gmra.mrb[0].mxu0 %v1177
        %v5188 = vpop.f32.mrb[0].mxu0
        %v5189 = vadd.f32 %v4932, %v5188
        %v5190 = vpop.f32.mrb[0].mxu0
        %v5191 = vpop.f32.mrb[0].mxu0
        %v5192 = vadd.f32 %v4935, %v5191
        %v5193 = vpop.f32.mrb[0].mxu0
        %5194 = vmatprep.mubr.bf16.mxu0 %v1201
        %5195 = vmatmul.mubr.bf16.gmra.mrb[0].mxu0 %v1193
        %v5196 = vpop.f32.mrb[0].mxu0
        %v5197 = vadd.f32 %v4940, %v5196
        %v5198 = vpop.f32.mrb[0].mxu0
        %v5199 = vpop.f32.mrb[0].mxu0
        %v5200 = vadd.f32 %v4943, %v5199
        %v5201 = vpop.f32.mrb[0].mxu0
        %5202 = vmatprep.mubr.bf16.mxu0 %v1217
        %5203 = vmatmul.mubr.bf16.gmra.mrb[0].mxu0 %v1209
        %v5204 = vpop.f32.mrb[0].mxu0
        %v5205 = vadd.f32 %v4948, %v5204
        %v5206 = vpop.f32.mrb[0].mxu0
        %v5207 = vpop.f32.mrb[0].mxu0
        %v5208 = vadd.f32 %v4951, %v5207
        %v5209 = vpop.f32.mrb[0].mxu0
        %5210 = vmatprep.mubr.bf16.mxu0 %v1233
        %5211 = vmatmul.mubr.bf16.gmra.mrb[0].mxu0 %v1225
        %v5212 = vpop.f32.mrb[0].mxu0
        %v5213 = vadd.f32 %v4956, %v5212
        %v5214 = vpop.f32.mrb[0].mxu0
        %v5215 = vpop.f32.mrb[0].mxu0
        %v5216 = vadd.f32 %v4959, %v5215
        %v5217 = vpop.f32.mrb[0].mxu0
        %5218 = vmatprep.mubr.bf16.mxu0 %v1249
        %5219 = vmatmul.mubr.bf16.gmra.mrb[0].mxu0 %v1241
        %v5220 = vpop.f32.mrb[0].mxu0
        %v5221 = vadd.f32 %v4964, %v5220
        %v5222 = vpop.f32.mrb[0].mxu0
        %v5223 = vpop.f32.mrb[0].mxu0
        %v5224 = vadd.f32 %v4967, %v5223
        %v5225 = vpop.f32.mrb[0].mxu0
        %5226 = vmatprep.mubr.bf16.mxu0 %v1265
        %5227 = vmatmul.mubr.bf16.gmra.mrb[0].mxu0 %v1257
        %v5228 = vpop.f32.mrb[0].mxu0
        %v5229 = vadd.f32 %v4972, %v5228
        %v5230 = vpop.f32.mrb[0].mxu0
        %v5231 = vpop.f32.mrb[0].mxu0
        %v5232 = vadd.f32 %v4975, %v5231
        %v5233 = vpop.f32.mrb[0].mxu0
        %5234 = vmatprep.mubr.bf16.mxu0 %v1281
        %5235 = vmatmul.mubr.bf16.gmra.mrb[0].mxu0 %v1273
        %v5236 = vpop.f32.mrb[0].mxu0
        %v5237 = vadd.f32 %v4980, %v5236
        %v5238 = vpop.f32.mrb[0].mxu0
        %v5239 = vpop.f32.mrb[0].mxu0
        %v5240 = vadd.f32 %v4983, %v5239
        %v5241 = vpop.f32.mrb[0].mxu0
        %5242 = vmatprep.mubr.bf16.mxu0 %v1297
        %5243 = vmatmul.mubr.bf16.gmra.mrb[0].mxu0 %v1289
        %v5244 = vpop.f32.mrb[0].mxu0
        %v5245 = vadd.f32 %v4988, %v5244
        %v5246 = vpop.f32.mrb[0].mxu0
        %v5247 = vpop.f32.mrb[0].mxu0
        %v5248 = vadd.f32 %v4991, %v5247
        %v5249 = vpop.f32.mrb[0].mxu0
        %5250 = vmatprep.mubr.bf16.mxu0 %v1313
        %5251 = vmatmul.mubr.bf16.gmra.mrb[0].mxu0 %v1305
        %v5252 = vpop.f32.mrb[0].mxu0
        %v5253 = vadd.f32 %v4996, %v5252
        %v5254 = vpop.f32.mrb[0].mxu0
        %v5255 = vpop.f32.mrb[0].mxu0
        %v5256 = vadd.f32 %v4999, %v5255
        %v5257 = vpop.f32.mrb[0].mxu0
        %5258 = vmatprep.mubr.bf16.mxu0 %v1329
        %5259 = vmatmul.mubr.bf16.gmra.mrb[0].mxu0 %v1321
        %v5260 = vpop.f32.mrb[0].mxu0
        %v5261 = vadd.f32 %v5004, %v5260
        %v5262 = vpop.f32.mrb[0].mxu0
        %v5263 = vpop.f32.mrb[0].mxu0
        %v5264 = vadd.f32 %v5007, %v5263
        %v5265 = vpop.f32.mrb[0].mxu0
        %5266 = vmatprep.mubr.bf16.mxu0 %v1345
        %5267 = vmatmul.mubr.bf16.gmra.mrb[0].mxu0 %v1337
        %v5268 = vpop.f32.mrb[0].mxu0
        %v5269 = vadd.f32 %v5012, %v5268
        %v5270 = vpop.f32.mrb[0].mxu0
        %v5271 = vpop.f32.mrb[0].mxu0
        %v5272 = vadd.f32 %v5015, %v5271
        %v5273 = vpop.f32.mrb[0].mxu0
        %5274 = vmatprep.mubr.bf16.mxu0 %v1361
        %5275 = vmatmul.mubr.bf16.gmra.mrb[0].mxu0 %v1353
        %v5276 = vpop.f32.mrb[0].mxu0
        %v5277 = vadd.f32 %v5020, %v5276
        %v5278 = vpop.f32.mrb[0].mxu0
        %v5279 = vpop.f32.mrb[0].mxu0
        %v5280 = vadd.f32 %v5023, %v5279
        %v5281 = vpop.f32.mrb[0].mxu0
        %5282 = vmatprep.mubr.bf16.mxu0 %v1377
        %5283 = vmatmul.mubr.bf16.gmra.mrb[0].mxu0 %v1369
        %v5284 = vpop.f32.mrb[0].mxu0
        %v5285 = vadd.f32 %v5028, %v5284
        %v5286 = vpop.f32.mrb[0].mxu0
        %v5287 = vpop.f32.mrb[0].mxu0
        %v5288 = vadd.f32 %v5031, %v5287
        %v5289 = vpop.f32.mrb[0].mxu0
        %5290 = vmatprep.mubr.bf16.mxu0 %v1393
        %5291 = vmatmul.mubr.bf16.gmra.mrb[0].mxu0 %v1385
        %v5292 = vpop.f32.mrb[0].mxu0
        %v5293 = vadd.f32 %v5036, %v5292
        %v5294 = vpop.f32.mrb[0].mxu0
        %v5295 = vpop.f32.mrb[0].mxu0
        %v5296 = vadd.f32 %v5039, %v5295
        %v5297 = vpop.f32.mrb[0].mxu0
        %5298 = vdwg.mxu0
        %v5299 = vld [vmem:[%s2276 + $0x4] sm:$0xf]
        %v5300 = vld [vmem:[%s2276 + $0xc] sm:$0xf]
        %v5301 = vld [vmem:[%s2276 + $0x14] sm:$0xf]
        %v5302 = vld [vmem:[%s2276 + $0x1c] sm:$0xf]
        %v5303 = vld [vmem:[%s2276 + $0x24] sm:$0xf]
        %v5304 = vld [vmem:[%s2276 + $0x2c] sm:$0xf]
        %v5305 = vld [vmem:[%s2276 + $0x34] sm:$0xf]
        %v5306 = vld [vmem:[%s2276 + $0x3c] sm:$0xf]
        %v5307 = vld [vmem:[%s2276 + $0x44] sm:$0xf]
        %v5308 = vld [vmem:[%s2276 + $0x4c] sm:$0xf]
        %v5309 = vld [vmem:[%s2276 + $0x54] sm:$0xf]
        %v5310 = vld [vmem:[%s2276 + $0x5c] sm:$0xf]
        %v5311 = vld [vmem:[%s2276 + $0x64] sm:$0xf]
        %v5312 = vld [vmem:[%s2276 + $0x6c] sm:$0xf]
        %v5313 = vld [vmem:[%s2276 + $0x74] sm:$0xf]
        %v5314 = vld [vmem:[%s2276 + $0x7c] sm:$0xf]
        %v5315 = vld [vmem:[%s2276 + $0x84] sm:$0xf]
        %v5316 = vld [vmem:[%s2276 + $0x8c] sm:$0xf]
        %v5317 = vld [vmem:[%s2276 + $0x94] sm:$0xf]
        %v5318 = vld [vmem:[%s2276 + $0x9c] sm:$0xf]
        %v5319 = vld [vmem:[%s2276 + $0xa4] sm:$0xf]
        %v5320 = vld [vmem:[%s2276 + $0xac] sm:$0xf]
        %v5321 = vld [vmem:[%s2276 + $0xb4] sm:$0xf]
        %v5322 = vld [vmem:[%s2276 + $0xbc] sm:$0xf]
        %v5323 = vld [vmem:[%s2276 + $0xc4] sm:$0xf]
        %v5324 = vld [vmem:[%s2276 + $0xcc] sm:$0xf]
        %v5325 = vld [vmem:[%s2276 + $0xd4] sm:$0xf]
        %v5326 = vld [vmem:[%s2276 + $0xdc] sm:$0xf]
        %v5327 = vld [vmem:[%s2276 + $0xe4] sm:$0xf]
        %v5328 = vld [vmem:[%s2276 + $0xec] sm:$0xf]
        %v5329 = vld [vmem:[%s2276 + $0xf4] sm:$0xf]
        %v5330 = vld [vmem:[%s2276 + $0xfc] sm:$0xf]
        %v5363 = vunpack.c.l.b16 %v5299
        %v5364 = vunpack.c.l.b16 %v5300
        %v5365 = vunpack.c.l.b16 %v5301
        %v5366 = vunpack.c.l.b16 %v5302
        %v5367 = vunpack.c.l.b16 %v5303
        %v5368 = vunpack.c.l.b16 %v5304
        %v5369 = vunpack.c.l.b16 %v5305
        %v5370 = vunpack.c.l.b16 %v5306
        %v5371 = vunpack.c.l.b16 %v5307
        %v5372 = vunpack.c.l.b16 %v5308
        %v5373 = vunpack.c.l.b16 %v5309
        %v5374 = vunpack.c.l.b16 %v5310
        %v5375 = vunpack.c.l.b16 %v5311
        %v5376 = vunpack.c.l.b16 %v5312
        %v5377 = vunpack.c.l.b16 %v5313
        %v5378 = vunpack.c.l.b16 %v5314
        %v5379 = vunpack.c.l.b16 %v5315
        %v5380 = vunpack.c.l.b16 %v5316
        %v5381 = vunpack.c.l.b16 %v5317
        %v5382 = vunpack.c.l.b16 %v5318
        %v5383 = vunpack.c.l.b16 %v5319
        %v5384 = vunpack.c.l.b16 %v5320
        %v5385 = vunpack.c.l.b16 %v5321
        %v5386 = vunpack.c.l.b16 %v5322
        %v5387 = vunpack.c.l.b16 %v5323
        %v5388 = vunpack.c.l.b16 %v5324
        %v5389 = vunpack.c.l.b16 %v5325
        %v5390 = vunpack.c.l.b16 %v5326
        %v5391 = vunpack.c.l.b16 %v5327
        %v5392 = vunpack.c.l.b16 %v5328
        %v5393 = vunpack.c.l.b16 %v5329
        %v5394 = vunpack.c.l.b16 %v5330
        %v5395 = vpack.c.b16 %v5364, %v5363
        %v5396 = vpack.c.b16 %v5366, %v5365
        %v5397 = vpack.c.b16 %v5368, %v5367
        %v5398 = vpack.c.b16 %v5370, %v5369
        %v5399 = vpack.c.b16 %v5372, %v5371
        %v5400 = vpack.c.b16 %v5374, %v5373
        %v5401 = vpack.c.b16 %v5376, %v5375
        %v5402 = vpack.c.b16 %v5378, %v5377
        %v5403 = vpack.c.b16 %v5380, %v5379
        %v5404 = vpack.c.b16 %v5382, %v5381
        %v5405 = vpack.c.b16 %v5384, %v5383
        %v5406 = vpack.c.b16 %v5386, %v5385
        %v5407 = vpack.c.b16 %v5388, %v5387
        %v5408 = vpack.c.b16 %v5390, %v5389
        %v5409 = vpack.c.b16 %v5392, %v5391
        %v5410 = vpack.c.b16 %v5394, %v5393
        %5427 = vmatprep.subr.bf16.mxu0 0
        %5428 = vmatpush1.bf16.msra.mxu0 %v5395
        %5429 = vmatprep.subr.bf16.mxu0 0
        %5430 = vmatpush1.bf16.msra.mxu0 %v5396
        %5431 = vmatprep.subr.bf16.mxu0 0
        %5432 = vmatpush1.bf16.msra.mxu0 %v5397
        %5433 = vmatprep.subr.bf16.mxu0 0
        %5434 = vmatpush1.bf16.msra.mxu0 %v5398
        %5435 = vmatprep.subr.bf16.mxu0 0
        %5436 = vmatpush1.bf16.msra.mxu0 %v5399
        %5437 = vmatprep.subr.bf16.mxu0 0
        %5438 = vmatpush1.bf16.msra.mxu0 %v5400
        %5439 = vmatprep.subr.bf16.mxu0 0
        %5440 = vmatpush1.bf16.msra.mxu0 %v5401
        %5441 = vmatprep.subr.bf16.mxu0 0
        %5442 = vmatpush1.bf16.msra.mxu0 %v5402
        %5443 = vmatprep.subr.bf16.mxu0 0
        %5444 = vmatpush1.bf16.msra.mxu0 %v5403
        %5445 = vmatprep.subr.bf16.mxu0 0
        %5446 = vmatpush1.bf16.msra.mxu0 %v5404
        %5447 = vmatprep.subr.bf16.mxu0 0
        %5448 = vmatpush1.bf16.msra.mxu0 %v5405
        %5449 = vmatprep.subr.bf16.mxu0 0
        %5450 = vmatpush1.bf16.msra.mxu0 %v5406
        %5451 = vmatprep.subr.bf16.mxu0 0
        %5452 = vmatpush1.bf16.msra.mxu0 %v5407
        %5453 = vmatprep.subr.bf16.mxu0 0
        %5454 = vmatpush1.bf16.msra.mxu0 %v5408
        %5455 = vmatprep.subr.bf16.mxu0 0
        %5456 = vmatpush1.bf16.msra.mxu0 %v5409
        %5457 = vmatprep.subr.bf16.mxu0 0
        %5458 = vmatpush1.bf16.msra.mxu0 %v5410
        %5459 = vmatprep.mubr.bf16.mxu0 %v1510
        %5460 = vmatmul.mubr.bf16.gmra.mrb[0].mxu0 %v1506
        %v5461 = vpop.f32.mrb[0].mxu0
        %v5462 = vadd.f32 0.0, %v5461
        %v5463 = vpop.f32.mrb[0].mxu0
        %v5464 = vpop.f32.mrb[0].mxu0
        %v5465 = vadd.f32 0.0, %v5464
        %v5466 = vpop.f32.mrb[0].mxu0
        %5467 = vmatprep.mubr.bf16.mxu0 %v1516
        %5468 = vmatmul.mubr.bf16.gmra.mrb[0].mxu0 %v1513
        %v5469 = vpop.f32.mrb[0].mxu0
        %v5470 = vadd.f32 0.0, %v5469
        %v5471 = vpop.f32.mrb[0].mxu0
        %v5472 = vpop.f32.mrb[0].mxu0
        %v5473 = vadd.f32 0.0, %v5472
        %v5474 = vpop.f32.mrb[0].mxu0
        %5475 = vmatprep.mubr.bf16.mxu0 %v1522
        %5476 = vmatmul.mubr.bf16.gmra.mrb[0].mxu0 %v1519
        %v5477 = vpop.f32.mrb[0].mxu0
        %v5478 = vadd.f32 0.0, %v5477
        %v5479 = vpop.f32.mrb[0].mxu0
        %v5480 = vpop.f32.mrb[0].mxu0
        %v5481 = vadd.f32 0.0, %v5480
        %v5482 = vpop.f32.mrb[0].mxu0
        %5483 = vmatprep.mubr.bf16.mxu0 %v1528
        %5484 = vmatmul.mubr.bf16.gmra.mrb[0].mxu0 %v1525
        %v5485 = vpop.f32.mrb[0].mxu0
        %v5486 = vadd.f32 0.0, %v5485
        %v5487 = vpop.f32.mrb[0].mxu0
        %v5488 = vpop.f32.mrb[0].mxu0
        %v5489 = vadd.f32 0.0, %v5488
        %v5490 = vpop.f32.mrb[0].mxu0
        %5491 = vmatprep.mubr.bf16.mxu0 %v1534
        %5492 = vmatmul.mubr.bf16.gmra.mrb[0].mxu0 %v1531
        %v5493 = vpop.f32.mrb[0].mxu0
        %v5494 = vadd.f32 0.0, %v5493
        %v5495 = vpop.f32.mrb[0].mxu0
        %v5496 = vpop.f32.mrb[0].mxu0
        %v5497 = vadd.f32 0.0, %v5496
        %v5498 = vpop.f32.mrb[0].mxu0
        %5499 = vmatprep.mubr.bf16.mxu0 %v1540
        %5500 = vmatmul.mubr.bf16.gmra.mrb[0].mxu0 %v1537
        %v5501 = vpop.f32.mrb[0].mxu0
        %v5502 = vadd.f32 0.0, %v5501
        %v5503 = vpop.f32.mrb[0].mxu0
        %v5504 = vpop.f32.mrb[0].mxu0
        %v5505 = vadd.f32 0.0, %v5504
        %v5506 = vpop.f32.mrb[0].mxu0
        %5507 = vmatprep.mubr.bf16.mxu0 %v1546
        %5508 = vmatmul.mubr.bf16.gmra.mrb[0].mxu0 %v1543
        %v5509 = vpop.f32.mrb[0].mxu0
        %v5510 = vadd.f32 0.0, %v5509
        %v5511 = vpop.f32.mrb[0].mxu0
        %v5512 = vpop.f32.mrb[0].mxu0
        %v5513 = vadd.f32 0.0, %v5512
        %v5514 = vpop.f32.mrb[0].mxu0
        %5515 = vmatprep.mubr.bf16.mxu0 %v1552
        %5516 = vmatmul.mubr.bf16.gmra.mrb[0].mxu0 %v1549
        %v5517 = vpop.f32.mrb[0].mxu0
        %v5518 = vadd.f32 0.0, %v5517
        %v5519 = vpop.f32.mrb[0].mxu0
        %v5520 = vpop.f32.mrb[0].mxu0
        %v5521 = vadd.f32 0.0, %v5520
        %v5522 = vpop.f32.mrb[0].mxu0
        %5523 = vmatprep.mubr.bf16.mxu0 %v1558
        %5524 = vmatmul.mubr.bf16.gmra.mrb[0].mxu0 %v1555
        %v5525 = vpop.f32.mrb[0].mxu0
        %v5526 = vadd.f32 0.0, %v5525
        %v5527 = vpop.f32.mrb[0].mxu0
        %v5528 = vpop.f32.mrb[0].mxu0
        %v5529 = vadd.f32 0.0, %v5528
        %v5530 = vpop.f32.mrb[0].mxu0
        %5531 = vmatprep.mubr.bf16.mxu0 %v1564
        %5532 = vmatmul.mubr.bf16.gmra.mrb[0].mxu0 %v1561
        %v5533 = vpop.f32.mrb[0].mxu0
        %v5534 = vadd.f32 0.0, %v5533
        %v5535 = vpop.f32.mrb[0].mxu0
        %v5536 = vpop.f32.mrb[0].mxu0
        %v5537 = vadd.f32 0.0, %v5536
        %v5538 = vpop.f32.mrb[0].mxu0
        %5539 = vmatprep.mubr.bf16.mxu0 %v1570
        %5540 = vmatmul.mubr.bf16.gmra.mrb[0].mxu0 %v1567
        %v5541 = vpop.f32.mrb[0].mxu0
        %v5542 = vadd.f32 0.0, %v5541
        %v5543 = vpop.f32.mrb[0].mxu0
        %v5544 = vpop.f32.mrb[0].mxu0
        %v5545 = vadd.f32 0.0, %v5544
        %v5546 = vpop.f32.mrb[0].mxu0
        %5547 = vmatprep.mubr.bf16.mxu0 %v1576
        %5548 = vmatmul.mubr.bf16.gmra.mrb[0].mxu0 %v1573
        %v5549 = vpop.f32.mrb[0].mxu0
        %v5550 = vadd.f32 0.0, %v5549
        %v5551 = vpop.f32.mrb[0].mxu0
        %v5552 = vpop.f32.mrb[0].mxu0
        %v5553 = vadd.f32 0.0, %v5552
        %v5554 = vpop.f32.mrb[0].mxu0
        %5555 = vmatprep.mubr.bf16.mxu0 %v1582
        %5556 = vmatmul.mubr.bf16.gmra.mrb[0].mxu0 %v1579
        %v5557 = vpop.f32.mrb[0].mxu0
        %v5558 = vadd.f32 0.0, %v5557
        %v5559 = vpop.f32.mrb[0].mxu0
        %v5560 = vpop.f32.mrb[0].mxu0
        %v5561 = vadd.f32 0.0, %v5560
        %v5562 = vpop.f32.mrb[0].mxu0
        %5563 = vmatprep.mubr.bf16.mxu0 %v1588
        %5564 = vmatmul.mubr.bf16.gmra.mrb[0].mxu0 %v1585
        %v5565 = vpop.f32.mrb[0].mxu0
        %v5566 = vadd.f32 0.0, %v5565
        %v5567 = vpop.f32.mrb[0].mxu0
        %v5568 = vpop.f32.mrb[0].mxu0
        %v5569 = vadd.f32 0.0, %v5568
        %v5570 = vpop.f32.mrb[0].mxu0
        %5571 = vmatprep.mubr.bf16.mxu0 %v1594
        %5572 = vmatmul.mubr.bf16.gmra.mrb[0].mxu0 %v1591
        %v5573 = vpop.f32.mrb[0].mxu0
        %v5574 = vadd.f32 0.0, %v5573
        %v5575 = vpop.f32.mrb[0].mxu0
        %v5576 = vpop.f32.mrb[0].mxu0
        %v5577 = vadd.f32 0.0, %v5576
        %v5578 = vpop.f32.mrb[0].mxu0
        %5579 = vmatprep.mubr.bf16.mxu0 %v1600
        %5580 = vmatmul.mubr.bf16.gmra.mrb[0].mxu0 %v1597
        %v5581 = vpop.f32.mrb[0].mxu0
        %v5582 = vadd.f32 0.0, %v5581
        %v5583 = vpop.f32.mrb[0].mxu0
        %v5584 = vpop.f32.mrb[0].mxu0
        %v5585 = vadd.f32 0.0, %v5584
        %v5586 = vpop.f32.mrb[0].mxu0
        %5587 = vdwg.mxu0
        %v5588 = vadd.f32 %v5173, %v5462
        %v5589 = vadd.f32 %v5176, %v5465
        %v5590 = vadd.f32 %v5181, %v5470
        %v5591 = vadd.f32 %v5184, %v5473
        %v5592 = vadd.f32 %v5189, %v5478
        %v5593 = vadd.f32 %v5192, %v5481
        %v5594 = vadd.f32 %v5197, %v5486
        %v5595 = vadd.f32 %v5200, %v5489
        %v5596 = vadd.f32 %v5205, %v5494
        %v5597 = vadd.f32 %v5208, %v5497
        %v5598 = vadd.f32 %v5213, %v5502
        %v5599 = vadd.f32 %v5216, %v5505
        %v5600 = vadd.f32 %v5221, %v5510
        %v5601 = vadd.f32 %v5224, %v5513
        %v5602 = vadd.f32 %v5229, %v5518
        %v5603 = vadd.f32 %v5232, %v5521
        %v5604 = vadd.f32 %v5237, %v5526
        %v5605 = vadd.f32 %v5240, %v5529
        %v5606 = vadd.f32 %v5245, %v5534
        %v5607 = vadd.f32 %v5248, %v5537
        %v5608 = vadd.f32 %v5253, %v5542
        %v5609 = vadd.f32 %v5256, %v5545
        %v5610 = vadd.f32 %v5261, %v5550
        %v5611 = vadd.f32 %v5264, %v5553
        %v5612 = vadd.f32 %v5269, %v5558
        %v5613 = vadd.f32 %v5272, %v5561
        %v5614 = vadd.f32 %v5277, %v5566
        %v5615 = vadd.f32 %v5280, %v5569
        %v5616 = vadd.f32 %v5285, %v5574
        %v5617 = vadd.f32 %v5288, %v5577
        %v5618 = vadd.f32 %v5293, %v5582
        %v5619 = vadd.f32 %v5296, %v5585
        %v5620 = vld [vmem:[%s2598 + $0x4] sm:$0xf]
        %v5621 = vld [vmem:[%s2598 + $0xc] sm:$0xf]
        %v5622 = vld [vmem:[%s2598 + $0x14] sm:$0xf]
        %v5623 = vld [vmem:[%s2598 + $0x1c] sm:$0xf]
        %v5624 = vld [vmem:[%s2598 + $0x24] sm:$0xf]
        %v5625 = vld [vmem:[%s2598 + $0x2c] sm:$0xf]
        %v5626 = vld [vmem:[%s2598 + $0x34] sm:$0xf]
        %v5627 = vld [vmem:[%s2598 + $0x3c] sm:$0xf]
        %v5628 = vld [vmem:[%s2598 + $0x44] sm:$0xf]
        %v5629 = vld [vmem:[%s2598 + $0x4c] sm:$0xf]
        %v5630 = vld [vmem:[%s2598 + $0x54] sm:$0xf]
        %v5631 = vld [vmem:[%s2598 + $0x5c] sm:$0xf]
        %v5632 = vld [vmem:[%s2598 + $0x64] sm:$0xf]
        %v5633 = vld [vmem:[%s2598 + $0x6c] sm:$0xf]
        %v5634 = vld [vmem:[%s2598 + $0x74] sm:$0xf]
        %v5635 = vld [vmem:[%s2598 + $0x7c] sm:$0xf]
        %v5636 = vld [vmem:[%s2598 + $0x84] sm:$0xf]
        %v5637 = vld [vmem:[%s2598 + $0x8c] sm:$0xf]
        %v5638 = vld [vmem:[%s2598 + $0x94] sm:$0xf]
        %v5639 = vld [vmem:[%s2598 + $0x9c] sm:$0xf]
        %v5640 = vld [vmem:[%s2598 + $0xa4] sm:$0xf]
        %v5641 = vld [vmem:[%s2598 + $0xac] sm:$0xf]
        %v5642 = vld [vmem:[%s2598 + $0xb4] sm:$0xf]
        %v5643 = vld [vmem:[%s2598 + $0xbc] sm:$0xf]
        %v5644 = vld [vmem:[%s2598 + $0xc4] sm:$0xf]
        %v5645 = vld [vmem:[%s2598 + $0xcc] sm:$0xf]
        %v5646 = vld [vmem:[%s2598 + $0xd4] sm:$0xf]
        %v5647 = vld [vmem:[%s2598 + $0xdc] sm:$0xf]
        %v5648 = vld [vmem:[%s2598 + $0xe4] sm:$0xf]
        %v5649 = vld [vmem:[%s2598 + $0xec] sm:$0xf]
        %v5650 = vld [vmem:[%s2598 + $0xf4] sm:$0xf]
        %v5651 = vld [vmem:[%s2598 + $0xfc] sm:$0xf]
        %v5684 = vunpack.c.l.b16 %v5620
        %v5685 = vunpack.c.l.b16 %v5621
        %v5686 = vunpack.c.l.b16 %v5622
        %v5687 = vunpack.c.l.b16 %v5623
        %v5688 = vunpack.c.l.b16 %v5624
        %v5689 = vunpack.c.l.b16 %v5625
        %v5690 = vunpack.c.l.b16 %v5626
        %v5691 = vunpack.c.l.b16 %v5627
        %v5692 = vunpack.c.l.b16 %v5628
        %v5693 = vunpack.c.l.b16 %v5629
        %v5694 = vunpack.c.l.b16 %v5630
        %v5695 = vunpack.c.l.b16 %v5631
        %v5696 = vunpack.c.l.b16 %v5632
        %v5697 = vunpack.c.l.b16 %v5633
        %v5698 = vunpack.c.l.b16 %v5634
        %v5699 = vunpack.c.l.b16 %v5635
        %v5700 = vunpack.c.l.b16 %v5636
        %v5701 = vunpack.c.l.b16 %v5637
        %v5702 = vunpack.c.l.b16 %v5638
        %v5703 = vunpack.c.l.b16 %v5639
        %v5704 = vunpack.c.l.b16 %v5640
        %v5705 = vunpack.c.l.b16 %v5641
        %v5706 = vunpack.c.l.b16 %v5642
        %v5707 = vunpack.c.l.b16 %v5643
        %v5708 = vunpack.c.l.b16 %v5644
        %v5709 = vunpack.c.l.b16 %v5645
        %v5710 = vunpack.c.l.b16 %v5646
        %v5711 = vunpack.c.l.b16 %v5647
        %v5712 = vunpack.c.l.b16 %v5648
        %v5713 = vunpack.c.l.b16 %v5649
        %v5714 = vunpack.c.l.b16 %v5650
        %v5715 = vunpack.c.l.b16 %v5651
        %v5716 = vpack.c.b16 %v5685, %v5684
        %v5717 = vpack.c.b16 %v5687, %v5686
        %v5718 = vpack.c.b16 %v5689, %v5688
        %v5719 = vpack.c.b16 %v5691, %v5690
        %v5720 = vpack.c.b16 %v5693, %v5692
        %v5721 = vpack.c.b16 %v5695, %v5694
        %v5722 = vpack.c.b16 %v5697, %v5696
        %v5723 = vpack.c.b16 %v5699, %v5698
        %v5724 = vpack.c.b16 %v5701, %v5700
        %v5725 = vpack.c.b16 %v5703, %v5702
        %v5726 = vpack.c.b16 %v5705, %v5704
        %v5727 = vpack.c.b16 %v5707, %v5706
        %v5728 = vpack.c.b16 %v5709, %v5708
        %v5729 = vpack.c.b16 %v5711, %v5710
        %v5730 = vpack.c.b16 %v5713, %v5712
        %v5731 = vpack.c.b16 %v5715, %v5714
        %5748 = vmatprep.subr.bf16.mxu0 0
        %5749 = vmatpush1.bf16.msra.mxu0 %v5716
        %5750 = vmatprep.subr.bf16.mxu0 0
        %5751 = vmatpush1.bf16.msra.mxu0 %v5717
        %5752 = vmatprep.subr.bf16.mxu0 0
        %5753 = vmatpush1.bf16.msra.mxu0 %v5718
        %5754 = vmatprep.subr.bf16.mxu0 0
        %5755 = vmatpush1.bf16.msra.mxu0 %v5719
        %5756 = vmatprep.subr.bf16.mxu0 0
        %5757 = vmatpush1.bf16.msra.mxu0 %v5720
        %5758 = vmatprep.subr.bf16.mxu0 0
        %5759 = vmatpush1.bf16.msra.mxu0 %v5721
        %5760 = vmatprep.subr.bf16.mxu0 0
        %5761 = vmatpush1.bf16.msra.mxu0 %v5722
        %5762 = vmatprep.subr.bf16.mxu0 0
        %5763 = vmatpush1.bf16.msra.mxu0 %v5723
        %5764 = vmatprep.subr.bf16.mxu0 0
        %5765 = vmatpush1.bf16.msra.mxu0 %v5724
        %5766 = vmatprep.subr.bf16.mxu0 0
        %5767 = vmatpush1.bf16.msra.mxu0 %v5725
        %5768 = vmatprep.subr.bf16.mxu0 0
        %5769 = vmatpush1.bf16.msra.mxu0 %v5726
        %5770 = vmatprep.subr.bf16.mxu0 0
        %5771 = vmatpush1.bf16.msra.mxu0 %v5727
        %5772 = vmatprep.subr.bf16.mxu0 0
        %5773 = vmatpush1.bf16.msra.mxu0 %v5728
        %5774 = vmatprep.subr.bf16.mxu0 0
        %5775 = vmatpush1.bf16.msra.mxu0 %v5729
        %5776 = vmatprep.subr.bf16.mxu0 0
        %5777 = vmatpush1.bf16.msra.mxu0 %v5730
        %5778 = vmatprep.subr.bf16.mxu0 0
        %5779 = vmatpush1.bf16.msra.mxu0 %v5731
        %5780 = vmatprep.mubr.bf16.mxu0 %v1185
        %5781 = vmatmul.mubr.bf16.gmra.mrb[0].mxu0 %v1177
        %v5782 = vpop.f32.mrb[0].mxu0
        %v5783 = vadd.f32 0.0, %v5782
        %v5784 = vpop.f32.mrb[0].mxu0
        %v5785 = vpop.f32.mrb[0].mxu0
        %v5786 = vadd.f32 0.0, %v5785
        %v5787 = vpop.f32.mrb[0].mxu0
        %5788 = vmatprep.mubr.bf16.mxu0 %v1201
        %5789 = vmatmul.mubr.bf16.gmra.mrb[0].mxu0 %v1193
        %v5790 = vpop.f32.mrb[0].mxu0
        %v5791 = vadd.f32 0.0, %v5790
        %v5792 = vpop.f32.mrb[0].mxu0
        %v5793 = vpop.f32.mrb[0].mxu0
        %v5794 = vadd.f32 0.0, %v5793
        %v5795 = vpop.f32.mrb[0].mxu0
        %5796 = vmatprep.mubr.bf16.mxu0 %v1217
        %5797 = vmatmul.mubr.bf16.gmra.mrb[0].mxu0 %v1209
        %v5798 = vpop.f32.mrb[0].mxu0
        %v5799 = vadd.f32 0.0, %v5798
        %v5800 = vpop.f32.mrb[0].mxu0
        %v5801 = vpop.f32.mrb[0].mxu0
        %v5802 = vadd.f32 0.0, %v5801
        %v5803 = vpop.f32.mrb[0].mxu0
        %5804 = vmatprep.mubr.bf16.mxu0 %v1233
        %5805 = vmatmul.mubr.bf16.gmra.mrb[0].mxu0 %v1225
        %v5806 = vpop.f32.mrb[0].mxu0
        %v5807 = vadd.f32 0.0, %v5806
        %v5808 = vpop.f32.mrb[0].mxu0
        %v5809 = vpop.f32.mrb[0].mxu0
        %v5810 = vadd.f32 0.0, %v5809
        %v5811 = vpop.f32.mrb[0].mxu0
        %5812 = vmatprep.mubr.bf16.mxu0 %v1249
        %5813 = vmatmul.mubr.bf16.gmra.mrb[0].mxu0 %v1241
        %v5814 = vpop.f32.mrb[0].mxu0
        %v5815 = vadd.f32 0.0, %v5814
        %v5816 = vpop.f32.mrb[0].mxu0
        %v5817 = vpop.f32.mrb[0].mxu0
        %v5818 = vadd.f32 0.0, %v5817
        %v5819 = vpop.f32.mrb[0].mxu0
        %5820 = vmatprep.mubr.bf16.mxu0 %v1265
        %5821 = vmatmul.mubr.bf16.gmra.mrb[0].mxu0 %v1257
        %v5822 = vpop.f32.mrb[0].mxu0
        %v5823 = vadd.f32 0.0, %v5822
        %v5824 = vpop.f32.mrb[0].mxu0
        %v5825 = vpop.f32.mrb[0].mxu0
        %v5826 = vadd.f32 0.0, %v5825
        %v5827 = vpop.f32.mrb[0].mxu0
        %5828 = vmatprep.mubr.bf16.mxu0 %v1281
        %5829 = vmatmul.mubr.bf16.gmra.mrb[0].mxu0 %v1273
        %v5830 = vpop.f32.mrb[0].mxu0
        %v5831 = vadd.f32 0.0, %v5830
        %v5832 = vpop.f32.mrb[0].mxu0
        %v5833 = vpop.f32.mrb[0].mxu0
        %v5834 = vadd.f32 0.0, %v5833
        %v5835 = vpop.f32.mrb[0].mxu0
        %5836 = vmatprep.mubr.bf16.mxu0 %v1297
        %5837 = vmatmul.mubr.bf16.gmra.mrb[0].mxu0 %v1289
        %v5838 = vpop.f32.mrb[0].mxu0
        %v5839 = vadd.f32 0.0, %v5838
        %v5840 = vpop.f32.mrb[0].mxu0
        %v5841 = vpop.f32.mrb[0].mxu0
        %v5842 = vadd.f32 0.0, %v5841
        %v5843 = vpop.f32.mrb[0].mxu0
        %5844 = vmatprep.mubr.bf16.mxu0 %v1313
        %5845 = vmatmul.mubr.bf16.gmra.mrb[0].mxu0 %v1305
        %v5846 = vpop.f32.mrb[0].mxu0
        %v5847 = vadd.f32 0.0, %v5846
        %v5848 = vpop.f32.mrb[0].mxu0
        %v5849 = vpop.f32.mrb[0].mxu0
        %v5850 = vadd.f32 0.0, %v5849
        %v5851 = vpop.f32.mrb[0].mxu0
        %5852 = vmatprep.mubr.bf16.mxu0 %v1329
        %5853 = vmatmul.mubr.bf16.gmra.mrb[0].mxu0 %v1321
        %v5854 = vpop.f32.mrb[0].mxu0
        %v5855 = vadd.f32 0.0, %v5854
        %v5856 = vpop.f32.mrb[0].mxu0
        %v5857 = vpop.f32.mrb[0].mxu0
        %v5858 = vadd.f32 0.0, %v5857
        %v5859 = vpop.f32.mrb[0].mxu0
        %5860 = vmatprep.mubr.bf16.mxu0 %v1345
        %5861 = vmatmul.mubr.bf16.gmra.mrb[0].mxu0 %v1337
        %v5862 = vpop.f32.mrb[0].mxu0
        %v5863 = vadd.f32 0.0, %v5862
        %v5864 = vpop.f32.mrb[0].mxu0
        %v5865 = vpop.f32.mrb[0].mxu0
        %v5866 = vadd.f32 0.0, %v5865
        %v5867 = vpop.f32.mrb[0].mxu0
        %5868 = vmatprep.mubr.bf16.mxu0 %v1361
        %5869 = vmatmul.mubr.bf16.gmra.mrb[0].mxu0 %v1353
        %v5870 = vpop.f32.mrb[0].mxu0
        %v5871 = vadd.f32 0.0, %v5870
        %v5872 = vpop.f32.mrb[0].mxu0
        %v5873 = vpop.f32.mrb[0].mxu0
        %v5874 = vadd.f32 0.0, %v5873
        %v5875 = vpop.f32.mrb[0].mxu0
        %5876 = vmatprep.mubr.bf16.mxu0 %v1377
        %5877 = vmatmul.mubr.bf16.gmra.mrb[0].mxu0 %v1369
        %v5878 = vpop.f32.mrb[0].mxu0
        %v5879 = vadd.f32 0.0, %v5878
        %v5880 = vpop.f32.mrb[0].mxu0
        %v5881 = vpop.f32.mrb[0].mxu0
        %v5882 = vadd.f32 0.0, %v5881
        %v5883 = vpop.f32.mrb[0].mxu0
        %5884 = vmatprep.mubr.bf16.mxu0 %v1393
        %5885 = vmatmul.mubr.bf16.gmra.mrb[0].mxu0 %v1385
        %v5886 = vpop.f32.mrb[0].mxu0
        %v5887 = vadd.f32 0.0, %v5886
        %v5888 = vpop.f32.mrb[0].mxu0
        %v5889 = vpop.f32.mrb[0].mxu0
        %v5890 = vadd.f32 0.0, %v5889
        %v5891 = vpop.f32.mrb[0].mxu0
        %5892 = vmatprep.mubr.bf16.mxu0 %v1409
        %5893 = vmatmul.mubr.bf16.gmra.mrb[0].mxu0 %v1401
        %v5894 = vpop.f32.mrb[0].mxu0
        %v5895 = vadd.f32 0.0, %v5894
        %v5896 = vpop.f32.mrb[0].mxu0
        %v5897 = vpop.f32.mrb[0].mxu0
        %v5898 = vadd.f32 0.0, %v5897
        %v5899 = vpop.f32.mrb[0].mxu0
        %5900 = vmatprep.mubr.bf16.mxu0 %v1425
        %5901 = vmatmul.mubr.bf16.gmra.mrb[0].mxu0 %v1417
        %v5902 = vpop.f32.mrb[0].mxu0
        %v5903 = vadd.f32 0.0, %v5902
        %v5904 = vpop.f32.mrb[0].mxu0
        %v5905 = vpop.f32.mrb[0].mxu0
        %v5906 = vadd.f32 0.0, %v5905
        %v5907 = vpop.f32.mrb[0].mxu0
        %5908 = vdwg.mxu0
        %v5909 = vadd.f32 %v5588, %v5783
        %v5910 = vadd.f32 %v5589, %v5786
        %v5911 = vadd.f32 %v5590, %v5791
        %v5912 = vadd.f32 %v5591, %v5794
        %v5913 = vadd.f32 %v5592, %v5799
        %v5914 = vadd.f32 %v5593, %v5802
        %v5915 = vadd.f32 %v5594, %v5807
        %v5916 = vadd.f32 %v5595, %v5810
        %v5917 = vadd.f32 %v5596, %v5815
        %v5918 = vadd.f32 %v5597, %v5818
        %v5919 = vadd.f32 %v5598, %v5823
        %v5920 = vadd.f32 %v5599, %v5826
        %v5921 = vadd.f32 %v5600, %v5831
        %v5922 = vadd.f32 %v5601, %v5834
        %v5923 = vadd.f32 %v5602, %v5839
        %v5924 = vadd.f32 %v5603, %v5842
        %v5925 = vadd.f32 %v5604, %v5847
        %v5926 = vadd.f32 %v5605, %v5850
        %v5927 = vadd.f32 %v5606, %v5855
        %v5928 = vadd.f32 %v5607, %v5858
        %v5929 = vadd.f32 %v5608, %v5863
        %v5930 = vadd.f32 %v5609, %v5866
        %v5931 = vadd.f32 %v5610, %v5871
        %v5932 = vadd.f32 %v5611, %v5874
        %v5933 = vadd.f32 %v5612, %v5879
        %v5934 = vadd.f32 %v5613, %v5882
        %v5935 = vadd.f32 %v5614, %v5887
        %v5936 = vadd.f32 %v5615, %v5890
        %v5937 = vadd.f32 %v5616, %v5895
        %v5938 = vadd.f32 %v5617, %v5898
        %v5939 = vadd.f32 %v5618, %v5903
        %v5940 = vadd.f32 %v5619, %v5906
        %v5941 = vld [vmem:[%s2920 + $0x4] sm:$0xf]
        %v5942 = vld [vmem:[%s2920 + $0xc] sm:$0xf]
        %v5943 = vld [vmem:[%s2920 + $0x14] sm:$0xf]
        %v5944 = vld [vmem:[%s2920 + $0x1c] sm:$0xf]
        %v5945 = vld [vmem:[%s2920 + $0x24] sm:$0xf]
        %v5946 = vld [vmem:[%s2920 + $0x2c] sm:$0xf]
        %v5947 = vld [vmem:[%s2920 + $0x34] sm:$0xf]
        %v5948 = vld [vmem:[%s2920 + $0x3c] sm:$0xf]
        %v5949 = vld [vmem:[%s2920 + $0x44] sm:$0xf]
        %v5950 = vld [vmem:[%s2920 + $0x4c] sm:$0xf]
        %v5951 = vld [vmem:[%s2920 + $0x54] sm:$0xf]
        %v5952 = vld [vmem:[%s2920 + $0x5c] sm:$0xf]
        %v5953 = vld [vmem:[%s2920 + $0x64] sm:$0xf]
        %v5954 = vld [vmem:[%s2920 + $0x6c] sm:$0xf]
        %v5955 = vld [vmem:[%s2920 + $0x74] sm:$0xf]
        %v5956 = vld [vmem:[%s2920 + $0x7c] sm:$0xf]
        %v5957 = vld [vmem:[%s2920 + $0x84] sm:$0xf]
        %v5958 = vld [vmem:[%s2920 + $0x8c] sm:$0xf]
        %v5959 = vld [vmem:[%s2920 + $0x94] sm:$0xf]
        %v5960 = vld [vmem:[%s2920 + $0x9c] sm:$0xf]
        %v5961 = vld [vmem:[%s2920 + $0xa4] sm:$0xf]
        %v5962 = vld [vmem:[%s2920 + $0xac] sm:$0xf]
        %v5963 = vld [vmem:[%s2920 + $0xb4] sm:$0xf]
        %v5964 = vld [vmem:[%s2920 + $0xbc] sm:$0xf]
        %v5965 = vld [vmem:[%s2920 + $0xc4] sm:$0xf]
        %v5966 = vld [vmem:[%s2920 + $0xcc] sm:$0xf]
        %v5967 = vld [vmem:[%s2920 + $0xd4] sm:$0xf]
        %v5968 = vld [vmem:[%s2920 + $0xdc] sm:$0xf]
        %v5969 = vld [vmem:[%s2920 + $0xe4] sm:$0xf]
        %v5970 = vld [vmem:[%s2920 + $0xec] sm:$0xf]
        %v5971 = vld [vmem:[%s2920 + $0xf4] sm:$0xf]
        %v5972 = vld [vmem:[%s2920 + $0xfc] sm:$0xf]
        %v6005 = vunpack.c.l.b16 %v5941
        %v6006 = vunpack.c.l.b16 %v5942
        %v6007 = vunpack.c.l.b16 %v5943
        %v6008 = vunpack.c.l.b16 %v5944
        %v6009 = vunpack.c.l.b16 %v5945
        %v6010 = vunpack.c.l.b16 %v5946
        %v6011 = vunpack.c.l.b16 %v5947
        %v6012 = vunpack.c.l.b16 %v5948
        %v6013 = vunpack.c.l.b16 %v5949
        %v6014 = vunpack.c.l.b16 %v5950
        %v6015 = vunpack.c.l.b16 %v5951
        %v6016 = vunpack.c.l.b16 %v5952
        %v6017 = vunpack.c.l.b16 %v5953
        %v6018 = vunpack.c.l.b16 %v5954
        %v6019 = vunpack.c.l.b16 %v5955
        %v6020 = vunpack.c.l.b16 %v5956
        %v6021 = vunpack.c.l.b16 %v5957
        %v6022 = vunpack.c.l.b16 %v5958
        %v6023 = vunpack.c.l.b16 %v5959
        %v6024 = vunpack.c.l.b16 %v5960
        %v6025 = vunpack.c.l.b16 %v5961
        %v6026 = vunpack.c.l.b16 %v5962
        %v6027 = vunpack.c.l.b16 %v5963
        %v6028 = vunpack.c.l.b16 %v5964
        %v6029 = vunpack.c.l.b16 %v5965
        %v6030 = vunpack.c.l.b16 %v5966
        %v6031 = vunpack.c.l.b16 %v5967
        %v6032 = vunpack.c.l.b16 %v5968
        %v6033 = vunpack.c.l.b16 %v5969
        %v6034 = vunpack.c.l.b16 %v5970
        %v6035 = vunpack.c.l.b16 %v5971
        %v6036 = vunpack.c.l.b16 %v5972
        %v6037 = vpack.c.b16 %v6006, %v6005
        %v6038 = vpack.c.b16 %v6008, %v6007
        %v6039 = vpack.c.b16 %v6010, %v6009
        %v6040 = vpack.c.b16 %v6012, %v6011
        %v6041 = vpack.c.b16 %v6014, %v6013
        %v6042 = vpack.c.b16 %v6016, %v6015
        %v6043 = vpack.c.b16 %v6018, %v6017
        %v6044 = vpack.c.b16 %v6020, %v6019
        %v6045 = vpack.c.b16 %v6022, %v6021
        %v6046 = vpack.c.b16 %v6024, %v6023
        %v6047 = vpack.c.b16 %v6026, %v6025
        %v6048 = vpack.c.b16 %v6028, %v6027
        %v6049 = vpack.c.b16 %v6030, %v6029
        %v6050 = vpack.c.b16 %v6032, %v6031
        %v6051 = vpack.c.b16 %v6034, %v6033
        %v6052 = vpack.c.b16 %v6036, %v6035
        %6069 = vmatprep.subr.bf16.mxu0 0
        %6070 = vmatpush1.bf16.msra.mxu0 %v6037
        %6071 = vmatprep.subr.bf16.mxu0 0
        %6072 = vmatpush1.bf16.msra.mxu0 %v6038
        %6073 = vmatprep.subr.bf16.mxu0 0
        %6074 = vmatpush1.bf16.msra.mxu0 %v6039
        %6075 = vmatprep.subr.bf16.mxu0 0
        %6076 = vmatpush1.bf16.msra.mxu0 %v6040
        %6077 = vmatprep.subr.bf16.mxu0 0
        %6078 = vmatpush1.bf16.msra.mxu0 %v6041
        %6079 = vmatprep.subr.bf16.mxu0 0
        %6080 = vmatpush1.bf16.msra.mxu0 %v6042
        %6081 = vmatprep.subr.bf16.mxu0 0
        %6082 = vmatpush1.bf16.msra.mxu0 %v6043
        %6083 = vmatprep.subr.bf16.mxu0 0
        %6084 = vmatpush1.bf16.msra.mxu0 %v6044
        %6085 = vmatprep.subr.bf16.mxu0 0
        %6086 = vmatpush1.bf16.msra.mxu0 %v6045
        %6087 = vmatprep.subr.bf16.mxu0 0
        %6088 = vmatpush1.bf16.msra.mxu0 %v6046
        %6089 = vmatprep.subr.bf16.mxu0 0
        %6090 = vmatpush1.bf16.msra.mxu0 %v6047
        %6091 = vmatprep.subr.bf16.mxu0 0
        %6092 = vmatpush1.bf16.msra.mxu0 %v6048
        %6093 = vmatprep.subr.bf16.mxu0 0
        %6094 = vmatpush1.bf16.msra.mxu0 %v6049
        %6095 = vmatprep.subr.bf16.mxu0 0
        %6096 = vmatpush1.bf16.msra.mxu0 %v6050
        %6097 = vmatprep.subr.bf16.mxu0 0
        %6098 = vmatpush1.bf16.msra.mxu0 %v6051
        %6099 = vmatprep.subr.bf16.mxu0 0
        %6100 = vmatpush1.bf16.msra.mxu0 %v6052
        %6101 = vmatprep.mubr.bf16.mxu0 %v1104
        %6102 = vmatmul.mubr.bf16.gmra.mrb[0].mxu0 %v1103
        %v6103 = vpop.f32.mrb[0].mxu0
        %v6104 = vadd.f32 0.0, %v6103
        %v6105 = vpop.f32.mrb[0].mxu0
        %v6106 = vpop.f32.mrb[0].mxu0
        %v6107 = vadd.f32 0.0, %v6106
        %v6108 = vpop.f32.mrb[0].mxu0
        %6109 = vmatprep.mubr.bf16.mxu0 %v1106
        %6110 = vmatmul.mubr.bf16.gmra.mrb[0].mxu0 %v1105
        %v6111 = vpop.f32.mrb[0].mxu0
        %v6112 = vadd.f32 0.0, %v6111
        %v6113 = vpop.f32.mrb[0].mxu0
        %v6114 = vpop.f32.mrb[0].mxu0
        %v6115 = vadd.f32 0.0, %v6114
        %v6116 = vpop.f32.mrb[0].mxu0
        %6117 = vmatprep.mubr.bf16.mxu0 %v1108
        %6118 = vmatmul.mubr.bf16.gmra.mrb[0].mxu0 %v1107
        %v6119 = vpop.f32.mrb[0].mxu0
        %v6120 = vadd.f32 0.0, %v6119
        %v6121 = vpop.f32.mrb[0].mxu0
        %v6122 = vpop.f32.mrb[0].mxu0
        %v6123 = vadd.f32 0.0, %v6122
        %v6124 = vpop.f32.mrb[0].mxu0
        %6125 = vmatprep.mubr.bf16.mxu0 %v1110
        %6126 = vmatmul.mubr.bf16.gmra.mrb[0].mxu0 %v1109
        %v6127 = vpop.f32.mrb[0].mxu0
        %v6128 = vadd.f32 0.0, %v6127
        %v6129 = vpop.f32.mrb[0].mxu0
        %v6130 = vpop.f32.mrb[0].mxu0
        %v6131 = vadd.f32 0.0, %v6130
        %v6132 = vpop.f32.mrb[0].mxu0
        %6133 = vmatprep.mubr.bf16.mxu0 %v1112
        %6134 = vmatmul.mubr.bf16.gmra.mrb[0].mxu0 %v1111
        %v6135 = vpop.f32.mrb[0].mxu0
        %v6136 = vadd.f32 0.0, %v6135
        %v6137 = vpop.f32.mrb[0].mxu0
        %v6138 = vpop.f32.mrb[0].mxu0
        %v6139 = vadd.f32 0.0, %v6138
        %v6140 = vpop.f32.mrb[0].mxu0
        %6141 = vmatprep.mubr.bf16.mxu0 %v1114
        %6142 = vmatmul.mubr.bf16.gmra.mrb[0].mxu0 %v1113
        %v6143 = vpop.f32.mrb[0].mxu0
        %v6144 = vadd.f32 0.0, %v6143
        %v6145 = vpop.f32.mrb[0].mxu0
        %v6146 = vpop.f32.mrb[0].mxu0
        %v6147 = vadd.f32 0.0, %v6146
        %v6148 = vpop.f32.mrb[0].mxu0
        %6149 = vmatprep.mubr.bf16.mxu0 %v1116
        %6150 = vmatmul.mubr.bf16.gmra.mrb[0].mxu0 %v1115
        %v6151 = vpop.f32.mrb[0].mxu0
        %v6152 = vadd.f32 0.0, %v6151
        %v6153 = vpop.f32.mrb[0].mxu0
        %v6154 = vpop.f32.mrb[0].mxu0
        %v6155 = vadd.f32 0.0, %v6154
        %v6156 = vpop.f32.mrb[0].mxu0
        %6157 = vmatprep.mubr.bf16.mxu0 %v1118
        %6158 = vmatmul.mubr.bf16.gmra.mrb[0].mxu0 %v1117
        %v6159 = vpop.f32.mrb[0].mxu0
        %v6160 = vadd.f32 0.0, %v6159
        %v6161 = vpop.f32.mrb[0].mxu0
        %v6162 = vpop.f32.mrb[0].mxu0
        %v6163 = vadd.f32 0.0, %v6162
        %v6164 = vpop.f32.mrb[0].mxu0
        %6165 = vmatprep.mubr.bf16.mxu0 %v1120
        %6166 = vmatmul.mubr.bf16.gmra.mrb[0].mxu0 %v1119
        %v6167 = vpop.f32.mrb[0].mxu0
        %v6168 = vadd.f32 0.0, %v6167
        %v6169 = vpop.f32.mrb[0].mxu0
        %v6170 = vpop.f32.mrb[0].mxu0
        %v6171 = vadd.f32 0.0, %v6170
        %v6172 = vpop.f32.mrb[0].mxu0
        %6173 = vmatprep.mubr.bf16.mxu0 %v1122
        %6174 = vmatmul.mubr.bf16.gmra.mrb[0].mxu0 %v1121
        %v6175 = vpop.f32.mrb[0].mxu0
        %v6176 = vadd.f32 0.0, %v6175
        %v6177 = vpop.f32.mrb[0].mxu0
        %v6178 = vpop.f32.mrb[0].mxu0
        %v6179 = vadd.f32 0.0, %v6178
        %v6180 = vpop.f32.mrb[0].mxu0
        %6181 = vmatprep.mubr.bf16.mxu0 %v1124
        %6182 = vmatmul.mubr.bf16.gmra.mrb[0].mxu0 %v1123
        %v6183 = vpop.f32.mrb[0].mxu0
        %v6184 = vadd.f32 0.0, %v6183
        %v6185 = vpop.f32.mrb[0].mxu0
        %v6186 = vpop.f32.mrb[0].mxu0
        %v6187 = vadd.f32 0.0, %v6186
        %v6188 = vpop.f32.mrb[0].mxu0
        %6189 = vmatprep.mubr.bf16.mxu0 %v1126
        %6190 = vmatmul.mubr.bf16.gmra.mrb[0].mxu0 %v1125
        %v6191 = vpop.f32.mrb[0].mxu0
        %v6192 = vadd.f32 0.0, %v6191
        %v6193 = vpop.f32.mrb[0].mxu0
        %v6194 = vpop.f32.mrb[0].mxu0
        %v6195 = vadd.f32 0.0, %v6194
        %v6196 = vpop.f32.mrb[0].mxu0
        %6197 = vmatprep.mubr.bf16.mxu0 %v1128
        %6198 = vmatmul.mubr.bf16.gmra.mrb[0].mxu0 %v1127
        %v6199 = vpop.f32.mrb[0].mxu0
        %v6200 = vadd.f32 0.0, %v6199
        %v6201 = vpop.f32.mrb[0].mxu0
        %v6202 = vpop.f32.mrb[0].mxu0
        %v6203 = vadd.f32 0.0, %v6202
        %v6204 = vpop.f32.mrb[0].mxu0
        %6205 = vmatprep.mubr.bf16.mxu0 %v1130
        %6206 = vmatmul.mubr.bf16.gmra.mrb[0].mxu0 %v1129
        %v6207 = vpop.f32.mrb[0].mxu0
        %v6208 = vadd.f32 0.0, %v6207
        %v6209 = vpop.f32.mrb[0].mxu0
        %v6210 = vpop.f32.mrb[0].mxu0
        %v6211 = vadd.f32 0.0, %v6210
        %v6212 = vpop.f32.mrb[0].mxu0
        %6213 = vmatprep.mubr.bf16.mxu0 %v1132
        %6214 = vmatmul.mubr.bf16.gmra.mrb[0].mxu0 %v1131
        %v6215 = vpop.f32.mrb[0].mxu0
        %v6216 = vadd.f32 0.0, %v6215
        %v6217 = vpop.f32.mrb[0].mxu0
        %v6218 = vpop.f32.mrb[0].mxu0
        %v6219 = vadd.f32 0.0, %v6218
        %v6220 = vpop.f32.mrb[0].mxu0
        %6221 = vmatprep.mubr.bf16.mxu0 %v1134
        %6222 = vmatmul.mubr.bf16.gmra.mrb[0].mxu0 %v1133
        %v6223 = vpop.f32.mrb[0].mxu0
        %v6224 = vadd.f32 0.0, %v6223
        %v6225 = vpop.f32.mrb[0].mxu0
        %v6226 = vpop.f32.mrb[0].mxu0
        %v6227 = vadd.f32 0.0, %v6226
        %v6228 = vpop.f32.mrb[0].mxu0
        %6229 = vdwg.mxu0
        %v6230 = vadd.f32 %v5909, %v6104
        %v6231 = vadd.f32 %v5910, %v6107
        %v6232 = vadd.f32 %v5911, %v6112
        %v6233 = vadd.f32 %v5912, %v6115
        %v6234 = vadd.f32 %v5913, %v6120
        %v6235 = vadd.f32 %v5914, %v6123
        %v6236 = vadd.f32 %v5915, %v6128
        %v6237 = vadd.f32 %v5916, %v6131
        %v6238 = vadd.f32 %v5917, %v6136
        %v6239 = vadd.f32 %v5918, %v6139
        %v6240 = vadd.f32 %v5919, %v6144
        %v6241 = vadd.f32 %v5920, %v6147
        %v6242 = vadd.f32 %v5921, %v6152
        %v6243 = vadd.f32 %v5922, %v6155
        %v6244 = vadd.f32 %v5923, %v6160
        %v6245 = vadd.f32 %v5924, %v6163
        %v6246 = vadd.f32 %v5925, %v6168
        %v6247 = vadd.f32 %v5926, %v6171
        %v6248 = vadd.f32 %v5927, %v6176
        %v6249 = vadd.f32 %v5928, %v6179
        %v6250 = vadd.f32 %v5929, %v6184
        %v6251 = vadd.f32 %v5930, %v6187
        %v6252 = vadd.f32 %v5931, %v6192
        %v6253 = vadd.f32 %v5932, %v6195
        %v6254 = vadd.f32 %v5933, %v6200
        %v6255 = vadd.f32 %v5934, %v6203
        %v6256 = vadd.f32 %v5935, %v6208
        %v6257 = vadd.f32 %v5936, %v6211
        %v6258 = vadd.f32 %v5937, %v6216
        %v6259 = vadd.f32 %v5938, %v6219
        %v6260 = vadd.f32 %v5939, %v6224
        %v6261 = vadd.f32 %v5940, %v6227
        %v6262 = vld [vmem:[%s3246 + $0x4] sm:$0xf]
        %v6263 = vld [vmem:[%s3246 + $0xc] sm:$0xf]
        %v6264 = vld [vmem:[%s3246 + $0x14] sm:$0xf]
        %v6265 = vld [vmem:[%s3246 + $0x1c] sm:$0xf]
        %v6266 = vld [vmem:[%s3246 + $0x24] sm:$0xf]
        %v6267 = vld [vmem:[%s3246 + $0x2c] sm:$0xf]
        %v6268 = vld [vmem:[%s3246 + $0x34] sm:$0xf]
        %v6269 = vld [vmem:[%s3246 + $0x3c] sm:$0xf]
        %v6270 = vld [vmem:[%s3246 + $0x44] sm:$0xf]
        %v6271 = vld [vmem:[%s3246 + $0x4c] sm:$0xf]
        %v6272 = vld [vmem:[%s3246 + $0x54] sm:$0xf]
        %v6273 = vld [vmem:[%s3246 + $0x5c] sm:$0xf]
        %v6274 = vld [vmem:[%s3246 + $0x64] sm:$0xf]
        %v6275 = vld [vmem:[%s3246 + $0x6c] sm:$0xf]
        %v6276 = vld [vmem:[%s3246 + $0x74] sm:$0xf]
        %v6277 = vld [vmem:[%s3246 + $0x7c] sm:$0xf]
        %v6278 = vld [vmem:[%s3246 + $0x84] sm:$0xf]
        %v6279 = vld [vmem:[%s3246 + $0x8c] sm:$0xf]
        %v6280 = vld [vmem:[%s3246 + $0x94] sm:$0xf]
        %v6281 = vld [vmem:[%s3246 + $0x9c] sm:$0xf]
        %v6282 = vld [vmem:[%s3246 + $0xa4] sm:$0xf]
        %v6283 = vld [vmem:[%s3246 + $0xac] sm:$0xf]
        %v6284 = vld [vmem:[%s3246 + $0xb4] sm:$0xf]
        %v6285 = vld [vmem:[%s3246 + $0xbc] sm:$0xf]
        %v6286 = vld [vmem:[%s3246 + $0xc4] sm:$0xf]
        %v6287 = vld [vmem:[%s3246 + $0xcc] sm:$0xf]
        %v6288 = vld [vmem:[%s3246 + $0xd4] sm:$0xf]
        %v6289 = vld [vmem:[%s3246 + $0xdc] sm:$0xf]
        %v6290 = vld [vmem:[%s3246 + $0xe4] sm:$0xf]
        %v6291 = vld [vmem:[%s3246 + $0xec] sm:$0xf]
        %v6292 = vld [vmem:[%s3246 + $0xf4] sm:$0xf]
        %v6293 = vld [vmem:[%s3246 + $0xfc] sm:$0xf]
        %v6326 = vunpack.c.l.b16 %v6262
        %v6327 = vunpack.c.l.b16 %v6263
        %v6328 = vunpack.c.l.b16 %v6264
        %v6329 = vunpack.c.l.b16 %v6265
        %v6330 = vunpack.c.l.b16 %v6266
        %v6331 = vunpack.c.l.b16 %v6267
        %v6332 = vunpack.c.l.b16 %v6268
        %v6333 = vunpack.c.l.b16 %v6269
        %v6334 = vunpack.c.l.b16 %v6270
        %v6335 = vunpack.c.l.b16 %v6271
        %v6336 = vunpack.c.l.b16 %v6272
        %v6337 = vunpack.c.l.b16 %v6273
        %v6338 = vunpack.c.l.b16 %v6274
        %v6339 = vunpack.c.l.b16 %v6275
        %v6340 = vunpack.c.l.b16 %v6276
        %v6341 = vunpack.c.l.b16 %v6277
        %v6342 = vunpack.c.l.b16 %v6278
        %v6343 = vunpack.c.l.b16 %v6279
        %v6344 = vunpack.c.l.b16 %v6280
        %v6345 = vunpack.c.l.b16 %v6281
        %v6346 = vunpack.c.l.b16 %v6282
        %v6347 = vunpack.c.l.b16 %v6283
        %v6348 = vunpack.c.l.b16 %v6284
        %v6349 = vunpack.c.l.b16 %v6285
        %v6350 = vunpack.c.l.b16 %v6286
        %v6351 = vunpack.c.l.b16 %v6287
        %v6352 = vunpack.c.l.b16 %v6288
        %v6353 = vunpack.c.l.b16 %v6289
        %v6354 = vunpack.c.l.b16 %v6290
        %v6355 = vunpack.c.l.b16 %v6291
        %v6356 = vunpack.c.l.b16 %v6292
        %v6357 = vunpack.c.l.b16 %v6293
        %v6358 = vpack.c.b16 %v6327, %v6326
        %v6359 = vpack.c.b16 %v6329, %v6328
        %v6360 = vpack.c.b16 %v6331, %v6330
        %v6361 = vpack.c.b16 %v6333, %v6332
        %v6362 = vpack.c.b16 %v6335, %v6334
        %v6363 = vpack.c.b16 %v6337, %v6336
        %v6364 = vpack.c.b16 %v6339, %v6338
        %v6365 = vpack.c.b16 %v6341, %v6340
        %v6366 = vpack.c.b16 %v6343, %v6342
        %v6367 = vpack.c.b16 %v6345, %v6344
        %v6368 = vpack.c.b16 %v6347, %v6346
        %v6369 = vpack.c.b16 %v6349, %v6348
        %v6370 = vpack.c.b16 %v6351, %v6350
        %v6371 = vpack.c.b16 %v6353, %v6352
        %v6372 = vpack.c.b16 %v6355, %v6354
        %v6373 = vpack.c.b16 %v6357, %v6356
        %6390 = vmatprep.subr.bf16.mxu0 0
        %6391 = vmatpush1.bf16.msra.mxu0 %v6358
        %6392 = vmatprep.subr.bf16.mxu0 0
        %6393 = vmatpush1.bf16.msra.mxu0 %v6359
        %6394 = vmatprep.subr.bf16.mxu0 0
        %6395 = vmatpush1.bf16.msra.mxu0 %v6360
        %6396 = vmatprep.subr.bf16.mxu0 0
        %6397 = vmatpush1.bf16.msra.mxu0 %v6361
        %6398 = vmatprep.subr.bf16.mxu0 0
        %6399 = vmatpush1.bf16.msra.mxu0 %v6362
        %6400 = vmatprep.subr.bf16.mxu0 0
        %6401 = vmatpush1.bf16.msra.mxu0 %v6363
        %6402 = vmatprep.subr.bf16.mxu0 0
        %6403 = vmatpush1.bf16.msra.mxu0 %v6364
        %6404 = vmatprep.subr.bf16.mxu0 0
        %6405 = vmatpush1.bf16.msra.mxu0 %v6365
        %6406 = vmatprep.subr.bf16.mxu0 0
        %6407 = vmatpush1.bf16.msra.mxu0 %v6366
        %6408 = vmatprep.subr.bf16.mxu0 0
        %6409 = vmatpush1.bf16.msra.mxu0 %v6367
        %6410 = vmatprep.subr.bf16.mxu0 0
        %6411 = vmatpush1.bf16.msra.mxu0 %v6368
        %6412 = vmatprep.subr.bf16.mxu0 0
        %6413 = vmatpush1.bf16.msra.mxu0 %v6369
        %6414 = vmatprep.subr.bf16.mxu0 0
        %6415 = vmatpush1.bf16.msra.mxu0 %v6370
        %6416 = vmatprep.subr.bf16.mxu0 0
        %6417 = vmatpush1.bf16.msra.mxu0 %v6371
        %6418 = vmatprep.subr.bf16.mxu0 0
        %6419 = vmatpush1.bf16.msra.mxu0 %v6372
        %6420 = vmatprep.subr.bf16.mxu0 0
        %6421 = vmatpush1.bf16.msra.mxu0 %v6373
        %6422 = vmatprep.mubr.bf16.mxu0 %v1522
        %6423 = vmatmul.mubr.bf16.gmra.mrb[0].mxu0 %v1519
        %v6424 = vpop.f32.mrb[0].mxu0
        %v6425 = vadd.f32 0.0, %v6424
        %v6426 = vpop.f32.mrb[0].mxu0
        %v6427 = vpop.f32.mrb[0].mxu0
        %v6428 = vadd.f32 0.0, %v6427
        %v6429 = vpop.f32.mrb[0].mxu0
        %6430 = vmatprep.mubr.bf16.mxu0 %v1528
        %6431 = vmatmul.mubr.bf16.gmra.mrb[0].mxu0 %v1525
        %v6432 = vpop.f32.mrb[0].mxu0
        %v6433 = vadd.f32 0.0, %v6432
        %v6434 = vpop.f32.mrb[0].mxu0
        %v6435 = vpop.f32.mrb[0].mxu0
        %v6436 = vadd.f32 0.0, %v6435
        %v6437 = vpop.f32.mrb[0].mxu0
        %6438 = vmatprep.mubr.bf16.mxu0 %v1534
        %6439 = vmatmul.mubr.bf16.gmra.mrb[0].mxu0 %v1531
        %v6440 = vpop.f32.mrb[0].mxu0
        %v6441 = vadd.f32 0.0, %v6440
        %v6442 = vpop.f32.mrb[0].mxu0
        %v6443 = vpop.f32.mrb[0].mxu0
        %v6444 = vadd.f32 0.0, %v6443
        %v6445 = vpop.f32.mrb[0].mxu0
        %6446 = vmatprep.mubr.bf16.mxu0 %v1540
        %6447 = vmatmul.mubr.bf16.gmra.mrb[0].mxu0 %v1537
        %v6448 = vpop.f32.mrb[0].mxu0
        %v6449 = vadd.f32 0.0, %v6448
        %v6450 = vpop.f32.mrb[0].mxu0
        %v6451 = vpop.f32.mrb[0].mxu0
        %v6452 = vadd.f32 0.0, %v6451
        %v6453 = vpop.f32.mrb[0].mxu0
        %6454 = vmatprep.mubr.bf16.mxu0 %v1546
        %6455 = vmatmul.mubr.bf16.gmra.mrb[0].mxu0 %v1543
        %v6456 = vpop.f32.mrb[0].mxu0
        %v6457 = vadd.f32 0.0, %v6456
        %v6458 = vpop.f32.mrb[0].mxu0
        %v6459 = vpop.f32.mrb[0].mxu0
        %v6460 = vadd.f32 0.0, %v6459
        %v6461 = vpop.f32.mrb[0].mxu0
        %6462 = vmatprep.mubr.bf16.mxu0 %v1552
        %6463 = vmatmul.mubr.bf16.gmra.mrb[0].mxu0 %v1549
        %v6464 = vpop.f32.mrb[0].mxu0
        %v6465 = vadd.f32 0.0, %v6464
        %v6466 = vpop.f32.mrb[0].mxu0
        %v6467 = vpop.f32.mrb[0].mxu0
        %v6468 = vadd.f32 0.0, %v6467
        %v6469 = vpop.f32.mrb[0].mxu0
        %6470 = vmatprep.mubr.bf16.mxu0 %v1558
        %6471 = vmatmul.mubr.bf16.gmra.mrb[0].mxu0 %v1555
        %v6472 = vpop.f32.mrb[0].mxu0
        %v6473 = vadd.f32 0.0, %v6472
        %v6474 = vpop.f32.mrb[0].mxu0
        %v6475 = vpop.f32.mrb[0].mxu0
        %v6476 = vadd.f32 0.0, %v6475
        %v6477 = vpop.f32.mrb[0].mxu0
        %6478 = vmatprep.mubr.bf16.mxu0 %v1564
        %6479 = vmatmul.mubr.bf16.gmra.mrb[0].mxu0 %v1561
        %v6480 = vpop.f32.mrb[0].mxu0
        %v6481 = vadd.f32 0.0, %v6480
        %v6482 = vpop.f32.mrb[0].mxu0
        %v6483 = vpop.f32.mrb[0].mxu0
        %v6484 = vadd.f32 0.0, %v6483
        %v6485 = vpop.f32.mrb[0].mxu0
        %6486 = vmatprep.mubr.bf16.mxu0 %v1570
        %6487 = vmatmul.mubr.bf16.gmra.mrb[0].mxu0 %v1567
        %v6488 = vpop.f32.mrb[0].mxu0
        %v6489 = vadd.f32 0.0, %v6488
        %v6490 = vpop.f32.mrb[0].mxu0
        %v6491 = vpop.f32.mrb[0].mxu0
        %v6492 = vadd.f32 0.0, %v6491
        %v6493 = vpop.f32.mrb[0].mxu0
        %6494 = vmatprep.mubr.bf16.mxu0 %v1576
        %6495 = vmatmul.mubr.bf16.gmra.mrb[0].mxu0 %v1573
        %v6496 = vpop.f32.mrb[0].mxu0
        %v6497 = vadd.f32 0.0, %v6496
        %v6498 = vpop.f32.mrb[0].mxu0
        %v6499 = vpop.f32.mrb[0].mxu0
        %v6500 = vadd.f32 0.0, %v6499
        %v6501 = vpop.f32.mrb[0].mxu0
        %6502 = vmatprep.mubr.bf16.mxu0 %v1582
        %6503 = vmatmul.mubr.bf16.gmra.mrb[0].mxu0 %v1579
        %v6504 = vpop.f32.mrb[0].mxu0
        %v6505 = vadd.f32 0.0, %v6504
        %v6506 = vpop.f32.mrb[0].mxu0
        %v6507 = vpop.f32.mrb[0].mxu0
        %v6508 = vadd.f32 0.0, %v6507
        %v6509 = vpop.f32.mrb[0].mxu0
        %6510 = vmatprep.mubr.bf16.mxu0 %v1588
        %6511 = vmatmul.mubr.bf16.gmra.mrb[0].mxu0 %v1585
        %v6512 = vpop.f32.mrb[0].mxu0
        %v6513 = vadd.f32 0.0, %v6512
        %v6514 = vpop.f32.mrb[0].mxu0
        %v6515 = vpop.f32.mrb[0].mxu0
        %v6516 = vadd.f32 0.0, %v6515
        %v6517 = vpop.f32.mrb[0].mxu0
        %6518 = vmatprep.mubr.bf16.mxu0 %v1594
        %6519 = vmatmul.mubr.bf16.gmra.mrb[0].mxu0 %v1591
        %v6520 = vpop.f32.mrb[0].mxu0
        %v6521 = vadd.f32 0.0, %v6520
        %v6522 = vpop.f32.mrb[0].mxu0
        %v6523 = vpop.f32.mrb[0].mxu0
        %v6524 = vadd.f32 0.0, %v6523
        %v6525 = vpop.f32.mrb[0].mxu0
        %6526 = vmatprep.mubr.bf16.mxu0 %v1600
        %6527 = vmatmul.mubr.bf16.gmra.mrb[0].mxu0 %v1597
        %v6528 = vpop.f32.mrb[0].mxu0
        %v6529 = vadd.f32 0.0, %v6528
        %v6530 = vpop.f32.mrb[0].mxu0
        %v6531 = vpop.f32.mrb[0].mxu0
        %v6532 = vadd.f32 0.0, %v6531
        %v6533 = vpop.f32.mrb[0].mxu0
        %6534 = vmatprep.mubr.bf16.mxu0 %v1606
        %6535 = vmatmul.mubr.bf16.gmra.mrb[0].mxu0 %v1603
        %v6536 = vpop.f32.mrb[0].mxu0
        %v6537 = vadd.f32 0.0, %v6536
        %v6538 = vpop.f32.mrb[0].mxu0
        %v6539 = vpop.f32.mrb[0].mxu0
        %v6540 = vadd.f32 0.0, %v6539
        %v6541 = vpop.f32.mrb[0].mxu0
        %6542 = vmatprep.mubr.bf16.mxu0 %v1612
        %6543 = vmatmul.mubr.bf16.gmra.mrb[0].mxu0 %v1609
        %v6544 = vpop.f32.mrb[0].mxu0
        %v6545 = vadd.f32 0.0, %v6544
        %v6546 = vpop.f32.mrb[0].mxu0
        %v6547 = vpop.f32.mrb[0].mxu0
        %v6548 = vadd.f32 0.0, %v6547
        %v6549 = vpop.f32.mrb[0].mxu0
        %6550 = vdwg.mxu0
        %v6551 = vadd.f32 %v6230, %v6425
        %v6552 = vadd.f32 %v6231, %v6428
        %v6553 = vadd.f32 %v6232, %v6433
        %v6554 = vadd.f32 %v6233, %v6436
        %v6555 = vadd.f32 %v6234, %v6441
        %v6556 = vadd.f32 %v6235, %v6444
        %v6557 = vadd.f32 %v6236, %v6449
        %v6558 = vadd.f32 %v6237, %v6452
        %v6559 = vadd.f32 %v6238, %v6457
        %v6560 = vadd.f32 %v6239, %v6460
        %v6561 = vadd.f32 %v6240, %v6465
        %v6562 = vadd.f32 %v6241, %v6468
        %v6563 = vadd.f32 %v6242, %v6473
        %v6564 = vadd.f32 %v6243, %v6476
        %v6565 = vadd.f32 %v6244, %v6481
        %v6566 = vadd.f32 %v6245, %v6484
        %v6567 = vadd.f32 %v6246, %v6489
        %v6568 = vadd.f32 %v6247, %v6492
        %v6569 = vadd.f32 %v6248, %v6497
        %v6570 = vadd.f32 %v6249, %v6500
        %v6571 = vadd.f32 %v6250, %v6505
        %v6572 = vadd.f32 %v6251, %v6508
        %v6573 = vadd.f32 %v6252, %v6513
        %v6574 = vadd.f32 %v6253, %v6516
        %v6575 = vadd.f32 %v6254, %v6521
        %v6576 = vadd.f32 %v6255, %v6524
        %v6577 = vadd.f32 %v6256, %v6529
        %v6578 = vadd.f32 %v6257, %v6532
        %v6579 = vadd.f32 %v6258, %v6537
        %v6580 = vadd.f32 %v6259, %v6540
        %v6581 = vadd.f32 %v6260, %v6545
        %v6582 = vadd.f32 %v6261, %v6548
        %v6583 = vld [vmem:[%s3568 + $0x4] sm:$0xf]
        %v6584 = vld [vmem:[%s3568 + $0xc] sm:$0xf]
        %v6585 = vld [vmem:[%s3568 + $0x14] sm:$0xf]
        %v6586 = vld [vmem:[%s3568 + $0x1c] sm:$0xf]
        %v6587 = vld [vmem:[%s3568 + $0x24] sm:$0xf]
        %v6588 = vld [vmem:[%s3568 + $0x2c] sm:$0xf]
        %v6589 = vld [vmem:[%s3568 + $0x34] sm:$0xf]
        %v6590 = vld [vmem:[%s3568 + $0x3c] sm:$0xf]
        %v6591 = vld [vmem:[%s3568 + $0x44] sm:$0xf]
        %v6592 = vld [vmem:[%s3568 + $0x4c] sm:$0xf]
        %v6593 = vld [vmem:[%s3568 + $0x54] sm:$0xf]
        %v6594 = vld [vmem:[%s3568 + $0x5c] sm:$0xf]
        %v6595 = vld [vmem:[%s3568 + $0x64] sm:$0xf]
        %v6596 = vld [vmem:[%s3568 + $0x6c] sm:$0xf]
        %v6597 = vld [vmem:[%s3568 + $0x74] sm:$0xf]
        %v6598 = vld [vmem:[%s3568 + $0x7c] sm:$0xf]
        %v6599 = vld [vmem:[%s3568 + $0x84] sm:$0xf]
        %v6600 = vld [vmem:[%s3568 + $0x8c] sm:$0xf]
        %v6601 = vld [vmem:[%s3568 + $0x94] sm:$0xf]
        %v6602 = vld [vmem:[%s3568 + $0x9c] sm:$0xf]
        %v6603 = vld [vmem:[%s3568 + $0xa4] sm:$0xf]
        %v6604 = vld [vmem:[%s3568 + $0xac] sm:$0xf]
        %v6605 = vld [vmem:[%s3568 + $0xb4] sm:$0xf]
        %v6606 = vld [vmem:[%s3568 + $0xbc] sm:$0xf]
        %v6607 = vld [vmem:[%s3568 + $0xc4] sm:$0xf]
        %v6608 = vld [vmem:[%s3568 + $0xcc] sm:$0xf]
        %v6609 = vld [vmem:[%s3568 + $0xd4] sm:$0xf]
        %v6610 = vld [vmem:[%s3568 + $0xdc] sm:$0xf]
        %v6611 = vld [vmem:[%s3568 + $0xe4] sm:$0xf]
        %v6612 = vld [vmem:[%s3568 + $0xec] sm:$0xf]
        %v6613 = vld [vmem:[%s3568 + $0xf4] sm:$0xf]
        %v6614 = vld [vmem:[%s3568 + $0xfc] sm:$0xf]
        %v6647 = vunpack.c.l.b16 %v6583
        %v6648 = vunpack.c.l.b16 %v6584
        %v6649 = vunpack.c.l.b16 %v6585
        %v6650 = vunpack.c.l.b16 %v6586
        %v6651 = vunpack.c.l.b16 %v6587
        %v6652 = vunpack.c.l.b16 %v6588
        %v6653 = vunpack.c.l.b16 %v6589
        %v6654 = vunpack.c.l.b16 %v6590
        %v6655 = vunpack.c.l.b16 %v6591
        %v6656 = vunpack.c.l.b16 %v6592
        %v6657 = vunpack.c.l.b16 %v6593
        %v6658 = vunpack.c.l.b16 %v6594
        %v6659 = vunpack.c.l.b16 %v6595
        %v6660 = vunpack.c.l.b16 %v6596
        %v6661 = vunpack.c.l.b16 %v6597
        %v6662 = vunpack.c.l.b16 %v6598
        %v6663 = vunpack.c.l.b16 %v6599
        %v6664 = vunpack.c.l.b16 %v6600
        %v6665 = vunpack.c.l.b16 %v6601
        %v6666 = vunpack.c.l.b16 %v6602
        %v6667 = vunpack.c.l.b16 %v6603
        %v6668 = vunpack.c.l.b16 %v6604
        %v6669 = vunpack.c.l.b16 %v6605
        %v6670 = vunpack.c.l.b16 %v6606
        %v6671 = vunpack.c.l.b16 %v6607
        %v6672 = vunpack.c.l.b16 %v6608
        %v6673 = vunpack.c.l.b16 %v6609
        %v6674 = vunpack.c.l.b16 %v6610
        %v6675 = vunpack.c.l.b16 %v6611
        %v6676 = vunpack.c.l.b16 %v6612
        %v6677 = vunpack.c.l.b16 %v6613
        %v6678 = vunpack.c.l.b16 %v6614
        %v6679 = vpack.c.b16 %v6648, %v6647
        %v6680 = vpack.c.b16 %v6650, %v6649
        %v6681 = vpack.c.b16 %v6652, %v6651
        %v6682 = vpack.c.b16 %v6654, %v6653
        %v6683 = vpack.c.b16 %v6656, %v6655
        %v6684 = vpack.c.b16 %v6658, %v6657
        %v6685 = vpack.c.b16 %v6660, %v6659
        %v6686 = vpack.c.b16 %v6662, %v6661
        %v6687 = vpack.c.b16 %v6664, %v6663
        %v6688 = vpack.c.b16 %v6666, %v6665
        %v6689 = vpack.c.b16 %v6668, %v6667
        %v6690 = vpack.c.b16 %v6670, %v6669
        %v6691 = vpack.c.b16 %v6672, %v6671
        %v6692 = vpack.c.b16 %v6674, %v6673
        %v6693 = vpack.c.b16 %v6676, %v6675
        %v6694 = vpack.c.b16 %v6678, %v6677
        %6711 = vmatprep.subr.bf16.mxu0 0
        %6712 = vmatpush1.bf16.msra.mxu0 %v6679
        %6713 = vmatprep.subr.bf16.mxu0 0
        %6714 = vmatpush1.bf16.msra.mxu0 %v6680
        %6715 = vmatprep.subr.bf16.mxu0 0
        %6716 = vmatpush1.bf16.msra.mxu0 %v6681
        %6717 = vmatprep.subr.bf16.mxu0 0
        %6718 = vmatpush1.bf16.msra.mxu0 %v6682
        %6719 = vmatprep.subr.bf16.mxu0 0
        %6720 = vmatpush1.bf16.msra.mxu0 %v6683
        %6721 = vmatprep.subr.bf16.mxu0 0
        %6722 = vmatpush1.bf16.msra.mxu0 %v6684
        %6723 = vmatprep.subr.bf16.mxu0 0
        %6724 = vmatpush1.bf16.msra.mxu0 %v6685
        %6725 = vmatprep.subr.bf16.mxu0 0
        %6726 = vmatpush1.bf16.msra.mxu0 %v6686
        %6727 = vmatprep.subr.bf16.mxu0 0
        %6728 = vmatpush1.bf16.msra.mxu0 %v6687
        %6729 = vmatprep.subr.bf16.mxu0 0
        %6730 = vmatpush1.bf16.msra.mxu0 %v6688
        %6731 = vmatprep.subr.bf16.mxu0 0
        %6732 = vmatpush1.bf16.msra.mxu0 %v6689
        %6733 = vmatprep.subr.bf16.mxu0 0
        %6734 = vmatpush1.bf16.msra.mxu0 %v6690
        %6735 = vmatprep.subr.bf16.mxu0 0
        %6736 = vmatpush1.bf16.msra.mxu0 %v6691
        %6737 = vmatprep.subr.bf16.mxu0 0
        %6738 = vmatpush1.bf16.msra.mxu0 %v6692
        %6739 = vmatprep.subr.bf16.mxu0 0
        %6740 = vmatpush1.bf16.msra.mxu0 %v6693
        %6741 = vmatprep.subr.bf16.mxu0 0
        %6742 = vmatpush1.bf16.msra.mxu0 %v6694
        %6743 = vmatprep.mubr.bf16.mxu0 %v1217
        %6744 = vmatmul.mubr.bf16.gmra.mrb[0].mxu0 %v1209
        %v6745 = vpop.f32.mrb[0].mxu0
        %v6746 = vadd.f32 0.0, %v6745
        %v6747 = vpop.f32.mrb[0].mxu0
        %v6748 = vpop.f32.mrb[0].mxu0
        %v6749 = vadd.f32 0.0, %v6748
        %v6750 = vpop.f32.mrb[0].mxu0
        %6751 = vmatprep.mubr.bf16.mxu0 %v1233
        %6752 = vmatmul.mubr.bf16.gmra.mrb[0].mxu0 %v1225
        %v6753 = vpop.f32.mrb[0].mxu0
        %v6754 = vadd.f32 0.0, %v6753
        %v6755 = vpop.f32.mrb[0].mxu0
        %v6756 = vpop.f32.mrb[0].mxu0
        %v6757 = vadd.f32 0.0, %v6756
        %v6758 = vpop.f32.mrb[0].mxu0
        %6759 = vmatprep.mubr.bf16.mxu0 %v1249
        %6760 = vmatmul.mubr.bf16.gmra.mrb[0].mxu0 %v1241
        %v6761 = vpop.f32.mrb[0].mxu0
        %v6762 = vadd.f32 0.0, %v6761
        %v6763 = vpop.f32.mrb[0].mxu0
        %v6764 = vpop.f32.mrb[0].mxu0
        %v6765 = vadd.f32 0.0, %v6764
        %v6766 = vpop.f32.mrb[0].mxu0
        %6767 = vmatprep.mubr.bf16.mxu0 %v1265
        %6768 = vmatmul.mubr.bf16.gmra.mrb[0].mxu0 %v1257
        %v6769 = vpop.f32.mrb[0].mxu0
        %v6770 = vadd.f32 0.0, %v6769
        %v6771 = vpop.f32.mrb[0].mxu0
        %v6772 = vpop.f32.mrb[0].mxu0
        %v6773 = vadd.f32 0.0, %v6772
        %v6774 = vpop.f32.mrb[0].mxu0
        %6775 = vmatprep.mubr.bf16.mxu0 %v1281
        %6776 = vmatmul.mubr.bf16.gmra.mrb[0].mxu0 %v1273
        %v6777 = vpop.f32.mrb[0].mxu0
        %v6778 = vadd.f32 0.0, %v6777
        %v6779 = vpop.f32.mrb[0].mxu0
        %v6780 = vpop.f32.mrb[0].mxu0
        %v6781 = vadd.f32 0.0, %v6780
        %v6782 = vpop.f32.mrb[0].mxu0
        %6783 = vmatprep.mubr.bf16.mxu0 %v1297
        %6784 = vmatmul.mubr.bf16.gmra.mrb[0].mxu0 %v1289
        %v6785 = vpop.f32.mrb[0].mxu0
        %v6786 = vadd.f32 0.0, %v6785
        %v6787 = vpop.f32.mrb[0].mxu0
        %v6788 = vpop.f32.mrb[0].mxu0
        %v6789 = vadd.f32 0.0, %v6788
        %v6790 = vpop.f32.mrb[0].mxu0
        %6791 = vmatprep.mubr.bf16.mxu0 %v1313
        %6792 = vmatmul.mubr.bf16.gmra.mrb[0].mxu0 %v1305
        %v6793 = vpop.f32.mrb[0].mxu0
        %v6794 = vadd.f32 0.0, %v6793
        %v6795 = vpop.f32.mrb[0].mxu0
        %v6796 = vpop.f32.mrb[0].mxu0
        %v6797 = vadd.f32 0.0, %v6796
        %v6798 = vpop.f32.mrb[0].mxu0
        %6799 = vmatprep.mubr.bf16.mxu0 %v1329
        %6800 = vmatmul.mubr.bf16.gmra.mrb[0].mxu0 %v1321
        %v6801 = vpop.f32.mrb[0].mxu0
        %v6802 = vadd.f32 0.0, %v6801
        %v6803 = vpop.f32.mrb[0].mxu0
        %v6804 = vpop.f32.mrb[0].mxu0
        %v6805 = vadd.f32 0.0, %v6804
        %v6806 = vpop.f32.mrb[0].mxu0
        %6807 = vmatprep.mubr.bf16.mxu0 %v1345
        %6808 = vmatmul.mubr.bf16.gmra.mrb[0].mxu0 %v1337
        %v6809 = vpop.f32.mrb[0].mxu0
        %v6810 = vadd.f32 0.0, %v6809
        %v6811 = vpop.f32.mrb[0].mxu0
        %v6812 = vpop.f32.mrb[0].mxu0
        %v6813 = vadd.f32 0.0, %v6812
        %v6814 = vpop.f32.mrb[0].mxu0
        %6815 = vmatprep.mubr.bf16.mxu0 %v1361
        %6816 = vmatmul.mubr.bf16.gmra.mrb[0].mxu0 %v1353
        %v6817 = vpop.f32.mrb[0].mxu0
        %v6818 = vadd.f32 0.0, %v6817
        %v6819 = vpop.f32.mrb[0].mxu0
        %v6820 = vpop.f32.mrb[0].mxu0
        %v6821 = vadd.f32 0.0, %v6820
        %v6822 = vpop.f32.mrb[0].mxu0
        %6823 = vmatprep.mubr.bf16.mxu0 %v1377
        %6824 = vmatmul.mubr.bf16.gmra.mrb[0].mxu0 %v1369
        %v6825 = vpop.f32.mrb[0].mxu0
        %v6826 = vadd.f32 0.0, %v6825
        %v6827 = vpop.f32.mrb[0].mxu0
        %v6828 = vpop.f32.mrb[0].mxu0
        %v6829 = vadd.f32 0.0, %v6828
        %v6830 = vpop.f32.mrb[0].mxu0
        %6831 = vmatprep.mubr.bf16.mxu0 %v1393
        %6832 = vmatmul.mubr.bf16.gmra.mrb[0].mxu0 %v1385
        %v6833 = vpop.f32.mrb[0].mxu0
        %v6834 = vadd.f32 0.0, %v6833
        %v6835 = vpop.f32.mrb[0].mxu0
        %v6836 = vpop.f32.mrb[0].mxu0
        %v6837 = vadd.f32 0.0, %v6836
        %v6838 = vpop.f32.mrb[0].mxu0
        %6839 = vmatprep.mubr.bf16.mxu0 %v1409
        %6840 = vmatmul.mubr.bf16.gmra.mrb[0].mxu0 %v1401
        %v6841 = vpop.f32.mrb[0].mxu0
        %v6842 = vadd.f32 0.0, %v6841
        %v6843 = vpop.f32.mrb[0].mxu0
        %v6844 = vpop.f32.mrb[0].mxu0
        %v6845 = vadd.f32 0.0, %v6844
        %v6846 = vpop.f32.mrb[0].mxu0
        %6847 = vmatprep.mubr.bf16.mxu0 %v1425
        %6848 = vmatmul.mubr.bf16.gmra.mrb[0].mxu0 %v1417
        %v6849 = vpop.f32.mrb[0].mxu0
        %v6850 = vadd.f32 0.0, %v6849
        %v6851 = vpop.f32.mrb[0].mxu0
        %v6852 = vpop.f32.mrb[0].mxu0
        %v6853 = vadd.f32 0.0, %v6852
        %v6854 = vpop.f32.mrb[0].mxu0
        %6855 = vmatprep.mubr.bf16.mxu0 %v1441
        %6856 = vmatmul.mubr.bf16.gmra.mrb[0].mxu0 %v1433
        %v6857 = vpop.f32.mrb[0].mxu0
        %v6858 = vadd.f32 0.0, %v6857
        %v6859 = vpop.f32.mrb[0].mxu0
        %v6860 = vpop.f32.mrb[0].mxu0
        %v6861 = vadd.f32 0.0, %v6860
        %v6862 = vpop.f32.mrb[0].mxu0
        %6863 = vmatprep.mubr.bf16.mxu0 %v1457
        %6864 = vmatmul.mubr.bf16.gmra.mrb[0].mxu0 %v1449
        %v6865 = vpop.f32.mrb[0].mxu0
        %v6866 = vadd.f32 0.0, %v6865
        %v6867 = vpop.f32.mrb[0].mxu0
        %v6868 = vpop.f32.mrb[0].mxu0
        %v6869 = vadd.f32 0.0, %v6868
        %v6870 = vpop.f32.mrb[0].mxu0
        %6871 = vdwg.mxu0
        %v6872 = vadd.f32 %v6551, %v6746
        %v6873 = vadd.f32 %v6552, %v6749
        %v6874 = vadd.f32 %v6553, %v6754
        %v6875 = vadd.f32 %v6554, %v6757
        %v6876 = vadd.f32 %v6555, %v6762
        %v6877 = vadd.f32 %v6556, %v6765
        %v6878 = vadd.f32 %v6557, %v6770
        %v6879 = vadd.f32 %v6558, %v6773
        %v6880 = vadd.f32 %v6559, %v6778
        %v6881 = vadd.f32 %v6560, %v6781
        %v6882 = vadd.f32 %v6561, %v6786
        %v6883 = vadd.f32 %v6562, %v6789
        %v6884 = vadd.f32 %v6563, %v6794
        %v6885 = vadd.f32 %v6564, %v6797
        %v6886 = vadd.f32 %v6565, %v6802
        %v6887 = vadd.f32 %v6566, %v6805
        %v6888 = vadd.f32 %v6567, %v6810
        %v6889 = vadd.f32 %v6568, %v6813
        %v6890 = vadd.f32 %v6569, %v6818
        %v6891 = vadd.f32 %v6570, %v6821
        %v6892 = vadd.f32 %v6571, %v6826
        %v6893 = vadd.f32 %v6572, %v6829
        %v6894 = vadd.f32 %v6573, %v6834
        %v6895 = vadd.f32 %v6574, %v6837
        %v6896 = vadd.f32 %v6575, %v6842
        %v6897 = vadd.f32 %v6576, %v6845
        %v6898 = vadd.f32 %v6577, %v6850
        %v6899 = vadd.f32 %v6578, %v6853
        %v6900 = vadd.f32 %v6579, %v6858
        %v6901 = vadd.f32 %v6580, %v6861
        %v6902 = vadd.f32 %v6581, %v6866
        %v6903 = vadd.f32 %v6582, %v6869
        %v6904 = vld [vmem:[%s3890 + $0x4] sm:$0xf]
        %v6905 = vld [vmem:[%s3890 + $0xc] sm:$0xf]
        %v6906 = vld [vmem:[%s3890 + $0x14] sm:$0xf]
        %v6907 = vld [vmem:[%s3890 + $0x1c] sm:$0xf]
        %v6908 = vld [vmem:[%s3890 + $0x24] sm:$0xf]
        %v6909 = vld [vmem:[%s3890 + $0x2c] sm:$0xf]
        %v6910 = vld [vmem:[%s3890 + $0x34] sm:$0xf]
        %v6911 = vld [vmem:[%s3890 + $0x3c] sm:$0xf]
        %v6912 = vld [vmem:[%s3890 + $0x44] sm:$0xf]
        %v6913 = vld [vmem:[%s3890 + $0x4c] sm:$0xf]
        %v6914 = vld [vmem:[%s3890 + $0x54] sm:$0xf]
        %v6915 = vld [vmem:[%s3890 + $0x5c] sm:$0xf]
        %v6916 = vld [vmem:[%s3890 + $0x64] sm:$0xf]
        %v6917 = vld [vmem:[%s3890 + $0x6c] sm:$0xf]
        %v6918 = vld [vmem:[%s3890 + $0x74] sm:$0xf]
        %v6919 = vld [vmem:[%s3890 + $0x7c] sm:$0xf]
        %v6920 = vld [vmem:[%s3890 + $0x84] sm:$0xf]
        %v6921 = vld [vmem:[%s3890 + $0x8c] sm:$0xf]
        %v6922 = vld [vmem:[%s3890 + $0x94] sm:$0xf]
        %v6923 = vld [vmem:[%s3890 + $0x9c] sm:$0xf]
        %v6924 = vld [vmem:[%s3890 + $0xa4] sm:$0xf]
        %v6925 = vld [vmem:[%s3890 + $0xac] sm:$0xf]
        %v6926 = vld [vmem:[%s3890 + $0xb4] sm:$0xf]
        %v6927 = vld [vmem:[%s3890 + $0xbc] sm:$0xf]
        %v6928 = vld [vmem:[%s3890 + $0xc4] sm:$0xf]
        %v6929 = vld [vmem:[%s3890 + $0xcc] sm:$0xf]
        %v6930 = vld [vmem:[%s3890 + $0xd4] sm:$0xf]
        %v6931 = vld [vmem:[%s3890 + $0xdc] sm:$0xf]
        %v6932 = vld [vmem:[%s3890 + $0xe4] sm:$0xf]
        %v6933 = vld [vmem:[%s3890 + $0xec] sm:$0xf]
        %v6934 = vld [vmem:[%s3890 + $0xf4] sm:$0xf]
        %v6935 = vld [vmem:[%s3890 + $0xfc] sm:$0xf]
        %v6968 = vunpack.c.l.b16 %v6904
        %v6969 = vunpack.c.l.b16 %v6905
        %v6970 = vunpack.c.l.b16 %v6906
        %v6971 = vunpack.c.l.b16 %v6907
        %v6972 = vunpack.c.l.b16 %v6908
        %v6973 = vunpack.c.l.b16 %v6909
        %v6974 = vunpack.c.l.b16 %v6910
        %v6975 = vunpack.c.l.b16 %v6911
        %v6976 = vunpack.c.l.b16 %v6912
        %v6977 = vunpack.c.l.b16 %v6913
        %v6978 = vunpack.c.l.b16 %v6914
        %v6979 = vunpack.c.l.b16 %v6915
        %v6980 = vunpack.c.l.b16 %v6916
        %v6981 = vunpack.c.l.b16 %v6917
        %v6982 = vunpack.c.l.b16 %v6918
        %v6983 = vunpack.c.l.b16 %v6919
        %v6984 = vunpack.c.l.b16 %v6920
        %v6985 = vunpack.c.l.b16 %v6921
        %v6986 = vunpack.c.l.b16 %v6922
        %v6987 = vunpack.c.l.b16 %v6923
        %v6988 = vunpack.c.l.b16 %v6924
        %v6989 = vunpack.c.l.b16 %v6925
        %v6990 = vunpack.c.l.b16 %v6926
        %v6991 = vunpack.c.l.b16 %v6927
        %v6992 = vunpack.c.l.b16 %v6928
        %v6993 = vunpack.c.l.b16 %v6929
        %v6994 = vunpack.c.l.b16 %v6930
        %v6995 = vunpack.c.l.b16 %v6931
        %v6996 = vunpack.c.l.b16 %v6932
        %v6997 = vunpack.c.l.b16 %v6933
        %v6998 = vunpack.c.l.b16 %v6934
        %v6999 = vunpack.c.l.b16 %v6935
        %v7000 = vpack.c.b16 %v6969, %v6968
        %v7001 = vpack.c.b16 %v6971, %v6970
        %v7002 = vpack.c.b16 %v6973, %v6972
        %v7003 = vpack.c.b16 %v6975, %v6974
        %v7004 = vpack.c.b16 %v6977, %v6976
        %v7005 = vpack.c.b16 %v6979, %v6978
        %v7006 = vpack.c.b16 %v6981, %v6980
        %v7007 = vpack.c.b16 %v6983, %v6982
        %v7008 = vpack.c.b16 %v6985, %v6984
        %v7009 = vpack.c.b16 %v6987, %v6986
        %v7010 = vpack.c.b16 %v6989, %v6988
        %v7011 = vpack.c.b16 %v6991, %v6990
        %v7012 = vpack.c.b16 %v6993, %v6992
        %v7013 = vpack.c.b16 %v6995, %v6994
        %v7014 = vpack.c.b16 %v6997, %v6996
        %v7015 = vpack.c.b16 %v6999, %v6998
        %7032 = vmatprep.subr.bf16.mxu0 0
        %7033 = vmatpush1.bf16.msra.mxu0 %v7000
        %7034 = vmatprep.subr.bf16.mxu0 0
        %7035 = vmatpush1.bf16.msra.mxu0 %v7001
        %7036 = vmatprep.subr.bf16.mxu0 0
        %7037 = vmatpush1.bf16.msra.mxu0 %v7002
        %7038 = vmatprep.subr.bf16.mxu0 0
        %7039 = vmatpush1.bf16.msra.mxu0 %v7003
        %7040 = vmatprep.subr.bf16.mxu0 0
        %7041 = vmatpush1.bf16.msra.mxu0 %v7004
        %7042 = vmatprep.subr.bf16.mxu0 0
        %7043 = vmatpush1.bf16.msra.mxu0 %v7005
        %7044 = vmatprep.subr.bf16.mxu0 0
        %7045 = vmatpush1.bf16.msra.mxu0 %v7006
        %7046 = vmatprep.subr.bf16.mxu0 0
        %7047 = vmatpush1.bf16.msra.mxu0 %v7007
        %7048 = vmatprep.subr.bf16.mxu0 0
        %7049 = vmatpush1.bf16.msra.mxu0 %v7008
        %7050 = vmatprep.subr.bf16.mxu0 0
        %7051 = vmatpush1.bf16.msra.mxu0 %v7009
        %7052 = vmatprep.subr.bf16.mxu0 0
        %7053 = vmatpush1.bf16.msra.mxu0 %v7010
        %7054 = vmatprep.subr.bf16.mxu0 0
        %7055 = vmatpush1.bf16.msra.mxu0 %v7011
        %7056 = vmatprep.subr.bf16.mxu0 0
        %7057 = vmatpush1.bf16.msra.mxu0 %v7012
        %7058 = vmatprep.subr.bf16.mxu0 0
        %7059 = vmatpush1.bf16.msra.mxu0 %v7013
        %7060 = vmatprep.subr.bf16.mxu0 0
        %7061 = vmatpush1.bf16.msra.mxu0 %v7014
        %7062 = vmatprep.subr.bf16.mxu0 0
        %7063 = vmatpush1.bf16.msra.mxu0 %v7015
        %7064 = vmatprep.mubr.bf16.mxu0 %v1108
        %7065 = vmatmul.mubr.bf16.gmra.mrb[0].mxu0 %v1107
        %v7066 = vpop.f32.mrb[0].mxu0
        %v7067 = vadd.f32 0.0, %v7066
        %v7068 = vpop.f32.mrb[0].mxu0
        %v7069 = vpop.f32.mrb[0].mxu0
        %v7070 = vadd.f32 0.0, %v7069
        %v7071 = vpop.f32.mrb[0].mxu0
        %7072 = vmatprep.mubr.bf16.mxu0 %v1110
        %7073 = vmatmul.mubr.bf16.gmra.mrb[0].mxu0 %v1109
        %v7074 = vpop.f32.mrb[0].mxu0
        %v7075 = vadd.f32 0.0, %v7074
        %v7076 = vpop.f32.mrb[0].mxu0
        %v7077 = vpop.f32.mrb[0].mxu0
        %v7078 = vadd.f32 0.0, %v7077
        %v7079 = vpop.f32.mrb[0].mxu0
        %7080 = vmatprep.mubr.bf16.mxu0 %v1112
        %7081 = vmatmul.mubr.bf16.gmra.mrb[0].mxu0 %v1111
        %v7082 = vpop.f32.mrb[0].mxu0
        %v7083 = vadd.f32 0.0, %v7082
        %v7084 = vpop.f32.mrb[0].mxu0
        %v7085 = vpop.f32.mrb[0].mxu0
        %v7086 = vadd.f32 0.0, %v7085
        %v7087 = vpop.f32.mrb[0].mxu0
        %7088 = vmatprep.mubr.bf16.mxu0 %v1114
        %7089 = vmatmul.mubr.bf16.gmra.mrb[0].mxu0 %v1113
        %v7090 = vpop.f32.mrb[0].mxu0
        %v7091 = vadd.f32 0.0, %v7090
        %v7092 = vpop.f32.mrb[0].mxu0
        %v7093 = vpop.f32.mrb[0].mxu0
        %v7094 = vadd.f32 0.0, %v7093
        %v7095 = vpop.f32.mrb[0].mxu0
        %7096 = vmatprep.mubr.bf16.mxu0 %v1116
        %7097 = vmatmul.mubr.bf16.gmra.mrb[0].mxu0 %v1115
        %v7098 = vpop.f32.mrb[0].mxu0
        %v7099 = vadd.f32 0.0, %v7098
        %v7100 = vpop.f32.mrb[0].mxu0
        %v7101 = vpop.f32.mrb[0].mxu0
        %v7102 = vadd.f32 0.0, %v7101
        %v7103 = vpop.f32.mrb[0].mxu0
        %7104 = vmatprep.mubr.bf16.mxu0 %v1118
        %7105 = vmatmul.mubr.bf16.gmra.mrb[0].mxu0 %v1117
        %v7106 = vpop.f32.mrb[0].mxu0
        %v7107 = vadd.f32 0.0, %v7106
        %v7108 = vpop.f32.mrb[0].mxu0
        %v7109 = vpop.f32.mrb[0].mxu0
        %v7110 = vadd.f32 0.0, %v7109
        %v7111 = vpop.f32.mrb[0].mxu0
        %7112 = vmatprep.mubr.bf16.mxu0 %v1120
        %7113 = vmatmul.mubr.bf16.gmra.mrb[0].mxu0 %v1119
        %v7114 = vpop.f32.mrb[0].mxu0
        %v7115 = vadd.f32 0.0, %v7114
        %v7116 = vpop.f32.mrb[0].mxu0
        %v7117 = vpop.f32.mrb[0].mxu0
        %v7118 = vadd.f32 0.0, %v7117
        %v7119 = vpop.f32.mrb[0].mxu0
        %7120 = vmatprep.mubr.bf16.mxu0 %v1122
        %7121 = vmatmul.mubr.bf16.gmra.mrb[0].mxu0 %v1121
        %v7122 = vpop.f32.mrb[0].mxu0
        %v7123 = vadd.f32 0.0, %v7122
        %v7124 = vpop.f32.mrb[0].mxu0
        %v7125 = vpop.f32.mrb[0].mxu0
        %v7126 = vadd.f32 0.0, %v7125
        %v7127 = vpop.f32.mrb[0].mxu0
        %7128 = vmatprep.mubr.bf16.mxu0 %v1124
        %7129 = vmatmul.mubr.bf16.gmra.mrb[0].mxu0 %v1123
        %v7130 = vpop.f32.mrb[0].mxu0
        %v7131 = vadd.f32 0.0, %v7130
        %v7132 = vpop.f32.mrb[0].mxu0
        %v7133 = vpop.f32.mrb[0].mxu0
        %v7134 = vadd.f32 0.0, %v7133
        %v7135 = vpop.f32.mrb[0].mxu0
        %7136 = vmatprep.mubr.bf16.mxu0 %v1126
        %7137 = vmatmul.mubr.bf16.gmra.mrb[0].mxu0 %v1125
        %v7138 = vpop.f32.mrb[0].mxu0
        %v7139 = vadd.f32 0.0, %v7138
        %v7140 = vpop.f32.mrb[0].mxu0
        %v7141 = vpop.f32.mrb[0].mxu0
        %v7142 = vadd.f32 0.0, %v7141
        %v7143 = vpop.f32.mrb[0].mxu0
        %7144 = vmatprep.mubr.bf16.mxu0 %v1128
        %7145 = vmatmul.mubr.bf16.gmra.mrb[0].mxu0 %v1127
        %v7146 = vpop.f32.mrb[0].mxu0
        %v7147 = vadd.f32 0.0, %v7146
        %v7148 = vpop.f32.mrb[0].mxu0
        %v7149 = vpop.f32.mrb[0].mxu0
        %v7150 = vadd.f32 0.0, %v7149
        %v7151 = vpop.f32.mrb[0].mxu0
        %7152 = vmatprep.mubr.bf16.mxu0 %v1130
        %7153 = vmatmul.mubr.bf16.gmra.mrb[0].mxu0 %v1129
        %v7154 = vpop.f32.mrb[0].mxu0
        %v7155 = vadd.f32 0.0, %v7154
        %v7156 = vpop.f32.mrb[0].mxu0
        %v7157 = vpop.f32.mrb[0].mxu0
        %v7158 = vadd.f32 0.0, %v7157
        %v7159 = vpop.f32.mrb[0].mxu0
        %7160 = vmatprep.mubr.bf16.mxu0 %v1132
        %7161 = vmatmul.mubr.bf16.gmra.mrb[0].mxu0 %v1131
        %v7162 = vpop.f32.mrb[0].mxu0
        %v7163 = vadd.f32 0.0, %v7162
        %v7164 = vpop.f32.mrb[0].mxu0
        %v7165 = vpop.f32.mrb[0].mxu0
        %v7166 = vadd.f32 0.0, %v7165
        %v7167 = vpop.f32.mrb[0].mxu0
        %7168 = vmatprep.mubr.bf16.mxu0 %v1134
        %7169 = vmatmul.mubr.bf16.gmra.mrb[0].mxu0 %v1133
        %v7170 = vpop.f32.mrb[0].mxu0
        %v7171 = vadd.f32 0.0, %v7170
        %v7172 = vpop.f32.mrb[0].mxu0
        %v7173 = vpop.f32.mrb[0].mxu0
        %v7174 = vadd.f32 0.0, %v7173
        %v7175 = vpop.f32.mrb[0].mxu0
        %7176 = vmatprep.mubr.bf16.mxu0 %v1136
        %7177 = vmatmul.mubr.bf16.gmra.mrb[0].mxu0 %v1135
        %v7178 = vpop.f32.mrb[0].mxu0
        %v7179 = vadd.f32 0.0, %v7178
        %v7180 = vpop.f32.mrb[0].mxu0
        %v7181 = vpop.f32.mrb[0].mxu0
        %v7182 = vadd.f32 0.0, %v7181
        %v7183 = vpop.f32.mrb[0].mxu0
        %7184 = vmatprep.mubr.bf16.mxu0 %v1138
        %7185 = vmatmul.mubr.bf16.gmra.mrb[0].mxu0 %v1137
        %v7186 = vpop.f32.mrb[0].mxu0
        %v7187 = vadd.f32 0.0, %v7186
        %v7188 = vpop.f32.mrb[0].mxu0
        %v7189 = vpop.f32.mrb[0].mxu0
        %v7190 = vadd.f32 0.0, %v7189
        %v7191 = vpop.f32.mrb[0].mxu0
        %7192 = vdwg.mxu0
        %v7193 = vadd.f32 %v6872, %v7067
        %v7194 = vadd.f32 %v6873, %v7070
        %v7195 = vadd.f32 %v6874, %v7075
        %v7196 = vadd.f32 %v6875, %v7078
        %v7197 = vadd.f32 %v6876, %v7083
        %v7198 = vadd.f32 %v6877, %v7086
        %v7199 = vadd.f32 %v6878, %v7091
        %v7200 = vadd.f32 %v6879, %v7094
        %v7201 = vadd.f32 %v6880, %v7099
        %v7202 = vadd.f32 %v6881, %v7102
        %v7203 = vadd.f32 %v6882, %v7107
        %v7204 = vadd.f32 %v6883, %v7110
        %v7205 = vadd.f32 %v6884, %v7115
        %v7206 = vadd.f32 %v6885, %v7118
        %v7207 = vadd.f32 %v6886, %v7123
        %v7208 = vadd.f32 %v6887, %v7126
        %v7209 = vadd.f32 %v6888, %v7131
        %v7210 = vadd.f32 %v6889, %v7134
        %v7211 = vadd.f32 %v6890, %v7139
        %v7212 = vadd.f32 %v6891, %v7142
        %v7213 = vadd.f32 %v6892, %v7147
        %v7214 = vadd.f32 %v6893, %v7150
        %v7215 = vadd.f32 %v6894, %v7155
        %v7216 = vadd.f32 %v6895, %v7158
        %v7217 = vadd.f32 %v6896, %v7163
        %v7218 = vadd.f32 %v6897, %v7166
        %v7219 = vadd.f32 %v6898, %v7171
        %v7220 = vadd.f32 %v6899, %v7174
        %v7221 = vadd.f32 %v6900, %v7179
        %v7222 = vadd.f32 %v6901, %v7182
        %v7223 = vadd.f32 %v6902, %v7187
        %v7224 = vadd.f32 %v6903, %v7190
        %v7225 = vld [vmem:[%s4216 + $0x4] sm:$0xf]
        %v7226 = vld [vmem:[%s4216 + $0xc] sm:$0xf]
        %v7227 = vld [vmem:[%s4216 + $0x14] sm:$0xf]
        %v7228 = vld [vmem:[%s4216 + $0x1c] sm:$0xf]
        %v7229 = vld [vmem:[%s4216 + $0x24] sm:$0xf]
        %v7230 = vld [vmem:[%s4216 + $0x2c] sm:$0xf]
        %v7231 = vld [vmem:[%s4216 + $0x34] sm:$0xf]
        %v7232 = vld [vmem:[%s4216 + $0x3c] sm:$0xf]
        %v7233 = vld [vmem:[%s4216 + $0x44] sm:$0xf]
        %v7234 = vld [vmem:[%s4216 + $0x4c] sm:$0xf]
        %v7235 = vld [vmem:[%s4216 + $0x54] sm:$0xf]
        %v7236 = vld [vmem:[%s4216 + $0x5c] sm:$0xf]
        %v7237 = vld [vmem:[%s4216 + $0x64] sm:$0xf]
        %v7238 = vld [vmem:[%s4216 + $0x6c] sm:$0xf]
        %v7239 = vld [vmem:[%s4216 + $0x74] sm:$0xf]
        %v7240 = vld [vmem:[%s4216 + $0x7c] sm:$0xf]
        %v7241 = vld [vmem:[%s4216 + $0x84] sm:$0xf]
        %v7242 = vld [vmem:[%s4216 + $0x8c] sm:$0xf]
        %v7243 = vld [vmem:[%s4216 + $0x94] sm:$0xf]
        %v7244 = vld [vmem:[%s4216 + $0x9c] sm:$0xf]
        %v7245 = vld [vmem:[%s4216 + $0xa4] sm:$0xf]
        %v7246 = vld [vmem:[%s4216 + $0xac] sm:$0xf]
        %v7247 = vld [vmem:[%s4216 + $0xb4] sm:$0xf]
        %v7248 = vld [vmem:[%s4216 + $0xbc] sm:$0xf]
        %v7249 = vld [vmem:[%s4216 + $0xc4] sm:$0xf]
        %v7250 = vld [vmem:[%s4216 + $0xcc] sm:$0xf]
        %v7251 = vld [vmem:[%s4216 + $0xd4] sm:$0xf]
        %v7252 = vld [vmem:[%s4216 + $0xdc] sm:$0xf]
        %v7253 = vld [vmem:[%s4216 + $0xe4] sm:$0xf]
        %v7254 = vld [vmem:[%s4216 + $0xec] sm:$0xf]
        %v7255 = vld [vmem:[%s4216 + $0xf4] sm:$0xf]
        %v7256 = vld [vmem:[%s4216 + $0xfc] sm:$0xf]
        %v7289 = vunpack.c.l.b16 %v7225
        %v7290 = vunpack.c.l.b16 %v7226
        %v7291 = vunpack.c.l.b16 %v7227
        %v7292 = vunpack.c.l.b16 %v7228
        %v7293 = vunpack.c.l.b16 %v7229
        %v7294 = vunpack.c.l.b16 %v7230
        %v7295 = vunpack.c.l.b16 %v7231
        %v7296 = vunpack.c.l.b16 %v7232
        %v7297 = vunpack.c.l.b16 %v7233
        %v7298 = vunpack.c.l.b16 %v7234
        %v7299 = vunpack.c.l.b16 %v7235
        %v7300 = vunpack.c.l.b16 %v7236
        %v7301 = vunpack.c.l.b16 %v7237
        %v7302 = vunpack.c.l.b16 %v7238
        %v7303 = vunpack.c.l.b16 %v7239
        %v7304 = vunpack.c.l.b16 %v7240
        %v7305 = vunpack.c.l.b16 %v7241
        %v7306 = vunpack.c.l.b16 %v7242
        %v7307 = vunpack.c.l.b16 %v7243
        %v7308 = vunpack.c.l.b16 %v7244
        %v7309 = vunpack.c.l.b16 %v7245
        %v7310 = vunpack.c.l.b16 %v7246
        %v7311 = vunpack.c.l.b16 %v7247
        %v7312 = vunpack.c.l.b16 %v7248
        %v7313 = vunpack.c.l.b16 %v7249
        %v7314 = vunpack.c.l.b16 %v7250
        %v7315 = vunpack.c.l.b16 %v7251
        %v7316 = vunpack.c.l.b16 %v7252
        %v7317 = vunpack.c.l.b16 %v7253
        %v7318 = vunpack.c.l.b16 %v7254
        %v7319 = vunpack.c.l.b16 %v7255
        %v7320 = vunpack.c.l.b16 %v7256
        %v7321 = vpack.c.b16 %v7290, %v7289
        %v7322 = vpack.c.b16 %v7292, %v7291
        %v7323 = vpack.c.b16 %v7294, %v7293
        %v7324 = vpack.c.b16 %v7296, %v7295
        %v7325 = vpack.c.b16 %v7298, %v7297
        %v7326 = vpack.c.b16 %v7300, %v7299
        %v7327 = vpack.c.b16 %v7302, %v7301
        %v7328 = vpack.c.b16 %v7304, %v7303
        %v7329 = vpack.c.b16 %v7306, %v7305
        %v7330 = vpack.c.b16 %v7308, %v7307
        %v7331 = vpack.c.b16 %v7310, %v7309
        %v7332 = vpack.c.b16 %v7312, %v7311
        %v7333 = vpack.c.b16 %v7314, %v7313
        %v7334 = vpack.c.b16 %v7316, %v7315
        %v7335 = vpack.c.b16 %v7318, %v7317
        %v7336 = vpack.c.b16 %v7320, %v7319
        %7353 = vmatprep.subr.bf16.mxu0 0
        %7354 = vmatpush1.bf16.msra.mxu0 %v7321
        %7355 = vmatprep.subr.bf16.mxu0 0
        %7356 = vmatpush1.bf16.msra.mxu0 %v7322
        %7357 = vmatprep.subr.bf16.mxu0 0
        %7358 = vmatpush1.bf16.msra.mxu0 %v7323
        %7359 = vmatprep.subr.bf16.mxu0 0
        %7360 = vmatpush1.bf16.msra.mxu0 %v7324
        %7361 = vmatprep.subr.bf16.mxu0 0
        %7362 = vmatpush1.bf16.msra.mxu0 %v7325
        %7363 = vmatprep.subr.bf16.mxu0 0
        %7364 = vmatpush1.bf16.msra.mxu0 %v7326
        %7365 = vmatprep.subr.bf16.mxu0 0
        %7366 = vmatpush1.bf16.msra.mxu0 %v7327
        %7367 = vmatprep.subr.bf16.mxu0 0
        %7368 = vmatpush1.bf16.msra.mxu0 %v7328
        %7369 = vmatprep.subr.bf16.mxu0 0
        %7370 = vmatpush1.bf16.msra.mxu0 %v7329
        %7371 = vmatprep.subr.bf16.mxu0 0
        %7372 = vmatpush1.bf16.msra.mxu0 %v7330
        %7373 = vmatprep.subr.bf16.mxu0 0
        %7374 = vmatpush1.bf16.msra.mxu0 %v7331
        %7375 = vmatprep.subr.bf16.mxu0 0
        %7376 = vmatpush1.bf16.msra.mxu0 %v7332
        %7377 = vmatprep.subr.bf16.mxu0 0
        %7378 = vmatpush1.bf16.msra.mxu0 %v7333
        %7379 = vmatprep.subr.bf16.mxu0 0
        %7380 = vmatpush1.bf16.msra.mxu0 %v7334
        %7381 = vmatprep.subr.bf16.mxu0 0
        %7382 = vmatpush1.bf16.msra.mxu0 %v7335
        %7383 = vmatprep.subr.bf16.mxu0 0
        %7384 = vmatpush1.bf16.msra.mxu0 %v7336
        %7385 = vmatprep.mubr.bf16.mxu0 %v1534
        %7386 = vmatmul.mubr.bf16.gmra.mrb[0].mxu0 %v1531
        %v7387 = vpop.f32.mrb[0].mxu0
        %v7388 = vadd.f32 0.0, %v7387
        %v7389 = vpop.f32.mrb[0].mxu0
        %v7390 = vpop.f32.mrb[0].mxu0
        %v7391 = vadd.f32 0.0, %v7390
        %v7392 = vpop.f32.mrb[0].mxu0
        %7393 = vmatprep.mubr.bf16.mxu0 %v1540
        %7394 = vmatmul.mubr.bf16.gmra.mrb[0].mxu0 %v1537
        %v7395 = vpop.f32.mrb[0].mxu0
        %v7396 = vadd.f32 0.0, %v7395
        %v7397 = vpop.f32.mrb[0].mxu0
        %v7398 = vpop.f32.mrb[0].mxu0
        %v7399 = vadd.f32 0.0, %v7398
        %v7400 = vpop.f32.mrb[0].mxu0
        %7401 = vmatprep.mubr.bf16.mxu0 %v1546
        %7402 = vmatmul.mubr.bf16.gmra.mrb[0].mxu0 %v1543
        %v7403 = vpop.f32.mrb[0].mxu0
        %v7404 = vadd.f32 0.0, %v7403
        %v7405 = vpop.f32.mrb[0].mxu0
        %v7406 = vpop.f32.mrb[0].mxu0
        %v7407 = vadd.f32 0.0, %v7406
        %v7408 = vpop.f32.mrb[0].mxu0
        %7409 = vmatprep.mubr.bf16.mxu0 %v1552
        %7410 = vmatmul.mubr.bf16.gmra.mrb[0].mxu0 %v1549
        %v7411 = vpop.f32.mrb[0].mxu0
        %v7412 = vadd.f32 0.0, %v7411
        %v7413 = vpop.f32.mrb[0].mxu0
        %v7414 = vpop.f32.mrb[0].mxu0
        %v7415 = vadd.f32 0.0, %v7414
        %v7416 = vpop.f32.mrb[0].mxu0
        %7417 = vmatprep.mubr.bf16.mxu0 %v1558
        %7418 = vmatmul.mubr.bf16.gmra.mrb[0].mxu0 %v1555
        %v7419 = vpop.f32.mrb[0].mxu0
        %v7420 = vadd.f32 0.0, %v7419
        %v7421 = vpop.f32.mrb[0].mxu0
        %v7422 = vpop.f32.mrb[0].mxu0
        %v7423 = vadd.f32 0.0, %v7422
        %v7424 = vpop.f32.mrb[0].mxu0
        %7425 = vmatprep.mubr.bf16.mxu0 %v1564
        %7426 = vmatmul.mubr.bf16.gmra.mrb[0].mxu0 %v1561
        %v7427 = vpop.f32.mrb[0].mxu0
        %v7428 = vadd.f32 0.0, %v7427
        %v7429 = vpop.f32.mrb[0].mxu0
        %v7430 = vpop.f32.mrb[0].mxu0
        %v7431 = vadd.f32 0.0, %v7430
        %v7432 = vpop.f32.mrb[0].mxu0
        %7433 = vmatprep.mubr.bf16.mxu0 %v1570
        %7434 = vmatmul.mubr.bf16.gmra.mrb[0].mxu0 %v1567
        %v7435 = vpop.f32.mrb[0].mxu0
        %v7436 = vadd.f32 0.0, %v7435
        %v7437 = vpop.f32.mrb[0].mxu0
        %v7438 = vpop.f32.mrb[0].mxu0
        %v7439 = vadd.f32 0.0, %v7438
        %v7440 = vpop.f32.mrb[0].mxu0
        %7441 = vmatprep.mubr.bf16.mxu0 %v1576
        %7442 = vmatmul.mubr.bf16.gmra.mrb[0].mxu0 %v1573
        %v7443 = vpop.f32.mrb[0].mxu0
        %v7444 = vadd.f32 0.0, %v7443
        %v7445 = vpop.f32.mrb[0].mxu0
        %v7446 = vpop.f32.mrb[0].mxu0
        %v7447 = vadd.f32 0.0, %v7446
        %v7448 = vpop.f32.mrb[0].mxu0
        %7449 = vmatprep.mubr.bf16.mxu0 %v1582
        %7450 = vmatmul.mubr.bf16.gmra.mrb[0].mxu0 %v1579
        %v7451 = vpop.f32.mrb[0].mxu0
        %v7452 = vadd.f32 0.0, %v7451
        %v7453 = vpop.f32.mrb[0].mxu0
        %v7454 = vpop.f32.mrb[0].mxu0
        %v7455 = vadd.f32 0.0, %v7454
        %v7456 = vpop.f32.mrb[0].mxu0
        %7457 = vmatprep.mubr.bf16.mxu0 %v1588
        %7458 = vmatmul.mubr.bf16.gmra.mrb[0].mxu0 %v1585
        %v7459 = vpop.f32.mrb[0].mxu0
        %v7460 = vadd.f32 0.0, %v7459
        %v7461 = vpop.f32.mrb[0].mxu0
        %v7462 = vpop.f32.mrb[0].mxu0
        %v7463 = vadd.f32 0.0, %v7462
        %v7464 = vpop.f32.mrb[0].mxu0
        %7465 = vmatprep.mubr.bf16.mxu0 %v1594
        %7466 = vmatmul.mubr.bf16.gmra.mrb[0].mxu0 %v1591
        %v7467 = vpop.f32.mrb[0].mxu0
        %v7468 = vadd.f32 0.0, %v7467
        %v7469 = vpop.f32.mrb[0].mxu0
        %v7470 = vpop.f32.mrb[0].mxu0
        %v7471 = vadd.f32 0.0, %v7470
        %v7472 = vpop.f32.mrb[0].mxu0
        %7473 = vmatprep.mubr.bf16.mxu0 %v1600
        %7474 = vmatmul.mubr.bf16.gmra.mrb[0].mxu0 %v1597
        %v7475 = vpop.f32.mrb[0].mxu0
        %v7476 = vadd.f32 0.0, %v7475
        %v7477 = vpop.f32.mrb[0].mxu0
        %v7478 = vpop.f32.mrb[0].mxu0
        %v7479 = vadd.f32 0.0, %v7478
        %v7480 = vpop.f32.mrb[0].mxu0
        %7481 = vmatprep.mubr.bf16.mxu0 %v1606
        %7482 = vmatmul.mubr.bf16.gmra.mrb[0].mxu0 %v1603
        %v7483 = vpop.f32.mrb[0].mxu0
        %v7484 = vadd.f32 0.0, %v7483
        %v7485 = vpop.f32.mrb[0].mxu0
        %v7486 = vpop.f32.mrb[0].mxu0
        %v7487 = vadd.f32 0.0, %v7486
        %v7488 = vpop.f32.mrb[0].mxu0
        %7489 = vmatprep.mubr.bf16.mxu0 %v1612
        %7490 = vmatmul.mubr.bf16.gmra.mrb[0].mxu0 %v1609
        %v7491 = vpop.f32.mrb[0].mxu0
        %v7492 = vadd.f32 0.0, %v7491
        %v7493 = vpop.f32.mrb[0].mxu0
        %v7494 = vpop.f32.mrb[0].mxu0
        %v7495 = vadd.f32 0.0, %v7494
        %v7496 = vpop.f32.mrb[0].mxu0
        %7497 = vmatprep.mubr.bf16.mxu0 %v1618
        %7498 = vmatmul.mubr.bf16.gmra.mrb[0].mxu0 %v1615
        %v7499 = vpop.f32.mrb[0].mxu0
        %v7500 = vadd.f32 0.0, %v7499
        %v7501 = vpop.f32.mrb[0].mxu0
        %v7502 = vpop.f32.mrb[0].mxu0
        %v7503 = vadd.f32 0.0, %v7502
        %v7504 = vpop.f32.mrb[0].mxu0
        %7505 = vmatprep.mubr.bf16.mxu0 %v1664
        %7506 = vmatmul.mubr.bf16.gmra.mrb[0].mxu0 %v1663
        %v7507 = vpop.f32.mrb[0].mxu0
        %v7508 = vadd.f32 0.0, %v7507
        %v7509 = vpop.f32.mrb[0].mxu0
        %v7510 = vpop.f32.mrb[0].mxu0
        %v7511 = vadd.f32 0.0, %v7510
        %v7512 = vpop.f32.mrb[0].mxu0
        %7513 = vdwg.mxu0
        %v7514 = vadd.f32 %v7193, %v7388
        %v7515 = vadd.f32 %v7194, %v7391
        %v7516 = vadd.f32 %v7195, %v7396
        %v7517 = vadd.f32 %v7196, %v7399
        %v7518 = vadd.f32 %v7197, %v7404
        %v7519 = vadd.f32 %v7198, %v7407
        %v7520 = vadd.f32 %v7199, %v7412
        %v7521 = vadd.f32 %v7200, %v7415
        %v7522 = vadd.f32 %v7201, %v7420
        %v7523 = vadd.f32 %v7202, %v7423
        %v7524 = vadd.f32 %v7203, %v7428
        %v7525 = vadd.f32 %v7204, %v7431
        %v7526 = vadd.f32 %v7205, %v7436
        %v7527 = vadd.f32 %v7206, %v7439
        %v7528 = vadd.f32 %v7207, %v7444
        %v7529 = vadd.f32 %v7208, %v7447
        %v7530 = vadd.f32 %v7209, %v7452
        %v7531 = vadd.f32 %v7210, %v7455
        %v7532 = vadd.f32 %v7211, %v7460
        %v7533 = vadd.f32 %v7212, %v7463
        %v7534 = vadd.f32 %v7213, %v7468
        %v7535 = vadd.f32 %v7214, %v7471
        %v7536 = vadd.f32 %v7215, %v7476
        %v7537 = vadd.f32 %v7216, %v7479
        %v7538 = vadd.f32 %v7217, %v7484
        %v7539 = vadd.f32 %v7218, %v7487
        %v7540 = vadd.f32 %v7219, %v7492
        %v7541 = vadd.f32 %v7220, %v7495
        %v7542 = vadd.f32 %v7221, %v7500
        %v7543 = vadd.f32 %v7222, %v7503
        %v7544 = vadd.f32 %v7223, %v7508
        %v7545 = vadd.f32 %v7224, %v7511
        %v7546 = vld [vmem:[#allocation7 + $0x1] sm:$0x1]
        %v7548 = vlaneseq
        %v7549 = vshrl.u32 %v7548, 7
        %v7550 = vsub.s32 0, %v7549
        %v7551 = vrot.slane %v7546, %v7550
        %v7553 = vadd.f32 %v7514, %v7551
        %v7554 = vadd.f32 %v7515, %v7551
        %v7555 = vadd.f32 %v7516, %v7551
        %v7556 = vadd.f32 %v7517, %v7551
        %v7557 = vadd.f32 %v7518, %v7551
        %v7558 = vadd.f32 %v7519, %v7551
        %v7559 = vadd.f32 %v7520, %v7551
        %v7560 = vadd.f32 %v7521, %v7551
        %v7561 = vadd.f32 %v7522, %v7551
        %v7562 = vadd.f32 %v7523, %v7551
        %v7563 = vadd.f32 %v7524, %v7551
        %v7564 = vadd.f32 %v7525, %v7551
        %v7565 = vadd.f32 %v7526, %v7551
        %v7566 = vadd.f32 %v7527, %v7551
        %v7567 = vadd.f32 %v7528, %v7551
        %v7568 = vadd.f32 %v7529, %v7551
        %v7569 = vadd.f32 %v7530, %v7551
        %v7570 = vadd.f32 %v7531, %v7551
        %v7571 = vadd.f32 %v7532, %v7551
        %v7572 = vadd.f32 %v7533, %v7551
        %v7573 = vadd.f32 %v7534, %v7551
        %v7574 = vadd.f32 %v7535, %v7551
        %v7575 = vadd.f32 %v7536, %v7551
        %v7576 = vadd.f32 %v7537, %v7551
        %v7577 = vadd.f32 %v7538, %v7551
        %v7578 = vadd.f32 %v7539, %v7551
        %v7579 = vadd.f32 %v7540, %v7551
        %v7580 = vadd.f32 %v7541, %v7551
        %v7581 = vadd.f32 %v7542, %v7551
        %v7582 = vadd.f32 %v7543, %v7551
        %v7583 = vadd.f32 %v7544, %v7551
        %v7584 = vadd.f32 %v7545, %v7551
        %v7585 = vmax.f32 %v7553, 0.0
        %v7586 = vmax.f32 %v7554, 0.0
        %v7587 = vmax.f32 %v7555, 0.0
        %v7588 = vmax.f32 %v7556, 0.0
        %v7589 = vmax.f32 %v7557, 0.0
        %v7590 = vmax.f32 %v7558, 0.0
        %v7591 = vmax.f32 %v7559, 0.0
        %v7592 = vmax.f32 %v7560, 0.0
        %v7593 = vmax.f32 %v7561, 0.0
        %v7594 = vmax.f32 %v7562, 0.0
        %v7595 = vmax.f32 %v7563, 0.0
        %v7596 = vmax.f32 %v7564, 0.0
        %v7597 = vmax.f32 %v7565, 0.0
        %v7598 = vmax.f32 %v7566, 0.0
        %v7599 = vmax.f32 %v7567, 0.0
        %v7600 = vmax.f32 %v7568, 0.0
        %v7601 = vmax.f32 %v7569, 0.0
        %v7602 = vmax.f32 %v7570, 0.0
        %v7603 = vmax.f32 %v7571, 0.0
        %v7604 = vmax.f32 %v7572, 0.0
        %v7605 = vmax.f32 %v7573, 0.0
        %v7606 = vmax.f32 %v7574, 0.0
        %v7607 = vmax.f32 %v7575, 0.0
        %v7608 = vmax.f32 %v7576, 0.0
        %v7609 = vmax.f32 %v7577, 0.0
        %v7610 = vmax.f32 %v7578, 0.0
        %v7611 = vmax.f32 %v7579, 0.0
        %v7612 = vmax.f32 %v7580, 0.0
        %v7613 = vmax.f32 %v7581, 0.0
        %v7614 = vmax.f32 %v7582, 0.0
        %v7615 = vmax.f32 %v7583, 0.0
        %v7616 = vmax.f32 %v7584, 0.0
        %v7617 = vsel %vm4641, %v7585, 0.0
        %v7618 = vsel %vm4642, %v7586, 0.0
        %v7619 = vsel %vm4643, %v7587, 0.0
        %v7620 = vsel %vm4644, %v7588, 0.0
        %v7621 = vsel %vm4645, %v7589, 0.0
        %v7622 = vsel %vm4646, %v7590, 0.0
        %v7623 = vsel %vm4647, %v7591, 0.0
        %v7624 = vsel %vm4648, %v7592, 0.0
        %v7625 = vsel %vm4649, %v7593, 0.0
        %v7626 = vsel %vm4650, %v7594, 0.0
        %v7627 = vsel %vm4651, %v7595, 0.0
        %v7628 = vsel %vm4652, %v7596, 0.0
        %v7629 = vsel %vm4653, %v7597, 0.0
        %v7630 = vsel %vm4654, %v7598, 0.0
        %v7631 = vsel %vm4655, %v7599, 0.0
        %v7632 = vsel %vm4656, %v7600, 0.0
        %v7633 = vsel %vm4657, %v7601, 0.0
        %v7634 = vsel %vm4658, %v7602, 0.0
        %v7635 = vsel %vm4659, %v7603, 0.0
        %v7636 = vsel %vm4660, %v7604, 0.0
        %v7637 = vsel %vm4661, %v7605, 0.0
        %v7638 = vsel %vm4662, %v7606, 0.0
        %v7639 = vsel %vm4663, %v7607, 0.0
        %v7640 = vsel %vm4664, %v7608, 0.0
        %v7641 = vsel %vm4665, %v7609, 0.0
        %v7642 = vsel %vm4666, %v7610, 0.0
        %v7643 = vsel %vm4667, %v7611, 0.0
        %v7644 = vsel %vm4668, %v7612, 0.0
        %v7645 = vsel %vm4669, %v7613, 0.0
        %v7646 = vsel %vm4670, %v7614, 0.0
        %v7647 = vsel %vm4671, %v7615, 0.0
        %v7648 = vsel %vm4672, %v7616, 0.0
        %v7649 = vpack.c.bf16 %v7618, %v7617
        %v7650 = vpack.c.bf16 %v7620, %v7619
        %v7651 = vpack.c.bf16 %v7622, %v7621
        %v7652 = vpack.c.bf16 %v7624, %v7623
        %v7653 = vpack.c.bf16 %v7626, %v7625
        %v7654 = vpack.c.bf16 %v7628, %v7627
        %v7655 = vpack.c.bf16 %v7630, %v7629
        %v7656 = vpack.c.bf16 %v7632, %v7631
        %v7657 = vpack.c.bf16 %v7634, %v7633
        %v7658 = vpack.c.bf16 %v7636, %v7635
        %v7659 = vpack.c.bf16 %v7638, %v7637
        %v7660 = vpack.c.bf16 %v7640, %v7639
        %v7661 = vpack.c.bf16 %v7642, %v7641
        %v7662 = vpack.c.bf16 %v7644, %v7643
        %v7663 = vpack.c.bf16 %v7646, %v7645
        %v7664 = vpack.c.bf16 %v7648, %v7647
        %7665 = vst [vmem:[#allocation2 + $0x20] sm:$0xff] %v4705
        %7666 = vst [vmem:[#allocation2 + $0x30] sm:$0xff] %v4706
        %7667 = vst [vmem:[#allocation2 + $0x40] sm:$0xff] %v4707
        %7668 = vst [vmem:[#allocation2 + $0x50] sm:$0xff] %v4708
        %7669 = vst [vmem:[#allocation2 + $0x60] sm:$0xff] %v4709
        %7670 = vst [vmem:[#allocation2 + $0x70] sm:$0xff] %v4710
        %7671 = vst [vmem:[#allocation2 + $0x80] sm:$0xff] %v4711
        %7672 = vst [vmem:[#allocation2 + $0x90] sm:$0xff] %v4712
        %7673 = vst [vmem:[#allocation2 + $0xa0] sm:$0xff] %v4713
        %7674 = vst [vmem:[#allocation2 + $0xb0] sm:$0xff] %v4714
        %7675 = vst [vmem:[#allocation2 + $0xc0] sm:$0xff] %v4715
        %7676 = vst [vmem:[#allocation2 + $0xd0] sm:$0xff] %v4716
        %7677 = vst [vmem:[#allocation2 + $0xe0] sm:$0xff] %v4717
        %7678 = vst [vmem:[#allocation2 + $0xf0] sm:$0xff] %v4718
        %7679 = vst [vmem:[#allocation2 + $0x100] sm:$0xff] %v4719
        %7680 = vst [vmem:[#allocation2 + $0x110] sm:$0xff] %v4720
        %7681 = vst [vmem:[#allocation2 + $0x28] sm:$0xff] %v7649
        %7682 = vst [vmem:[#allocation2 + $0x38] sm:$0xff] %v7650
        %7683 = vst [vmem:[#allocation2 + $0x48] sm:$0xff] %v7651
        %7684 = vst [vmem:[#allocation2 + $0x58] sm:$0xff] %v7652
        %7685 = vst [vmem:[#allocation2 + $0x68] sm:$0xff] %v7653
        %7686 = vst [vmem:[#allocation2 + $0x78] sm:$0xff] %v7654
        %7687 = vst [vmem:[#allocation2 + $0x88] sm:$0xff] %v7655
        %7688 = vst [vmem:[#allocation2 + $0x98] sm:$0xff] %v7656
        %7689 = vst [vmem:[#allocation2 + $0xa8] sm:$0xff] %v7657
        %7690 = vst [vmem:[#allocation2 + $0xb8] sm:$0xff] %v7658
        %7691 = vst [vmem:[#allocation2 + $0xc8] sm:$0xff] %v7659
        %7692 = vst [vmem:[#allocation2 + $0xd8] sm:$0xff] %v7660
        %7693 = vst [vmem:[#allocation2 + $0xe8] sm:$0xff] %v7661
        %7694 = vst [vmem:[#allocation2 + $0xf8] sm:$0xff] %v7662
        %7695 = vst [vmem:[#allocation2 + $0x108] sm:$0xff] %v7663
        %7696 = vst [vmem:[#allocation2 + $0x118] sm:$0xff] %v7664
        %v7697 = vld [vmem:[#allocation2] sm:$0xff]
        %v7698 = vld [vmem:[#allocation2 + $0x8] sm:$0xff]
        %v7699 = vld [vmem:[#allocation2 + $0x10] sm:$0xff]
        %v7700 = vld [vmem:[#allocation2 + $0x18] sm:$0xff]
        %v7701 = vld [vmem:[#allocation2 + $0x20] sm:$0xff]
        %v7702 = vld [vmem:[#allocation2 + $0x28] sm:$0xff]
        %v7703 = vld [vmem:[#allocation2 + $0x30] sm:$0xff]
        %v7704 = vld [vmem:[#allocation2 + $0x38] sm:$0xff]
        %v7705 = vld [vmem:[#allocation2 + $0x40] sm:$0xff]
        %v7706 = vld [vmem:[#allocation2 + $0x48] sm:$0xff]
        %v7707 = vld [vmem:[#allocation2 + $0x50] sm:$0xff]
        %v7708 = vld [vmem:[#allocation2 + $0x58] sm:$0xff]
        %v7709 = vld [vmem:[#allocation2 + $0x60] sm:$0xff]
        %v7710 = vld [vmem:[#allocation2 + $0x68] sm:$0xff]
        %v7711 = vld [vmem:[#allocation2 + $0x70] sm:$0xff]
        %v7712 = vld [vmem:[#allocation2 + $0x78] sm:$0xff]
        %v7713 = vld [vmem:[#allocation2 + $0x80] sm:$0xff]
        %v7714 = vld [vmem:[#allocation2 + $0x88] sm:$0xff]
        %v7715 = vld [vmem:[#allocation2 + $0x90] sm:$0xff]
        %v7716 = vld [vmem:[#allocation2 + $0x98] sm:$0xff]
        %v7717 = vld [vmem:[#allocation2 + $0xa0] sm:$0xff]
        %v7718 = vld [vmem:[#allocation2 + $0xa8] sm:$0xff]
        %v7719 = vld [vmem:[#allocation2 + $0xb0] sm:$0xff]
        %v7720 = vld [vmem:[#allocation2 + $0xb8] sm:$0xff]
        %v7721 = vld [vmem:[#allocation2 + $0xc0] sm:$0xff]
        %v7722 = vld [vmem:[#allocation2 + $0xc8] sm:$0xff]
        %v7723 = vld [vmem:[#allocation2 + $0xd0] sm:$0xff]
        %v7724 = vld [vmem:[#allocation2 + $0xd8] sm:$0xff]
        %v7725 = vld [vmem:[#allocation2 + $0xe0] sm:$0xff]
        %v7726 = vld [vmem:[#allocation2 + $0xe8] sm:$0xff]
        %v7727 = vld [vmem:[#allocation2 + $0xf0] sm:$0xff]
        %v7728 = vld [vmem:[#allocation2 + $0xf8] sm:$0xff]
        %v7729 = vld [vmem:[#allocation2 + $0x100] sm:$0xff]
        %v7730 = vld [vmem:[#allocation2 + $0x108] sm:$0xff]
        %v7731 = vld [vmem:[#allocation2 + $0x110] sm:$0xff]
        %v7732 = vld [vmem:[#allocation2 + $0x118] sm:$0xff]
        %v7733 = vld [vmem:[#allocation2 + $0x120] sm:$0xff]
        %v7734 = vld [vmem:[#allocation2 + $0x128] sm:$0xff]
        %v7735 = vld [vmem:[#allocation2 + $0x130] sm:$0xff]
        %v7736 = vld [vmem:[#allocation2 + $0x138] sm:$0xff]
        %v7738 = vshrl.u32 %v7697, 16
        %v7740 = vrot.slane %v7738, 7
        %v7741 = vshll.u32 %v7697, 16
        %v7743 = vor.u32 %v7740, %v7741
        %v7745 = vshrl.u32 %v7698, 16
        %v7747 = vrot.slane %v7745, 7
        %v7748 = vshll.u32 %v7698, 16
        %v7750 = vor.u32 %v7747, %v7748
        %v7752 = vshrl.u32 %v7699, 16
        %v7754 = vrot.slane %v7752, 7
        %v7755 = vshll.u32 %v7699, 16
        %v7757 = vor.u32 %v7754, %v7755
        %v7758 = vsel %vm1139, %v7740, %v7757
        %v7760 = vshrl.u32 %v7700, 16
        %v7762 = vrot.slane %v7760, 7
        %v7763 = vshll.u32 %v7700, 16
        %v7765 = vor.u32 %v7762, %v7763
        %v7766 = vsel %vm1139, %v7747, %v7765
        %v7768 = vshrl.u32 %v7701, 16
        %v7770 = vrot.slane %v7768, 7
        %v7771 = vshll.u32 %v7701, 16
        %v7773 = vor.u32 %v7770, %v7771
        %v7774 = vsel %vm1139, %v7754, %v7773
        %v7776 = vshrl.u32 %v7702, 16
        %v7778 = vrot.slane %v7776, 7
        %v7779 = vshll.u32 %v7702, 16
        %v7781 = vor.u32 %v7778, %v7779
        %v7782 = vsel %vm1139, %v7762, %v7781
        %v7784 = vshrl.u32 %v7703, 16
        %v7786 = vrot.slane %v7784, 7
        %v7787 = vshll.u32 %v7703, 16
        %v7789 = vor.u32 %v7786, %v7787
        %v7790 = vsel %vm1139, %v7770, %v7789
        %v7792 = vshrl.u32 %v7704, 16
        %v7794 = vrot.slane %v7792, 7
        %v7795 = vshll.u32 %v7704, 16
        %v7797 = vor.u32 %v7794, %v7795
        %v7798 = vsel %vm1139, %v7778, %v7797
        %v7800 = vshrl.u32 %v7705, 16
        %v7802 = vrot.slane %v7800, 7
        %v7803 = vshll.u32 %v7705, 16
        %v7805 = vor.u32 %v7802, %v7803
        %v7806 = vsel %vm1139, %v7786, %v7805
        %v7808 = vshrl.u32 %v7706, 16
        %v7810 = vrot.slane %v7808, 7
        %v7811 = vshll.u32 %v7706, 16
        %v7813 = vor.u32 %v7810, %v7811
        %v7814 = vsel %vm1139, %v7794, %v7813
        %v7816 = vshrl.u32 %v7707, 16
        %v7818 = vrot.slane %v7816, 7
        %v7819 = vshll.u32 %v7707, 16
        %v7821 = vor.u32 %v7818, %v7819
        %v7822 = vsel %vm1139, %v7802, %v7821
        %v7824 = vshrl.u32 %v7708, 16
        %v7826 = vrot.slane %v7824, 7
        %v7827 = vshll.u32 %v7708, 16
        %v7829 = vor.u32 %v7826, %v7827
        %v7830 = vsel %vm1139, %v7810, %v7829
        %v7832 = vshrl.u32 %v7709, 16
        %v7834 = vrot.slane %v7832, 7
        %v7835 = vshll.u32 %v7709, 16
        %v7837 = vor.u32 %v7834, %v7835
        %v7838 = vsel %vm1139, %v7818, %v7837
        %v7840 = vshrl.u32 %v7710, 16
        %v7842 = vrot.slane %v7840, 7
        %v7843 = vshll.u32 %v7710, 16
        %v7845 = vor.u32 %v7842, %v7843
        %v7846 = vsel %vm1139, %v7826, %v7845
        %v7848 = vshrl.u32 %v7711, 16
        %v7850 = vrot.slane %v7848, 7
        %v7851 = vshll.u32 %v7711, 16
        %v7853 = vor.u32 %v7850, %v7851
        %v7854 = vsel %vm1139, %v7834, %v7853
        %v7856 = vshrl.u32 %v7712, 16
        %v7858 = vrot.slane %v7856, 7
        %v7859 = vshll.u32 %v7712, 16
        %v7861 = vor.u32 %v7858, %v7859
        %v7862 = vsel %vm1139, %v7842, %v7861
        %v7864 = vshrl.u32 %v7713, 16
        %v7866 = vrot.slane %v7864, 7
        %v7867 = vshll.u32 %v7713, 16
        %v7869 = vor.u32 %v7866, %v7867
        %v7870 = vsel %vm1139, %v7850, %v7869
        %v7872 = vshrl.u32 %v7714, 16
        %v7874 = vrot.slane %v7872, 7
        %v7875 = vshll.u32 %v7714, 16
        %v7877 = vor.u32 %v7874, %v7875
        %v7878 = vsel %vm1139, %v7858, %v7877
        %v7880 = vshrl.u32 %v7715, 16
        %v7882 = vrot.slane %v7880, 7
        %v7883 = vshll.u32 %v7715, 16
        %v7885 = vor.u32 %v7882, %v7883
        %v7886 = vsel %vm1139, %v7866, %v7885
        %v7888 = vshrl.u32 %v7716, 16
        %v7890 = vrot.slane %v7888, 7
        %v7891 = vshll.u32 %v7716, 16
        %v7893 = vor.u32 %v7890, %v7891
        %v7894 = vsel %vm1139, %v7874, %v7893
        %v7896 = vshrl.u32 %v7717, 16
        %v7898 = vrot.slane %v7896, 7
        %v7899 = vshll.u32 %v7717, 16
        %v7901 = vor.u32 %v7898, %v7899
        %v7902 = vsel %vm1139, %v7882, %v7901
        %v7904 = vshrl.u32 %v7718, 16
        %v7906 = vrot.slane %v7904, 7
        %v7907 = vshll.u32 %v7718, 16
        %v7909 = vor.u32 %v7906, %v7907
        %v7910 = vsel %vm1139, %v7890, %v7909
        %v7912 = vshrl.u32 %v7719, 16
        %v7914 = vrot.slane %v7912, 7
        %v7915 = vshll.u32 %v7719, 16
        %v7917 = vor.u32 %v7914, %v7915
        %v7918 = vsel %vm1139, %v7898, %v7917
        %v7920 = vshrl.u32 %v7720, 16
        %v7922 = vrot.slane %v7920, 7
        %v7923 = vshll.u32 %v7720, 16
        %v7925 = vor.u32 %v7922, %v7923
        %v7926 = vsel %vm1139, %v7906, %v7925
        %v7928 = vshrl.u32 %v7721, 16
        %v7930 = vrot.slane %v7928, 7
        %v7931 = vshll.u32 %v7721, 16
        %v7933 = vor.u32 %v7930, %v7931
        %v7934 = vsel %vm1139, %v7914, %v7933
        %v7936 = vshrl.u32 %v7722, 16
        %v7938 = vrot.slane %v7936, 7
        %v7939 = vshll.u32 %v7722, 16
        %v7941 = vor.u32 %v7938, %v7939
        %v7942 = vsel %vm1139, %v7922, %v7941
        %v7944 = vshrl.u32 %v7723, 16
        %v7946 = vrot.slane %v7944, 7
        %v7947 = vshll.u32 %v7723, 16
        %v7949 = vor.u32 %v7946, %v7947
        %v7950 = vsel %vm1139, %v7930, %v7949
        %v7952 = vshrl.u32 %v7724, 16
        %v7954 = vrot.slane %v7952, 7
        %v7955 = vshll.u32 %v7724, 16
        %v7957 = vor.u32 %v7954, %v7955
        %v7958 = vsel %vm1139, %v7938, %v7957
        %v7960 = vshrl.u32 %v7725, 16
        %v7962 = vrot.slane %v7960, 7
        %v7963 = vshll.u32 %v7725, 16
        %v7965 = vor.u32 %v7962, %v7963
        %v7966 = vsel %vm1139, %v7946, %v7965
        %v7968 = vshrl.u32 %v7726, 16
        %v7970 = vrot.slane %v7968, 7
        %v7971 = vshll.u32 %v7726, 16
        %v7973 = vor.u32 %v7970, %v7971
        %v7974 = vsel %vm1139, %v7954, %v7973
        %v7976 = vshrl.u32 %v7727, 16
        %v7978 = vrot.slane %v7976, 7
        %v7979 = vshll.u32 %v7727, 16
        %v7981 = vor.u32 %v7978, %v7979
        %v7982 = vsel %vm1139, %v7962, %v7981
        %v7984 = vshrl.u32 %v7728, 16
        %v7986 = vrot.slane %v7984, 7
        %v7987 = vshll.u32 %v7728, 16
        %v7989 = vor.u32 %v7986, %v7987
        %v7990 = vsel %vm1139, %v7970, %v7989
        %v7992 = vshrl.u32 %v7729, 16
        %v7994 = vrot.slane %v7992, 7
        %v7995 = vshll.u32 %v7729, 16
        %v7997 = vor.u32 %v7994, %v7995
        %v7998 = vsel %vm1139, %v7978, %v7997
        %v8000 = vshrl.u32 %v7730, 16
        %v8002 = vrot.slane %v8000, 7
        %v8003 = vshll.u32 %v7730, 16
        %v8005 = vor.u32 %v8002, %v8003
        %v8006 = vsel %vm1139, %v7986, %v8005
        %v8008 = vshrl.u32 %v7731, 16
        %v8010 = vrot.slane %v8008, 7
        %v8011 = vshll.u32 %v7731, 16
        %v8013 = vor.u32 %v8010, %v8011
        %v8014 = vsel %vm1139, %v7994, %v8013
        %v8016 = vshrl.u32 %v7732, 16
        %v8018 = vrot.slane %v8016, 7
        %v8019 = vshll.u32 %v7732, 16
        %v8021 = vor.u32 %v8018, %v8019
        %v8022 = vsel %vm1139, %v8002, %v8021
        %v8024 = vshrl.u32 %v7733, 16
        %v8026 = vrot.slane %v8024, 7
        %v8027 = vshll.u32 %v7733, 16
        %v8029 = vor.u32 %v8026, %v8027
        %v8030 = vsel %vm1139, %v8010, %v8029
        %v8032 = vshrl.u32 %v7734, 16
        %v8034 = vrot.slane %v8032, 7
        %v8035 = vshll.u32 %v7734, 16
        %v8037 = vor.u32 %v8034, %v8035
        %v8038 = vsel %vm1139, %v8018, %v8037
        %v8040 = vshrl.u32 %v7735, 16
        %v8042 = vrot.slane %v8040, 7
        %v8043 = vshll.u32 %v7735, 16
        %v8045 = vor.u32 %v8042, %v8043
        %v8046 = vsel %vm1139, %v8026, %v8045
        %v8048 = vshrl.u32 %v7736, 16
        %v8050 = vrot.slane %v8048, 7
        %v8051 = vshll.u32 %v7736, 16
        %v8053 = vor.u32 %v8050, %v8051
        %v8054 = vsel %vm1139, %v8034, %v8053
        %v8095 = vsel %vm1499, 0, %v7743
        %v8096 = vsel %vm1499, 0, %v7750
        %v8097 = vrot.slane %v7741, 1
        %v8098 = vor.u32 %v7738, %v8097
        %v8099 = vrot.slane %v7755, 1
        %v8100 = vsel %vm1502, %v8098, %v8099
        %v8101 = vrot.slane %v7748, 1
        %v8102 = vor.u32 %v7745, %v8101
        %v8103 = vrot.slane %v7763, 1
        %v8104 = vsel %vm1502, %v8102, %v8103
        %v8105 = vor.u32 %v7752, %v8099
        %v8106 = vrot.slane %v7771, 1
        %v8107 = vsel %vm1502, %v8105, %v8106
        %v8108 = vor.u32 %v7760, %v8103
        %v8109 = vrot.slane %v7779, 1
        %v8110 = vsel %vm1502, %v8108, %v8109
        %v8111 = vor.u32 %v7768, %v8106
        %v8112 = vrot.slane %v7787, 1
        %v8113 = vsel %vm1502, %v8111, %v8112
        %v8114 = vor.u32 %v7776, %v8109
        %v8115 = vrot.slane %v7795, 1
        %v8116 = vsel %vm1502, %v8114, %v8115
        %v8117 = vor.u32 %v7784, %v8112
        %v8118 = vrot.slane %v7803, 1
        %v8119 = vsel %vm1502, %v8117, %v8118
        %v8120 = vor.u32 %v7792, %v8115
        %v8121 = vrot.slane %v7811, 1
        %v8122 = vsel %vm1502, %v8120, %v8121
        %v8123 = vor.u32 %v7800, %v8118
        %v8124 = vrot.slane %v7819, 1
        %v8125 = vsel %vm1502, %v8123, %v8124
        %v8126 = vor.u32 %v7808, %v8121
        %v8127 = vrot.slane %v7827, 1
        %v8128 = vsel %vm1502, %v8126, %v8127
        %v8129 = vor.u32 %v7816, %v8124
        %v8130 = vrot.slane %v7835, 1
        %v8131 = vsel %vm1502, %v8129, %v8130
        %v8132 = vor.u32 %v7824, %v8127
        %v8133 = vrot.slane %v7843, 1
        %v8134 = vsel %vm1502, %v8132, %v8133
        %v8135 = vor.u32 %v7832, %v8130
        %v8136 = vrot.slane %v7851, 1
        %v8137 = vsel %vm1502, %v8135, %v8136
        %v8138 = vor.u32 %v7840, %v8133
        %v8139 = vrot.slane %v7859, 1
        %v8140 = vsel %vm1502, %v8138, %v8139
        %v8141 = vor.u32 %v7848, %v8136
        %v8142 = vrot.slane %v7867, 1
        %v8143 = vsel %vm1502, %v8141, %v8142
        %v8144 = vor.u32 %v7856, %v8139
        %v8145 = vrot.slane %v7875, 1
        %v8146 = vsel %vm1502, %v8144, %v8145
        %v8147 = vor.u32 %v7864, %v8142
        %v8148 = vrot.slane %v7883, 1
        %v8149 = vsel %vm1502, %v8147, %v8148
        %v8150 = vor.u32 %v7872, %v8145
        %v8151 = vrot.slane %v7891, 1
        %v8152 = vsel %vm1502, %v8150, %v8151
        %v8153 = vor.u32 %v7880, %v8148
        %v8154 = vrot.slane %v7899, 1
        %v8155 = vsel %vm1502, %v8153, %v8154
        %v8156 = vor.u32 %v7888, %v8151
        %v8157 = vrot.slane %v7907, 1
        %v8158 = vsel %vm1502, %v8156, %v8157
        %v8159 = vor.u32 %v7896, %v8154
        %v8160 = vrot.slane %v7915, 1
        %v8161 = vsel %vm1502, %v8159, %v8160
        %v8162 = vor.u32 %v7904, %v8157
        %v8163 = vrot.slane %v7923, 1
        %v8164 = vsel %vm1502, %v8162, %v8163
        %v8165 = vor.u32 %v7912, %v8160
        %v8166 = vrot.slane %v7931, 1
        %v8167 = vsel %vm1502, %v8165, %v8166
        %v8168 = vor.u32 %v7920, %v8163
        %v8169 = vrot.slane %v7939, 1
        %v8170 = vsel %vm1502, %v8168, %v8169
        %v8171 = vor.u32 %v7928, %v8166
        %v8172 = vrot.slane %v7947, 1
        %v8173 = vsel %vm1502, %v8171, %v8172
        %v8174 = vor.u32 %v7936, %v8169
        %v8175 = vrot.slane %v7955, 1
        %v8176 = vsel %vm1502, %v8174, %v8175
        %v8177 = vor.u32 %v7944, %v8172
        %v8178 = vrot.slane %v7963, 1
        %v8179 = vsel %vm1502, %v8177, %v8178
        %v8180 = vor.u32 %v7952, %v8175
        %v8181 = vrot.slane %v7971, 1
        %v8182 = vsel %vm1502, %v8180, %v8181
        %v8183 = vor.u32 %v7960, %v8178
        %v8184 = vrot.slane %v7979, 1
        %v8185 = vsel %vm1502, %v8183, %v8184
        %v8186 = vor.u32 %v7968, %v8181
        %v8187 = vrot.slane %v7987, 1
        %v8188 = vsel %vm1502, %v8186, %v8187
        %v8189 = vor.u32 %v7976, %v8184
        %v8190 = vrot.slane %v7995, 1
        %v8191 = vsel %vm1502, %v8189, %v8190
        %v8192 = vor.u32 %v7984, %v8187
        %v8193 = vrot.slane %v8003, 1
        %v8194 = vsel %vm1502, %v8192, %v8193
        %v8195 = vor.u32 %v7992, %v8190
        %v8196 = vrot.slane %v8011, 1
        %v8197 = vsel %vm1502, %v8195, %v8196
        %v8198 = vor.u32 %v8000, %v8193
        %v8199 = vrot.slane %v8019, 1
        %v8200 = vsel %vm1502, %v8198, %v8199
        %v8201 = vor.u32 %v8008, %v8196
        %v8202 = vrot.slane %v8027, 1
        %v8203 = vsel %vm1502, %v8201, %v8202
        %v8204 = vor.u32 %v8016, %v8199
        %v8205 = vrot.slane %v8035, 1
        %v8206 = vsel %vm1502, %v8204, %v8205
        %v8207 = vor.u32 %v8024, %v8202
        %v8208 = vrot.slane %v8043, 1
        %v8209 = vsel %vm1502, %v8207, %v8208
        %v8210 = vor.u32 %v8032, %v8205
        %v8211 = vrot.slane %v8051, 1
        %v8212 = vsel %vm1502, %v8210, %v8211
        %v8213 = vor.u32 %v8040, %v8208
        %v8214 = vor.u32 %v8048, %v8211
        %v8255 = vsel %vm1662, %v8213, 0
        %v8256 = vsel %vm1662, %v8214, 0
        %v8257 = vld [vmem:[%s3] sm:$0xf]
        %v8258 = vld [vmem:[%s3 + $0x4] sm:$0xf]
        %v8259 = vld [vmem:[%s3 + $0x8] sm:$0xf]
        %v8260 = vld [vmem:[%s3 + $0xc] sm:$0xf]
        %v8261 = vld [vmem:[%s3 + $0x10] sm:$0xf]
        %v8262 = vld [vmem:[%s3 + $0x14] sm:$0xf]
        %v8263 = vld [vmem:[%s3 + $0x18] sm:$0xf]
        %v8264 = vld [vmem:[%s3 + $0x1c] sm:$0xf]
        %v8265 = vld [vmem:[%s3 + $0x20] sm:$0xf]
        %v8266 = vld [vmem:[%s3 + $0x24] sm:$0xf]
        %v8267 = vld [vmem:[%s3 + $0x28] sm:$0xf]
        %v8268 = vld [vmem:[%s3 + $0x2c] sm:$0xf]
        %v8269 = vld [vmem:[%s3 + $0x30] sm:$0xf]
        %v8270 = vld [vmem:[%s3 + $0x34] sm:$0xf]
        %v8271 = vld [vmem:[%s3 + $0x38] sm:$0xf]
        %v8272 = vld [vmem:[%s3 + $0x3c] sm:$0xf]
        %v8273 = vld [vmem:[%s3 + $0x40] sm:$0xf]
        %v8274 = vld [vmem:[%s3 + $0x44] sm:$0xf]
        %v8275 = vld [vmem:[%s3 + $0x48] sm:$0xf]
        %v8276 = vld [vmem:[%s3 + $0x4c] sm:$0xf]
        %v8277 = vld [vmem:[%s3 + $0x50] sm:$0xf]
        %v8278 = vld [vmem:[%s3 + $0x54] sm:$0xf]
        %v8279 = vld [vmem:[%s3 + $0x58] sm:$0xf]
        %v8280 = vld [vmem:[%s3 + $0x5c] sm:$0xf]
        %v8281 = vld [vmem:[%s3 + $0x60] sm:$0xf]
        %v8282 = vld [vmem:[%s3 + $0x64] sm:$0xf]
        %v8283 = vld [vmem:[%s3 + $0x68] sm:$0xf]
        %v8284 = vld [vmem:[%s3 + $0x6c] sm:$0xf]
        %v8285 = vld [vmem:[%s3 + $0x70] sm:$0xf]
        %v8286 = vld [vmem:[%s3 + $0x74] sm:$0xf]
        %v8287 = vld [vmem:[%s3 + $0x78] sm:$0xf]
        %v8288 = vld [vmem:[%s3 + $0x7c] sm:$0xf]
        %s8289 = scalar_lea.vmem %s3, 128
        %v8290 = vld [vmem:[%s8289] sm:$0xf]
        %v8291 = vld [vmem:[%s8289 + $0x4] sm:$0xf]
        %v8292 = vld [vmem:[%s8289 + $0x8] sm:$0xf]
        %v8293 = vld [vmem:[%s8289 + $0xc] sm:$0xf]
        %v8294 = vld [vmem:[%s8289 + $0x10] sm:$0xf]
        %v8295 = vld [vmem:[%s8289 + $0x14] sm:$0xf]
        %v8296 = vld [vmem:[%s8289 + $0x18] sm:$0xf]
        %v8297 = vld [vmem:[%s8289 + $0x1c] sm:$0xf]
        %v8298 = vld [vmem:[%s8289 + $0x20] sm:$0xf]
        %v8299 = vld [vmem:[%s8289 + $0x24] sm:$0xf]
        %v8300 = vld [vmem:[%s8289 + $0x28] sm:$0xf]
        %v8301 = vld [vmem:[%s8289 + $0x2c] sm:$0xf]
        %v8302 = vld [vmem:[%s8289 + $0x30] sm:$0xf]
        %v8303 = vld [vmem:[%s8289 + $0x34] sm:$0xf]
        %v8304 = vld [vmem:[%s8289 + $0x38] sm:$0xf]
        %v8305 = vld [vmem:[%s8289 + $0x3c] sm:$0xf]
        %v8306 = vld [vmem:[%s8289 + $0x40] sm:$0xf]
        %v8307 = vld [vmem:[%s8289 + $0x44] sm:$0xf]
        %v8308 = vld [vmem:[%s8289 + $0x48] sm:$0xf]
        %v8309 = vld [vmem:[%s8289 + $0x4c] sm:$0xf]
        %v8310 = vld [vmem:[%s8289 + $0x50] sm:$0xf]
        %v8311 = vld [vmem:[%s8289 + $0x54] sm:$0xf]
        %v8312 = vld [vmem:[%s8289 + $0x58] sm:$0xf]
        %v8313 = vld [vmem:[%s8289 + $0x5c] sm:$0xf]
        %v8314 = vld [vmem:[%s8289 + $0x60] sm:$0xf]
        %v8315 = vld [vmem:[%s8289 + $0x64] sm:$0xf]
        %v8316 = vld [vmem:[%s8289 + $0x68] sm:$0xf]
        %v8317 = vld [vmem:[%s8289 + $0x6c] sm:$0xf]
        %v8318 = vld [vmem:[%s8289 + $0x70] sm:$0xf]
        %v8319 = vld [vmem:[%s8289 + $0x74] sm:$0xf]
        %v8320 = vld [vmem:[%s8289 + $0x78] sm:$0xf]
        %v8321 = vld [vmem:[%s8289 + $0x7c] sm:$0xf]
        %v8354 = vunpack.c.l.b16 %v8290
        %v8355 = vunpack.c.l.b16 %v8291
        %v8356 = vunpack.c.l.b16 %v8292
        %v8357 = vunpack.c.l.b16 %v8293
        %v8358 = vunpack.c.l.b16 %v8294
        %v8359 = vunpack.c.l.b16 %v8295
        %v8360 = vunpack.c.l.b16 %v8296
        %v8361 = vunpack.c.l.b16 %v8297
        %v8362 = vunpack.c.l.b16 %v8298
        %v8363 = vunpack.c.l.b16 %v8299
        %v8364 = vunpack.c.l.b16 %v8300
        %v8365 = vunpack.c.l.b16 %v8301
        %v8366 = vunpack.c.l.b16 %v8302
        %v8367 = vunpack.c.l.b16 %v8303
        %v8368 = vunpack.c.l.b16 %v8304
        %v8369 = vunpack.c.l.b16 %v8305
        %v8370 = vunpack.c.l.b16 %v8306
        %v8371 = vunpack.c.l.b16 %v8307
        %v8372 = vunpack.c.l.b16 %v8308
        %v8373 = vunpack.c.l.b16 %v8309
        %v8374 = vunpack.c.l.b16 %v8310
        %v8375 = vunpack.c.l.b16 %v8311
        %v8376 = vunpack.c.l.b16 %v8312
        %v8377 = vunpack.c.l.b16 %v8313
        %v8378 = vunpack.c.l.b16 %v8314
        %v8379 = vunpack.c.l.b16 %v8315
        %v8380 = vunpack.c.l.b16 %v8316
        %v8381 = vunpack.c.l.b16 %v8317
        %v8382 = vunpack.c.l.b16 %v8318
        %v8383 = vunpack.c.l.b16 %v8319
        %v8384 = vunpack.c.l.b16 %v8320
        %v8385 = vunpack.c.l.b16 %v8321
        %v8386 = vpack.c.b16 %v8355, %v8354
        %v8387 = vpack.c.b16 %v8357, %v8356
        %v8388 = vpack.c.b16 %v8359, %v8358
        %v8389 = vpack.c.b16 %v8361, %v8360
        %v8390 = vpack.c.b16 %v8363, %v8362
        %v8391 = vpack.c.b16 %v8365, %v8364
        %v8392 = vpack.c.b16 %v8367, %v8366
        %v8393 = vpack.c.b16 %v8369, %v8368
        %v8394 = vpack.c.b16 %v8371, %v8370
        %v8395 = vpack.c.b16 %v8373, %v8372
        %v8396 = vpack.c.b16 %v8375, %v8374
        %v8397 = vpack.c.b16 %v8377, %v8376
        %v8398 = vpack.c.b16 %v8379, %v8378
        %v8399 = vpack.c.b16 %v8381, %v8380
        %v8400 = vpack.c.b16 %v8383, %v8382
        %v8401 = vpack.c.b16 %v8385, %v8384
        %8418 = vmatprep.subr.bf16.mxu0 0
        %8419 = vmatpush1.bf16.msra.mxu0 %v8386
        %8420 = vmatprep.subr.bf16.mxu0 0
        %8421 = vmatpush1.bf16.msra.mxu0 %v8387
        %8422 = vmatprep.subr.bf16.mxu0 0
        %8423 = vmatpush1.bf16.msra.mxu0 %v8388
        %8424 = vmatprep.subr.bf16.mxu0 0
        %8425 = vmatpush1.bf16.msra.mxu0 %v8389
        %8426 = vmatprep.subr.bf16.mxu0 0
        %8427 = vmatpush1.bf16.msra.mxu0 %v8390
        %8428 = vmatprep.subr.bf16.mxu0 0
        %8429 = vmatpush1.bf16.msra.mxu0 %v8391
        %8430 = vmatprep.subr.bf16.mxu0 0
        %8431 = vmatpush1.bf16.msra.mxu0 %v8392
        %8432 = vmatprep.subr.bf16.mxu0 0
        %8433 = vmatpush1.bf16.msra.mxu0 %v8393
        %8434 = vmatprep.subr.bf16.mxu0 0
        %8435 = vmatpush1.bf16.msra.mxu0 %v8394
        %8436 = vmatprep.subr.bf16.mxu0 0
        %8437 = vmatpush1.bf16.msra.mxu0 %v8395
        %8438 = vmatprep.subr.bf16.mxu0 0
        %8439 = vmatpush1.bf16.msra.mxu0 %v8396
        %8440 = vmatprep.subr.bf16.mxu0 0
        %8441 = vmatpush1.bf16.msra.mxu0 %v8397
        %8442 = vmatprep.subr.bf16.mxu0 0
        %8443 = vmatpush1.bf16.msra.mxu0 %v8398
        %8444 = vmatprep.subr.bf16.mxu0 0
        %8445 = vmatpush1.bf16.msra.mxu0 %v8399
        %8446 = vmatprep.subr.bf16.mxu0 0
        %8447 = vmatpush1.bf16.msra.mxu0 %v8400
        %8448 = vmatprep.subr.bf16.mxu0 0
        %8449 = vmatpush1.bf16.msra.mxu0 %v8401
        %8450 = vmatprep.mubr.bf16.mxu0 %v7698
        %8451 = vmatmul.mubr.bf16.gmra.mrb[0].mxu0 %v7697
        %v8452 = vpop.f32.mrb[0].mxu0
        %v8453 = vadd.f32 0.0, %v8452
        %v8454 = vpop.f32.mrb[0].mxu0
        %v8455 = vpop.f32.mrb[0].mxu0
        %v8456 = vadd.f32 0.0, %v8455
        %v8457 = vpop.f32.mrb[0].mxu0
        %8458 = vmatprep.mubr.bf16.mxu0 %v7700
        %8459 = vmatmul.mubr.bf16.gmra.mrb[0].mxu0 %v7699
        %v8460 = vpop.f32.mrb[0].mxu0
        %v8461 = vadd.f32 0.0, %v8460
        %v8462 = vpop.f32.mrb[0].mxu0
        %v8463 = vpop.f32.mrb[0].mxu0
        %v8464 = vadd.f32 0.0, %v8463
        %v8465 = vpop.f32.mrb[0].mxu0
        %8466 = vmatprep.mubr.bf16.mxu0 %v7702
        %8467 = vmatmul.mubr.bf16.gmra.mrb[0].mxu0 %v7701
        %v8468 = vpop.f32.mrb[0].mxu0
        %v8469 = vadd.f32 0.0, %v8468
        %v8470 = vpop.f32.mrb[0].mxu0
        %v8471 = vpop.f32.mrb[0].mxu0
        %v8472 = vadd.f32 0.0, %v8471
        %v8473 = vpop.f32.mrb[0].mxu0
        %8474 = vmatprep.mubr.bf16.mxu0 %v7704
        %8475 = vmatmul.mubr.bf16.gmra.mrb[0].mxu0 %v7703
        %v8476 = vpop.f32.mrb[0].mxu0
        %v8477 = vadd.f32 0.0, %v8476
        %v8478 = vpop.f32.mrb[0].mxu0
        %v8479 = vpop.f32.mrb[0].mxu0
        %v8480 = vadd.f32 0.0, %v8479
        %v8481 = vpop.f32.mrb[0].mxu0
        %8482 = vmatprep.mubr.bf16.mxu0 %v7706
        %8483 = vmatmul.mubr.bf16.gmra.mrb[0].mxu0 %v7705
        %v8484 = vpop.f32.mrb[0].mxu0
        %v8485 = vadd.f32 0.0, %v8484
        %v8486 = vpop.f32.mrb[0].mxu0
        %v8487 = vpop.f32.mrb[0].mxu0
        %v8488 = vadd.f32 0.0, %v8487
        %v8489 = vpop.f32.mrb[0].mxu0
        %8490 = vmatprep.mubr.bf16.mxu0 %v7708
        %8491 = vmatmul.mubr.bf16.gmra.mrb[0].mxu0 %v7707
        %v8492 = vpop.f32.mrb[0].mxu0
        %v8493 = vadd.f32 0.0, %v8492
        %v8494 = vpop.f32.mrb[0].mxu0
        %v8495 = vpop.f32.mrb[0].mxu0
        %v8496 = vadd.f32 0.0, %v8495
        %v8497 = vpop.f32.mrb[0].mxu0
        %8498 = vmatprep.mubr.bf16.mxu0 %v7710
        %8499 = vmatmul.mubr.bf16.gmra.mrb[0].mxu0 %v7709
        %v8500 = vpop.f32.mrb[0].mxu0
        %v8501 = vadd.f32 0.0, %v8500
        %v8502 = vpop.f32.mrb[0].mxu0
        %v8503 = vpop.f32.mrb[0].mxu0
        %v8504 = vadd.f32 0.0, %v8503
        %v8505 = vpop.f32.mrb[0].mxu0
        %8506 = vmatprep.mubr.bf16.mxu0 %v7712
        %8507 = vmatmul.mubr.bf16.gmra.mrb[0].mxu0 %v7711
        %v8508 = vpop.f32.mrb[0].mxu0
        %v8509 = vadd.f32 0.0, %v8508
        %v8510 = vpop.f32.mrb[0].mxu0
        %v8511 = vpop.f32.mrb[0].mxu0
        %v8512 = vadd.f32 0.0, %v8511
        %v8513 = vpop.f32.mrb[0].mxu0
        %8514 = vmatprep.mubr.bf16.mxu0 %v7714
        %8515 = vmatmul.mubr.bf16.gmra.mrb[0].mxu0 %v7713
        %v8516 = vpop.f32.mrb[0].mxu0
        %v8517 = vadd.f32 0.0, %v8516
        %v8518 = vpop.f32.mrb[0].mxu0
        %v8519 = vpop.f32.mrb[0].mxu0
        %v8520 = vadd.f32 0.0, %v8519
        %v8521 = vpop.f32.mrb[0].mxu0
        %8522 = vmatprep.mubr.bf16.mxu0 %v7716
        %8523 = vmatmul.mubr.bf16.gmra.mrb[0].mxu0 %v7715
        %v8524 = vpop.f32.mrb[0].mxu0
        %v8525 = vadd.f32 0.0, %v8524
        %v8526 = vpop.f32.mrb[0].mxu0
        %v8527 = vpop.f32.mrb[0].mxu0
        %v8528 = vadd.f32 0.0, %v8527
        %v8529 = vpop.f32.mrb[0].mxu0
        %8530 = vmatprep.mubr.bf16.mxu0 %v7718
        %8531 = vmatmul.mubr.bf16.gmra.mrb[0].mxu0 %v7717
        %v8532 = vpop.f32.mrb[0].mxu0
        %v8533 = vadd.f32 0.0, %v8532
        %v8534 = vpop.f32.mrb[0].mxu0
        %v8535 = vpop.f32.mrb[0].mxu0
        %v8536 = vadd.f32 0.0, %v8535
        %v8537 = vpop.f32.mrb[0].mxu0
        %8538 = vmatprep.mubr.bf16.mxu0 %v7720
        %8539 = vmatmul.mubr.bf16.gmra.mrb[0].mxu0 %v7719
        %v8540 = vpop.f32.mrb[0].mxu0
        %v8541 = vadd.f32 0.0, %v8540
        %v8542 = vpop.f32.mrb[0].mxu0
        %v8543 = vpop.f32.mrb[0].mxu0
        %v8544 = vadd.f32 0.0, %v8543
        %v8545 = vpop.f32.mrb[0].mxu0
        %8546 = vmatprep.mubr.bf16.mxu0 %v7722
        %8547 = vmatmul.mubr.bf16.gmra.mrb[0].mxu0 %v7721
        %v8548 = vpop.f32.mrb[0].mxu0
        %v8549 = vadd.f32 0.0, %v8548
        %v8550 = vpop.f32.mrb[0].mxu0
        %v8551 = vpop.f32.mrb[0].mxu0
        %v8552 = vadd.f32 0.0, %v8551
        %v8553 = vpop.f32.mrb[0].mxu0
        %8554 = vmatprep.mubr.bf16.mxu0 %v7724
        %8555 = vmatmul.mubr.bf16.gmra.mrb[0].mxu0 %v7723
        %v8556 = vpop.f32.mrb[0].mxu0
        %v8557 = vadd.f32 0.0, %v8556
        %v8558 = vpop.f32.mrb[0].mxu0
        %v8559 = vpop.f32.mrb[0].mxu0
        %v8560 = vadd.f32 0.0, %v8559
        %v8561 = vpop.f32.mrb[0].mxu0
        %8562 = vmatprep.mubr.bf16.mxu0 %v7726
        %8563 = vmatmul.mubr.bf16.gmra.mrb[0].mxu0 %v7725
        %v8564 = vpop.f32.mrb[0].mxu0
        %v8565 = vadd.f32 0.0, %v8564
        %v8566 = vpop.f32.mrb[0].mxu0
        %v8567 = vpop.f32.mrb[0].mxu0
        %v8568 = vadd.f32 0.0, %v8567
        %v8569 = vpop.f32.mrb[0].mxu0
        %8570 = vmatprep.mubr.bf16.mxu0 %v7728
        %8571 = vmatmul.mubr.bf16.gmra.mrb[0].mxu0 %v7727
        %v8572 = vpop.f32.mrb[0].mxu0
        %v8573 = vadd.f32 0.0, %v8572
        %v8574 = vpop.f32.mrb[0].mxu0
        %v8575 = vpop.f32.mrb[0].mxu0
        %v8576 = vadd.f32 0.0, %v8575
        %v8577 = vpop.f32.mrb[0].mxu0
        %8578 = vdwg.mxu0
        %v8611 = vunpack.c.l.b16 %v8257
        %v8612 = vunpack.c.l.b16 %v8258
        %v8613 = vunpack.c.l.b16 %v8259
        %v8614 = vunpack.c.l.b16 %v8260
        %v8615 = vunpack.c.l.b16 %v8261
        %v8616 = vunpack.c.l.b16 %v8262
        %v8617 = vunpack.c.l.b16 %v8263
        %v8618 = vunpack.c.l.b16 %v8264
        %v8619 = vunpack.c.l.b16 %v8265
        %v8620 = vunpack.c.l.b16 %v8266
        %v8621 = vunpack.c.l.b16 %v8267
        %v8622 = vunpack.c.l.b16 %v8268
        %v8623 = vunpack.c.l.b16 %v8269
        %v8624 = vunpack.c.l.b16 %v8270
        %v8625 = vunpack.c.l.b16 %v8271
        %v8626 = vunpack.c.l.b16 %v8272
        %v8627 = vunpack.c.l.b16 %v8273
        %v8628 = vunpack.c.l.b16 %v8274
        %v8629 = vunpack.c.l.b16 %v8275
        %v8630 = vunpack.c.l.b16 %v8276
        %v8631 = vunpack.c.l.b16 %v8277
        %v8632 = vunpack.c.l.b16 %v8278
        %v8633 = vunpack.c.l.b16 %v8279
        %v8634 = vunpack.c.l.b16 %v8280
        %v8635 = vunpack.c.l.b16 %v8281
        %v8636 = vunpack.c.l.b16 %v8282
        %v8637 = vunpack.c.l.b16 %v8283
        %v8638 = vunpack.c.l.b16 %v8284
        %v8639 = vunpack.c.l.b16 %v8285
        %v8640 = vunpack.c.l.b16 %v8286
        %v8641 = vunpack.c.l.b16 %v8287
        %v8642 = vunpack.c.l.b16 %v8288
        %v8643 = vpack.c.b16 %v8612, %v8611
        %v8644 = vpack.c.b16 %v8614, %v8613
        %v8645 = vpack.c.b16 %v8616, %v8615
        %v8646 = vpack.c.b16 %v8618, %v8617
        %v8647 = vpack.c.b16 %v8620, %v8619
        %v8648 = vpack.c.b16 %v8622, %v8621
        %v8649 = vpack.c.b16 %v8624, %v8623
        %v8650 = vpack.c.b16 %v8626, %v8625
        %v8651 = vpack.c.b16 %v8628, %v8627
        %v8652 = vpack.c.b16 %v8630, %v8629
        %v8653 = vpack.c.b16 %v8632, %v8631
        %v8654 = vpack.c.b16 %v8634, %v8633
        %v8655 = vpack.c.b16 %v8636, %v8635
        %v8656 = vpack.c.b16 %v8638, %v8637
        %v8657 = vpack.c.b16 %v8640, %v8639
        %v8658 = vpack.c.b16 %v8642, %v8641
        %8675 = vmatprep.subr.bf16.mxu0 0
        %8676 = vmatpush1.bf16.msra.mxu0 %v8643
        %8677 = vmatprep.subr.bf16.mxu0 0
        %8678 = vmatpush1.bf16.msra.mxu0 %v8644
        %8679 = vmatprep.subr.bf16.mxu0 0
        %8680 = vmatpush1.bf16.msra.mxu0 %v8645
        %8681 = vmatprep.subr.bf16.mxu0 0
        %8682 = vmatpush1.bf16.msra.mxu0 %v8646
        %8683 = vmatprep.subr.bf16.mxu0 0
        %8684 = vmatpush1.bf16.msra.mxu0 %v8647
        %8685 = vmatprep.subr.bf16.mxu0 0
        %8686 = vmatpush1.bf16.msra.mxu0 %v8648
        %8687 = vmatprep.subr.bf16.mxu0 0
        %8688 = vmatpush1.bf16.msra.mxu0 %v8649
        %8689 = vmatprep.subr.bf16.mxu0 0
        %8690 = vmatpush1.bf16.msra.mxu0 %v8650
        %8691 = vmatprep.subr.bf16.mxu0 0
        %8692 = vmatpush1.bf16.msra.mxu0 %v8651
        %8693 = vmatprep.subr.bf16.mxu0 0
        %8694 = vmatpush1.bf16.msra.mxu0 %v8652
        %8695 = vmatprep.subr.bf16.mxu0 0
        %8696 = vmatpush1.bf16.msra.mxu0 %v8653
        %8697 = vmatprep.subr.bf16.mxu0 0
        %8698 = vmatpush1.bf16.msra.mxu0 %v8654
        %8699 = vmatprep.subr.bf16.mxu0 0
        %8700 = vmatpush1.bf16.msra.mxu0 %v8655
        %8701 = vmatprep.subr.bf16.mxu0 0
        %8702 = vmatpush1.bf16.msra.mxu0 %v8656
        %8703 = vmatprep.subr.bf16.mxu0 0
        %8704 = vmatpush1.bf16.msra.mxu0 %v8657
        %8705 = vmatprep.subr.bf16.mxu0 0
        %8706 = vmatpush1.bf16.msra.mxu0 %v8658
        %8707 = vmatprep.mubr.bf16.mxu0 %v8096
        %8708 = vmatmul.mubr.bf16.gmra.mrb[0].mxu0 %v8095
        %v8709 = vpop.f32.mrb[0].mxu0
        %v8710 = vadd.f32 %v8453, %v8709
        %v8711 = vpop.f32.mrb[0].mxu0
        %v8712 = vpop.f32.mrb[0].mxu0
        %v8713 = vadd.f32 %v8456, %v8712
        %v8714 = vpop.f32.mrb[0].mxu0
        %8715 = vmatprep.mubr.bf16.mxu0 %v7766
        %8716 = vmatmul.mubr.bf16.gmra.mrb[0].mxu0 %v7758
        %v8717 = vpop.f32.mrb[0].mxu0
        %v8718 = vadd.f32 %v8461, %v8717
        %v8719 = vpop.f32.mrb[0].mxu0
        %v8720 = vpop.f32.mrb[0].mxu0
        %v8721 = vadd.f32 %v8464, %v8720
        %v8722 = vpop.f32.mrb[0].mxu0
        %8723 = vmatprep.mubr.bf16.mxu0 %v7782
        %8724 = vmatmul.mubr.bf16.gmra.mrb[0].mxu0 %v7774
        %v8725 = vpop.f32.mrb[0].mxu0
        %v8726 = vadd.f32 %v8469, %v8725
        %v8727 = vpop.f32.mrb[0].mxu0
        %v8728 = vpop.f32.mrb[0].mxu0
        %v8729 = vadd.f32 %v8472, %v8728
        %v8730 = vpop.f32.mrb[0].mxu0
        %8731 = vmatprep.mubr.bf16.mxu0 %v7798
        %8732 = vmatmul.mubr.bf16.gmra.mrb[0].mxu0 %v7790
        %v8733 = vpop.f32.mrb[0].mxu0
        %v8734 = vadd.f32 %v8477, %v8733
        %v8735 = vpop.f32.mrb[0].mxu0
        %v8736 = vpop.f32.mrb[0].mxu0
        %v8737 = vadd.f32 %v8480, %v8736
        %v8738 = vpop.f32.mrb[0].mxu0
        %8739 = vmatprep.mubr.bf16.mxu0 %v7814
        %8740 = vmatmul.mubr.bf16.gmra.mrb[0].mxu0 %v7806
        %v8741 = vpop.f32.mrb[0].mxu0
        %v8742 = vadd.f32 %v8485, %v8741
        %v8743 = vpop.f32.mrb[0].mxu0
        %v8744 = vpop.f32.mrb[0].mxu0
        %v8745 = vadd.f32 %v8488, %v8744
        %v8746 = vpop.f32.mrb[0].mxu0
        %8747 = vmatprep.mubr.bf16.mxu0 %v7830
        %8748 = vmatmul.mubr.bf16.gmra.mrb[0].mxu0 %v7822
        %v8749 = vpop.f32.mrb[0].mxu0
        %v8750 = vadd.f32 %v8493, %v8749
        %v8751 = vpop.f32.mrb[0].mxu0
        %v8752 = vpop.f32.mrb[0].mxu0
        %v8753 = vadd.f32 %v8496, %v8752
        %v8754 = vpop.f32.mrb[0].mxu0
        %8755 = vmatprep.mubr.bf16.mxu0 %v7846
        %8756 = vmatmul.mubr.bf16.gmra.mrb[0].mxu0 %v7838
        %v8757 = vpop.f32.mrb[0].mxu0
        %v8758 = vadd.f32 %v8501, %v8757
        %v8759 = vpop.f32.mrb[0].mxu0
        %v8760 = vpop.f32.mrb[0].mxu0
        %v8761 = vadd.f32 %v8504, %v8760
        %v8762 = vpop.f32.mrb[0].mxu0
        %8763 = vmatprep.mubr.bf16.mxu0 %v7862
        %8764 = vmatmul.mubr.bf16.gmra.mrb[0].mxu0 %v7854
        %v8765 = vpop.f32.mrb[0].mxu0
        %v8766 = vadd.f32 %v8509, %v8765
        %v8767 = vpop.f32.mrb[0].mxu0
        %v8768 = vpop.f32.mrb[0].mxu0
        %v8769 = vadd.f32 %v8512, %v8768
        %v8770 = vpop.f32.mrb[0].mxu0
        %8771 = vmatprep.mubr.bf16.mxu0 %v7878
        %8772 = vmatmul.mubr.bf16.gmra.mrb[0].mxu0 %v7870
        %v8773 = vpop.f32.mrb[0].mxu0
        %v8774 = vadd.f32 %v8517, %v8773
        %v8775 = vpop.f32.mrb[0].mxu0
        %v8776 = vpop.f32.mrb[0].mxu0
        %v8777 = vadd.f32 %v8520, %v8776
        %v8778 = vpop.f32.mrb[0].mxu0
        %8779 = vmatprep.mubr.bf16.mxu0 %v7894
        %8780 = vmatmul.mubr.bf16.gmra.mrb[0].mxu0 %v7886
        %v8781 = vpop.f32.mrb[0].mxu0
        %v8782 = vadd.f32 %v8525, %v8781
        %v8783 = vpop.f32.mrb[0].mxu0
        %v8784 = vpop.f32.mrb[0].mxu0
        %v8785 = vadd.f32 %v8528, %v8784
        %v8786 = vpop.f32.mrb[0].mxu0
        %8787 = vmatprep.mubr.bf16.mxu0 %v7910
        %8788 = vmatmul.mubr.bf16.gmra.mrb[0].mxu0 %v7902
        %v8789 = vpop.f32.mrb[0].mxu0
        %v8790 = vadd.f32 %v8533, %v8789
        %v8791 = vpop.f32.mrb[0].mxu0
        %v8792 = vpop.f32.mrb[0].mxu0
        %v8793 = vadd.f32 %v8536, %v8792
        %v8794 = vpop.f32.mrb[0].mxu0
        %8795 = vmatprep.mubr.bf16.mxu0 %v7926
        %8796 = vmatmul.mubr.bf16.gmra.mrb[0].mxu0 %v7918
        %v8797 = vpop.f32.mrb[0].mxu0
        %v8798 = vadd.f32 %v8541, %v8797
        %v8799 = vpop.f32.mrb[0].mxu0
        %v8800 = vpop.f32.mrb[0].mxu0
        %v8801 = vadd.f32 %v8544, %v8800
        %v8802 = vpop.f32.mrb[0].mxu0
        %8803 = vmatprep.mubr.bf16.mxu0 %v7942
        %8804 = vmatmul.mubr.bf16.gmra.mrb[0].mxu0 %v7934
        %v8805 = vpop.f32.mrb[0].mxu0
        %v8806 = vadd.f32 %v8549, %v8805
        %v8807 = vpop.f32.mrb[0].mxu0
        %v8808 = vpop.f32.mrb[0].mxu0
        %v8809 = vadd.f32 %v8552, %v8808
        %v8810 = vpop.f32.mrb[0].mxu0
        %8811 = vmatprep.mubr.bf16.mxu0 %v7958
        %8812 = vmatmul.mubr.bf16.gmra.mrb[0].mxu0 %v7950
        %v8813 = vpop.f32.mrb[0].mxu0
        %v8814 = vadd.f32 %v8557, %v8813
        %v8815 = vpop.f32.mrb[0].mxu0
        %v8816 = vpop.f32.mrb[0].mxu0
        %v8817 = vadd.f32 %v8560, %v8816
        %v8818 = vpop.f32.mrb[0].mxu0
        %8819 = vmatprep.mubr.bf16.mxu0 %v7974
        %8820 = vmatmul.mubr.bf16.gmra.mrb[0].mxu0 %v7966
        %v8821 = vpop.f32.mrb[0].mxu0
        %v8822 = vadd.f32 %v8565, %v8821
        %v8823 = vpop.f32.mrb[0].mxu0
        %v8824 = vpop.f32.mrb[0].mxu0
        %v8825 = vadd.f32 %v8568, %v8824
        %v8826 = vpop.f32.mrb[0].mxu0
        %8827 = vmatprep.mubr.bf16.mxu0 %v7990
        %8828 = vmatmul.mubr.bf16.gmra.mrb[0].mxu0 %v7982
        %v8829 = vpop.f32.mrb[0].mxu0
        %v8830 = vadd.f32 %v8573, %v8829
        %v8831 = vpop.f32.mrb[0].mxu0
        %v8832 = vpop.f32.mrb[0].mxu0
        %v8833 = vadd.f32 %v8576, %v8832
        %v8834 = vpop.f32.mrb[0].mxu0
        %8835 = vdwg.mxu0
        %s8836 = scalar_lea.vmem %s3, 256
        %v8837 = vld [vmem:[%s8836] sm:$0xf]
        %v8838 = vld [vmem:[%s8836 + $0x4] sm:$0xf]
        %v8839 = vld [vmem:[%s8836 + $0x8] sm:$0xf]
        %v8840 = vld [vmem:[%s8836 + $0xc] sm:$0xf]
        %v8841 = vld [vmem:[%s8836 + $0x10] sm:$0xf]
        %v8842 = vld [vmem:[%s8836 + $0x14] sm:$0xf]
        %v8843 = vld [vmem:[%s8836 + $0x18] sm:$0xf]
        %v8844 = vld [vmem:[%s8836 + $0x1c] sm:$0xf]
        %v8845 = vld [vmem:[%s8836 + $0x20] sm:$0xf]
        %v8846 = vld [vmem:[%s8836 + $0x24] sm:$0xf]
        %v8847 = vld [vmem:[%s8836 + $0x28] sm:$0xf]
        %v8848 = vld [vmem:[%s8836 + $0x2c] sm:$0xf]
        %v8849 = vld [vmem:[%s8836 + $0x30] sm:$0xf]
        %v8850 = vld [vmem:[%s8836 + $0x34] sm:$0xf]
        %v8851 = vld [vmem:[%s8836 + $0x38] sm:$0xf]
        %v8852 = vld [vmem:[%s8836 + $0x3c] sm:$0xf]
        %v8853 = vld [vmem:[%s8836 + $0x40] sm:$0xf]
        %v8854 = vld [vmem:[%s8836 + $0x44] sm:$0xf]
        %v8855 = vld [vmem:[%s8836 + $0x48] sm:$0xf]
        %v8856 = vld [vmem:[%s8836 + $0x4c] sm:$0xf]
        %v8857 = vld [vmem:[%s8836 + $0x50] sm:$0xf]
        %v8858 = vld [vmem:[%s8836 + $0x54] sm:$0xf]
        %v8859 = vld [vmem:[%s8836 + $0x58] sm:$0xf]
        %v8860 = vld [vmem:[%s8836 + $0x5c] sm:$0xf]
        %v8861 = vld [vmem:[%s8836 + $0x60] sm:$0xf]
        %v8862 = vld [vmem:[%s8836 + $0x64] sm:$0xf]
        %v8863 = vld [vmem:[%s8836 + $0x68] sm:$0xf]
        %v8864 = vld [vmem:[%s8836 + $0x6c] sm:$0xf]
        %v8865 = vld [vmem:[%s8836 + $0x70] sm:$0xf]
        %v8866 = vld [vmem:[%s8836 + $0x74] sm:$0xf]
        %v8867 = vld [vmem:[%s8836 + $0x78] sm:$0xf]
        %v8868 = vld [vmem:[%s8836 + $0x7c] sm:$0xf]
        %v8901 = vunpack.c.l.b16 %v8837
        %v8902 = vunpack.c.l.b16 %v8838
        %v8903 = vunpack.c.l.b16 %v8839
        %v8904 = vunpack.c.l.b16 %v8840
        %v8905 = vunpack.c.l.b16 %v8841
        %v8906 = vunpack.c.l.b16 %v8842
        %v8907 = vunpack.c.l.b16 %v8843
        %v8908 = vunpack.c.l.b16 %v8844
        %v8909 = vunpack.c.l.b16 %v8845
        %v8910 = vunpack.c.l.b16 %v8846
        %v8911 = vunpack.c.l.b16 %v8847
        %v8912 = vunpack.c.l.b16 %v8848
        %v8913 = vunpack.c.l.b16 %v8849
        %v8914 = vunpack.c.l.b16 %v8850
        %v8915 = vunpack.c.l.b16 %v8851
        %v8916 = vunpack.c.l.b16 %v8852
        %v8917 = vunpack.c.l.b16 %v8853
        %v8918 = vunpack.c.l.b16 %v8854
        %v8919 = vunpack.c.l.b16 %v8855
        %v8920 = vunpack.c.l.b16 %v8856
        %v8921 = vunpack.c.l.b16 %v8857
        %v8922 = vunpack.c.l.b16 %v8858
        %v8923 = vunpack.c.l.b16 %v8859
        %v8924 = vunpack.c.l.b16 %v8860
        %v8925 = vunpack.c.l.b16 %v8861
        %v8926 = vunpack.c.l.b16 %v8862
        %v8927 = vunpack.c.l.b16 %v8863
        %v8928 = vunpack.c.l.b16 %v8864
        %v8929 = vunpack.c.l.b16 %v8865
        %v8930 = vunpack.c.l.b16 %v8866
        %v8931 = vunpack.c.l.b16 %v8867
        %v8932 = vunpack.c.l.b16 %v8868
        %v8933 = vpack.c.b16 %v8902, %v8901
        %v8934 = vpack.c.b16 %v8904, %v8903
        %v8935 = vpack.c.b16 %v8906, %v8905
        %v8936 = vpack.c.b16 %v8908, %v8907
        %v8937 = vpack.c.b16 %v8910, %v8909
        %v8938 = vpack.c.b16 %v8912, %v8911
        %v8939 = vpack.c.b16 %v8914, %v8913
        %v8940 = vpack.c.b16 %v8916, %v8915
        %v8941 = vpack.c.b16 %v8918, %v8917
        %v8942 = vpack.c.b16 %v8920, %v8919
        %v8943 = vpack.c.b16 %v8922, %v8921
        %v8944 = vpack.c.b16 %v8924, %v8923
        %v8945 = vpack.c.b16 %v8926, %v8925
        %v8946 = vpack.c.b16 %v8928, %v8927
        %v8947 = vpack.c.b16 %v8930, %v8929
        %v8948 = vpack.c.b16 %v8932, %v8931
        %8965 = vmatprep.subr.bf16.mxu0 0
        %8966 = vmatpush1.bf16.msra.mxu0 %v8933
        %8967 = vmatprep.subr.bf16.mxu0 0
        %8968 = vmatpush1.bf16.msra.mxu0 %v8934
        %8969 = vmatprep.subr.bf16.mxu0 0
        %8970 = vmatpush1.bf16.msra.mxu0 %v8935
        %8971 = vmatprep.subr.bf16.mxu0 0
        %8972 = vmatpush1.bf16.msra.mxu0 %v8936
        %8973 = vmatprep.subr.bf16.mxu0 0
        %8974 = vmatpush1.bf16.msra.mxu0 %v8937
        %8975 = vmatprep.subr.bf16.mxu0 0
        %8976 = vmatpush1.bf16.msra.mxu0 %v8938
        %8977 = vmatprep.subr.bf16.mxu0 0
        %8978 = vmatpush1.bf16.msra.mxu0 %v8939
        %8979 = vmatprep.subr.bf16.mxu0 0
        %8980 = vmatpush1.bf16.msra.mxu0 %v8940
        %8981 = vmatprep.subr.bf16.mxu0 0
        %8982 = vmatpush1.bf16.msra.mxu0 %v8941
        %8983 = vmatprep.subr.bf16.mxu0 0
        %8984 = vmatpush1.bf16.msra.mxu0 %v8942
        %8985 = vmatprep.subr.bf16.mxu0 0
        %8986 = vmatpush1.bf16.msra.mxu0 %v8943
        %8987 = vmatprep.subr.bf16.mxu0 0
        %8988 = vmatpush1.bf16.msra.mxu0 %v8944
        %8989 = vmatprep.subr.bf16.mxu0 0
        %8990 = vmatpush1.bf16.msra.mxu0 %v8945
        %8991 = vmatprep.subr.bf16.mxu0 0
        %8992 = vmatpush1.bf16.msra.mxu0 %v8946
        %8993 = vmatprep.subr.bf16.mxu0 0
        %8994 = vmatpush1.bf16.msra.mxu0 %v8947
        %8995 = vmatprep.subr.bf16.mxu0 0
        %8996 = vmatpush1.bf16.msra.mxu0 %v8948
        %8997 = vmatprep.mubr.bf16.mxu0 %v8104
        %8998 = vmatmul.mubr.bf16.gmra.mrb[0].mxu0 %v8100
        %v8999 = vpop.f32.mrb[0].mxu0
        %v9000 = vadd.f32 0.0, %v8999
        %v9001 = vpop.f32.mrb[0].mxu0
        %v9002 = vpop.f32.mrb[0].mxu0
        %v9003 = vadd.f32 0.0, %v9002
        %v9004 = vpop.f32.mrb[0].mxu0
        %9005 = vmatprep.mubr.bf16.mxu0 %v8110
        %9006 = vmatmul.mubr.bf16.gmra.mrb[0].mxu0 %v8107
        %v9007 = vpop.f32.mrb[0].mxu0
        %v9008 = vadd.f32 0.0, %v9007
        %v9009 = vpop.f32.mrb[0].mxu0
        %v9010 = vpop.f32.mrb[0].mxu0
        %v9011 = vadd.f32 0.0, %v9010
        %v9012 = vpop.f32.mrb[0].mxu0
        %9013 = vmatprep.mubr.bf16.mxu0 %v8116
        %9014 = vmatmul.mubr.bf16.gmra.mrb[0].mxu0 %v8113
        %v9015 = vpop.f32.mrb[0].mxu0
        %v9016 = vadd.f32 0.0, %v9015
        %v9017 = vpop.f32.mrb[0].mxu0
        %v9018 = vpop.f32.mrb[0].mxu0
        %v9019 = vadd.f32 0.0, %v9018
        %v9020 = vpop.f32.mrb[0].mxu0
        %9021 = vmatprep.mubr.bf16.mxu0 %v8122
        %9022 = vmatmul.mubr.bf16.gmra.mrb[0].mxu0 %v8119
        %v9023 = vpop.f32.mrb[0].mxu0
        %v9024 = vadd.f32 0.0, %v9023
        %v9025 = vpop.f32.mrb[0].mxu0
        %v9026 = vpop.f32.mrb[0].mxu0
        %v9027 = vadd.f32 0.0, %v9026
        %v9028 = vpop.f32.mrb[0].mxu0
        %9029 = vmatprep.mubr.bf16.mxu0 %v8128
        %9030 = vmatmul.mubr.bf16.gmra.mrb[0].mxu0 %v8125
        %v9031 = vpop.f32.mrb[0].mxu0
        %v9032 = vadd.f32 0.0, %v9031
        %v9033 = vpop.f32.mrb[0].mxu0
        %v9034 = vpop.f32.mrb[0].mxu0
        %v9035 = vadd.f32 0.0, %v9034
        %v9036 = vpop.f32.mrb[0].mxu0
        %9037 = vmatprep.mubr.bf16.mxu0 %v8134
        %9038 = vmatmul.mubr.bf16.gmra.mrb[0].mxu0 %v8131
        %v9039 = vpop.f32.mrb[0].mxu0
        %v9040 = vadd.f32 0.0, %v9039
        %v9041 = vpop.f32.mrb[0].mxu0
        %v9042 = vpop.f32.mrb[0].mxu0
        %v9043 = vadd.f32 0.0, %v9042
        %v9044 = vpop.f32.mrb[0].mxu0
        %9045 = vmatprep.mubr.bf16.mxu0 %v8140
        %9046 = vmatmul.mubr.bf16.gmra.mrb[0].mxu0 %v8137
        %v9047 = vpop.f32.mrb[0].mxu0
        %v9048 = vadd.f32 0.0, %v9047
        %v9049 = vpop.f32.mrb[0].mxu0
        %v9050 = vpop.f32.mrb[0].mxu0
        %v9051 = vadd.f32 0.0, %v9050
        %v9052 = vpop.f32.mrb[0].mxu0
        %9053 = vmatprep.mubr.bf16.mxu0 %v8146
        %9054 = vmatmul.mubr.bf16.gmra.mrb[0].mxu0 %v8143
        %v9055 = vpop.f32.mrb[0].mxu0
        %v9056 = vadd.f32 0.0, %v9055
        %v9057 = vpop.f32.mrb[0].mxu0
        %v9058 = vpop.f32.mrb[0].mxu0
        %v9059 = vadd.f32 0.0, %v9058
        %v9060 = vpop.f32.mrb[0].mxu0
        %9061 = vmatprep.mubr.bf16.mxu0 %v8152
        %9062 = vmatmul.mubr.bf16.gmra.mrb[0].mxu0 %v8149
        %v9063 = vpop.f32.mrb[0].mxu0
        %v9064 = vadd.f32 0.0, %v9063
        %v9065 = vpop.f32.mrb[0].mxu0
        %v9066 = vpop.f32.mrb[0].mxu0
        %v9067 = vadd.f32 0.0, %v9066
        %v9068 = vpop.f32.mrb[0].mxu0
        %9069 = vmatprep.mubr.bf16.mxu0 %v8158
        %9070 = vmatmul.mubr.bf16.gmra.mrb[0].mxu0 %v8155
        %v9071 = vpop.f32.mrb[0].mxu0
        %v9072 = vadd.f32 0.0, %v9071
        %v9073 = vpop.f32.mrb[0].mxu0
        %v9074 = vpop.f32.mrb[0].mxu0
        %v9075 = vadd.f32 0.0, %v9074
        %v9076 = vpop.f32.mrb[0].mxu0
        %9077 = vmatprep.mubr.bf16.mxu0 %v8164
        %9078 = vmatmul.mubr.bf16.gmra.mrb[0].mxu0 %v8161
        %v9079 = vpop.f32.mrb[0].mxu0
        %v9080 = vadd.f32 0.0, %v9079
        %v9081 = vpop.f32.mrb[0].mxu0
        %v9082 = vpop.f32.mrb[0].mxu0
        %v9083 = vadd.f32 0.0, %v9082
        %v9084 = vpop.f32.mrb[0].mxu0
        %9085 = vmatprep.mubr.bf16.mxu0 %v8170
        %9086 = vmatmul.mubr.bf16.gmra.mrb[0].mxu0 %v8167
        %v9087 = vpop.f32.mrb[0].mxu0
        %v9088 = vadd.f32 0.0, %v9087
        %v9089 = vpop.f32.mrb[0].mxu0
        %v9090 = vpop.f32.mrb[0].mxu0
        %v9091 = vadd.f32 0.0, %v9090
        %v9092 = vpop.f32.mrb[0].mxu0
        %9093 = vmatprep.mubr.bf16.mxu0 %v8176
        %9094 = vmatmul.mubr.bf16.gmra.mrb[0].mxu0 %v8173
        %v9095 = vpop.f32.mrb[0].mxu0
        %v9096 = vadd.f32 0.0, %v9095
        %v9097 = vpop.f32.mrb[0].mxu0
        %v9098 = vpop.f32.mrb[0].mxu0
        %v9099 = vadd.f32 0.0, %v9098
        %v9100 = vpop.f32.mrb[0].mxu0
        %9101 = vmatprep.mubr.bf16.mxu0 %v8182
        %9102 = vmatmul.mubr.bf16.gmra.mrb[0].mxu0 %v8179
        %v9103 = vpop.f32.mrb[0].mxu0
        %v9104 = vadd.f32 0.0, %v9103
        %v9105 = vpop.f32.mrb[0].mxu0
        %v9106 = vpop.f32.mrb[0].mxu0
        %v9107 = vadd.f32 0.0, %v9106
        %v9108 = vpop.f32.mrb[0].mxu0
        %9109 = vmatprep.mubr.bf16.mxu0 %v8188
        %9110 = vmatmul.mubr.bf16.gmra.mrb[0].mxu0 %v8185
        %v9111 = vpop.f32.mrb[0].mxu0
        %v9112 = vadd.f32 0.0, %v9111
        %v9113 = vpop.f32.mrb[0].mxu0
        %v9114 = vpop.f32.mrb[0].mxu0
        %v9115 = vadd.f32 0.0, %v9114
        %v9116 = vpop.f32.mrb[0].mxu0
        %9117 = vmatprep.mubr.bf16.mxu0 %v8194
        %9118 = vmatmul.mubr.bf16.gmra.mrb[0].mxu0 %v8191
        %v9119 = vpop.f32.mrb[0].mxu0
        %v9120 = vadd.f32 0.0, %v9119
        %v9121 = vpop.f32.mrb[0].mxu0
        %v9122 = vpop.f32.mrb[0].mxu0
        %v9123 = vadd.f32 0.0, %v9122
        %v9124 = vpop.f32.mrb[0].mxu0
        %9125 = vdwg.mxu0
        %v9126 = vadd.f32 %v8710, %v9000
        %v9127 = vadd.f32 %v8713, %v9003
        %v9128 = vadd.f32 %v8718, %v9008
        %v9129 = vadd.f32 %v8721, %v9011
        %v9130 = vadd.f32 %v8726, %v9016
        %v9131 = vadd.f32 %v8729, %v9019
        %v9132 = vadd.f32 %v8734, %v9024
        %v9133 = vadd.f32 %v8737, %v9027
        %v9134 = vadd.f32 %v8742, %v9032
        %v9135 = vadd.f32 %v8745, %v9035
        %v9136 = vadd.f32 %v8750, %v9040
        %v9137 = vadd.f32 %v8753, %v9043
        %v9138 = vadd.f32 %v8758, %v9048
        %v9139 = vadd.f32 %v8761, %v9051
        %v9140 = vadd.f32 %v8766, %v9056
        %v9141 = vadd.f32 %v8769, %v9059
        %v9142 = vadd.f32 %v8774, %v9064
        %v9143 = vadd.f32 %v8777, %v9067
        %v9144 = vadd.f32 %v8782, %v9072
        %v9145 = vadd.f32 %v8785, %v9075
        %v9146 = vadd.f32 %v8790, %v9080
        %v9147 = vadd.f32 %v8793, %v9083
        %v9148 = vadd.f32 %v8798, %v9088
        %v9149 = vadd.f32 %v8801, %v9091
        %v9150 = vadd.f32 %v8806, %v9096
        %v9151 = vadd.f32 %v8809, %v9099
        %v9152 = vadd.f32 %v8814, %v9104
        %v9153 = vadd.f32 %v8817, %v9107
        %v9154 = vadd.f32 %v8822, %v9112
        %v9155 = vadd.f32 %v8825, %v9115
        %v9156 = vadd.f32 %v8830, %v9120
        %v9157 = vadd.f32 %v8833, %v9123
        %s9158 = scalar_lea.vmem %s3, 384
        %v9159 = vld [vmem:[%s9158] sm:$0xf]
        %v9160 = vld [vmem:[%s9158 + $0x4] sm:$0xf]
        %v9161 = vld [vmem:[%s9158 + $0x8] sm:$0xf]
        %v9162 = vld [vmem:[%s9158 + $0xc] sm:$0xf]
        %v9163 = vld [vmem:[%s9158 + $0x10] sm:$0xf]
        %v9164 = vld [vmem:[%s9158 + $0x14] sm:$0xf]
        %v9165 = vld [vmem:[%s9158 + $0x18] sm:$0xf]
        %v9166 = vld [vmem:[%s9158 + $0x1c] sm:$0xf]
        %v9167 = vld [vmem:[%s9158 + $0x20] sm:$0xf]
        %v9168 = vld [vmem:[%s9158 + $0x24] sm:$0xf]
        %v9169 = vld [vmem:[%s9158 + $0x28] sm:$0xf]
        %v9170 = vld [vmem:[%s9158 + $0x2c] sm:$0xf]
        %v9171 = vld [vmem:[%s9158 + $0x30] sm:$0xf]
        %v9172 = vld [vmem:[%s9158 + $0x34] sm:$0xf]
        %v9173 = vld [vmem:[%s9158 + $0x38] sm:$0xf]
        %v9174 = vld [vmem:[%s9158 + $0x3c] sm:$0xf]
        %v9175 = vld [vmem:[%s9158 + $0x40] sm:$0xf]
        %v9176 = vld [vmem:[%s9158 + $0x44] sm:$0xf]
        %v9177 = vld [vmem:[%s9158 + $0x48] sm:$0xf]
        %v9178 = vld [vmem:[%s9158 + $0x4c] sm:$0xf]
        %v9179 = vld [vmem:[%s9158 + $0x50] sm:$0xf]
        %v9180 = vld [vmem:[%s9158 + $0x54] sm:$0xf]
        %v9181 = vld [vmem:[%s9158 + $0x58] sm:$0xf]
        %v9182 = vld [vmem:[%s9158 + $0x5c] sm:$0xf]
        %v9183 = vld [vmem:[%s9158 + $0x60] sm:$0xf]
        %v9184 = vld [vmem:[%s9158 + $0x64] sm:$0xf]
        %v9185 = vld [vmem:[%s9158 + $0x68] sm:$0xf]
        %v9186 = vld [vmem:[%s9158 + $0x6c] sm:$0xf]
        %v9187 = vld [vmem:[%s9158 + $0x70] sm:$0xf]
        %v9188 = vld [vmem:[%s9158 + $0x74] sm:$0xf]
        %v9189 = vld [vmem:[%s9158 + $0x78] sm:$0xf]
        %v9190 = vld [vmem:[%s9158 + $0x7c] sm:$0xf]
        %v9223 = vunpack.c.l.b16 %v9159
        %v9224 = vunpack.c.l.b16 %v9160
        %v9225 = vunpack.c.l.b16 %v9161
        %v9226 = vunpack.c.l.b16 %v9162
        %v9227 = vunpack.c.l.b16 %v9163
        %v9228 = vunpack.c.l.b16 %v9164
        %v9229 = vunpack.c.l.b16 %v9165
        %v9230 = vunpack.c.l.b16 %v9166
        %v9231 = vunpack.c.l.b16 %v9167
        %v9232 = vunpack.c.l.b16 %v9168
        %v9233 = vunpack.c.l.b16 %v9169
        %v9234 = vunpack.c.l.b16 %v9170
        %v9235 = vunpack.c.l.b16 %v9171
        %v9236 = vunpack.c.l.b16 %v9172
        %v9237 = vunpack.c.l.b16 %v9173
        %v9238 = vunpack.c.l.b16 %v9174
        %v9239 = vunpack.c.l.b16 %v9175
        %v9240 = vunpack.c.l.b16 %v9176
        %v9241 = vunpack.c.l.b16 %v9177
        %v9242 = vunpack.c.l.b16 %v9178
        %v9243 = vunpack.c.l.b16 %v9179
        %v9244 = vunpack.c.l.b16 %v9180
        %v9245 = vunpack.c.l.b16 %v9181
        %v9246 = vunpack.c.l.b16 %v9182
        %v9247 = vunpack.c.l.b16 %v9183
        %v9248 = vunpack.c.l.b16 %v9184
        %v9249 = vunpack.c.l.b16 %v9185
        %v9250 = vunpack.c.l.b16 %v9186
        %v9251 = vunpack.c.l.b16 %v9187
        %v9252 = vunpack.c.l.b16 %v9188
        %v9253 = vunpack.c.l.b16 %v9189
        %v9254 = vunpack.c.l.b16 %v9190
        %v9255 = vpack.c.b16 %v9224, %v9223
        %v9256 = vpack.c.b16 %v9226, %v9225
        %v9257 = vpack.c.b16 %v9228, %v9227
        %v9258 = vpack.c.b16 %v9230, %v9229
        %v9259 = vpack.c.b16 %v9232, %v9231
        %v9260 = vpack.c.b16 %v9234, %v9233
        %v9261 = vpack.c.b16 %v9236, %v9235
        %v9262 = vpack.c.b16 %v9238, %v9237
        %v9263 = vpack.c.b16 %v9240, %v9239
        %v9264 = vpack.c.b16 %v9242, %v9241
        %v9265 = vpack.c.b16 %v9244, %v9243
        %v9266 = vpack.c.b16 %v9246, %v9245
        %v9267 = vpack.c.b16 %v9248, %v9247
        %v9268 = vpack.c.b16 %v9250, %v9249
        %v9269 = vpack.c.b16 %v9252, %v9251
        %v9270 = vpack.c.b16 %v9254, %v9253
        %9287 = vmatprep.subr.bf16.mxu0 0
        %9288 = vmatpush1.bf16.msra.mxu0 %v9255
        %9289 = vmatprep.subr.bf16.mxu0 0
        %9290 = vmatpush1.bf16.msra.mxu0 %v9256
        %9291 = vmatprep.subr.bf16.mxu0 0
        %9292 = vmatpush1.bf16.msra.mxu0 %v9257
        %9293 = vmatprep.subr.bf16.mxu0 0
        %9294 = vmatpush1.bf16.msra.mxu0 %v9258
        %9295 = vmatprep.subr.bf16.mxu0 0
        %9296 = vmatpush1.bf16.msra.mxu0 %v9259
        %9297 = vmatprep.subr.bf16.mxu0 0
        %9298 = vmatpush1.bf16.msra.mxu0 %v9260
        %9299 = vmatprep.subr.bf16.mxu0 0
        %9300 = vmatpush1.bf16.msra.mxu0 %v9261
        %9301 = vmatprep.subr.bf16.mxu0 0
        %9302 = vmatpush1.bf16.msra.mxu0 %v9262
        %9303 = vmatprep.subr.bf16.mxu0 0
        %9304 = vmatpush1.bf16.msra.mxu0 %v9263
        %9305 = vmatprep.subr.bf16.mxu0 0
        %9306 = vmatpush1.bf16.msra.mxu0 %v9264
        %9307 = vmatprep.subr.bf16.mxu0 0
        %9308 = vmatpush1.bf16.msra.mxu0 %v9265
        %9309 = vmatprep.subr.bf16.mxu0 0
        %9310 = vmatpush1.bf16.msra.mxu0 %v9266
        %9311 = vmatprep.subr.bf16.mxu0 0
        %9312 = vmatpush1.bf16.msra.mxu0 %v9267
        %9313 = vmatprep.subr.bf16.mxu0 0
        %9314 = vmatpush1.bf16.msra.mxu0 %v9268
        %9315 = vmatprep.subr.bf16.mxu0 0
        %9316 = vmatpush1.bf16.msra.mxu0 %v9269
        %9317 = vmatprep.subr.bf16.mxu0 0
        %9318 = vmatpush1.bf16.msra.mxu0 %v9270
        %9319 = vmatprep.mubr.bf16.mxu0 %v7782
        %9320 = vmatmul.mubr.bf16.gmra.mrb[0].mxu0 %v7774
        %v9321 = vpop.f32.mrb[0].mxu0
        %v9322 = vadd.f32 0.0, %v9321
        %v9323 = vpop.f32.mrb[0].mxu0
        %v9324 = vpop.f32.mrb[0].mxu0
        %v9325 = vadd.f32 0.0, %v9324
        %v9326 = vpop.f32.mrb[0].mxu0
        %9327 = vmatprep.mubr.bf16.mxu0 %v7798
        %9328 = vmatmul.mubr.bf16.gmra.mrb[0].mxu0 %v7790
        %v9329 = vpop.f32.mrb[0].mxu0
        %v9330 = vadd.f32 0.0, %v9329
        %v9331 = vpop.f32.mrb[0].mxu0
        %v9332 = vpop.f32.mrb[0].mxu0
        %v9333 = vadd.f32 0.0, %v9332
        %v9334 = vpop.f32.mrb[0].mxu0
        %9335 = vmatprep.mubr.bf16.mxu0 %v7814
        %9336 = vmatmul.mubr.bf16.gmra.mrb[0].mxu0 %v7806
        %v9337 = vpop.f32.mrb[0].mxu0
        %v9338 = vadd.f32 0.0, %v9337
        %v9339 = vpop.f32.mrb[0].mxu0
        %v9340 = vpop.f32.mrb[0].mxu0
        %v9341 = vadd.f32 0.0, %v9340
        %v9342 = vpop.f32.mrb[0].mxu0
        %9343 = vmatprep.mubr.bf16.mxu0 %v7830
        %9344 = vmatmul.mubr.bf16.gmra.mrb[0].mxu0 %v7822
        %v9345 = vpop.f32.mrb[0].mxu0
        %v9346 = vadd.f32 0.0, %v9345
        %v9347 = vpop.f32.mrb[0].mxu0
        %v9348 = vpop.f32.mrb[0].mxu0
        %v9349 = vadd.f32 0.0, %v9348
        %v9350 = vpop.f32.mrb[0].mxu0
        %9351 = vmatprep.mubr.bf16.mxu0 %v7846
        %9352 = vmatmul.mubr.bf16.gmra.mrb[0].mxu0 %v7838
        %v9353 = vpop.f32.mrb[0].mxu0
        %v9354 = vadd.f32 0.0, %v9353
        %v9355 = vpop.f32.mrb[0].mxu0
        %v9356 = vpop.f32.mrb[0].mxu0
        %v9357 = vadd.f32 0.0, %v9356
        %v9358 = vpop.f32.mrb[0].mxu0
        %9359 = vmatprep.mubr.bf16.mxu0 %v7862
        %9360 = vmatmul.mubr.bf16.gmra.mrb[0].mxu0 %v7854
        %v9361 = vpop.f32.mrb[0].mxu0
        %v9362 = vadd.f32 0.0, %v9361
        %v9363 = vpop.f32.mrb[0].mxu0
        %v9364 = vpop.f32.mrb[0].mxu0
        %v9365 = vadd.f32 0.0, %v9364
        %v9366 = vpop.f32.mrb[0].mxu0
        %9367 = vmatprep.mubr.bf16.mxu0 %v7878
        %9368 = vmatmul.mubr.bf16.gmra.mrb[0].mxu0 %v7870
        %v9369 = vpop.f32.mrb[0].mxu0
        %v9370 = vadd.f32 0.0, %v9369
        %v9371 = vpop.f32.mrb[0].mxu0
        %v9372 = vpop.f32.mrb[0].mxu0
        %v9373 = vadd.f32 0.0, %v9372
        %v9374 = vpop.f32.mrb[0].mxu0
        %9375 = vmatprep.mubr.bf16.mxu0 %v7894
        %9376 = vmatmul.mubr.bf16.gmra.mrb[0].mxu0 %v7886
        %v9377 = vpop.f32.mrb[0].mxu0
        %v9378 = vadd.f32 0.0, %v9377
        %v9379 = vpop.f32.mrb[0].mxu0
        %v9380 = vpop.f32.mrb[0].mxu0
        %v9381 = vadd.f32 0.0, %v9380
        %v9382 = vpop.f32.mrb[0].mxu0
        %9383 = vmatprep.mubr.bf16.mxu0 %v7910
        %9384 = vmatmul.mubr.bf16.gmra.mrb[0].mxu0 %v7902
        %v9385 = vpop.f32.mrb[0].mxu0
        %v9386 = vadd.f32 0.0, %v9385
        %v9387 = vpop.f32.mrb[0].mxu0
        %v9388 = vpop.f32.mrb[0].mxu0
        %v9389 = vadd.f32 0.0, %v9388
        %v9390 = vpop.f32.mrb[0].mxu0
        %9391 = vmatprep.mubr.bf16.mxu0 %v7926
        %9392 = vmatmul.mubr.bf16.gmra.mrb[0].mxu0 %v7918
        %v9393 = vpop.f32.mrb[0].mxu0
        %v9394 = vadd.f32 0.0, %v9393
        %v9395 = vpop.f32.mrb[0].mxu0
        %v9396 = vpop.f32.mrb[0].mxu0
        %v9397 = vadd.f32 0.0, %v9396
        %v9398 = vpop.f32.mrb[0].mxu0
        %9399 = vmatprep.mubr.bf16.mxu0 %v7942
        %9400 = vmatmul.mubr.bf16.gmra.mrb[0].mxu0 %v7934
        %v9401 = vpop.f32.mrb[0].mxu0
        %v9402 = vadd.f32 0.0, %v9401
        %v9403 = vpop.f32.mrb[0].mxu0
        %v9404 = vpop.f32.mrb[0].mxu0
        %v9405 = vadd.f32 0.0, %v9404
        %v9406 = vpop.f32.mrb[0].mxu0
        %9407 = vmatprep.mubr.bf16.mxu0 %v7958
        %9408 = vmatmul.mubr.bf16.gmra.mrb[0].mxu0 %v7950
        %v9409 = vpop.f32.mrb[0].mxu0
        %v9410 = vadd.f32 0.0, %v9409
        %v9411 = vpop.f32.mrb[0].mxu0
        %v9412 = vpop.f32.mrb[0].mxu0
        %v9413 = vadd.f32 0.0, %v9412
        %v9414 = vpop.f32.mrb[0].mxu0
        %9415 = vmatprep.mubr.bf16.mxu0 %v7974
        %9416 = vmatmul.mubr.bf16.gmra.mrb[0].mxu0 %v7966
        %v9417 = vpop.f32.mrb[0].mxu0
        %v9418 = vadd.f32 0.0, %v9417
        %v9419 = vpop.f32.mrb[0].mxu0
        %v9420 = vpop.f32.mrb[0].mxu0
        %v9421 = vadd.f32 0.0, %v9420
        %v9422 = vpop.f32.mrb[0].mxu0
        %9423 = vmatprep.mubr.bf16.mxu0 %v7990
        %9424 = vmatmul.mubr.bf16.gmra.mrb[0].mxu0 %v7982
        %v9425 = vpop.f32.mrb[0].mxu0
        %v9426 = vadd.f32 0.0, %v9425
        %v9427 = vpop.f32.mrb[0].mxu0
        %v9428 = vpop.f32.mrb[0].mxu0
        %v9429 = vadd.f32 0.0, %v9428
        %v9430 = vpop.f32.mrb[0].mxu0
        %9431 = vmatprep.mubr.bf16.mxu0 %v8006
        %9432 = vmatmul.mubr.bf16.gmra.mrb[0].mxu0 %v7998
        %v9433 = vpop.f32.mrb[0].mxu0
        %v9434 = vadd.f32 0.0, %v9433
        %v9435 = vpop.f32.mrb[0].mxu0
        %v9436 = vpop.f32.mrb[0].mxu0
        %v9437 = vadd.f32 0.0, %v9436
        %v9438 = vpop.f32.mrb[0].mxu0
        %9439 = vmatprep.mubr.bf16.mxu0 %v8022
        %9440 = vmatmul.mubr.bf16.gmra.mrb[0].mxu0 %v8014
        %v9441 = vpop.f32.mrb[0].mxu0
        %v9442 = vadd.f32 0.0, %v9441
        %v9443 = vpop.f32.mrb[0].mxu0
        %v9444 = vpop.f32.mrb[0].mxu0
        %v9445 = vadd.f32 0.0, %v9444
        %v9446 = vpop.f32.mrb[0].mxu0
        %9447 = vdwg.mxu0
        %v9448 = vadd.f32 %v9126, %v9322
        %v9449 = vadd.f32 %v9127, %v9325
        %v9450 = vadd.f32 %v9128, %v9330
        %v9451 = vadd.f32 %v9129, %v9333
        %v9452 = vadd.f32 %v9130, %v9338
        %v9453 = vadd.f32 %v9131, %v9341
        %v9454 = vadd.f32 %v9132, %v9346
        %v9455 = vadd.f32 %v9133, %v9349
        %v9456 = vadd.f32 %v9134, %v9354
        %v9457 = vadd.f32 %v9135, %v9357
        %v9458 = vadd.f32 %v9136, %v9362
        %v9459 = vadd.f32 %v9137, %v9365
        %v9460 = vadd.f32 %v9138, %v9370
        %v9461 = vadd.f32 %v9139, %v9373
        %v9462 = vadd.f32 %v9140, %v9378
        %v9463 = vadd.f32 %v9141, %v9381
        %v9464 = vadd.f32 %v9142, %v9386
        %v9465 = vadd.f32 %v9143, %v9389
        %v9466 = vadd.f32 %v9144, %v9394
        %v9467 = vadd.f32 %v9145, %v9397
        %v9468 = vadd.f32 %v9146, %v9402
        %v9469 = vadd.f32 %v9147, %v9405
        %v9470 = vadd.f32 %v9148, %v9410
        %v9471 = vadd.f32 %v9149, %v9413
        %v9472 = vadd.f32 %v9150, %v9418
        %v9473 = vadd.f32 %v9151, %v9421
        %v9474 = vadd.f32 %v9152, %v9426
        %v9475 = vadd.f32 %v9153, %v9429
        %v9476 = vadd.f32 %v9154, %v9434
        %v9477 = vadd.f32 %v9155, %v9437
        %v9478 = vadd.f32 %v9156, %v9442
        %v9479 = vadd.f32 %v9157, %v9445
        %s9480 = scalar_lea.vmem %s3, 512
        %v9481 = vld [vmem:[%s9480] sm:$0xf]
        %v9482 = vld [vmem:[%s9480 + $0x4] sm:$0xf]
        %v9483 = vld [vmem:[%s9480 + $0x8] sm:$0xf]
        %v9484 = vld [vmem:[%s9480 + $0xc] sm:$0xf]
        %v9485 = vld [vmem:[%s9480 + $0x10] sm:$0xf]
        %v9486 = vld [vmem:[%s9480 + $0x14] sm:$0xf]
        %v9487 = vld [vmem:[%s9480 + $0x18] sm:$0xf]
        %v9488 = vld [vmem:[%s9480 + $0x1c] sm:$0xf]
        %v9489 = vld [vmem:[%s9480 + $0x20] sm:$0xf]
        %v9490 = vld [vmem:[%s9480 + $0x24] sm:$0xf]
        %v9491 = vld [vmem:[%s9480 + $0x28] sm:$0xf]
        %v9492 = vld [vmem:[%s9480 + $0x2c] sm:$0xf]
        %v9493 = vld [vmem:[%s9480 + $0x30] sm:$0xf]
        %v9494 = vld [vmem:[%s9480 + $0x34] sm:$0xf]
        %v9495 = vld [vmem:[%s9480 + $0x38] sm:$0xf]
        %v9496 = vld [vmem:[%s9480 + $0x3c] sm:$0xf]
        %v9497 = vld [vmem:[%s9480 + $0x40] sm:$0xf]
        %v9498 = vld [vmem:[%s9480 + $0x44] sm:$0xf]
        %v9499 = vld [vmem:[%s9480 + $0x48] sm:$0xf]
        %v9500 = vld [vmem:[%s9480 + $0x4c] sm:$0xf]
        %v9501 = vld [vmem:[%s9480 + $0x50] sm:$0xf]
        %v9502 = vld [vmem:[%s9480 + $0x54] sm:$0xf]
        %v9503 = vld [vmem:[%s9480 + $0x58] sm:$0xf]
        %v9504 = vld [vmem:[%s9480 + $0x5c] sm:$0xf]
        %v9505 = vld [vmem:[%s9480 + $0x60] sm:$0xf]
        %v9506 = vld [vmem:[%s9480 + $0x64] sm:$0xf]
        %v9507 = vld [vmem:[%s9480 + $0x68] sm:$0xf]
        %v9508 = vld [vmem:[%s9480 + $0x6c] sm:$0xf]
        %v9509 = vld [vmem:[%s9480 + $0x70] sm:$0xf]
        %v9510 = vld [vmem:[%s9480 + $0x74] sm:$0xf]
        %v9511 = vld [vmem:[%s9480 + $0x78] sm:$0xf]
        %v9512 = vld [vmem:[%s9480 + $0x7c] sm:$0xf]
        %v9545 = vunpack.c.l.b16 %v9481
        %v9546 = vunpack.c.l.b16 %v9482
        %v9547 = vunpack.c.l.b16 %v9483
        %v9548 = vunpack.c.l.b16 %v9484
        %v9549 = vunpack.c.l.b16 %v9485
        %v9550 = vunpack.c.l.b16 %v9486
        %v9551 = vunpack.c.l.b16 %v9487
        %v9552 = vunpack.c.l.b16 %v9488
        %v9553 = vunpack.c.l.b16 %v9489
        %v9554 = vunpack.c.l.b16 %v9490
        %v9555 = vunpack.c.l.b16 %v9491
        %v9556 = vunpack.c.l.b16 %v9492
        %v9557 = vunpack.c.l.b16 %v9493
        %v9558 = vunpack.c.l.b16 %v9494
        %v9559 = vunpack.c.l.b16 %v9495
        %v9560 = vunpack.c.l.b16 %v9496
        %v9561 = vunpack.c.l.b16 %v9497
        %v9562 = vunpack.c.l.b16 %v9498
        %v9563 = vunpack.c.l.b16 %v9499
        %v9564 = vunpack.c.l.b16 %v9500
        %v9565 = vunpack.c.l.b16 %v9501
        %v9566 = vunpack.c.l.b16 %v9502
        %v9567 = vunpack.c.l.b16 %v9503
        %v9568 = vunpack.c.l.b16 %v9504
        %v9569 = vunpack.c.l.b16 %v9505
        %v9570 = vunpack.c.l.b16 %v9506
        %v9571 = vunpack.c.l.b16 %v9507
        %v9572 = vunpack.c.l.b16 %v9508
        %v9573 = vunpack.c.l.b16 %v9509
        %v9574 = vunpack.c.l.b16 %v9510
        %v9575 = vunpack.c.l.b16 %v9511
        %v9576 = vunpack.c.l.b16 %v9512
        %v9577 = vpack.c.b16 %v9546, %v9545
        %v9578 = vpack.c.b16 %v9548, %v9547
        %v9579 = vpack.c.b16 %v9550, %v9549
        %v9580 = vpack.c.b16 %v9552, %v9551
        %v9581 = vpack.c.b16 %v9554, %v9553
        %v9582 = vpack.c.b16 %v9556, %v9555
        %v9583 = vpack.c.b16 %v9558, %v9557
        %v9584 = vpack.c.b16 %v9560, %v9559
        %v9585 = vpack.c.b16 %v9562, %v9561
        %v9586 = vpack.c.b16 %v9564, %v9563
        %v9587 = vpack.c.b16 %v9566, %v9565
        %v9588 = vpack.c.b16 %v9568, %v9567
        %v9589 = vpack.c.b16 %v9570, %v9569
        %v9590 = vpack.c.b16 %v9572, %v9571
        %v9591 = vpack.c.b16 %v9574, %v9573
        %v9592 = vpack.c.b16 %v9576, %v9575
        %9609 = vmatprep.subr.bf16.mxu0 0
        %9610 = vmatpush1.bf16.msra.mxu0 %v9577
        %9611 = vmatprep.subr.bf16.mxu0 0
        %9612 = vmatpush1.bf16.msra.mxu0 %v9578
        %9613 = vmatprep.subr.bf16.mxu0 0
        %9614 = vmatpush1.bf16.msra.mxu0 %v9579
        %9615 = vmatprep.subr.bf16.mxu0 0
        %9616 = vmatpush1.bf16.msra.mxu0 %v9580
        %9617 = vmatprep.subr.bf16.mxu0 0
        %9618 = vmatpush1.bf16.msra.mxu0 %v9581
        %9619 = vmatprep.subr.bf16.mxu0 0
        %9620 = vmatpush1.bf16.msra.mxu0 %v9582
        %9621 = vmatprep.subr.bf16.mxu0 0
        %9622 = vmatpush1.bf16.msra.mxu0 %v9583
        %9623 = vmatprep.subr.bf16.mxu0 0
        %9624 = vmatpush1.bf16.msra.mxu0 %v9584
        %9625 = vmatprep.subr.bf16.mxu0 0
        %9626 = vmatpush1.bf16.msra.mxu0 %v9585
        %9627 = vmatprep.subr.bf16.mxu0 0
        %9628 = vmatpush1.bf16.msra.mxu0 %v9586
        %9629 = vmatprep.subr.bf16.mxu0 0
        %9630 = vmatpush1.bf16.msra.mxu0 %v9587
        %9631 = vmatprep.subr.bf16.mxu0 0
        %9632 = vmatpush1.bf16.msra.mxu0 %v9588
        %9633 = vmatprep.subr.bf16.mxu0 0
        %9634 = vmatpush1.bf16.msra.mxu0 %v9589
        %9635 = vmatprep.subr.bf16.mxu0 0
        %9636 = vmatpush1.bf16.msra.mxu0 %v9590
        %9637 = vmatprep.subr.bf16.mxu0 0
        %9638 = vmatpush1.bf16.msra.mxu0 %v9591
        %9639 = vmatprep.subr.bf16.mxu0 0
        %9640 = vmatpush1.bf16.msra.mxu0 %v9592
        %9641 = vmatprep.mubr.bf16.mxu0 %v7702
        %9642 = vmatmul.mubr.bf16.gmra.mrb[0].mxu0 %v7701
        %v9643 = vpop.f32.mrb[0].mxu0
        %v9644 = vadd.f32 0.0, %v9643
        %v9645 = vpop.f32.mrb[0].mxu0
        %v9646 = vpop.f32.mrb[0].mxu0
        %v9647 = vadd.f32 0.0, %v9646
        %v9648 = vpop.f32.mrb[0].mxu0
        %9649 = vmatprep.mubr.bf16.mxu0 %v7704
        %9650 = vmatmul.mubr.bf16.gmra.mrb[0].mxu0 %v7703
        %v9651 = vpop.f32.mrb[0].mxu0
        %v9652 = vadd.f32 0.0, %v9651
        %v9653 = vpop.f32.mrb[0].mxu0
        %v9654 = vpop.f32.mrb[0].mxu0
        %v9655 = vadd.f32 0.0, %v9654
        %v9656 = vpop.f32.mrb[0].mxu0
        %9657 = vmatprep.mubr.bf16.mxu0 %v7706
        %9658 = vmatmul.mubr.bf16.gmra.mrb[0].mxu0 %v7705
        %v9659 = vpop.f32.mrb[0].mxu0
        %v9660 = vadd.f32 0.0, %v9659
        %v9661 = vpop.f32.mrb[0].mxu0
        %v9662 = vpop.f32.mrb[0].mxu0
        %v9663 = vadd.f32 0.0, %v9662
        %v9664 = vpop.f32.mrb[0].mxu0
        %9665 = vmatprep.mubr.bf16.mxu0 %v7708
        %9666 = vmatmul.mubr.bf16.gmra.mrb[0].mxu0 %v7707
        %v9667 = vpop.f32.mrb[0].mxu0
        %v9668 = vadd.f32 0.0, %v9667
        %v9669 = vpop.f32.mrb[0].mxu0
        %v9670 = vpop.f32.mrb[0].mxu0
        %v9671 = vadd.f32 0.0, %v9670
        %v9672 = vpop.f32.mrb[0].mxu0
        %9673 = vmatprep.mubr.bf16.mxu0 %v7710
        %9674 = vmatmul.mubr.bf16.gmra.mrb[0].mxu0 %v7709
        %v9675 = vpop.f32.mrb[0].mxu0
        %v9676 = vadd.f32 0.0, %v9675
        %v9677 = vpop.f32.mrb[0].mxu0
        %v9678 = vpop.f32.mrb[0].mxu0
        %v9679 = vadd.f32 0.0, %v9678
        %v9680 = vpop.f32.mrb[0].mxu0
        %9681 = vmatprep.mubr.bf16.mxu0 %v7712
        %9682 = vmatmul.mubr.bf16.gmra.mrb[0].mxu0 %v7711
        %v9683 = vpop.f32.mrb[0].mxu0
        %v9684 = vadd.f32 0.0, %v9683
        %v9685 = vpop.f32.mrb[0].mxu0
        %v9686 = vpop.f32.mrb[0].mxu0
        %v9687 = vadd.f32 0.0, %v9686
        %v9688 = vpop.f32.mrb[0].mxu0
        %9689 = vmatprep.mubr.bf16.mxu0 %v7714
        %9690 = vmatmul.mubr.bf16.gmra.mrb[0].mxu0 %v7713
        %v9691 = vpop.f32.mrb[0].mxu0
        %v9692 = vadd.f32 0.0, %v9691
        %v9693 = vpop.f32.mrb[0].mxu0
        %v9694 = vpop.f32.mrb[0].mxu0
        %v9695 = vadd.f32 0.0, %v9694
        %v9696 = vpop.f32.mrb[0].mxu0
        %9697 = vmatprep.mubr.bf16.mxu0 %v7716
        %9698 = vmatmul.mubr.bf16.gmra.mrb[0].mxu0 %v7715
        %v9699 = vpop.f32.mrb[0].mxu0
        %v9700 = vadd.f32 0.0, %v9699
        %v9701 = vpop.f32.mrb[0].mxu0
        %v9702 = vpop.f32.mrb[0].mxu0
        %v9703 = vadd.f32 0.0, %v9702
        %v9704 = vpop.f32.mrb[0].mxu0
        %9705 = vmatprep.mubr.bf16.mxu0 %v7718
        %9706 = vmatmul.mubr.bf16.gmra.mrb[0].mxu0 %v7717
        %v9707 = vpop.f32.mrb[0].mxu0
        %v9708 = vadd.f32 0.0, %v9707
        %v9709 = vpop.f32.mrb[0].mxu0
        %v9710 = vpop.f32.mrb[0].mxu0
        %v9711 = vadd.f32 0.0, %v9710
        %v9712 = vpop.f32.mrb[0].mxu0
        %9713 = vmatprep.mubr.bf16.mxu0 %v7720
        %9714 = vmatmul.mubr.bf16.gmra.mrb[0].mxu0 %v7719
        %v9715 = vpop.f32.mrb[0].mxu0
        %v9716 = vadd.f32 0.0, %v9715
        %v9717 = vpop.f32.mrb[0].mxu0
        %v9718 = vpop.f32.mrb[0].mxu0
        %v9719 = vadd.f32 0.0, %v9718
        %v9720 = vpop.f32.mrb[0].mxu0
        %9721 = vmatprep.mubr.bf16.mxu0 %v7722
        %9722 = vmatmul.mubr.bf16.gmra.mrb[0].mxu0 %v7721
        %v9723 = vpop.f32.mrb[0].mxu0
        %v9724 = vadd.f32 0.0, %v9723
        %v9725 = vpop.f32.mrb[0].mxu0
        %v9726 = vpop.f32.mrb[0].mxu0
        %v9727 = vadd.f32 0.0, %v9726
        %v9728 = vpop.f32.mrb[0].mxu0
        %9729 = vmatprep.mubr.bf16.mxu0 %v7724
        %9730 = vmatmul.mubr.bf16.gmra.mrb[0].mxu0 %v7723
        %v9731 = vpop.f32.mrb[0].mxu0
        %v9732 = vadd.f32 0.0, %v9731
        %v9733 = vpop.f32.mrb[0].mxu0
        %v9734 = vpop.f32.mrb[0].mxu0
        %v9735 = vadd.f32 0.0, %v9734
        %v9736 = vpop.f32.mrb[0].mxu0
        %9737 = vmatprep.mubr.bf16.mxu0 %v7726
        %9738 = vmatmul.mubr.bf16.gmra.mrb[0].mxu0 %v7725
        %v9739 = vpop.f32.mrb[0].mxu0
        %v9740 = vadd.f32 0.0, %v9739
        %v9741 = vpop.f32.mrb[0].mxu0
        %v9742 = vpop.f32.mrb[0].mxu0
        %v9743 = vadd.f32 0.0, %v9742
        %v9744 = vpop.f32.mrb[0].mxu0
        %9745 = vmatprep.mubr.bf16.mxu0 %v7728
        %9746 = vmatmul.mubr.bf16.gmra.mrb[0].mxu0 %v7727
        %v9747 = vpop.f32.mrb[0].mxu0
        %v9748 = vadd.f32 0.0, %v9747
        %v9749 = vpop.f32.mrb[0].mxu0
        %v9750 = vpop.f32.mrb[0].mxu0
        %v9751 = vadd.f32 0.0, %v9750
        %v9752 = vpop.f32.mrb[0].mxu0
        %9753 = vmatprep.mubr.bf16.mxu0 %v7730
        %9754 = vmatmul.mubr.bf16.gmra.mrb[0].mxu0 %v7729
        %v9755 = vpop.f32.mrb[0].mxu0
        %v9756 = vadd.f32 0.0, %v9755
        %v9757 = vpop.f32.mrb[0].mxu0
        %v9758 = vpop.f32.mrb[0].mxu0
        %v9759 = vadd.f32 0.0, %v9758
        %v9760 = vpop.f32.mrb[0].mxu0
        %9761 = vmatprep.mubr.bf16.mxu0 %v7732
        %9762 = vmatmul.mubr.bf16.gmra.mrb[0].mxu0 %v7731
        %v9763 = vpop.f32.mrb[0].mxu0
        %v9764 = vadd.f32 0.0, %v9763
        %v9765 = vpop.f32.mrb[0].mxu0
        %v9766 = vpop.f32.mrb[0].mxu0
        %v9767 = vadd.f32 0.0, %v9766
        %v9768 = vpop.f32.mrb[0].mxu0
        %9769 = vdwg.mxu0
        %v9770 = vadd.f32 %v9448, %v9644
        %v9771 = vadd.f32 %v9449, %v9647
        %v9772 = vadd.f32 %v9450, %v9652
        %v9773 = vadd.f32 %v9451, %v9655
        %v9774 = vadd.f32 %v9452, %v9660
        %v9775 = vadd.f32 %v9453, %v9663
        %v9776 = vadd.f32 %v9454, %v9668
        %v9777 = vadd.f32 %v9455, %v9671
        %v9778 = vadd.f32 %v9456, %v9676
        %v9779 = vadd.f32 %v9457, %v9679
        %v9780 = vadd.f32 %v9458, %v9684
        %v9781 = vadd.f32 %v9459, %v9687
        %v9782 = vadd.f32 %v9460, %v9692
        %v9783 = vadd.f32 %v9461, %v9695
        %v9784 = vadd.f32 %v9462, %v9700
        %v9785 = vadd.f32 %v9463, %v9703
        %v9786 = vadd.f32 %v9464, %v9708
        %v9787 = vadd.f32 %v9465, %v9711
        %v9788 = vadd.f32 %v9466, %v9716
        %v9789 = vadd.f32 %v9467, %v9719
        %v9790 = vadd.f32 %v9468, %v9724
        %v9791 = vadd.f32 %v9469, %v9727
        %v9792 = vadd.f32 %v9470, %v9732
        %v9793 = vadd.f32 %v9471, %v9735
        %v9794 = vadd.f32 %v9472, %v9740
        %v9795 = vadd.f32 %v9473, %v9743
        %v9796 = vadd.f32 %v9474, %v9748
        %v9797 = vadd.f32 %v9475, %v9751
        %v9798 = vadd.f32 %v9476, %v9756
        %v9799 = vadd.f32 %v9477, %v9759
        %v9800 = vadd.f32 %v9478, %v9764
        %v9801 = vadd.f32 %v9479, %v9767
        %s9802 = scalar_lea.vmem %s3, 640
        %v9803 = vld [vmem:[%s9802] sm:$0xf]
        %v9804 = vld [vmem:[%s9802 + $0x4] sm:$0xf]
        %v9805 = vld [vmem:[%s9802 + $0x8] sm:$0xf]
        %v9806 = vld [vmem:[%s9802 + $0xc] sm:$0xf]
        %v9807 = vld [vmem:[%s9802 + $0x10] sm:$0xf]
        %v9808 = vld [vmem:[%s9802 + $0x14] sm:$0xf]
        %v9809 = vld [vmem:[%s9802 + $0x18] sm:$0xf]
        %v9810 = vld [vmem:[%s9802 + $0x1c] sm:$0xf]
        %v9811 = vld [vmem:[%s9802 + $0x20] sm:$0xf]
        %v9812 = vld [vmem:[%s9802 + $0x24] sm:$0xf]
        %v9813 = vld [vmem:[%s9802 + $0x28] sm:$0xf]
        %v9814 = vld [vmem:[%s9802 + $0x2c] sm:$0xf]
        %v9815 = vld [vmem:[%s9802 + $0x30] sm:$0xf]
        %v9816 = vld [vmem:[%s9802 + $0x34] sm:$0xf]
        %v9817 = vld [vmem:[%s9802 + $0x38] sm:$0xf]
        %v9818 = vld [vmem:[%s9802 + $0x3c] sm:$0xf]
        %v9819 = vld [vmem:[%s9802 + $0x40] sm:$0xf]
        %v9820 = vld [vmem:[%s9802 + $0x44] sm:$0xf]
        %v9821 = vld [vmem:[%s9802 + $0x48] sm:$0xf]
        %v9822 = vld [vmem:[%s9802 + $0x4c] sm:$0xf]
        %v9823 = vld [vmem:[%s9802 + $0x50] sm:$0xf]
        %v9824 = vld [vmem:[%s9802 + $0x54] sm:$0xf]
        %v9825 = vld [vmem:[%s9802 + $0x58] sm:$0xf]
        %v9826 = vld [vmem:[%s9802 + $0x5c] sm:$0xf]
        %v9827 = vld [vmem:[%s9802 + $0x60] sm:$0xf]
        %v9828 = vld [vmem:[%s9802 + $0x64] sm:$0xf]
        %v9829 = vld [vmem:[%s9802 + $0x68] sm:$0xf]
        %v9830 = vld [vmem:[%s9802 + $0x6c] sm:$0xf]
        %v9831 = vld [vmem:[%s9802 + $0x70] sm:$0xf]
        %v9832 = vld [vmem:[%s9802 + $0x74] sm:$0xf]
        %v9833 = vld [vmem:[%s9802 + $0x78] sm:$0xf]
        %v9834 = vld [vmem:[%s9802 + $0x7c] sm:$0xf]
        %v9867 = vunpack.c.l.b16 %v9803
        %v9868 = vunpack.c.l.b16 %v9804
        %v9869 = vunpack.c.l.b16 %v9805
        %v9870 = vunpack.c.l.b16 %v9806
        %v9871 = vunpack.c.l.b16 %v9807
        %v9872 = vunpack.c.l.b16 %v9808
        %v9873 = vunpack.c.l.b16 %v9809
        %v9874 = vunpack.c.l.b16 %v9810
        %v9875 = vunpack.c.l.b16 %v9811
        %v9876 = vunpack.c.l.b16 %v9812
        %v9877 = vunpack.c.l.b16 %v9813
        %v9878 = vunpack.c.l.b16 %v9814
        %v9879 = vunpack.c.l.b16 %v9815
        %v9880 = vunpack.c.l.b16 %v9816
        %v9881 = vunpack.c.l.b16 %v9817
        %v9882 = vunpack.c.l.b16 %v9818
        %v9883 = vunpack.c.l.b16 %v9819
        %v9884 = vunpack.c.l.b16 %v9820
        %v9885 = vunpack.c.l.b16 %v9821
        %v9886 = vunpack.c.l.b16 %v9822
        %v9887 = vunpack.c.l.b16 %v9823
        %v9888 = vunpack.c.l.b16 %v9824
        %v9889 = vunpack.c.l.b16 %v9825
        %v9890 = vunpack.c.l.b16 %v9826
        %v9891 = vunpack.c.l.b16 %v9827
        %v9892 = vunpack.c.l.b16 %v9828
        %v9893 = vunpack.c.l.b16 %v9829
        %v9894 = vunpack.c.l.b16 %v9830
        %v9895 = vunpack.c.l.b16 %v9831
        %v9896 = vunpack.c.l.b16 %v9832
        %v9897 = vunpack.c.l.b16 %v9833
        %v9898 = vunpack.c.l.b16 %v9834
        %v9899 = vpack.c.b16 %v9868, %v9867
        %v9900 = vpack.c.b16 %v9870, %v9869
        %v9901 = vpack.c.b16 %v9872, %v9871
        %v9902 = vpack.c.b16 %v9874, %v9873
        %v9903 = vpack.c.b16 %v9876, %v9875
        %v9904 = vpack.c.b16 %v9878, %v9877
        %v9905 = vpack.c.b16 %v9880, %v9879
        %v9906 = vpack.c.b16 %v9882, %v9881
        %v9907 = vpack.c.b16 %v9884, %v9883
        %v9908 = vpack.c.b16 %v9886, %v9885
        %v9909 = vpack.c.b16 %v9888, %v9887
        %v9910 = vpack.c.b16 %v9890, %v9889
        %v9911 = vpack.c.b16 %v9892, %v9891
        %v9912 = vpack.c.b16 %v9894, %v9893
        %v9913 = vpack.c.b16 %v9896, %v9895
        %v9914 = vpack.c.b16 %v9898, %v9897
        %9931 = vmatprep.subr.bf16.mxu0 0
        %9932 = vmatpush1.bf16.msra.mxu0 %v9899
        %9933 = vmatprep.subr.bf16.mxu0 0
        %9934 = vmatpush1.bf16.msra.mxu0 %v9900
        %9935 = vmatprep.subr.bf16.mxu0 0
        %9936 = vmatpush1.bf16.msra.mxu0 %v9901
        %9937 = vmatprep.subr.bf16.mxu0 0
        %9938 = vmatpush1.bf16.msra.mxu0 %v9902
        %9939 = vmatprep.subr.bf16.mxu0 0
        %9940 = vmatpush1.bf16.msra.mxu0 %v9903
        %9941 = vmatprep.subr.bf16.mxu0 0
        %9942 = vmatpush1.bf16.msra.mxu0 %v9904
        %9943 = vmatprep.subr.bf16.mxu0 0
        %9944 = vmatpush1.bf16.msra.mxu0 %v9905
        %9945 = vmatprep.subr.bf16.mxu0 0
        %9946 = vmatpush1.bf16.msra.mxu0 %v9906
        %9947 = vmatprep.subr.bf16.mxu0 0
        %9948 = vmatpush1.bf16.msra.mxu0 %v9907
        %9949 = vmatprep.subr.bf16.mxu0 0
        %9950 = vmatpush1.bf16.msra.mxu0 %v9908
        %9951 = vmatprep.subr.bf16.mxu0 0
        %9952 = vmatpush1.bf16.msra.mxu0 %v9909
        %9953 = vmatprep.subr.bf16.mxu0 0
        %9954 = vmatpush1.bf16.msra.mxu0 %v9910
        %9955 = vmatprep.subr.bf16.mxu0 0
        %9956 = vmatpush1.bf16.msra.mxu0 %v9911
        %9957 = vmatprep.subr.bf16.mxu0 0
        %9958 = vmatpush1.bf16.msra.mxu0 %v9912
        %9959 = vmatprep.subr.bf16.mxu0 0
        %9960 = vmatpush1.bf16.msra.mxu0 %v9913
        %9961 = vmatprep.subr.bf16.mxu0 0
        %9962 = vmatpush1.bf16.msra.mxu0 %v9914
        %9963 = vmatprep.mubr.bf16.mxu0 %v8116
        %9964 = vmatmul.mubr.bf16.gmra.mrb[0].mxu0 %v8113
        %v9965 = vpop.f32.mrb[0].mxu0
        %v9966 = vadd.f32 0.0, %v9965
        %v9967 = vpop.f32.mrb[0].mxu0
        %v9968 = vpop.f32.mrb[0].mxu0
        %v9969 = vadd.f32 0.0, %v9968
        %v9970 = vpop.f32.mrb[0].mxu0
        %9971 = vmatprep.mubr.bf16.mxu0 %v8122
        %9972 = vmatmul.mubr.bf16.gmra.mrb[0].mxu0 %v8119
        %v9973 = vpop.f32.mrb[0].mxu0
        %v9974 = vadd.f32 0.0, %v9973
        %v9975 = vpop.f32.mrb[0].mxu0
        %v9976 = vpop.f32.mrb[0].mxu0
        %v9977 = vadd.f32 0.0, %v9976
        %v9978 = vpop.f32.mrb[0].mxu0
        %9979 = vmatprep.mubr.bf16.mxu0 %v8128
        %9980 = vmatmul.mubr.bf16.gmra.mrb[0].mxu0 %v8125
        %v9981 = vpop.f32.mrb[0].mxu0
        %v9982 = vadd.f32 0.0, %v9981
        %v9983 = vpop.f32.mrb[0].mxu0
        %v9984 = vpop.f32.mrb[0].mxu0
        %v9985 = vadd.f32 0.0, %v9984
        %v9986 = vpop.f32.mrb[0].mxu0
        %9987 = vmatprep.mubr.bf16.mxu0 %v8134
        %9988 = vmatmul.mubr.bf16.gmra.mrb[0].mxu0 %v8131
        %v9989 = vpop.f32.mrb[0].mxu0
        %v9990 = vadd.f32 0.0, %v9989
        %v9991 = vpop.f32.mrb[0].mxu0
        %v9992 = vpop.f32.mrb[0].mxu0
        %v9993 = vadd.f32 0.0, %v9992
        %v9994 = vpop.f32.mrb[0].mxu0
        %9995 = vmatprep.mubr.bf16.mxu0 %v8140
        %9996 = vmatmul.mubr.bf16.gmra.mrb[0].mxu0 %v8137
        %v9997 = vpop.f32.mrb[0].mxu0
        %v9998 = vadd.f32 0.0, %v9997
        %v9999 = vpop.f32.mrb[0].mxu0
        %v10000 = vpop.f32.mrb[0].mxu0
        %v10001 = vadd.f32 0.0, %v10000
        %v10002 = vpop.f32.mrb[0].mxu0
        %10003 = vmatprep.mubr.bf16.mxu0 %v8146
        %10004 = vmatmul.mubr.bf16.gmra.mrb[0].mxu0 %v8143
        %v10005 = vpop.f32.mrb[0].mxu0
        %v10006 = vadd.f32 0.0, %v10005
        %v10007 = vpop.f32.mrb[0].mxu0
        %v10008 = vpop.f32.mrb[0].mxu0
        %v10009 = vadd.f32 0.0, %v10008
        %v10010 = vpop.f32.mrb[0].mxu0
        %10011 = vmatprep.mubr.bf16.mxu0 %v8152
        %10012 = vmatmul.mubr.bf16.gmra.mrb[0].mxu0 %v8149
        %v10013 = vpop.f32.mrb[0].mxu0
        %v10014 = vadd.f32 0.0, %v10013
        %v10015 = vpop.f32.mrb[0].mxu0
        %v10016 = vpop.f32.mrb[0].mxu0
        %v10017 = vadd.f32 0.0, %v10016
        %v10018 = vpop.f32.mrb[0].mxu0
        %10019 = vmatprep.mubr.bf16.mxu0 %v8158
        %10020 = vmatmul.mubr.bf16.gmra.mrb[0].mxu0 %v8155
        %v10021 = vpop.f32.mrb[0].mxu0
        %v10022 = vadd.f32 0.0, %v10021
        %v10023 = vpop.f32.mrb[0].mxu0
        %v10024 = vpop.f32.mrb[0].mxu0
        %v10025 = vadd.f32 0.0, %v10024
        %v10026 = vpop.f32.mrb[0].mxu0
        %10027 = vmatprep.mubr.bf16.mxu0 %v8164
        %10028 = vmatmul.mubr.bf16.gmra.mrb[0].mxu0 %v8161
        %v10029 = vpop.f32.mrb[0].mxu0
        %v10030 = vadd.f32 0.0, %v10029
        %v10031 = vpop.f32.mrb[0].mxu0
        %v10032 = vpop.f32.mrb[0].mxu0
        %v10033 = vadd.f32 0.0, %v10032
        %v10034 = vpop.f32.mrb[0].mxu0
        %10035 = vmatprep.mubr.bf16.mxu0 %v8170
        %10036 = vmatmul.mubr.bf16.gmra.mrb[0].mxu0 %v8167
        %v10037 = vpop.f32.mrb[0].mxu0
        %v10038 = vadd.f32 0.0, %v10037
        %v10039 = vpop.f32.mrb[0].mxu0
        %v10040 = vpop.f32.mrb[0].mxu0
        %v10041 = vadd.f32 0.0, %v10040
        %v10042 = vpop.f32.mrb[0].mxu0
        %10043 = vmatprep.mubr.bf16.mxu0 %v8176
        %10044 = vmatmul.mubr.bf16.gmra.mrb[0].mxu0 %v8173
        %v10045 = vpop.f32.mrb[0].mxu0
        %v10046 = vadd.f32 0.0, %v10045
        %v10047 = vpop.f32.mrb[0].mxu0
        %v10048 = vpop.f32.mrb[0].mxu0
        %v10049 = vadd.f32 0.0, %v10048
        %v10050 = vpop.f32.mrb[0].mxu0
        %10051 = vmatprep.mubr.bf16.mxu0 %v8182
        %10052 = vmatmul.mubr.bf16.gmra.mrb[0].mxu0 %v8179
        %v10053 = vpop.f32.mrb[0].mxu0
        %v10054 = vadd.f32 0.0, %v10053
        %v10055 = vpop.f32.mrb[0].mxu0
        %v10056 = vpop.f32.mrb[0].mxu0
        %v10057 = vadd.f32 0.0, %v10056
        %v10058 = vpop.f32.mrb[0].mxu0
        %10059 = vmatprep.mubr.bf16.mxu0 %v8188
        %10060 = vmatmul.mubr.bf16.gmra.mrb[0].mxu0 %v8185
        %v10061 = vpop.f32.mrb[0].mxu0
        %v10062 = vadd.f32 0.0, %v10061
        %v10063 = vpop.f32.mrb[0].mxu0
        %v10064 = vpop.f32.mrb[0].mxu0
        %v10065 = vadd.f32 0.0, %v10064
        %v10066 = vpop.f32.mrb[0].mxu0
        %10067 = vmatprep.mubr.bf16.mxu0 %v8194
        %10068 = vmatmul.mubr.bf16.gmra.mrb[0].mxu0 %v8191
        %v10069 = vpop.f32.mrb[0].mxu0
        %v10070 = vadd.f32 0.0, %v10069
        %v10071 = vpop.f32.mrb[0].mxu0
        %v10072 = vpop.f32.mrb[0].mxu0
        %v10073 = vadd.f32 0.0, %v10072
        %v10074 = vpop.f32.mrb[0].mxu0
        %10075 = vmatprep.mubr.bf16.mxu0 %v8200
        %10076 = vmatmul.mubr.bf16.gmra.mrb[0].mxu0 %v8197
        %v10077 = vpop.f32.mrb[0].mxu0
        %v10078 = vadd.f32 0.0, %v10077
        %v10079 = vpop.f32.mrb[0].mxu0
        %v10080 = vpop.f32.mrb[0].mxu0
        %v10081 = vadd.f32 0.0, %v10080
        %v10082 = vpop.f32.mrb[0].mxu0
        %10083 = vmatprep.mubr.bf16.mxu0 %v8206
        %10084 = vmatmul.mubr.bf16.gmra.mrb[0].mxu0 %v8203
        %v10085 = vpop.f32.mrb[0].mxu0
        %v10086 = vadd.f32 0.0, %v10085
        %v10087 = vpop.f32.mrb[0].mxu0
        %v10088 = vpop.f32.mrb[0].mxu0
        %v10089 = vadd.f32 0.0, %v10088
        %v10090 = vpop.f32.mrb[0].mxu0
        %10091 = vdwg.mxu0
        %v10092 = vadd.f32 %v9770, %v9966
        %v10093 = vadd.f32 %v9771, %v9969
        %v10094 = vadd.f32 %v9772, %v9974
        %v10095 = vadd.f32 %v9773, %v9977
        %v10096 = vadd.f32 %v9774, %v9982
        %v10097 = vadd.f32 %v9775, %v9985
        %v10098 = vadd.f32 %v9776, %v9990
        %v10099 = vadd.f32 %v9777, %v9993
        %v10100 = vadd.f32 %v9778, %v9998
        %v10101 = vadd.f32 %v9779, %v10001
        %v10102 = vadd.f32 %v9780, %v10006
        %v10103 = vadd.f32 %v9781, %v10009
        %v10104 = vadd.f32 %v9782, %v10014
        %v10105 = vadd.f32 %v9783, %v10017
        %v10106 = vadd.f32 %v9784, %v10022
        %v10107 = vadd.f32 %v9785, %v10025
        %v10108 = vadd.f32 %v9786, %v10030
        %v10109 = vadd.f32 %v9787, %v10033
        %v10110 = vadd.f32 %v9788, %v10038
        %v10111 = vadd.f32 %v9789, %v10041
        %v10112 = vadd.f32 %v9790, %v10046
        %v10113 = vadd.f32 %v9791, %v10049
        %v10114 = vadd.f32 %v9792, %v10054
        %v10115 = vadd.f32 %v9793, %v10057
        %v10116 = vadd.f32 %v9794, %v10062
        %v10117 = vadd.f32 %v9795, %v10065
        %v10118 = vadd.f32 %v9796, %v10070
        %v10119 = vadd.f32 %v9797, %v10073
        %v10120 = vadd.f32 %v9798, %v10078
        %v10121 = vadd.f32 %v9799, %v10081
        %v10122 = vadd.f32 %v9800, %v10086
        %v10123 = vadd.f32 %v9801, %v10089
        %s10124 = scalar_lea.vmem %s3, 768
        %v10125 = vld [vmem:[%s10124] sm:$0xf]
        %v10126 = vld [vmem:[%s10124 + $0x4] sm:$0xf]
        %v10127 = vld [vmem:[%s10124 + $0x8] sm:$0xf]
        %v10128 = vld [vmem:[%s10124 + $0xc] sm:$0xf]
        %v10129 = vld [vmem:[%s10124 + $0x10] sm:$0xf]
        %v10130 = vld [vmem:[%s10124 + $0x14] sm:$0xf]
        %v10131 = vld [vmem:[%s10124 + $0x18] sm:$0xf]
        %v10132 = vld [vmem:[%s10124 + $0x1c] sm:$0xf]
        %v10133 = vld [vmem:[%s10124 + $0x20] sm:$0xf]
        %v10134 = vld [vmem:[%s10124 + $0x24] sm:$0xf]
        %v10135 = vld [vmem:[%s10124 + $0x28] sm:$0xf]
        %v10136 = vld [vmem:[%s10124 + $0x2c] sm:$0xf]
        %v10137 = vld [vmem:[%s10124 + $0x30] sm:$0xf]
        %v10138 = vld [vmem:[%s10124 + $0x34] sm:$0xf]
        %v10139 = vld [vmem:[%s10124 + $0x38] sm:$0xf]
        %v10140 = vld [vmem:[%s10124 + $0x3c] sm:$0xf]
        %v10141 = vld [vmem:[%s10124 + $0x40] sm:$0xf]
        %v10142 = vld [vmem:[%s10124 + $0x44] sm:$0xf]
        %v10143 = vld [vmem:[%s10124 + $0x48] sm:$0xf]
        %v10144 = vld [vmem:[%s10124 + $0x4c] sm:$0xf]
        %v10145 = vld [vmem:[%s10124 + $0x50] sm:$0xf]
        %v10146 = vld [vmem:[%s10124 + $0x54] sm:$0xf]
        %v10147 = vld [vmem:[%s10124 + $0x58] sm:$0xf]
        %v10148 = vld [vmem:[%s10124 + $0x5c] sm:$0xf]
        %v10149 = vld [vmem:[%s10124 + $0x60] sm:$0xf]
        %v10150 = vld [vmem:[%s10124 + $0x64] sm:$0xf]
        %v10151 = vld [vmem:[%s10124 + $0x68] sm:$0xf]
        %v10152 = vld [vmem:[%s10124 + $0x6c] sm:$0xf]
        %v10153 = vld [vmem:[%s10124 + $0x70] sm:$0xf]
        %v10154 = vld [vmem:[%s10124 + $0x74] sm:$0xf]
        %v10155 = vld [vmem:[%s10124 + $0x78] sm:$0xf]
        %v10156 = vld [vmem:[%s10124 + $0x7c] sm:$0xf]
        %v10189 = vunpack.c.l.b16 %v10125
        %v10190 = vunpack.c.l.b16 %v10126
        %v10191 = vunpack.c.l.b16 %v10127
        %v10192 = vunpack.c.l.b16 %v10128
        %v10193 = vunpack.c.l.b16 %v10129
        %v10194 = vunpack.c.l.b16 %v10130
        %v10195 = vunpack.c.l.b16 %v10131
        %v10196 = vunpack.c.l.b16 %v10132
        %v10197 = vunpack.c.l.b16 %v10133
        %v10198 = vunpack.c.l.b16 %v10134
        %v10199 = vunpack.c.l.b16 %v10135
        %v10200 = vunpack.c.l.b16 %v10136
        %v10201 = vunpack.c.l.b16 %v10137
        %v10202 = vunpack.c.l.b16 %v10138
        %v10203 = vunpack.c.l.b16 %v10139
        %v10204 = vunpack.c.l.b16 %v10140
        %v10205 = vunpack.c.l.b16 %v10141
        %v10206 = vunpack.c.l.b16 %v10142
        %v10207 = vunpack.c.l.b16 %v10143
        %v10208 = vunpack.c.l.b16 %v10144
        %v10209 = vunpack.c.l.b16 %v10145
        %v10210 = vunpack.c.l.b16 %v10146
        %v10211 = vunpack.c.l.b16 %v10147
        %v10212 = vunpack.c.l.b16 %v10148
        %v10213 = vunpack.c.l.b16 %v10149
        %v10214 = vunpack.c.l.b16 %v10150
        %v10215 = vunpack.c.l.b16 %v10151
        %v10216 = vunpack.c.l.b16 %v10152
        %v10217 = vunpack.c.l.b16 %v10153
        %v10218 = vunpack.c.l.b16 %v10154
        %v10219 = vunpack.c.l.b16 %v10155
        %v10220 = vunpack.c.l.b16 %v10156
        %v10221 = vpack.c.b16 %v10190, %v10189
        %v10222 = vpack.c.b16 %v10192, %v10191
        %v10223 = vpack.c.b16 %v10194, %v10193
        %v10224 = vpack.c.b16 %v10196, %v10195
        %v10225 = vpack.c.b16 %v10198, %v10197
        %v10226 = vpack.c.b16 %v10200, %v10199
        %v10227 = vpack.c.b16 %v10202, %v10201
        %v10228 = vpack.c.b16 %v10204, %v10203
        %v10229 = vpack.c.b16 %v10206, %v10205
        %v10230 = vpack.c.b16 %v10208, %v10207
        %v10231 = vpack.c.b16 %v10210, %v10209
        %v10232 = vpack.c.b16 %v10212, %v10211
        %v10233 = vpack.c.b16 %v10214, %v10213
        %v10234 = vpack.c.b16 %v10216, %v10215
        %v10235 = vpack.c.b16 %v10218, %v10217
        %v10236 = vpack.c.b16 %v10220, %v10219
        %10253 = vmatprep.subr.bf16.mxu0 0
        %10254 = vmatpush1.bf16.msra.mxu0 %v10221
        %10255 = vmatprep.subr.bf16.mxu0 0
        %10256 = vmatpush1.bf16.msra.mxu0 %v10222
        %10257 = vmatprep.subr.bf16.mxu0 0
        %10258 = vmatpush1.bf16.msra.mxu0 %v10223
        %10259 = vmatprep.subr.bf16.mxu0 0
        %10260 = vmatpush1.bf16.msra.mxu0 %v10224
        %10261 = vmatprep.subr.bf16.mxu0 0
        %10262 = vmatpush1.bf16.msra.mxu0 %v10225
        %10263 = vmatprep.subr.bf16.mxu0 0
        %10264 = vmatpush1.bf16.msra.mxu0 %v10226
        %10265 = vmatprep.subr.bf16.mxu0 0
        %10266 = vmatpush1.bf16.msra.mxu0 %v10227
        %10267 = vmatprep.subr.bf16.mxu0 0
        %10268 = vmatpush1.bf16.msra.mxu0 %v10228
        %10269 = vmatprep.subr.bf16.mxu0 0
        %10270 = vmatpush1.bf16.msra.mxu0 %v10229
        %10271 = vmatprep.subr.bf16.mxu0 0
        %10272 = vmatpush1.bf16.msra.mxu0 %v10230
        %10273 = vmatprep.subr.bf16.mxu0 0
        %10274 = vmatpush1.bf16.msra.mxu0 %v10231
        %10275 = vmatprep.subr.bf16.mxu0 0
        %10276 = vmatpush1.bf16.msra.mxu0 %v10232
        %10277 = vmatprep.subr.bf16.mxu0 0
        %10278 = vmatpush1.bf16.msra.mxu0 %v10233
        %10279 = vmatprep.subr.bf16.mxu0 0
        %10280 = vmatpush1.bf16.msra.mxu0 %v10234
        %10281 = vmatprep.subr.bf16.mxu0 0
        %10282 = vmatpush1.bf16.msra.mxu0 %v10235
        %10283 = vmatprep.subr.bf16.mxu0 0
        %10284 = vmatpush1.bf16.msra.mxu0 %v10236
        %10285 = vmatprep.mubr.bf16.mxu0 %v7814
        %10286 = vmatmul.mubr.bf16.gmra.mrb[0].mxu0 %v7806
        %v10287 = vpop.f32.mrb[0].mxu0
        %v10288 = vadd.f32 0.0, %v10287
        %v10289 = vpop.f32.mrb[0].mxu0
        %v10290 = vpop.f32.mrb[0].mxu0
        %v10291 = vadd.f32 0.0, %v10290
        %v10292 = vpop.f32.mrb[0].mxu0
        %10293 = vmatprep.mubr.bf16.mxu0 %v7830
        %10294 = vmatmul.mubr.bf16.gmra.mrb[0].mxu0 %v7822
        %v10295 = vpop.f32.mrb[0].mxu0
        %v10296 = vadd.f32 0.0, %v10295
        %v10297 = vpop.f32.mrb[0].mxu0
        %v10298 = vpop.f32.mrb[0].mxu0
        %v10299 = vadd.f32 0.0, %v10298
        %v10300 = vpop.f32.mrb[0].mxu0
        %10301 = vmatprep.mubr.bf16.mxu0 %v7846
        %10302 = vmatmul.mubr.bf16.gmra.mrb[0].mxu0 %v7838
        %v10303 = vpop.f32.mrb[0].mxu0
        %v10304 = vadd.f32 0.0, %v10303
        %v10305 = vpop.f32.mrb[0].mxu0
        %v10306 = vpop.f32.mrb[0].mxu0
        %v10307 = vadd.f32 0.0, %v10306
        %v10308 = vpop.f32.mrb[0].mxu0
        %10309 = vmatprep.mubr.bf16.mxu0 %v7862
        %10310 = vmatmul.mubr.bf16.gmra.mrb[0].mxu0 %v7854
        %v10311 = vpop.f32.mrb[0].mxu0
        %v10312 = vadd.f32 0.0, %v10311
        %v10313 = vpop.f32.mrb[0].mxu0
        %v10314 = vpop.f32.mrb[0].mxu0
        %v10315 = vadd.f32 0.0, %v10314
        %v10316 = vpop.f32.mrb[0].mxu0
        %10317 = vmatprep.mubr.bf16.mxu0 %v7878
        %10318 = vmatmul.mubr.bf16.gmra.mrb[0].mxu0 %v7870
        %v10319 = vpop.f32.mrb[0].mxu0
        %v10320 = vadd.f32 0.0, %v10319
        %v10321 = vpop.f32.mrb[0].mxu0
        %v10322 = vpop.f32.mrb[0].mxu0
        %v10323 = vadd.f32 0.0, %v10322
        %v10324 = vpop.f32.mrb[0].mxu0
        %10325 = vmatprep.mubr.bf16.mxu0 %v7894
        %10326 = vmatmul.mubr.bf16.gmra.mrb[0].mxu0 %v7886
        %v10327 = vpop.f32.mrb[0].mxu0
        %v10328 = vadd.f32 0.0, %v10327
        %v10329 = vpop.f32.mrb[0].mxu0
        %v10330 = vpop.f32.mrb[0].mxu0
        %v10331 = vadd.f32 0.0, %v10330
        %v10332 = vpop.f32.mrb[0].mxu0
        %10333 = vmatprep.mubr.bf16.mxu0 %v7910
        %10334 = vmatmul.mubr.bf16.gmra.mrb[0].mxu0 %v7902
        %v10335 = vpop.f32.mrb[0].mxu0
        %v10336 = vadd.f32 0.0, %v10335
        %v10337 = vpop.f32.mrb[0].mxu0
        %v10338 = vpop.f32.mrb[0].mxu0
        %v10339 = vadd.f32 0.0, %v10338
        %v10340 = vpop.f32.mrb[0].mxu0
        %10341 = vmatprep.mubr.bf16.mxu0 %v7926
        %10342 = vmatmul.mubr.bf16.gmra.mrb[0].mxu0 %v7918
        %v10343 = vpop.f32.mrb[0].mxu0
        %v10344 = vadd.f32 0.0, %v10343
        %v10345 = vpop.f32.mrb[0].mxu0
        %v10346 = vpop.f32.mrb[0].mxu0
        %v10347 = vadd.f32 0.0, %v10346
        %v10348 = vpop.f32.mrb[0].mxu0
        %10349 = vmatprep.mubr.bf16.mxu0 %v7942
        %10350 = vmatmul.mubr.bf16.gmra.mrb[0].mxu0 %v7934
        %v10351 = vpop.f32.mrb[0].mxu0
        %v10352 = vadd.f32 0.0, %v10351
        %v10353 = vpop.f32.mrb[0].mxu0
        %v10354 = vpop.f32.mrb[0].mxu0
        %v10355 = vadd.f32 0.0, %v10354
        %v10356 = vpop.f32.mrb[0].mxu0
        %10357 = vmatprep.mubr.bf16.mxu0 %v7958
        %10358 = vmatmul.mubr.bf16.gmra.mrb[0].mxu0 %v7950
        %v10359 = vpop.f32.mrb[0].mxu0
        %v10360 = vadd.f32 0.0, %v10359
        %v10361 = vpop.f32.mrb[0].mxu0
        %v10362 = vpop.f32.mrb[0].mxu0
        %v10363 = vadd.f32 0.0, %v10362
        %v10364 = vpop.f32.mrb[0].mxu0
        %10365 = vmatprep.mubr.bf16.mxu0 %v7974
        %10366 = vmatmul.mubr.bf16.gmra.mrb[0].mxu0 %v7966
        %v10367 = vpop.f32.mrb[0].mxu0
        %v10368 = vadd.f32 0.0, %v10367
        %v10369 = vpop.f32.mrb[0].mxu0
        %v10370 = vpop.f32.mrb[0].mxu0
        %v10371 = vadd.f32 0.0, %v10370
        %v10372 = vpop.f32.mrb[0].mxu0
        %10373 = vmatprep.mubr.bf16.mxu0 %v7990
        %10374 = vmatmul.mubr.bf16.gmra.mrb[0].mxu0 %v7982
        %v10375 = vpop.f32.mrb[0].mxu0
        %v10376 = vadd.f32 0.0, %v10375
        %v10377 = vpop.f32.mrb[0].mxu0
        %v10378 = vpop.f32.mrb[0].mxu0
        %v10379 = vadd.f32 0.0, %v10378
        %v10380 = vpop.f32.mrb[0].mxu0
        %10381 = vmatprep.mubr.bf16.mxu0 %v8006
        %10382 = vmatmul.mubr.bf16.gmra.mrb[0].mxu0 %v7998
        %v10383 = vpop.f32.mrb[0].mxu0
        %v10384 = vadd.f32 0.0, %v10383
        %v10385 = vpop.f32.mrb[0].mxu0
        %v10386 = vpop.f32.mrb[0].mxu0
        %v10387 = vadd.f32 0.0, %v10386
        %v10388 = vpop.f32.mrb[0].mxu0
        %10389 = vmatprep.mubr.bf16.mxu0 %v8022
        %10390 = vmatmul.mubr.bf16.gmra.mrb[0].mxu0 %v8014
        %v10391 = vpop.f32.mrb[0].mxu0
        %v10392 = vadd.f32 0.0, %v10391
        %v10393 = vpop.f32.mrb[0].mxu0
        %v10394 = vpop.f32.mrb[0].mxu0
        %v10395 = vadd.f32 0.0, %v10394
        %v10396 = vpop.f32.mrb[0].mxu0
        %10397 = vmatprep.mubr.bf16.mxu0 %v8038
        %10398 = vmatmul.mubr.bf16.gmra.mrb[0].mxu0 %v8030
        %v10399 = vpop.f32.mrb[0].mxu0
        %v10400 = vadd.f32 0.0, %v10399
        %v10401 = vpop.f32.mrb[0].mxu0
        %v10402 = vpop.f32.mrb[0].mxu0
        %v10403 = vadd.f32 0.0, %v10402
        %v10404 = vpop.f32.mrb[0].mxu0
        %10405 = vmatprep.mubr.bf16.mxu0 %v8054
        %10406 = vmatmul.mubr.bf16.gmra.mrb[0].mxu0 %v8046
        %v10407 = vpop.f32.mrb[0].mxu0
        %v10408 = vadd.f32 0.0, %v10407
        %v10409 = vpop.f32.mrb[0].mxu0
        %v10410 = vpop.f32.mrb[0].mxu0
        %v10411 = vadd.f32 0.0, %v10410
        %v10412 = vpop.f32.mrb[0].mxu0
        %10413 = vdwg.mxu0
        %v10414 = vadd.f32 %v10092, %v10288
        %v10415 = vadd.f32 %v10093, %v10291
        %v10416 = vadd.f32 %v10094, %v10296
        %v10417 = vadd.f32 %v10095, %v10299
        %v10418 = vadd.f32 %v10096, %v10304
        %v10419 = vadd.f32 %v10097, %v10307
        %v10420 = vadd.f32 %v10098, %v10312
        %v10421 = vadd.f32 %v10099, %v10315
        %v10422 = vadd.f32 %v10100, %v10320
        %v10423 = vadd.f32 %v10101, %v10323
        %v10424 = vadd.f32 %v10102, %v10328
        %v10425 = vadd.f32 %v10103, %v10331
        %v10426 = vadd.f32 %v10104, %v10336
        %v10427 = vadd.f32 %v10105, %v10339
        %v10428 = vadd.f32 %v10106, %v10344
        %v10429 = vadd.f32 %v10107, %v10347
        %v10430 = vadd.f32 %v10108, %v10352
        %v10431 = vadd.f32 %v10109, %v10355
        %v10432 = vadd.f32 %v10110, %v10360
        %v10433 = vadd.f32 %v10111, %v10363
        %v10434 = vadd.f32 %v10112, %v10368
        %v10435 = vadd.f32 %v10113, %v10371
        %v10436 = vadd.f32 %v10114, %v10376
        %v10437 = vadd.f32 %v10115, %v10379
        %v10438 = vadd.f32 %v10116, %v10384
        %v10439 = vadd.f32 %v10117, %v10387
        %v10440 = vadd.f32 %v10118, %v10392
        %v10441 = vadd.f32 %v10119, %v10395
        %v10442 = vadd.f32 %v10120, %v10400
        %v10443 = vadd.f32 %v10121, %v10403
        %v10444 = vadd.f32 %v10122, %v10408
        %v10445 = vadd.f32 %v10123, %v10411
        %s10446 = scalar_lea.vmem %s3, 896
        %v10447 = vld [vmem:[%s10446] sm:$0xf]
        %v10448 = vld [vmem:[%s10446 + $0x4] sm:$0xf]
        %v10449 = vld [vmem:[%s10446 + $0x8] sm:$0xf]
        %v10450 = vld [vmem:[%s10446 + $0xc] sm:$0xf]
        %v10451 = vld [vmem:[%s10446 + $0x10] sm:$0xf]
        %v10452 = vld [vmem:[%s10446 + $0x14] sm:$0xf]
        %v10453 = vld [vmem:[%s10446 + $0x18] sm:$0xf]
        %v10454 = vld [vmem:[%s10446 + $0x1c] sm:$0xf]
        %v10455 = vld [vmem:[%s10446 + $0x20] sm:$0xf]
        %v10456 = vld [vmem:[%s10446 + $0x24] sm:$0xf]
        %v10457 = vld [vmem:[%s10446 + $0x28] sm:$0xf]
        %v10458 = vld [vmem:[%s10446 + $0x2c] sm:$0xf]
        %v10459 = vld [vmem:[%s10446 + $0x30] sm:$0xf]
        %v10460 = vld [vmem:[%s10446 + $0x34] sm:$0xf]
        %v10461 = vld [vmem:[%s10446 + $0x38] sm:$0xf]
        %v10462 = vld [vmem:[%s10446 + $0x3c] sm:$0xf]
        %v10463 = vld [vmem:[%s10446 + $0x40] sm:$0xf]
        %v10464 = vld [vmem:[%s10446 + $0x44] sm:$0xf]
        %v10465 = vld [vmem:[%s10446 + $0x48] sm:$0xf]
        %v10466 = vld [vmem:[%s10446 + $0x4c] sm:$0xf]
        %v10467 = vld [vmem:[%s10446 + $0x50] sm:$0xf]
        %v10468 = vld [vmem:[%s10446 + $0x54] sm:$0xf]
        %v10469 = vld [vmem:[%s10446 + $0x58] sm:$0xf]
        %v10470 = vld [vmem:[%s10446 + $0x5c] sm:$0xf]
        %v10471 = vld [vmem:[%s10446 + $0x60] sm:$0xf]
        %v10472 = vld [vmem:[%s10446 + $0x64] sm:$0xf]
        %v10473 = vld [vmem:[%s10446 + $0x68] sm:$0xf]
        %v10474 = vld [vmem:[%s10446 + $0x6c] sm:$0xf]
        %v10475 = vld [vmem:[%s10446 + $0x70] sm:$0xf]
        %v10476 = vld [vmem:[%s10446 + $0x74] sm:$0xf]
        %v10477 = vld [vmem:[%s10446 + $0x78] sm:$0xf]
        %v10478 = vld [vmem:[%s10446 + $0x7c] sm:$0xf]
        %v10511 = vunpack.c.l.b16 %v10447
        %v10512 = vunpack.c.l.b16 %v10448
        %v10513 = vunpack.c.l.b16 %v10449
        %v10514 = vunpack.c.l.b16 %v10450
        %v10515 = vunpack.c.l.b16 %v10451
        %v10516 = vunpack.c.l.b16 %v10452
        %v10517 = vunpack.c.l.b16 %v10453
        %v10518 = vunpack.c.l.b16 %v10454
        %v10519 = vunpack.c.l.b16 %v10455
        %v10520 = vunpack.c.l.b16 %v10456
        %v10521 = vunpack.c.l.b16 %v10457
        %v10522 = vunpack.c.l.b16 %v10458
        %v10523 = vunpack.c.l.b16 %v10459
        %v10524 = vunpack.c.l.b16 %v10460
        %v10525 = vunpack.c.l.b16 %v10461
        %v10526 = vunpack.c.l.b16 %v10462
        %v10527 = vunpack.c.l.b16 %v10463
        %v10528 = vunpack.c.l.b16 %v10464
        %v10529 = vunpack.c.l.b16 %v10465
        %v10530 = vunpack.c.l.b16 %v10466
        %v10531 = vunpack.c.l.b16 %v10467
        %v10532 = vunpack.c.l.b16 %v10468
        %v10533 = vunpack.c.l.b16 %v10469
        %v10534 = vunpack.c.l.b16 %v10470
        %v10535 = vunpack.c.l.b16 %v10471
        %v10536 = vunpack.c.l.b16 %v10472
        %v10537 = vunpack.c.l.b16 %v10473
        %v10538 = vunpack.c.l.b16 %v10474
        %v10539 = vunpack.c.l.b16 %v10475
        %v10540 = vunpack.c.l.b16 %v10476
        %v10541 = vunpack.c.l.b16 %v10477
        %v10542 = vunpack.c.l.b16 %v10478
        %v10543 = vpack.c.b16 %v10512, %v10511
        %v10544 = vpack.c.b16 %v10514, %v10513
        %v10545 = vpack.c.b16 %v10516, %v10515
        %v10546 = vpack.c.b16 %v10518, %v10517
        %v10547 = vpack.c.b16 %v10520, %v10519
        %v10548 = vpack.c.b16 %v10522, %v10521
        %v10549 = vpack.c.b16 %v10524, %v10523
        %v10550 = vpack.c.b16 %v10526, %v10525
        %v10551 = vpack.c.b16 %v10528, %v10527
        %v10552 = vpack.c.b16 %v10530, %v10529
        %v10553 = vpack.c.b16 %v10532, %v10531
        %v10554 = vpack.c.b16 %v10534, %v10533
        %v10555 = vpack.c.b16 %v10536, %v10535
        %v10556 = vpack.c.b16 %v10538, %v10537
        %v10557 = vpack.c.b16 %v10540, %v10539
        %v10558 = vpack.c.b16 %v10542, %v10541
        %10575 = vmatprep.subr.bf16.mxu0 0
        %10576 = vmatpush1.bf16.msra.mxu0 %v10543
        %10577 = vmatprep.subr.bf16.mxu0 0
        %10578 = vmatpush1.bf16.msra.mxu0 %v10544
        %10579 = vmatprep.subr.bf16.mxu0 0
        %10580 = vmatpush1.bf16.msra.mxu0 %v10545
        %10581 = vmatprep.subr.bf16.mxu0 0
        %10582 = vmatpush1.bf16.msra.mxu0 %v10546
        %10583 = vmatprep.subr.bf16.mxu0 0
        %10584 = vmatpush1.bf16.msra.mxu0 %v10547
        %10585 = vmatprep.subr.bf16.mxu0 0
        %10586 = vmatpush1.bf16.msra.mxu0 %v10548
        %10587 = vmatprep.subr.bf16.mxu0 0
        %10588 = vmatpush1.bf16.msra.mxu0 %v10549
        %10589 = vmatprep.subr.bf16.mxu0 0
        %10590 = vmatpush1.bf16.msra.mxu0 %v10550
        %10591 = vmatprep.subr.bf16.mxu0 0
        %10592 = vmatpush1.bf16.msra.mxu0 %v10551
        %10593 = vmatprep.subr.bf16.mxu0 0
        %10594 = vmatpush1.bf16.msra.mxu0 %v10552
        %10595 = vmatprep.subr.bf16.mxu0 0
        %10596 = vmatpush1.bf16.msra.mxu0 %v10553
        %10597 = vmatprep.subr.bf16.mxu0 0
        %10598 = vmatpush1.bf16.msra.mxu0 %v10554
        %10599 = vmatprep.subr.bf16.mxu0 0
        %10600 = vmatpush1.bf16.msra.mxu0 %v10555
        %10601 = vmatprep.subr.bf16.mxu0 0
        %10602 = vmatpush1.bf16.msra.mxu0 %v10556
        %10603 = vmatprep.subr.bf16.mxu0 0
        %10604 = vmatpush1.bf16.msra.mxu0 %v10557
        %10605 = vmatprep.subr.bf16.mxu0 0
        %10606 = vmatpush1.bf16.msra.mxu0 %v10558
        %10607 = vmatprep.mubr.bf16.mxu0 %v7706
        %10608 = vmatmul.mubr.bf16.gmra.mrb[0].mxu0 %v7705
        %v10609 = vpop.f32.mrb[0].mxu0
        %v10610 = vadd.f32 0.0, %v10609
        %v10611 = vpop.f32.mrb[0].mxu0
        %v10612 = vpop.f32.mrb[0].mxu0
        %v10613 = vadd.f32 0.0, %v10612
        %v10614 = vpop.f32.mrb[0].mxu0
        %10615 = vmatprep.mubr.bf16.mxu0 %v7708
        %10616 = vmatmul.mubr.bf16.gmra.mrb[0].mxu0 %v7707
        %v10617 = vpop.f32.mrb[0].mxu0
        %v10618 = vadd.f32 0.0, %v10617
        %v10619 = vpop.f32.mrb[0].mxu0
        %v10620 = vpop.f32.mrb[0].mxu0
        %v10621 = vadd.f32 0.0, %v10620
        %v10622 = vpop.f32.mrb[0].mxu0
        %10623 = vmatprep.mubr.bf16.mxu0 %v7710
        %10624 = vmatmul.mubr.bf16.gmra.mrb[0].mxu0 %v7709
        %v10625 = vpop.f32.mrb[0].mxu0
        %v10626 = vadd.f32 0.0, %v10625
        %v10627 = vpop.f32.mrb[0].mxu0
        %v10628 = vpop.f32.mrb[0].mxu0
        %v10629 = vadd.f32 0.0, %v10628
        %v10630 = vpop.f32.mrb[0].mxu0
        %10631 = vmatprep.mubr.bf16.mxu0 %v7712
        %10632 = vmatmul.mubr.bf16.gmra.mrb[0].mxu0 %v7711
        %v10633 = vpop.f32.mrb[0].mxu0
        %v10634 = vadd.f32 0.0, %v10633
        %v10635 = vpop.f32.mrb[0].mxu0
        %v10636 = vpop.f32.mrb[0].mxu0
        %v10637 = vadd.f32 0.0, %v10636
        %v10638 = vpop.f32.mrb[0].mxu0
        %10639 = vmatprep.mubr.bf16.mxu0 %v7714
        %10640 = vmatmul.mubr.bf16.gmra.mrb[0].mxu0 %v7713
        %v10641 = vpop.f32.mrb[0].mxu0
        %v10642 = vadd.f32 0.0, %v10641
        %v10643 = vpop.f32.mrb[0].mxu0
        %v10644 = vpop.f32.mrb[0].mxu0
        %v10645 = vadd.f32 0.0, %v10644
        %v10646 = vpop.f32.mrb[0].mxu0
        %10647 = vmatprep.mubr.bf16.mxu0 %v7716
        %10648 = vmatmul.mubr.bf16.gmra.mrb[0].mxu0 %v7715
        %v10649 = vpop.f32.mrb[0].mxu0
        %v10650 = vadd.f32 0.0, %v10649
        %v10651 = vpop.f32.mrb[0].mxu0
        %v10652 = vpop.f32.mrb[0].mxu0
        %v10653 = vadd.f32 0.0, %v10652
        %v10654 = vpop.f32.mrb[0].mxu0
        %10655 = vmatprep.mubr.bf16.mxu0 %v7718
        %10656 = vmatmul.mubr.bf16.gmra.mrb[0].mxu0 %v7717
        %v10657 = vpop.f32.mrb[0].mxu0
        %v10658 = vadd.f32 0.0, %v10657
        %v10659 = vpop.f32.mrb[0].mxu0
        %v10660 = vpop.f32.mrb[0].mxu0
        %v10661 = vadd.f32 0.0, %v10660
        %v10662 = vpop.f32.mrb[0].mxu0
        %10663 = vmatprep.mubr.bf16.mxu0 %v7720
        %10664 = vmatmul.mubr.bf16.gmra.mrb[0].mxu0 %v7719
        %v10665 = vpop.f32.mrb[0].mxu0
        %v10666 = vadd.f32 0.0, %v10665
        %v10667 = vpop.f32.mrb[0].mxu0
        %v10668 = vpop.f32.mrb[0].mxu0
        %v10669 = vadd.f32 0.0, %v10668
        %v10670 = vpop.f32.mrb[0].mxu0
        %10671 = vmatprep.mubr.bf16.mxu0 %v7722
        %10672 = vmatmul.mubr.bf16.gmra.mrb[0].mxu0 %v7721
        %v10673 = vpop.f32.mrb[0].mxu0
        %v10674 = vadd.f32 0.0, %v10673
        %v10675 = vpop.f32.mrb[0].mxu0
        %v10676 = vpop.f32.mrb[0].mxu0
        %v10677 = vadd.f32 0.0, %v10676
        %v10678 = vpop.f32.mrb[0].mxu0
        %10679 = vmatprep.mubr.bf16.mxu0 %v7724
        %10680 = vmatmul.mubr.bf16.gmra.mrb[0].mxu0 %v7723
        %v10681 = vpop.f32.mrb[0].mxu0
        %v10682 = vadd.f32 0.0, %v10681
        %v10683 = vpop.f32.mrb[0].mxu0
        %v10684 = vpop.f32.mrb[0].mxu0
        %v10685 = vadd.f32 0.0, %v10684
        %v10686 = vpop.f32.mrb[0].mxu0
        %10687 = vmatprep.mubr.bf16.mxu0 %v7726
        %10688 = vmatmul.mubr.bf16.gmra.mrb[0].mxu0 %v7725
        %v10689 = vpop.f32.mrb[0].mxu0
        %v10690 = vadd.f32 0.0, %v10689
        %v10691 = vpop.f32.mrb[0].mxu0
        %v10692 = vpop.f32.mrb[0].mxu0
        %v10693 = vadd.f32 0.0, %v10692
        %v10694 = vpop.f32.mrb[0].mxu0
        %10695 = vmatprep.mubr.bf16.mxu0 %v7728
        %10696 = vmatmul.mubr.bf16.gmra.mrb[0].mxu0 %v7727
        %v10697 = vpop.f32.mrb[0].mxu0
        %v10698 = vadd.f32 0.0, %v10697
        %v10699 = vpop.f32.mrb[0].mxu0
        %v10700 = vpop.f32.mrb[0].mxu0
        %v10701 = vadd.f32 0.0, %v10700
        %v10702 = vpop.f32.mrb[0].mxu0
        %10703 = vmatprep.mubr.bf16.mxu0 %v7730
        %10704 = vmatmul.mubr.bf16.gmra.mrb[0].mxu0 %v7729
        %v10705 = vpop.f32.mrb[0].mxu0
        %v10706 = vadd.f32 0.0, %v10705
        %v10707 = vpop.f32.mrb[0].mxu0
        %v10708 = vpop.f32.mrb[0].mxu0
        %v10709 = vadd.f32 0.0, %v10708
        %v10710 = vpop.f32.mrb[0].mxu0
        %10711 = vmatprep.mubr.bf16.mxu0 %v7732
        %10712 = vmatmul.mubr.bf16.gmra.mrb[0].mxu0 %v7731
        %v10713 = vpop.f32.mrb[0].mxu0
        %v10714 = vadd.f32 0.0, %v10713
        %v10715 = vpop.f32.mrb[0].mxu0
        %v10716 = vpop.f32.mrb[0].mxu0
        %v10717 = vadd.f32 0.0, %v10716
        %v10718 = vpop.f32.mrb[0].mxu0
        %10719 = vmatprep.mubr.bf16.mxu0 %v7734
        %10720 = vmatmul.mubr.bf16.gmra.mrb[0].mxu0 %v7733
        %v10721 = vpop.f32.mrb[0].mxu0
        %v10722 = vadd.f32 0.0, %v10721
        %v10723 = vpop.f32.mrb[0].mxu0
        %v10724 = vpop.f32.mrb[0].mxu0
        %v10725 = vadd.f32 0.0, %v10724
        %v10726 = vpop.f32.mrb[0].mxu0
        %10727 = vmatprep.mubr.bf16.mxu0 %v7736
        %10728 = vmatmul.mubr.bf16.gmra.mrb[0].mxu0 %v7735
        %v10729 = vpop.f32.mrb[0].mxu0
        %v10730 = vadd.f32 0.0, %v10729
        %v10731 = vpop.f32.mrb[0].mxu0
        %v10732 = vpop.f32.mrb[0].mxu0
        %v10733 = vadd.f32 0.0, %v10732
        %v10734 = vpop.f32.mrb[0].mxu0
        %10735 = vdwg.mxu0
        %v10736 = vadd.f32 %v10414, %v10610
        %v10737 = vadd.f32 %v10415, %v10613
        %v10738 = vadd.f32 %v10416, %v10618
        %v10739 = vadd.f32 %v10417, %v10621
        %v10740 = vadd.f32 %v10418, %v10626
        %v10741 = vadd.f32 %v10419, %v10629
        %v10742 = vadd.f32 %v10420, %v10634
        %v10743 = vadd.f32 %v10421, %v10637
        %v10744 = vadd.f32 %v10422, %v10642
        %v10745 = vadd.f32 %v10423, %v10645
        %v10746 = vadd.f32 %v10424, %v10650
        %v10747 = vadd.f32 %v10425, %v10653
        %v10748 = vadd.f32 %v10426, %v10658
        %v10749 = vadd.f32 %v10427, %v10661
        %v10750 = vadd.f32 %v10428, %v10666
        %v10751 = vadd.f32 %v10429, %v10669
        %v10752 = vadd.f32 %v10430, %v10674
        %v10753 = vadd.f32 %v10431, %v10677
        %v10754 = vadd.f32 %v10432, %v10682
        %v10755 = vadd.f32 %v10433, %v10685
        %v10756 = vadd.f32 %v10434, %v10690
        %v10757 = vadd.f32 %v10435, %v10693
        %v10758 = vadd.f32 %v10436, %v10698
        %v10759 = vadd.f32 %v10437, %v10701
        %v10760 = vadd.f32 %v10438, %v10706
        %v10761 = vadd.f32 %v10439, %v10709
        %v10762 = vadd.f32 %v10440, %v10714
        %v10763 = vadd.f32 %v10441, %v10717
        %v10764 = vadd.f32 %v10442, %v10722
        %v10765 = vadd.f32 %v10443, %v10725
        %v10766 = vadd.f32 %v10444, %v10730
        %v10767 = vadd.f32 %v10445, %v10733
        %s10768 = scalar_lea.vmem %s3, 1024
        %v10769 = vld [vmem:[%s10768] sm:$0xf]
        %v10770 = vld [vmem:[%s10768 + $0x4] sm:$0xf]
        %v10771 = vld [vmem:[%s10768 + $0x8] sm:$0xf]
        %v10772 = vld [vmem:[%s10768 + $0xc] sm:$0xf]
        %v10773 = vld [vmem:[%s10768 + $0x10] sm:$0xf]
        %v10774 = vld [vmem:[%s10768 + $0x14] sm:$0xf]
        %v10775 = vld [vmem:[%s10768 + $0x18] sm:$0xf]
        %v10776 = vld [vmem:[%s10768 + $0x1c] sm:$0xf]
        %v10777 = vld [vmem:[%s10768 + $0x20] sm:$0xf]
        %v10778 = vld [vmem:[%s10768 + $0x24] sm:$0xf]
        %v10779 = vld [vmem:[%s10768 + $0x28] sm:$0xf]
        %v10780 = vld [vmem:[%s10768 + $0x2c] sm:$0xf]
        %v10781 = vld [vmem:[%s10768 + $0x30] sm:$0xf]
        %v10782 = vld [vmem:[%s10768 + $0x34] sm:$0xf]
        %v10783 = vld [vmem:[%s10768 + $0x38] sm:$0xf]
        %v10784 = vld [vmem:[%s10768 + $0x3c] sm:$0xf]
        %v10785 = vld [vmem:[%s10768 + $0x40] sm:$0xf]
        %v10786 = vld [vmem:[%s10768 + $0x44] sm:$0xf]
        %v10787 = vld [vmem:[%s10768 + $0x48] sm:$0xf]
        %v10788 = vld [vmem:[%s10768 + $0x4c] sm:$0xf]
        %v10789 = vld [vmem:[%s10768 + $0x50] sm:$0xf]
        %v10790 = vld [vmem:[%s10768 + $0x54] sm:$0xf]
        %v10791 = vld [vmem:[%s10768 + $0x58] sm:$0xf]
        %v10792 = vld [vmem:[%s10768 + $0x5c] sm:$0xf]
        %v10793 = vld [vmem:[%s10768 + $0x60] sm:$0xf]
        %v10794 = vld [vmem:[%s10768 + $0x64] sm:$0xf]
        %v10795 = vld [vmem:[%s10768 + $0x68] sm:$0xf]
        %v10796 = vld [vmem:[%s10768 + $0x6c] sm:$0xf]
        %v10797 = vld [vmem:[%s10768 + $0x70] sm:$0xf]
        %v10798 = vld [vmem:[%s10768 + $0x74] sm:$0xf]
        %v10799 = vld [vmem:[%s10768 + $0x78] sm:$0xf]
        %v10800 = vld [vmem:[%s10768 + $0x7c] sm:$0xf]
        %v10833 = vunpack.c.l.b16 %v10769
        %v10834 = vunpack.c.l.b16 %v10770
        %v10835 = vunpack.c.l.b16 %v10771
        %v10836 = vunpack.c.l.b16 %v10772
        %v10837 = vunpack.c.l.b16 %v10773
        %v10838 = vunpack.c.l.b16 %v10774
        %v10839 = vunpack.c.l.b16 %v10775
        %v10840 = vunpack.c.l.b16 %v10776
        %v10841 = vunpack.c.l.b16 %v10777
        %v10842 = vunpack.c.l.b16 %v10778
        %v10843 = vunpack.c.l.b16 %v10779
        %v10844 = vunpack.c.l.b16 %v10780
        %v10845 = vunpack.c.l.b16 %v10781
        %v10846 = vunpack.c.l.b16 %v10782
        %v10847 = vunpack.c.l.b16 %v10783
        %v10848 = vunpack.c.l.b16 %v10784
        %v10849 = vunpack.c.l.b16 %v10785
        %v10850 = vunpack.c.l.b16 %v10786
        %v10851 = vunpack.c.l.b16 %v10787
        %v10852 = vunpack.c.l.b16 %v10788
        %v10853 = vunpack.c.l.b16 %v10789
        %v10854 = vunpack.c.l.b16 %v10790
        %v10855 = vunpack.c.l.b16 %v10791
        %v10856 = vunpack.c.l.b16 %v10792
        %v10857 = vunpack.c.l.b16 %v10793
        %v10858 = vunpack.c.l.b16 %v10794
        %v10859 = vunpack.c.l.b16 %v10795
        %v10860 = vunpack.c.l.b16 %v10796
        %v10861 = vunpack.c.l.b16 %v10797
        %v10862 = vunpack.c.l.b16 %v10798
        %v10863 = vunpack.c.l.b16 %v10799
        %v10864 = vunpack.c.l.b16 %v10800
        %v10865 = vpack.c.b16 %v10834, %v10833
        %v10866 = vpack.c.b16 %v10836, %v10835
        %v10867 = vpack.c.b16 %v10838, %v10837
        %v10868 = vpack.c.b16 %v10840, %v10839
        %v10869 = vpack.c.b16 %v10842, %v10841
        %v10870 = vpack.c.b16 %v10844, %v10843
        %v10871 = vpack.c.b16 %v10846, %v10845
        %v10872 = vpack.c.b16 %v10848, %v10847
        %v10873 = vpack.c.b16 %v10850, %v10849
        %v10874 = vpack.c.b16 %v10852, %v10851
        %v10875 = vpack.c.b16 %v10854, %v10853
        %v10876 = vpack.c.b16 %v10856, %v10855
        %v10877 = vpack.c.b16 %v10858, %v10857
        %v10878 = vpack.c.b16 %v10860, %v10859
        %v10879 = vpack.c.b16 %v10862, %v10861
        %v10880 = vpack.c.b16 %v10864, %v10863
        %10897 = vmatprep.subr.bf16.mxu0 0
        %10898 = vmatpush1.bf16.msra.mxu0 %v10865
        %10899 = vmatprep.subr.bf16.mxu0 0
        %10900 = vmatpush1.bf16.msra.mxu0 %v10866
        %10901 = vmatprep.subr.bf16.mxu0 0
        %10902 = vmatpush1.bf16.msra.mxu0 %v10867
        %10903 = vmatprep.subr.bf16.mxu0 0
        %10904 = vmatpush1.bf16.msra.mxu0 %v10868
        %10905 = vmatprep.subr.bf16.mxu0 0
        %10906 = vmatpush1.bf16.msra.mxu0 %v10869
        %10907 = vmatprep.subr.bf16.mxu0 0
        %10908 = vmatpush1.bf16.msra.mxu0 %v10870
        %10909 = vmatprep.subr.bf16.mxu0 0
        %10910 = vmatpush1.bf16.msra.mxu0 %v10871
        %10911 = vmatprep.subr.bf16.mxu0 0
        %10912 = vmatpush1.bf16.msra.mxu0 %v10872
        %10913 = vmatprep.subr.bf16.mxu0 0
        %10914 = vmatpush1.bf16.msra.mxu0 %v10873
        %10915 = vmatprep.subr.bf16.mxu0 0
        %10916 = vmatpush1.bf16.msra.mxu0 %v10874
        %10917 = vmatprep.subr.bf16.mxu0 0
        %10918 = vmatpush1.bf16.msra.mxu0 %v10875
        %10919 = vmatprep.subr.bf16.mxu0 0
        %10920 = vmatpush1.bf16.msra.mxu0 %v10876
        %10921 = vmatprep.subr.bf16.mxu0 0
        %10922 = vmatpush1.bf16.msra.mxu0 %v10877
        %10923 = vmatprep.subr.bf16.mxu0 0
        %10924 = vmatpush1.bf16.msra.mxu0 %v10878
        %10925 = vmatprep.subr.bf16.mxu0 0
        %10926 = vmatpush1.bf16.msra.mxu0 %v10879
        %10927 = vmatprep.subr.bf16.mxu0 0
        %10928 = vmatpush1.bf16.msra.mxu0 %v10880
        %10929 = vmatprep.mubr.bf16.mxu0 %v8128
        %10930 = vmatmul.mubr.bf16.gmra.mrb[0].mxu0 %v8125
        %v10931 = vpop.f32.mrb[0].mxu0
        %v10932 = vadd.f32 0.0, %v10931
        %v10933 = vpop.f32.mrb[0].mxu0
        %v10934 = vpop.f32.mrb[0].mxu0
        %v10935 = vadd.f32 0.0, %v10934
        %v10936 = vpop.f32.mrb[0].mxu0
        %10937 = vmatprep.mubr.bf16.mxu0 %v8134
        %10938 = vmatmul.mubr.bf16.gmra.mrb[0].mxu0 %v8131
        %v10939 = vpop.f32.mrb[0].mxu0
        %v10940 = vadd.f32 0.0, %v10939
        %v10941 = vpop.f32.mrb[0].mxu0
        %v10942 = vpop.f32.mrb[0].mxu0
        %v10943 = vadd.f32 0.0, %v10942
        %v10944 = vpop.f32.mrb[0].mxu0
        %10945 = vmatprep.mubr.bf16.mxu0 %v8140
        %10946 = vmatmul.mubr.bf16.gmra.mrb[0].mxu0 %v8137
        %v10947 = vpop.f32.mrb[0].mxu0
        %v10948 = vadd.f32 0.0, %v10947
        %v10949 = vpop.f32.mrb[0].mxu0
        %v10950 = vpop.f32.mrb[0].mxu0
        %v10951 = vadd.f32 0.0, %v10950
        %v10952 = vpop.f32.mrb[0].mxu0
        %10953 = vmatprep.mubr.bf16.mxu0 %v8146
        %10954 = vmatmul.mubr.bf16.gmra.mrb[0].mxu0 %v8143
        %v10955 = vpop.f32.mrb[0].mxu0
        %v10956 = vadd.f32 0.0, %v10955
        %v10957 = vpop.f32.mrb[0].mxu0
        %v10958 = vpop.f32.mrb[0].mxu0
        %v10959 = vadd.f32 0.0, %v10958
        %v10960 = vpop.f32.mrb[0].mxu0
        %10961 = vmatprep.mubr.bf16.mxu0 %v8152
        %10962 = vmatmul.mubr.bf16.gmra.mrb[0].mxu0 %v8149
        %v10963 = vpop.f32.mrb[0].mxu0
        %v10964 = vadd.f32 0.0, %v10963
        %v10965 = vpop.f32.mrb[0].mxu0
        %v10966 = vpop.f32.mrb[0].mxu0
        %v10967 = vadd.f32 0.0, %v10966
        %v10968 = vpop.f32.mrb[0].mxu0
        %10969 = vmatprep.mubr.bf16.mxu0 %v8158
        %10970 = vmatmul.mubr.bf16.gmra.mrb[0].mxu0 %v8155
        %v10971 = vpop.f32.mrb[0].mxu0
        %v10972 = vadd.f32 0.0, %v10971
        %v10973 = vpop.f32.mrb[0].mxu0
        %v10974 = vpop.f32.mrb[0].mxu0
        %v10975 = vadd.f32 0.0, %v10974
        %v10976 = vpop.f32.mrb[0].mxu0
        %10977 = vmatprep.mubr.bf16.mxu0 %v8164
        %10978 = vmatmul.mubr.bf16.gmra.mrb[0].mxu0 %v8161
        %v10979 = vpop.f32.mrb[0].mxu0
        %v10980 = vadd.f32 0.0, %v10979
        %v10981 = vpop.f32.mrb[0].mxu0
        %v10982 = vpop.f32.mrb[0].mxu0
        %v10983 = vadd.f32 0.0, %v10982
        %v10984 = vpop.f32.mrb[0].mxu0
        %10985 = vmatprep.mubr.bf16.mxu0 %v8170
        %10986 = vmatmul.mubr.bf16.gmra.mrb[0].mxu0 %v8167
        %v10987 = vpop.f32.mrb[0].mxu0
        %v10988 = vadd.f32 0.0, %v10987
        %v10989 = vpop.f32.mrb[0].mxu0
        %v10990 = vpop.f32.mrb[0].mxu0
        %v10991 = vadd.f32 0.0, %v10990
        %v10992 = vpop.f32.mrb[0].mxu0
        %10993 = vmatprep.mubr.bf16.mxu0 %v8176
        %10994 = vmatmul.mubr.bf16.gmra.mrb[0].mxu0 %v8173
        %v10995 = vpop.f32.mrb[0].mxu0
        %v10996 = vadd.f32 0.0, %v10995
        %v10997 = vpop.f32.mrb[0].mxu0
        %v10998 = vpop.f32.mrb[0].mxu0
        %v10999 = vadd.f32 0.0, %v10998
        %v11000 = vpop.f32.mrb[0].mxu0
        %11001 = vmatprep.mubr.bf16.mxu0 %v8182
        %11002 = vmatmul.mubr.bf16.gmra.mrb[0].mxu0 %v8179
        %v11003 = vpop.f32.mrb[0].mxu0
        %v11004 = vadd.f32 0.0, %v11003
        %v11005 = vpop.f32.mrb[0].mxu0
        %v11006 = vpop.f32.mrb[0].mxu0
        %v11007 = vadd.f32 0.0, %v11006
        %v11008 = vpop.f32.mrb[0].mxu0
        %11009 = vmatprep.mubr.bf16.mxu0 %v8188
        %11010 = vmatmul.mubr.bf16.gmra.mrb[0].mxu0 %v8185
        %v11011 = vpop.f32.mrb[0].mxu0
        %v11012 = vadd.f32 0.0, %v11011
        %v11013 = vpop.f32.mrb[0].mxu0
        %v11014 = vpop.f32.mrb[0].mxu0
        %v11015 = vadd.f32 0.0, %v11014
        %v11016 = vpop.f32.mrb[0].mxu0
        %11017 = vmatprep.mubr.bf16.mxu0 %v8194
        %11018 = vmatmul.mubr.bf16.gmra.mrb[0].mxu0 %v8191
        %v11019 = vpop.f32.mrb[0].mxu0
        %v11020 = vadd.f32 0.0, %v11019
        %v11021 = vpop.f32.mrb[0].mxu0
        %v11022 = vpop.f32.mrb[0].mxu0
        %v11023 = vadd.f32 0.0, %v11022
        %v11024 = vpop.f32.mrb[0].mxu0
        %11025 = vmatprep.mubr.bf16.mxu0 %v8200
        %11026 = vmatmul.mubr.bf16.gmra.mrb[0].mxu0 %v8197
        %v11027 = vpop.f32.mrb[0].mxu0
        %v11028 = vadd.f32 0.0, %v11027
        %v11029 = vpop.f32.mrb[0].mxu0
        %v11030 = vpop.f32.mrb[0].mxu0
        %v11031 = vadd.f32 0.0, %v11030
        %v11032 = vpop.f32.mrb[0].mxu0
        %11033 = vmatprep.mubr.bf16.mxu0 %v8206
        %11034 = vmatmul.mubr.bf16.gmra.mrb[0].mxu0 %v8203
        %v11035 = vpop.f32.mrb[0].mxu0
        %v11036 = vadd.f32 0.0, %v11035
        %v11037 = vpop.f32.mrb[0].mxu0
        %v11038 = vpop.f32.mrb[0].mxu0
        %v11039 = vadd.f32 0.0, %v11038
        %v11040 = vpop.f32.mrb[0].mxu0
        %11041 = vmatprep.mubr.bf16.mxu0 %v8212
        %11042 = vmatmul.mubr.bf16.gmra.mrb[0].mxu0 %v8209
        %v11043 = vpop.f32.mrb[0].mxu0
        %v11044 = vadd.f32 0.0, %v11043
        %v11045 = vpop.f32.mrb[0].mxu0
        %v11046 = vpop.f32.mrb[0].mxu0
        %v11047 = vadd.f32 0.0, %v11046
        %v11048 = vpop.f32.mrb[0].mxu0
        %11049 = vmatprep.mubr.bf16.mxu0 %v8256
        %11050 = vmatmul.mubr.bf16.gmra.mrb[0].mxu0 %v8255
        %v11051 = vpop.f32.mrb[0].mxu0
        %v11052 = vadd.f32 0.0, %v11051
        %v11053 = vpop.f32.mrb[0].mxu0
        %v11054 = vpop.f32.mrb[0].mxu0
        %v11055 = vadd.f32 0.0, %v11054
        %v11056 = vpop.f32.mrb[0].mxu0
        %11057 = vdwg.mxu0
        %v11058 = vadd.f32 %v10736, %v10932
        %v11059 = vadd.f32 %v10737, %v10935
        %v11060 = vadd.f32 %v10738, %v10940
        %v11061 = vadd.f32 %v10739, %v10943
        %v11062 = vadd.f32 %v10740, %v10948
        %v11063 = vadd.f32 %v10741, %v10951
        %v11064 = vadd.f32 %v10742, %v10956
        %v11065 = vadd.f32 %v10743, %v10959
        %v11066 = vadd.f32 %v10744, %v10964
        %v11067 = vadd.f32 %v10745, %v10967
        %v11068 = vadd.f32 %v10746, %v10972
        %v11069 = vadd.f32 %v10747, %v10975
        %v11070 = vadd.f32 %v10748, %v10980
        %v11071 = vadd.f32 %v10749, %v10983
        %v11072 = vadd.f32 %v10750, %v10988
        %v11073 = vadd.f32 %v10751, %v10991
        %v11074 = vadd.f32 %v10752, %v10996
        %v11075 = vadd.f32 %v10753, %v10999
        %v11076 = vadd.f32 %v10754, %v11004
        %v11077 = vadd.f32 %v10755, %v11007
        %v11078 = vadd.f32 %v10756, %v11012
        %v11079 = vadd.f32 %v10757, %v11015
        %v11080 = vadd.f32 %v10758, %v11020
        %v11081 = vadd.f32 %v10759, %v11023
        %v11082 = vadd.f32 %v10760, %v11028
        %v11083 = vadd.f32 %v10761, %v11031
        %v11084 = vadd.f32 %v10762, %v11036
        %v11085 = vadd.f32 %v10763, %v11039
        %v11086 = vadd.f32 %v10764, %v11044
        %v11087 = vadd.f32 %v10765, %v11047
        %v11088 = vadd.f32 %v10766, %v11052
        %v11089 = vadd.f32 %v10767, %v11055
        %v11090 = vld [vmem:[#allocation9] sm:$0x1]
        %v11092 = vlaneseq
        %v11093 = vshrl.u32 %v11092, 7
        %v11094 = vsub.s32 0, %v11093
        %v11095 = vrot.slane %v11090, %v11094
        %v11097 = vadd.f32 %v11058, %v11095
        %v11098 = vadd.f32 %v11059, %v11095
        %v11099 = vadd.f32 %v11060, %v11095
        %v11100 = vadd.f32 %v11061, %v11095
        %v11101 = vadd.f32 %v11062, %v11095
        %v11102 = vadd.f32 %v11063, %v11095
        %v11103 = vadd.f32 %v11064, %v11095
        %v11104 = vadd.f32 %v11065, %v11095
        %v11105 = vadd.f32 %v11066, %v11095
        %v11106 = vadd.f32 %v11067, %v11095
        %v11107 = vadd.f32 %v11068, %v11095
        %v11108 = vadd.f32 %v11069, %v11095
        %v11109 = vadd.f32 %v11070, %v11095
        %v11110 = vadd.f32 %v11071, %v11095
        %v11111 = vadd.f32 %v11072, %v11095
        %v11112 = vadd.f32 %v11073, %v11095
        %v11113 = vadd.f32 %v11074, %v11095
        %v11114 = vadd.f32 %v11075, %v11095
        %v11115 = vadd.f32 %v11076, %v11095
        %v11116 = vadd.f32 %v11077, %v11095
        %v11117 = vadd.f32 %v11078, %v11095
        %v11118 = vadd.f32 %v11079, %v11095
        %v11119 = vadd.f32 %v11080, %v11095
        %v11120 = vadd.f32 %v11081, %v11095
        %v11121 = vadd.f32 %v11082, %v11095
        %v11122 = vadd.f32 %v11083, %v11095
        %v11123 = vadd.f32 %v11084, %v11095
        %v11124 = vadd.f32 %v11085, %v11095
        %v11125 = vadd.f32 %v11086, %v11095
        %v11126 = vadd.f32 %v11087, %v11095
        %v11127 = vadd.f32 %v11088, %v11095
        %v11128 = vadd.f32 %v11089, %v11095
        %v11129 = vmax.f32 %v11097, 0.0
        %v11130 = vmax.f32 %v11098, 0.0
        %v11131 = vmax.f32 %v11099, 0.0
        %v11132 = vmax.f32 %v11100, 0.0
        %v11133 = vmax.f32 %v11101, 0.0
        %v11134 = vmax.f32 %v11102, 0.0
        %v11135 = vmax.f32 %v11103, 0.0
        %v11136 = vmax.f32 %v11104, 0.0
        %v11137 = vmax.f32 %v11105, 0.0
        %v11138 = vmax.f32 %v11106, 0.0
        %v11139 = vmax.f32 %v11107, 0.0
        %v11140 = vmax.f32 %v11108, 0.0
        %v11141 = vmax.f32 %v11109, 0.0
        %v11142 = vmax.f32 %v11110, 0.0
        %v11143 = vmax.f32 %v11111, 0.0
        %v11144 = vmax.f32 %v11112, 0.0
        %v11145 = vmax.f32 %v11113, 0.0
        %v11146 = vmax.f32 %v11114, 0.0
        %v11147 = vmax.f32 %v11115, 0.0
        %v11148 = vmax.f32 %v11116, 0.0
        %v11149 = vmax.f32 %v11117, 0.0
        %v11150 = vmax.f32 %v11118, 0.0
        %v11151 = vmax.f32 %v11119, 0.0
        %v11152 = vmax.f32 %v11120, 0.0
        %v11153 = vmax.f32 %v11121, 0.0
        %v11154 = vmax.f32 %v11122, 0.0
        %v11155 = vmax.f32 %v11123, 0.0
        %v11156 = vmax.f32 %v11124, 0.0
        %v11157 = vmax.f32 %v11125, 0.0
        %v11158 = vmax.f32 %v11126, 0.0
        %v11159 = vmax.f32 %v11127, 0.0
        %v11160 = vmax.f32 %v11128, 0.0
        %v11161 = vpack.c.bf16 %v11130, %v11129
        %v11162 = vpack.c.bf16 %v11132, %v11131
        %v11163 = vpack.c.bf16 %v11134, %v11133
        %v11164 = vpack.c.bf16 %v11136, %v11135
        %v11165 = vpack.c.bf16 %v11138, %v11137
        %v11166 = vpack.c.bf16 %v11140, %v11139
        %v11167 = vpack.c.bf16 %v11142, %v11141
        %v11168 = vpack.c.bf16 %v11144, %v11143
        %v11169 = vpack.c.bf16 %v11146, %v11145
        %v11170 = vpack.c.bf16 %v11148, %v11147
        %v11171 = vpack.c.bf16 %v11150, %v11149
        %v11172 = vpack.c.bf16 %v11152, %v11151
        %v11173 = vpack.c.bf16 %v11154, %v11153
        %v11174 = vpack.c.bf16 %v11156, %v11155
        %v11175 = vpack.c.bf16 %v11158, %v11157
        %v11176 = vpack.c.bf16 %v11160, %v11159
        %v11177 = vld [vmem:[#allocation10] sm:$0xf]
        %v11178 = vld [vmem:[#allocation10 + $0x4] sm:$0xf]
        %v11179 = vld [vmem:[#allocation10 + $0x8] sm:$0xf]
        %v11180 = vld [vmem:[#allocation10 + $0xc] sm:$0xf]
        %v11181 = vld [vmem:[#allocation10 + $0x10] sm:$0xf]
        %v11182 = vld [vmem:[#allocation10 + $0x14] sm:$0xf]
        %v11183 = vld [vmem:[#allocation10 + $0x18] sm:$0xf]
        %v11184 = vld [vmem:[#allocation10 + $0x1c] sm:$0xf]
        %v11185 = vld [vmem:[#allocation10 + $0x20] sm:$0xf]
        %v11186 = vld [vmem:[#allocation10 + $0x24] sm:$0xf]
        %v11187 = vld [vmem:[#allocation10 + $0x28] sm:$0xf]
        %v11188 = vld [vmem:[#allocation10 + $0x2c] sm:$0xf]
        %v11189 = vld [vmem:[#allocation10 + $0x30] sm:$0xf]
        %v11190 = vld [vmem:[#allocation10 + $0x34] sm:$0xf]
        %v11191 = vld [vmem:[#allocation10 + $0x38] sm:$0xf]
        %v11192 = vld [vmem:[#allocation10 + $0x3c] sm:$0xf]
        %v11209 = vunpack.c.l.b16 %v11177
        %v11210 = vunpack.c.l.b16 %v11178
        %v11211 = vunpack.c.l.b16 %v11179
        %v11212 = vunpack.c.l.b16 %v11180
        %v11213 = vunpack.c.l.b16 %v11181
        %v11214 = vunpack.c.l.b16 %v11182
        %v11215 = vunpack.c.l.b16 %v11183
        %v11216 = vunpack.c.l.b16 %v11184
        %v11217 = vunpack.c.l.b16 %v11185
        %v11218 = vunpack.c.l.b16 %v11186
        %v11219 = vunpack.c.l.b16 %v11187
        %v11220 = vunpack.c.l.b16 %v11188
        %v11221 = vunpack.c.l.b16 %v11189
        %v11222 = vunpack.c.l.b16 %v11190
        %v11223 = vunpack.c.l.b16 %v11191
        %v11224 = vunpack.c.l.b16 %v11192
        %v11225 = vpack.c.b16 %v11210, %v11209
        %v11226 = vpack.c.b16 %v11212, %v11211
        %v11227 = vpack.c.b16 %v11214, %v11213
        %v11228 = vpack.c.b16 %v11216, %v11215
        %v11229 = vpack.c.b16 %v11218, %v11217
        %v11230 = vpack.c.b16 %v11220, %v11219
        %v11231 = vpack.c.b16 %v11222, %v11221
        %v11232 = vpack.c.b16 %v11224, %v11223
        %11241 = vmatprep.subr.bf16.mxu0 0
        %11242 = vmatpush1.bf16.msra.mxu0 %v11225
        %11243 = vmatprep.subr.bf16.mxu0 0
        %11244 = vmatpush1.bf16.msra.mxu0 %v11226
        %11245 = vmatprep.subr.bf16.mxu0 0
        %11246 = vmatpush1.bf16.msra.mxu0 %v11227
        %11247 = vmatprep.subr.bf16.mxu0 0
        %11248 = vmatpush1.bf16.msra.mxu0 %v11228
        %11249 = vmatprep.subr.bf16.mxu0 0
        %11250 = vmatpush1.bf16.msra.mxu0 %v11229
        %11251 = vmatprep.subr.bf16.mxu0 0
        %11252 = vmatpush1.bf16.msra.mxu0 %v11230
        %11253 = vmatprep.subr.bf16.mxu0 0
        %11254 = vmatpush1.bf16.msra.mxu0 %v11231
        %11255 = vmatprep.subr.bf16.mxu0 0
        %11256 = vmatpush1.bf16.msra.mxu0 %v11232
        %11257 = vmatprep.subr.bf16.mxu0 0
        %11258 = vmatpush1.bf16.msra.mxu0 0
        %11259 = vmatprep.subr.bf16.mxu0 0
        %11260 = vmatpush1.bf16.msra.mxu0 0
        %11261 = vmatprep.subr.bf16.mxu0 0
        %11262 = vmatpush1.bf16.msra.mxu0 0
        %11263 = vmatprep.subr.bf16.mxu0 0
        %11264 = vmatpush1.bf16.msra.mxu0 0
        %11265 = vmatprep.subr.bf16.mxu0 0
        %11266 = vmatpush1.bf16.msra.mxu0 0
        %11267 = vmatprep.subr.bf16.mxu0 0
        %11268 = vmatpush1.bf16.msra.mxu0 0
        %11269 = vmatprep.subr.bf16.mxu0 0
        %11270 = vmatpush1.bf16.msra.mxu0 0
        %11271 = vmatprep.subr.bf16.mxu0 0
        %11272 = vmatpush1.bf16.msra.mxu0 0
        %11273 = vmatprep.mubr.bf16.mxu0 0
        %11274 = vmatmul.mubr.bf16.gmra.mrb[0].mxu0 %v11161
        %v11275 = vpop.f32.mrb[0].mxu0
        %v11276 = vadd.f32 0.0, %v11275
        %v11277 = vpop.f32.mrb[0].mxu0
        %v11278 = vpop.f32.mrb[0].mxu0
        %v11279 = vadd.f32 0.0, %v11278
        %v11280 = vpop.f32.mrb[0].mxu0
        %11281 = vmatprep.mubr.bf16.mxu0 0
        %11282 = vmatmul.mubr.bf16.gmra.mrb[0].mxu0 %v11162
        %v11283 = vpop.f32.mrb[0].mxu0
        %v11284 = vadd.f32 0.0, %v11283
        %v11285 = vpop.f32.mrb[0].mxu0
        %v11286 = vpop.f32.mrb[0].mxu0
        %v11287 = vadd.f32 0.0, %v11286
        %v11288 = vpop.f32.mrb[0].mxu0
        %11289 = vmatprep.mubr.bf16.mxu0 0
        %11290 = vmatmul.mubr.bf16.gmra.mrb[0].mxu0 %v11163
        %v11291 = vpop.f32.mrb[0].mxu0
        %v11292 = vadd.f32 0.0, %v11291
        %v11293 = vpop.f32.mrb[0].mxu0
        %v11294 = vpop.f32.mrb[0].mxu0
        %v11295 = vadd.f32 0.0, %v11294
        %v11296 = vpop.f32.mrb[0].mxu0
        %11297 = vmatprep.mubr.bf16.mxu0 0
        %11298 = vmatmul.mubr.bf16.gmra.mrb[0].mxu0 %v11164
        %v11299 = vpop.f32.mrb[0].mxu0
        %v11300 = vadd.f32 0.0, %v11299
        %v11301 = vpop.f32.mrb[0].mxu0
        %v11302 = vpop.f32.mrb[0].mxu0
        %v11303 = vadd.f32 0.0, %v11302
        %v11304 = vpop.f32.mrb[0].mxu0
        %11305 = vmatprep.mubr.bf16.mxu0 0
        %11306 = vmatmul.mubr.bf16.gmra.mrb[0].mxu0 %v11165
        %v11307 = vpop.f32.mrb[0].mxu0
        %v11308 = vadd.f32 0.0, %v11307
        %v11309 = vpop.f32.mrb[0].mxu0
        %v11310 = vpop.f32.mrb[0].mxu0
        %v11311 = vadd.f32 0.0, %v11310
        %v11312 = vpop.f32.mrb[0].mxu0
        %11313 = vmatprep.mubr.bf16.mxu0 0
        %11314 = vmatmul.mubr.bf16.gmra.mrb[0].mxu0 %v11166
        %v11315 = vpop.f32.mrb[0].mxu0
        %v11316 = vadd.f32 0.0, %v11315
        %v11317 = vpop.f32.mrb[0].mxu0
        %v11318 = vpop.f32.mrb[0].mxu0
        %v11319 = vadd.f32 0.0, %v11318
        %v11320 = vpop.f32.mrb[0].mxu0
        %11321 = vmatprep.mubr.bf16.mxu0 0
        %11322 = vmatmul.mubr.bf16.gmra.mrb[0].mxu0 %v11167
        %v11323 = vpop.f32.mrb[0].mxu0
        %v11324 = vadd.f32 0.0, %v11323
        %v11325 = vpop.f32.mrb[0].mxu0
        %v11326 = vpop.f32.mrb[0].mxu0
        %v11327 = vadd.f32 0.0, %v11326
        %v11328 = vpop.f32.mrb[0].mxu0
        %11329 = vmatprep.mubr.bf16.mxu0 0
        %11330 = vmatmul.mubr.bf16.gmra.mrb[0].mxu0 %v11168
        %v11331 = vpop.f32.mrb[0].mxu0
        %v11332 = vadd.f32 0.0, %v11331
        %v11333 = vpop.f32.mrb[0].mxu0
        %v11334 = vpop.f32.mrb[0].mxu0
        %v11335 = vadd.f32 0.0, %v11334
        %v11336 = vpop.f32.mrb[0].mxu0
        %11337 = vmatprep.mubr.bf16.mxu0 0
        %11338 = vmatmul.mubr.bf16.gmra.mrb[0].mxu0 %v11169
        %v11339 = vpop.f32.mrb[0].mxu0
        %v11340 = vadd.f32 0.0, %v11339
        %v11341 = vpop.f32.mrb[0].mxu0
        %v11342 = vpop.f32.mrb[0].mxu0
        %v11343 = vadd.f32 0.0, %v11342
        %v11344 = vpop.f32.mrb[0].mxu0
        %11345 = vmatprep.mubr.bf16.mxu0 0
        %11346 = vmatmul.mubr.bf16.gmra.mrb[0].mxu0 %v11170
        %v11347 = vpop.f32.mrb[0].mxu0
        %v11348 = vadd.f32 0.0, %v11347
        %v11349 = vpop.f32.mrb[0].mxu0
        %v11350 = vpop.f32.mrb[0].mxu0
        %v11351 = vadd.f32 0.0, %v11350
        %v11352 = vpop.f32.mrb[0].mxu0
        %11353 = vmatprep.mubr.bf16.mxu0 0
        %11354 = vmatmul.mubr.bf16.gmra.mrb[0].mxu0 %v11171
        %v11355 = vpop.f32.mrb[0].mxu0
        %v11356 = vadd.f32 0.0, %v11355
        %v11357 = vpop.f32.mrb[0].mxu0
        %v11358 = vpop.f32.mrb[0].mxu0
        %v11359 = vadd.f32 0.0, %v11358
        %v11360 = vpop.f32.mrb[0].mxu0
        %11361 = vmatprep.mubr.bf16.mxu0 0
        %11362 = vmatmul.mubr.bf16.gmra.mrb[0].mxu0 %v11172
        %v11363 = vpop.f32.mrb[0].mxu0
        %v11364 = vadd.f32 0.0, %v11363
        %v11365 = vpop.f32.mrb[0].mxu0
        %v11366 = vpop.f32.mrb[0].mxu0
        %v11367 = vadd.f32 0.0, %v11366
        %v11368 = vpop.f32.mrb[0].mxu0
        %11369 = vmatprep.mubr.bf16.mxu0 0
        %11370 = vmatmul.mubr.bf16.gmra.mrb[0].mxu0 %v11173
        %v11371 = vpop.f32.mrb[0].mxu0
        %v11372 = vadd.f32 0.0, %v11371
        %v11373 = vpop.f32.mrb[0].mxu0
        %v11374 = vpop.f32.mrb[0].mxu0
        %v11375 = vadd.f32 0.0, %v11374
        %v11376 = vpop.f32.mrb[0].mxu0
        %11377 = vmatprep.mubr.bf16.mxu0 0
        %11378 = vmatmul.mubr.bf16.gmra.mrb[0].mxu0 %v11174
        %v11379 = vpop.f32.mrb[0].mxu0
        %v11380 = vadd.f32 0.0, %v11379
        %v11381 = vpop.f32.mrb[0].mxu0
        %v11382 = vpop.f32.mrb[0].mxu0
        %v11383 = vadd.f32 0.0, %v11382
        %v11384 = vpop.f32.mrb[0].mxu0
        %11385 = vmatprep.mubr.bf16.mxu0 0
        %11386 = vmatmul.mubr.bf16.gmra.mrb[0].mxu0 %v11175
        %v11387 = vpop.f32.mrb[0].mxu0
        %v11388 = vadd.f32 0.0, %v11387
        %v11389 = vpop.f32.mrb[0].mxu0
        %v11390 = vpop.f32.mrb[0].mxu0
        %v11391 = vadd.f32 0.0, %v11390
        %v11392 = vpop.f32.mrb[0].mxu0
        %11393 = vmatprep.mubr.bf16.mxu0 0
        %11394 = vmatmul.mubr.bf16.gmra.mrb[0].mxu0 %v11176
        %v11395 = vpop.f32.mrb[0].mxu0
        %v11396 = vadd.f32 0.0, %v11395
        %v11397 = vpop.f32.mrb[0].mxu0
        %v11398 = vpop.f32.mrb[0].mxu0
        %v11399 = vadd.f32 0.0, %v11398
        %v11400 = vpop.f32.mrb[0].mxu0
        %11401 = vdwg.mxu0
        %v11402 = vld [vmem:[#allocation12] sm:$0xf]
        %v11403 = vld [vmem:[#allocation12 + $0x4] sm:$0xf]
        %v11404 = vld [vmem:[#allocation12 + $0x8] sm:$0xf]
        %v11405 = vld [vmem:[#allocation12 + $0xc] sm:$0xf]
        %v11406 = vld [vmem:[#allocation12 + $0x10] sm:$0xf]
        %v11407 = vld [vmem:[#allocation12 + $0x14] sm:$0xf]
        %v11408 = vld [vmem:[#allocation12 + $0x18] sm:$0xf]
        %v11409 = vld [vmem:[#allocation12 + $0x1c] sm:$0xf]
        %v11410 = vld [vmem:[#allocation12 + $0x20] sm:$0xf]
        %v11411 = vld [vmem:[#allocation12 + $0x24] sm:$0xf]
        %v11412 = vld [vmem:[#allocation12 + $0x28] sm:$0xf]
        %v11413 = vld [vmem:[#allocation12 + $0x2c] sm:$0xf]
        %v11414 = vld [vmem:[#allocation12 + $0x30] sm:$0xf]
        %v11415 = vld [vmem:[#allocation12 + $0x34] sm:$0xf]
        %v11416 = vld [vmem:[#allocation12 + $0x38] sm:$0xf]
        %v11417 = vld [vmem:[#allocation12 + $0x3c] sm:$0xf]
        %v11418 = vld [vmem:[#allocation12 + $0x40] sm:$0xf]
        %v11419 = vld [vmem:[#allocation12 + $0x44] sm:$0xf]
        %v11420 = vld [vmem:[#allocation12 + $0x48] sm:$0xf]
        %v11421 = vld [vmem:[#allocation12 + $0x4c] sm:$0xf]
        %v11422 = vld [vmem:[#allocation12 + $0x50] sm:$0xf]
        %v11423 = vld [vmem:[#allocation12 + $0x54] sm:$0xf]
        %v11424 = vld [vmem:[#allocation12 + $0x58] sm:$0xf]
        %v11425 = vld [vmem:[#allocation12 + $0x5c] sm:$0xf]
        %v11426 = vld [vmem:[#allocation12 + $0x60] sm:$0xf]
        %v11427 = vld [vmem:[#allocation12 + $0x64] sm:$0xf]
        %v11428 = vld [vmem:[#allocation12 + $0x68] sm:$0xf]
        %v11429 = vld [vmem:[#allocation12 + $0x6c] sm:$0xf]
        %v11430 = vld [vmem:[#allocation12 + $0x70] sm:$0xf]
        %v11431 = vld [vmem:[#allocation12 + $0x74] sm:$0xf]
        %v11432 = vld [vmem:[#allocation12 + $0x78] sm:$0xf]
        %v11433 = vld [vmem:[#allocation12 + $0x7c] sm:$0xf]
        %v11434 = vunpack.c.l.bf16 %v11402
        %v11435 = vunpack.c.l.bf16 %v11403
        %v11436 = vunpack.c.l.bf16 %v11404
        %v11437 = vunpack.c.l.bf16 %v11405
        %v11438 = vunpack.c.l.bf16 %v11406
        %v11439 = vunpack.c.l.bf16 %v11407
        %v11440 = vunpack.c.l.bf16 %v11408
        %v11441 = vunpack.c.l.bf16 %v11409
        %v11442 = vunpack.c.l.bf16 %v11410
        %v11443 = vunpack.c.l.bf16 %v11411
        %v11444 = vunpack.c.l.bf16 %v11412
        %v11445 = vunpack.c.l.bf16 %v11413
        %v11446 = vunpack.c.l.bf16 %v11414
        %v11447 = vunpack.c.l.bf16 %v11415
        %v11448 = vunpack.c.l.bf16 %v11416
        %v11449 = vunpack.c.l.bf16 %v11417
        %v11450 = vunpack.c.l.bf16 %v11418
        %v11451 = vunpack.c.l.bf16 %v11419
        %v11452 = vunpack.c.l.bf16 %v11420
        %v11453 = vunpack.c.l.bf16 %v11421
        %v11454 = vunpack.c.l.bf16 %v11422
        %v11455 = vunpack.c.l.bf16 %v11423
        %v11456 = vunpack.c.l.bf16 %v11424
        %v11457 = vunpack.c.l.bf16 %v11425
        %v11458 = vunpack.c.l.bf16 %v11426
        %v11459 = vunpack.c.l.bf16 %v11427
        %v11460 = vunpack.c.l.bf16 %v11428
        %v11461 = vunpack.c.l.bf16 %v11429
        %v11462 = vunpack.c.l.bf16 %v11430
        %v11463 = vunpack.c.l.bf16 %v11431
        %v11464 = vunpack.c.l.bf16 %v11432
        %v11465 = vunpack.c.l.bf16 %v11433
        %v11466 = vmul.f32 %v11276, %v11434
        %v11467 = vmul.f32 %v11279, %v11435
        %v11468 = vmul.f32 %v11284, %v11436
        %v11469 = vmul.f32 %v11287, %v11437
        %v11470 = vmul.f32 %v11292, %v11438
        %v11471 = vmul.f32 %v11295, %v11439
        %v11472 = vmul.f32 %v11300, %v11440
        %v11473 = vmul.f32 %v11303, %v11441
        %v11474 = vmul.f32 %v11308, %v11442
        %v11475 = vmul.f32 %v11311, %v11443
        %v11476 = vmul.f32 %v11316, %v11444
        %v11477 = vmul.f32 %v11319, %v11445
        %v11478 = vmul.f32 %v11324, %v11446
        %v11479 = vmul.f32 %v11327, %v11447
        %v11480 = vmul.f32 %v11332, %v11448
        %v11481 = vmul.f32 %v11335, %v11449
        %v11482 = vmul.f32 %v11340, %v11450
        %v11483 = vmul.f32 %v11343, %v11451
        %v11484 = vmul.f32 %v11348, %v11452
        %v11485 = vmul.f32 %v11351, %v11453
        %v11486 = vmul.f32 %v11356, %v11454
        %v11487 = vmul.f32 %v11359, %v11455
        %v11488 = vmul.f32 %v11364, %v11456
        %v11489 = vmul.f32 %v11367, %v11457
        %v11490 = vmul.f32 %v11372, %v11458
        %v11491 = vmul.f32 %v11375, %v11459
        %v11492 = vmul.f32 %v11380, %v11460
        %v11493 = vmul.f32 %v11383, %v11461
        %v11494 = vmul.f32 %v11388, %v11462
        %v11495 = vmul.f32 %v11391, %v11463
        %v11496 = vmul.f32 %v11396, %v11464
        %v11497 = vmul.f32 %v11399, %v11465
        %v11498 = vpack.c.bf16 %v11467, %v11466
        %v11499 = vpack.c.bf16 %v11469, %v11468
        %v11500 = vpack.c.bf16 %v11471, %v11470
        %v11501 = vpack.c.bf16 %v11473, %v11472
        %v11502 = vpack.c.bf16 %v11475, %v11474
        %v11503 = vpack.c.bf16 %v11477, %v11476
        %v11504 = vpack.c.bf16 %v11479, %v11478
        %v11505 = vpack.c.bf16 %v11481, %v11480
        %v11506 = vpack.c.bf16 %v11483, %v11482
        %v11507 = vpack.c.bf16 %v11485, %v11484
        %v11508 = vpack.c.bf16 %v11487, %v11486
        %v11509 = vpack.c.bf16 %v11489, %v11488
        %v11510 = vpack.c.bf16 %v11491, %v11490
        %v11511 = vpack.c.bf16 %v11493, %v11492
        %v11512 = vpack.c.bf16 %v11495, %v11494
        %v11513 = vpack.c.bf16 %v11497, %v11496
        %v11514 = vld [vmem:[#allocation13] sm:$0xff]
        %v11515 = vld [vmem:[#allocation13 + $0x8] sm:$0xff]
        %v11516 = vld [vmem:[#allocation13 + $0x10] sm:$0xff]
        %v11517 = vld [vmem:[#allocation13 + $0x18] sm:$0xff]
        %v11518 = vld [vmem:[#allocation13 + $0x20] sm:$0xff]
        %v11519 = vld [vmem:[#allocation13 + $0x28] sm:$0xff]
        %v11520 = vld [vmem:[#allocation13 + $0x30] sm:$0xff]
        %v11521 = vld [vmem:[#allocation13 + $0x38] sm:$0xff]
        %v11522 = vld [vmem:[#allocation3] sm:$0x1]
        %v11524 = vlaneseq
        %v11525 = vshrl.u32 %v11524, 7
        %v11526 = vsub.s32 0, %v11525
        %v11527 = vrot.slane %v11522, %v11526
        %11528 = vset.pattern.permute.xlu0 0
        %11529 = vperm.xlu0 %11528, %v11527
        %v11530 = vpop.permute.xlu0 %11529
        %v11540 = vunpack.c.l.b16 %v11514
        %v11541 = vunpack.c.h.b16 %v11514
        %v11542 = vunpack.c.l.b16 %v11515
        %v11543 = vunpack.c.h.b16 %v11515
        %v11544 = vunpack.c.l.b16 %v11516
        %v11545 = vunpack.c.h.b16 %v11516
        %v11546 = vunpack.c.l.b16 %v11517
        %v11547 = vunpack.c.h.b16 %v11517
        %v11548 = vunpack.c.l.b16 %v11518
        %v11549 = vunpack.c.h.b16 %v11518
        %v11550 = vunpack.c.l.b16 %v11519
        %v11551 = vunpack.c.h.b16 %v11519
        %v11552 = vunpack.c.l.b16 %v11520
        %v11553 = vunpack.c.h.b16 %v11520
        %v11554 = vunpack.c.l.b16 %v11521
        %v11555 = vunpack.c.h.b16 %v11521
        %v11556 = vpack.c.b16 %v11542, %v11540
        %v11557 = vpack.c.b16 %v11543, %v11541
        %v11558 = vpack.c.b16 %v11546, %v11544
        %v11559 = vpack.c.b16 %v11547, %v11545
        %v11560 = vpack.c.b16 %v11550, %v11548
        %v11561 = vpack.c.b16 %v11551, %v11549
        %v11562 = vpack.c.b16 %v11554, %v11552
        %v11563 = vpack.c.b16 %v11555, %v11553
        %11572 = vmatprep.subr.bf16.mxu0 0
        %11573 = vmatpush1.bf16.msra.mxu0 %v11498
        %11574 = vmatprep.subr.bf16.mxu0 0
        %11575 = vmatpush1.bf16.msra.mxu0 %v11499
        %11576 = vmatprep.subr.bf16.mxu0 0
        %11577 = vmatpush1.bf16.msra.mxu0 %v11500
        %11578 = vmatprep.subr.bf16.mxu0 0
        %11579 = vmatpush1.bf16.msra.mxu0 %v11501
        %11580 = vmatprep.subr.bf16.mxu0 0
        %11581 = vmatpush1.bf16.msra.mxu0 %v11502
        %11582 = vmatprep.subr.bf16.mxu0 0
        %11583 = vmatpush1.bf16.msra.mxu0 %v11503
        %11584 = vmatprep.subr.bf16.mxu0 0
        %11585 = vmatpush1.bf16.msra.mxu0 %v11504
        %11586 = vmatprep.subr.bf16.mxu0 0
        %11587 = vmatpush1.bf16.msra.mxu0 %v11505
        %11588 = vmatprep.subr.bf16.mxu0 0
        %11589 = vmatpush1.bf16.msra.mxu0 %v11506
        %11590 = vmatprep.subr.bf16.mxu0 0
        %11591 = vmatpush1.bf16.msra.mxu0 %v11507
        %11592 = vmatprep.subr.bf16.mxu0 0
        %11593 = vmatpush1.bf16.msra.mxu0 %v11508
        %11594 = vmatprep.subr.bf16.mxu0 0
        %11595 = vmatpush1.bf16.msra.mxu0 %v11509
        %11596 = vmatprep.subr.bf16.mxu0 0
        %11597 = vmatpush1.bf16.msra.mxu0 %v11510
        %11598 = vmatprep.subr.bf16.mxu0 0
        %11599 = vmatpush1.bf16.msra.mxu0 %v11511
        %11600 = vmatprep.subr.bf16.mxu0 0
        %11601 = vmatpush1.bf16.msra.mxu0 %v11512
        %11602 = vmatprep.subr.bf16.mxu0 0
        %11603 = vmatpush1.bf16.msra.mxu0 %v11513
        %11604 = vmatprep.mubr.bf16.mxu0 %v11557
        %11605 = vmatmul.mubr.bf16.gmra.mrb[0].mxu0 %v11556
        %v11606 = vpop.f32.mrb[0].mxu0
        %v11607 = vadd.f32 %v11530, %v11606
        %v11608 = vpop.f32.mrb[0].mxu0
        %v11609 = vpop.f32.mrb[0].mxu0
        %v11610 = vadd.f32 %v11530, %v11609
        %v11611 = vpop.f32.mrb[0].mxu0
        %11612 = vmatprep.mubr.bf16.mxu0 %v11559
        %11613 = vmatmul.mubr.bf16.gmra.mrb[0].mxu0 %v11558
        %v11614 = vpop.f32.mrb[0].mxu0
        %v11615 = vadd.f32 %v11530, %v11614
        %v11616 = vpop.f32.mrb[0].mxu0
        %v11617 = vpop.f32.mrb[0].mxu0
        %v11618 = vadd.f32 %v11530, %v11617
        %v11619 = vpop.f32.mrb[0].mxu0
        %11620 = vmatprep.mubr.bf16.mxu0 %v11561
        %11621 = vmatmul.mubr.bf16.gmra.mrb[0].mxu0 %v11560
        %v11622 = vpop.f32.mrb[0].mxu0
        %v11623 = vadd.f32 %v11530, %v11622
        %v11624 = vpop.f32.mrb[0].mxu0
        %v11625 = vpop.f32.mrb[0].mxu0
        %v11626 = vadd.f32 %v11530, %v11625
        %v11627 = vpop.f32.mrb[0].mxu0
        %11628 = vmatprep.mubr.bf16.mxu0 %v11563
        %11629 = vmatmul.mubr.bf16.gmra.mrb[0].mxu0 %v11562
        %v11630 = vpop.f32.mrb[0].mxu0
        %v11631 = vadd.f32 %v11530, %v11630
        %v11632 = vpop.f32.mrb[0].mxu0
        %v11633 = vpop.f32.mrb[0].mxu0
        %v11634 = vadd.f32 %v11530, %v11633
        %v11635 = vpop.f32.mrb[0].mxu0
        %11636 = vdwg.mxu0
        %11637 = vst [vmem:[%s411] sm:$0xff] %v11607
        %11638 = vst [vmem:[%s411 + $0x8] sm:$0xff] %v11610
        %11639 = vst [vmem:[%s411 + $0x10] sm:$0xff] %v11615
        %11640 = vst [vmem:[%s411 + $0x18] sm:$0xff] %v11618
        %11641 = vst [vmem:[%s411 + $0x20] sm:$0xff] %v11623
        %11642 = vst [vmem:[%s411 + $0x28] sm:$0xff] %v11626
        %11643 = vst [vmem:[%s411 + $0x30] sm:$0xff] %v11631
        %11644 = vst [vmem:[%s411 + $0x38] sm:$0xff] %v11634
        %s11645 = sand.u32 %s231, 1
        %s11646 = scalar_lea.sflag [#allocation6], %s11645
        %s11647 = sand.u32 %s231, 1
        %s11648 = smul.addr %s11647, 64
        %s11649 = scalar_lea.vmem [#allocation15], %s11648
        // Predicated region
        $region81: #{depth_head_forward.1} parent=55 // pred_check
          %p11650 = pneg %p241
        $region82: #{depth_head_forward.1} parent=55 // pred_check_branch
          %11652 = sbr.rel (%p11650) target = $region84
        $region83: #{depth_head_forward.1} parent=55 // pred_region
          %s11654 = ssub.s32 1024, 1024
          %11655 = vsyncadd %s11646, %s11654
          %s11656 = smul.addr %s29, 8
          %s11657 = smul.addr %s11656, 128
          %s11658 = scalar_lea.hbm %s9, %s11657
          %s11659 = sshll.u32 %s11649, 4
          %s11660 = int_to_ptr.vmem [resolvable:$true] %s11659
          %11665 = dma.vmem_to_hbm [thread:$0]  %s11660, 1024, %s11658, %s11646, 128, 128, 8
        $region84: #{depth_head_forward.1} parent=55 // pred_fallthru
          _
      $region56: #{depth_head_forward.1} parent=5 // pred_fallthru
        _
      %p11666 = scmp.le.s32.totalorder 2, %s24
      // Predicated region
      $region85: #{depth_head_forward.1} parent=5 // pred_check
        %p11667 = pneg %p11666
      $region86: #{depth_head_forward.1} parent=5 // pred_check_branch
        %11669 = sbr.rel (%p11667) target = $region88
      $region87: #{depth_head_forward.1} parent=5 // pred_region
        %s11670 = ssub.s32 %s24, 2
        // Predicated region
        $region89: #{depth_head_forward.1} parent=87 // pred_check
          %p11671 = pneg %p247
        $region90: #{depth_head_forward.1} parent=87 // pred_check_branch
          %11673 = sbr.rel (%p11671) target = $region92
        $region91: #{depth_head_forward.1} parent=87 // pred_region
          %s11674 = sand.u32 %s232, 1
          %s11675 = scalar_lea.sflag [#allocation6], %s11674
          %s11676 = sand.u32 %s232, 1
          %s11677 = smul.addr %s11676, 64
          %s11678 = scalar_lea.vmem [#allocation15], %s11677
          %11679 = dma.done %s11675, 1024
        $region92: #{depth_head_forward.1} parent=87 // pred_fallthru
          _
      $region88: #{depth_head_forward.1} parent=5 // pred_fallthru
        _
    $region6: #{depth_head_forward.1} parent=1 // loop_footer
      %s28 = sadd.s32 1, %s24
    $region7: #{depth_head_forward.1} parent=1 // loop_footer_branch
      %23 = sbr.rel target = $region3
    $region8: #{depth_head_forward.1} parent=1 // loop_exit
      _
    %11680 = vsyncpa [#allocation5], 1
    %s11681 = scalar_lea.sflag [#allocation5], 1
    %11682 = vsyncpa %s11681, 1
    %11683 = vsyncpa [#allocation8], 1
    %11684 = vsyncpa [#allocation11], 1
    %11685 = vsyncpa [#allocation14], 1
    %11686 = vsyncpa [#allocation6], 1
    %s11687 = scalar_lea.sflag [#allocation6], 1
    %11688 = vsyncpa %s11687, 1

</llo_original>
